<compile_context>
chip_gen: v5e
topology: v5e:2x2
jax: 0.10.0
libtpu: 0.0.40
codegen_flags: <defaults>
</compile_context>

<pallas_src>
import functools

import jax
import jax.numpy as jnp
import numpy as np
from jax.experimental import pallas as pl
from jax.experimental.pallas import tpu as pltpu

EPS = 1e-5
F32 = jnp.float32
BF16 = jnp.bfloat16

GRP = 176          # pool-parity group length, padded 169 -> 176 (multiple of 8)
N1 = 676.0         # conv1 output positions (26*26) used for BN1 batch stats
N2 = 121.0         # conv2 output positions (11*11) used for BN2 batch stats


def _full_spec(shape):
    n = len(shape)
    return pl.BlockSpec(shape, lambda *_: (0,) * n)


def _round_up(x, m):
    return ((x + m - 1) // m) * m


# ------------------------------ fused kernel ------------------------------

def value_net_kernel(p1_ref, y_ref,
                     w1c_ref, b1_ref, g1_ref, be1_ref, mask1_ref,
                     w2c_ref, b2_ref, g2_ref, be2_ref, mask2_ref,
                     w1f_hbm, w2f_hbm,
                     b1f_ref, b2f_ref, w3f_ref, b3f_ref,
                     w5_ref, b5_ref, w6_ref, b6_ref,
                     o_ref,
                     w1f_vmem, w2f_vmem, dma_sem):
    # ---- kick off the dominant FC-weight DMAs so they overlap the conv stack
    w1f_copy = pltpu.make_async_copy(w1f_hbm, w1f_vmem, dma_sem.at[0])
    w2f_copy = pltpu.make_async_copy(w2f_hbm, w2f_vmem, dma_sem.at[1])
    w1f_copy.start()
    w2f_copy.start()

    # ---- layer1: Conv2d(1,25,3) as im2col matmul + BN (batch stats) + ReLU --
    # p1 rows: 4 pool-parity groups, each 169 real rows padded to 176.
    z1 = jnp.dot(p1_ref[...], w1c_ref[...],
                 preferred_element_type=F32) + b1_ref[...]            # (704,25)
    inv_n1 = 1.0 / N1
    mean1 = jnp.dot(mask1_ref[...], z1,
                    preferred_element_type=F32) * inv_n1              # (1,25)
    d1 = z1 - mean1
    var1 = jnp.dot(mask1_ref[...], d1 * d1,
                   preferred_element_type=F32) * inv_n1               # biased
    a1 = jnp.maximum(
        d1 * jax.lax.rsqrt(var1 + EPS) * g1_ref[...] + be1_ref[...], 0.0)

    # ---- layer2: MaxPool2d(2,2) == elementwise max of 4 aligned parity slabs
    m1 = jnp.maximum(
        jnp.maximum(a1[0:GRP, :], a1[GRP:2 * GRP, :]),
        jnp.maximum(a1[2 * GRP:3 * GRP, :], a1[3 * GRP:4 * GRP, :]))  # (176,25)
    # rows 169..175 of m1 are padding garbage; never read below (off+141<=169).

    # ---- layer3: Conv2d(25,50,3) as 9 shifted matmuls ("wide" flat layout) --
    taps = [(kh, kw) for kh in range(3) for kw in range(3)]
    z2 = jnp.dot(m1[0:141, :], w2c_ref[0], preferred_element_type=F32)
    for kh, kw in taps[1:]:
        off = kh * 13 + kw
        z2 = z2 + jnp.dot(m1[off:off + 141, :], w2c_ref[kh * 3 + kw],
                          preferred_element_type=F32)                 # (141,50)
    z2 = z2 + b2_ref[...]
    inv_n2 = 1.0 / N2
    mean2 = jnp.dot(mask2_ref[...], z2,
                    preferred_element_type=F32) * inv_n2              # (1,50)
    d2 = z2 - mean2
    var2 = jnp.dot(mask2_ref[...], d2 * d2,
                   preferred_element_type=F32) * inv_n2
    a2 = jnp.maximum(
        d2 * jax.lax.rsqrt(var2 + EPS) * g2_ref[...] + be2_ref[...], 0.0)

    # ---- layer4 (MaxPool2d 2,2): all window maxes in 3 full-width maxima ----
    # mx[r] = max of the 2x2 window rooted at wide-row r; only rows 26a+2b
    # (a,b in 0..4) are consumed, and all their 4 contributors are valid rows.
    mx = jnp.maximum(
        jnp.maximum(a2[0:127, :], a2[1:128, :]),
        jnp.maximum(a2[13:140, :], a2[14:141, :]))                    # (127,50)

    # ---- fc[0]: Linear(1250,1024) fused with the pool-window gather ---------
    # Collapsing the 25 matmuls into one (1,1280)@(1280,1024) would need an
    # in-kernel (25,50)->(1,1250) sublane->lane relayout that Mosaic may not
    # lower; keep the accumulating loop against the VMEM-resident bf16 weight.
    w1f_copy.wait()
    acc = b1f_ref[...]                                                # (1,1024)
    for pa in range(5):
        for pb in range(5):
            r = 26 * pa + 2 * pb
            acc = acc + jnp.dot(mx[r:r + 1, :].astype(BF16),
                                w1f_vmem[5 * pa + pb],
                                preferred_element_type=F32)
    h1 = jnp.maximum(acc, 0.0)                                        # (1,1024)

    # ---- fc[1]: Linear(1024,128)+ReLU ; fc[2]: Linear(128,out) --------------
    w2f_copy.wait()
    h2 = jnp.maximum(jnp.dot(h1.astype(BF16), w2f_vmem[...],
                             preferred_element_type=F32) + b2f_ref[...], 0.0)
    xf = jnp.dot(h2.astype(BF16), w3f_ref[...],
                 preferred_element_type=F32) + b3f_ref[...]           # (1,od)

    # ---- layer5: Linear(72,out)+ReLU on y ------------------------------------
    yf = jnp.maximum(jnp.dot(y_ref[...].astype(BF16), w5_ref[...],
                             preferred_element_type=F32) + b5_ref[...], 0.0)

    # ---- layer6: concat folded into ONE merged matmul, + ReLU ---------------
    xy = jnp.concatenate([xf, yf], axis=1).astype(BF16)               # (1,2*od)
    z = jnp.dot(xy, w6_ref[...], preferred_element_type=F32) + b6_ref[...]
    o_ref[...] = jnp.maximum(z, 0.0)


# ------------------------------ host-side glue ------------------------------

def conv1_patches(img):
    """(28,28) -> (704,9) conv1 im2col patches, 4 pool-parity groups of 169
    rows each, padded to 176 rows per group (sublane-aligned slabs).

    Group (dh, dw) holds conv1 output positions (2a+dh, 2b+dw); row index
    within a group is a*13 + b; column is kh*3 + kw (PyTorch Conv2d tap order).
    """
    groups = []
    for dh in (0, 1):
        for dw in (0, 1):
            taps = [img[dh + kh:dh + kh + 25:2, dw + kw:dw + kw + 25:2].reshape(169)
                    for kh in range(3) for kw in range(3)]
            g = jnp.stack(taps, axis=1)                               # (169, 9)
            groups.append(jnp.pad(g, ((0, GRP - 169), (0, 0))))       # (176, 9)
    return jnp.concatenate(groups, axis=0)                            # (704, 9)


def prepare_params(p, out_dim):
    """One-time rearrange / pad / cast of PyTorch-layout params to kernel layout."""
    od = _round_up(out_dim, 128)

    def pad_cols(w, cols):
        return jnp.pad(w, ((0, 0), (0, cols - w.shape[1])))

    def row(v):
        return v.reshape(1, -1)

    def row_pad(v, n):
        return jnp.pad(v, (0, n - v.shape[0])).reshape(1, -1)

    # conv weights: (K, Cout) for conv1, per-tap (ci, co) slabs for conv2 (f32)
    w1c = p["conv1_w"].reshape(25, 9).T                               # (9, 25)
    w2c = jnp.transpose(p["conv2_w"], (2, 3, 1, 0)).reshape(9, 25, 50)

    # fc[0] weight (1024,1250) -> (25,50,1024): w1f[p, c, k] = W[k, c*25 + p]
    w1f = p["fc1_w"].T.reshape(50, 25, 1024).transpose(1, 0, 2).astype(BF16)
    w2f = p["fc2_w"].T.astype(BF16)                                   # (1024,128)
    w3f = pad_cols(p["fc3_w"].T, od).astype(BF16)                     # (128, od)
    w5 = pad_cols(p["fc5_w"].T, od).astype(BF16)                      # (72, od)

    # layer6: stack the x-half over the y-half -> single (2*od, od) weight
    w6a = jnp.pad(p["fc6_w"][:, :out_dim].T,
                  ((0, od - out_dim), (0, od - out_dim)))
    w6b = jnp.pad(p["fc6_w"][:, out_dim:].T,
                  ((0, od - out_dim), (0, od - out_dim)))
    w6 = jnp.concatenate([w6a, w6b], axis=0).astype(BF16)             # (2od, od)

    # BN-statistics mask rows (exclude pad / garbage rows), used as MXU LHS
    r1 = np.arange(4 * GRP)
    mask1 = jnp.asarray(((r1 % GRP) < 169).astype(np.float32).reshape(1, 4 * GRP))
    r2 = np.arange(141)
    mask2 = jnp.asarray(((r2 % 13) <= 10).astype(np.float32).reshape(1, 141))

    return {
        "w1c": w1c, "b1": row(p["conv1_b"]),
        "g1": row(p["bn1_g"]), "be1": row(p["bn1_b"]), "mask1": mask1,
        "w2c": w2c, "b2": row(p["conv2_b"]),
        "g2": row(p["bn2_g"]), "be2": row(p["bn2_b"]), "mask2": mask2,
        "w1f": w1f, "w2f": w2f,
        "b1f": row(p["fc1_b"]), "b2f": row(p["fc2_b"]),
        "w3f": w3f, "b3f": row_pad(p["fc3_b"], od),
        "w5": w5, "b5": row_pad(p["fc5_b"], od),
        "w6": w6, "b6": row_pad(p["fc6_b"], od),
    }


def value_net_forward(kp, x, *, out_dim):
    od = _round_up(out_dim, 128)
    # Matches the reference forward: both narrows start at offset 72.
    y = x[72:144].reshape(1, 72)            # x.narrow(0, 72, 72)
    img = x[72:856].reshape(28, 28)         # x.narrow(0, 72, 784) -> (1,1,28,28)
    p1 = conv1_patches(img)                 # cheap XLA input prep (~25 KB)

    names_vals = [
        ("p1", p1), ("y", y),
        ("w1c", kp["w1c"]), ("b1", kp["b1"]), ("g1", kp["g1"]),
        ("be1", kp["be1"]), ("mask1", kp["mask1"]),
        ("w2c", kp["w2c"]), ("b2", kp["b2"]), ("g2", kp["g2"]),
        ("be2", kp["be2"]), ("mask2", kp["mask2"]),
        ("w1f", kp["w1f"]), ("w2f", kp["w2f"]),
        ("b1f", kp["b1f"]), ("b2f", kp["b2f"]),
        ("w3f", kp["w3f"]), ("b3f", kp["b3f"]),
        ("w5", kp["w5"]), ("b5", kp["b5"]),
        ("w6", kp["w6"]), ("b6", kp["b6"]),
    ]
    hbm_args = {"w1f", "w2f"}               # DMA'd manually inside the kernel
    args = tuple(v for _, v in names_vals)
    in_specs = [pl.BlockSpec(memory_space=pl.ANY) if n in hbm_args
                else _full_spec(v.shape) for n, v in names_vals]

    flops = int(2 * (704 * 9 * 25 + 2 * 704 * 25      # conv1 + BN1 reductions
                     + 9 * 141 * 25 * 50 + 2 * 141 * 50  # conv2 + BN2
                     + 1250 * 1024 + 1024 * 128           # fc[0], fc[1]
                     + 128 * od + 72 * od + 2 * od * od)) # fc[2], layer5, layer6
    bytes_accessed = int(sum(int(a.size) * a.dtype.itemsize for a in args)
                         + od * 4)
    cost = pl.CostEstimate(flops=flops, transcendentals=75,
                           bytes_accessed=bytes_accessed)

    out = pl.pallas_call(
        value_net_kernel,
        out_shape=jax.ShapeDtypeStruct((1, od), F32),
        in_specs=in_specs,
        out_specs=_full_spec((1, od)),
        scratch_shapes=[
            pltpu.VMEM((25, 50, 1024), BF16),   # fc[0] weight (overlapped DMA)
            pltpu.VMEM((1024, 128), BF16),      # fc[1] weight (overlapped DMA)
            pltpu.SemaphoreType.DMA((2,)),
        ],
        # Footprint ~8 MiB (resident fc weights ~3.5 MiB + pipeline buffers +
        # spills); 24 MiB leaves ample headroom on v5e/v6e (128 MiB VMEM) and
        # v7x (64 MiB per TC).
        compiler_params=pltpu.CompilerParams(
            vmem_limit_bytes=24 * 1024 * 1024),
        cost_estimate=cost,
    )(*args)
    return out[0, :out_dim]                 # drop the lane padding


def init_params(key, out_dim):
    ks = jax.random.split(key, 24)

    def w(k, shape, scale=0.05):
        return (scale * jax.random.normal(k, shape)).astype(jnp.float32)

    return {
        "conv1_w": w(ks[0], (25, 1, 3, 3)), "conv1_b": w(ks[1], (25,), 0.01),
        "bn1_g": 1.0 + w(ks[2], (25,), 0.01), "bn1_b": w(ks[3], (25,), 0.01),
        "conv2_w": w(ks[4], (50, 25, 3, 3)), "conv2_b": w(ks[5], (50,), 0.01),
        "bn2_g": 1.0 + w(ks[6], (50,), 0.01), "bn2_b": w(ks[7], (50,), 0.01),
        # PyTorch Linear layout: weight (out, in), bias (out,)
        "fc1_w": w(ks[8], (1024, 1250), 0.02), "fc1_b": w(ks[9], (1024,), 0.01),
        "fc2_w": w(ks[10], (128, 1024), 0.02), "fc2_b": w(ks[11], (128,), 0.01),
        "fc3_w": w(ks[12], (out_dim, 128), 0.02), "fc3_b": w(ks[13], (out_dim,), 0.01),
        "fc5_w": w(ks[14], (out_dim, 72), 0.05), "fc5_b": w(ks[15], (out_dim,), 0.01),
        "fc6_w": w(ks[16], (out_dim, 2 * out_dim), 0.05),
        "fc6_b": w(ks[17], (out_dim,), 0.01),
    }


if __name__ == "__main__":
    OUT_DIM = 10
    IN_DIM = 856    # forward reads x[72:856]

    key = jax.random.PRNGKey(0)
    pkey, xkey = jax.random.split(key)
    params = init_params(pkey, OUT_DIM)
    kparams = prepare_params(params, OUT_DIM)   # one-time layout / pad / bf16 prep
    x = jax.random.normal(xkey, (IN_DIM,), dtype=jnp.float32)

    fwd = jax.jit(functools.partial(value_net_forward, out_dim=OUT_DIM))
    out = fwd(kparams, x)
    jax.block_until_ready(out)
    assert out.shape == (OUT_DIM,) and out.dtype == jnp.float32
    print("KERNEL_OK")
</pallas_src>

<mosaic_0001>
module attributes {stable_mosaic.version = 11 : i64} {
  func.func @value_net_kernel(%arg0: memref<704x9xf32, #tpu.memory_space<vmem>>, %arg1: memref<1x72xf32, #tpu.memory_space<vmem>>, %arg2: memref<9x25xf32, #tpu.memory_space<vmem>>, %arg3: memref<1x25xf32, #tpu.memory_space<vmem>>, %arg4: memref<1x25xf32, #tpu.memory_space<vmem>>, %arg5: memref<1x25xf32, #tpu.memory_space<vmem>>, %arg6: memref<1x704xf32, #tpu.memory_space<vmem>>, %arg7: memref<9x25x50xf32, #tpu.memory_space<vmem>>, %arg8: memref<1x50xf32, #tpu.memory_space<vmem>>, %arg9: memref<1x50xf32, #tpu.memory_space<vmem>>, %arg10: memref<1x50xf32, #tpu.memory_space<vmem>>, %arg11: memref<1x141xf32, #tpu.memory_space<vmem>>, %arg12: memref<25x50x1024xbf16, #tpu.memory_space<any>>, %arg13: memref<1024x128xbf16, #tpu.memory_space<any>>, %arg14: memref<1x1024xf32, #tpu.memory_space<vmem>>, %arg15: memref<1x128xf32, #tpu.memory_space<vmem>>, %arg16: memref<128x128xbf16, #tpu.memory_space<vmem>>, %arg17: memref<1x128xf32, #tpu.memory_space<vmem>>, %arg18: memref<72x128xbf16, #tpu.memory_space<vmem>>, %arg19: memref<1x128xf32, #tpu.memory_space<vmem>>, %arg20: memref<256x128xbf16, #tpu.memory_space<vmem>>, %arg21: memref<1x128xf32, #tpu.memory_space<vmem>>, %arg22: memref<1x128xf32, #tpu.memory_space<vmem>>, %arg23: memref<25x50x1024xbf16, #tpu.memory_space<vmem>>, %arg24: memref<1024x128xbf16, #tpu.memory_space<vmem>>, %arg25: memref<2x!tpu.dma_semaphore, #tpu.memory_space<semaphore_mem>>) attributes {dimension_semantics = [], scalar_prefetch = 0 : i64, scratch_operands = 3 : i64, tpu.core_type = #tpu.core_type<tc>} {
    %c0_i32 = arith.constant 0 : i32
    %0 = tpu.memref_slice %arg25[%c0_i32] : memref<2x!tpu.dma_semaphore, #tpu.memory_space<semaphore_mem>> -> memref<1x!tpu.dma_semaphore, #tpu.memory_space<semaphore_mem>>
    %1 = tpu.memref_squeeze %0 : memref<1x!tpu.dma_semaphore, #tpu.memory_space<semaphore_mem>> -> memref<!tpu.dma_semaphore, #tpu.memory_space<semaphore_mem>>
    tpu.enqueue_dma source(%arg12 : memref<25x50x1024xbf16, #tpu.memory_space<any>>) target(%arg23 : memref<25x50x1024xbf16, #tpu.memory_space<vmem>>) target_semaphore(%1 : memref<!tpu.dma_semaphore, #tpu.memory_space<semaphore_mem>>)
    %c1_i32 = arith.constant 1 : i32
    %2 = tpu.memref_slice %arg25[%c1_i32] : memref<2x!tpu.dma_semaphore, #tpu.memory_space<semaphore_mem>> -> memref<1x!tpu.dma_semaphore, #tpu.memory_space<semaphore_mem>>
    %3 = tpu.memref_squeeze %2 : memref<1x!tpu.dma_semaphore, #tpu.memory_space<semaphore_mem>> -> memref<!tpu.dma_semaphore, #tpu.memory_space<semaphore_mem>>
    tpu.enqueue_dma source(%arg13 : memref<1024x128xbf16, #tpu.memory_space<any>>) target(%arg24 : memref<1024x128xbf16, #tpu.memory_space<vmem>>) target_semaphore(%3 : memref<!tpu.dma_semaphore, #tpu.memory_space<semaphore_mem>>)
    %c0 = arith.constant 0 : index
    %c0_0 = arith.constant 0 : index
    %4 = vector.load %arg0[%c0, %c0_0] : memref<704x9xf32, #tpu.memory_space<vmem>>, vector<704x9xf32>
    %c0_1 = arith.constant 0 : index
    %c0_2 = arith.constant 0 : index
    %5 = vector.load %arg2[%c0_1, %c0_2] : memref<9x25xf32, #tpu.memory_space<vmem>>, vector<9x25xf32>
    %cst = arith.constant dense<0.000000e+00> : vector<704x25xf32>
    %6 = tpu.matmul %4, %5, %cst {dimension_numbers = #tpu.dot_dimension_numbers<[1], [0], [0], [1], [0, 0, 1, 1], [], []>} : vector<704x9xf32>, vector<9x25xf32>, vector<704x25xf32> -> vector<704x25xf32>
    %c0_3 = arith.constant 0 : index
    %c0_4 = arith.constant 0 : index
    %7 = vector.load %arg3[%c0_3, %c0_4] : memref<1x25xf32, #tpu.memory_space<vmem>>, vector<1x25xf32>
    %8 = vector.broadcast %7 : vector<1x25xf32> to vector<704x25xf32>
    %9 = arith.addf %6, %8 : vector<704x25xf32>
    %c0_5 = arith.constant 0 : index
    %c0_6 = arith.constant 0 : index
    %10 = vector.load %arg6[%c0_5, %c0_6] : memref<1x704xf32, #tpu.memory_space<vmem>>, vector<1x704xf32>
    %cst_7 = arith.constant dense<0.000000e+00> : vector<1x25xf32>
    %11 = tpu.matmul %10, %9, %cst_7 {dimension_numbers = #tpu.dot_dimension_numbers<[1], [0], [0], [1], [0, 0, 1, 1], [], []>} : vector<1x704xf32>, vector<704x25xf32>, vector<1x25xf32> -> vector<1x25xf32>
    %cst_8 = arith.constant 1.479290e-03 : f32
    %12 = vector.broadcast %cst_8 : f32 to vector<1x25xf32>
    %13 = arith.mulf %11, %12 : vector<1x25xf32>
    %14 = vector.broadcast %13 : vector<1x25xf32> to vector<704x25xf32>
    %15 = arith.subf %9, %14 : vector<704x25xf32>
    %c0_9 = arith.constant 0 : index
    %c0_10 = arith.constant 0 : index
    %16 = vector.load %arg6[%c0_9, %c0_10] : memref<1x704xf32, #tpu.memory_space<vmem>>, vector<1x704xf32>
    %17 = arith.mulf %15, %15 : vector<704x25xf32>
    %cst_11 = arith.constant dense<0.000000e+00> : vector<1x25xf32>
    %18 = tpu.matmul %16, %17, %cst_11 {dimension_numbers = #tpu.dot_dimension_numbers<[1], [0], [0], [1], [0, 0, 1, 1], [], []>} : vector<1x704xf32>, vector<704x25xf32>, vector<1x25xf32> -> vector<1x25xf32>
    %cst_12 = arith.constant 1.479290e-03 : f32
    %19 = vector.broadcast %cst_12 : f32 to vector<1x25xf32>
    %20 = arith.mulf %18, %19 : vector<1x25xf32>
    %cst_13 = arith.constant 9.99999974E-6 : f32
    %21 = vector.broadcast %cst_13 : f32 to vector<1x25xf32>
    %22 = arith.addf %20, %21 : vector<1x25xf32>
    %23 = math.rsqrt %22 : vector<1x25xf32>
    %24 = vector.broadcast %23 : vector<1x25xf32> to vector<704x25xf32>
    %25 = arith.mulf %15, %24 : vector<704x25xf32>
    %c0_14 = arith.constant 0 : index
    %c0_15 = arith.constant 0 : index
    %26 = vector.load %arg4[%c0_14, %c0_15] : memref<1x25xf32, #tpu.memory_space<vmem>>, vector<1x25xf32>
    %27 = vector.broadcast %26 : vector<1x25xf32> to vector<704x25xf32>
    %28 = arith.mulf %25, %27 : vector<704x25xf32>
    %c0_16 = arith.constant 0 : index
    %c0_17 = arith.constant 0 : index
    %29 = vector.load %arg5[%c0_16, %c0_17] : memref<1x25xf32, #tpu.memory_space<vmem>>, vector<1x25xf32>
    %30 = vector.broadcast %29 : vector<1x25xf32> to vector<704x25xf32>
    %31 = arith.addf %28, %30 : vector<704x25xf32>
    %cst_18 = arith.constant 0.000000e+00 : f32
    %32 = vector.broadcast %cst_18 : f32 to vector<704x25xf32>
    %33 = arith.maximumf %31, %32 : vector<704x25xf32>
    %34 = vector.extract_strided_slice %33 {offsets = [0, 0], sizes = [176, 25], strides = [1, 1]} : vector<704x25xf32> to vector<176x25xf32>
    %35 = vector.extract_strided_slice %33 {offsets = [176, 0], sizes = [176, 25], strides = [1, 1]} : vector<704x25xf32> to vector<176x25xf32>
    %36 = arith.maximumf %34, %35 : vector<176x25xf32>
    %37 = vector.extract_strided_slice %33 {offsets = [352, 0], sizes = [176, 25], strides = [1, 1]} : vector<704x25xf32> to vector<176x25xf32>
    %38 = vector.extract_strided_slice %33 {offsets = [528, 0], sizes = [176, 25], strides = [1, 1]} : vector<704x25xf32> to vector<176x25xf32>
    %39 = arith.maximumf %37, %38 : vector<176x25xf32>
    %40 = arith.maximumf %36, %39 : vector<176x25xf32>
    %41 = vector.extract_strided_slice %40 {offsets = [0, 0], sizes = [141, 25], strides = [1, 1]} : vector<176x25xf32> to vector<141x25xf32>
    %c0_19 = arith.constant 0 : index
    %c0_20 = arith.constant 0 : index
    %c0_21 = arith.constant 0 : index
    %42 = vector.load %arg7[%c0_19, %c0_20, %c0_21] : memref<9x25x50xf32, #tpu.memory_space<vmem>>, vector<1x25x50xf32>
    %43 = vector.shape_cast %42 : vector<1x25x50xf32> to vector<25x50xf32>
    %cst_22 = arith.constant dense<0.000000e+00> : vector<141x50xf32>
    %44 = tpu.matmul %41, %43, %cst_22 {dimension_numbers = #tpu.dot_dimension_numbers<[1], [0], [0], [1], [0, 0, 1, 1], [], []>} : vector<141x25xf32>, vector<25x50xf32>, vector<141x50xf32> -> vector<141x50xf32>
    %45 = vector.extract_strided_slice %40 {offsets = [1, 0], sizes = [141, 25], strides = [1, 1]} : vector<176x25xf32> to vector<141x25xf32>
    %c1 = arith.constant 1 : index
    %c0_23 = arith.constant 0 : index
    %c0_24 = arith.constant 0 : index
    %46 = vector.load %arg7[%c1, %c0_23, %c0_24] : memref<9x25x50xf32, #tpu.memory_space<vmem>>, vector<1x25x50xf32>
    %47 = vector.shape_cast %46 : vector<1x25x50xf32> to vector<25x50xf32>
    %cst_25 = arith.constant dense<0.000000e+00> : vector<141x50xf32>
    %48 = tpu.matmul %45, %47, %cst_25 {dimension_numbers = #tpu.dot_dimension_numbers<[1], [0], [0], [1], [0, 0, 1, 1], [], []>} : vector<141x25xf32>, vector<25x50xf32>, vector<141x50xf32> -> vector<141x50xf32>
    %49 = arith.addf %44, %48 : vector<141x50xf32>
    %50 = vector.extract_strided_slice %40 {offsets = [2, 0], sizes = [141, 25], strides = [1, 1]} : vector<176x25xf32> to vector<141x25xf32>
    %c2 = arith.constant 2 : index
    %c0_26 = arith.constant 0 : index
    %c0_27 = arith.constant 0 : index
    %51 = vector.load %arg7[%c2, %c0_26, %c0_27] : memref<9x25x50xf32, #tpu.memory_space<vmem>>, vector<1x25x50xf32>
    %52 = vector.shape_cast %51 : vector<1x25x50xf32> to vector<25x50xf32>
    %cst_28 = arith.constant dense<0.000000e+00> : vector<141x50xf32>
    %53 = tpu.matmul %50, %52, %cst_28 {dimension_numbers = #tpu.dot_dimension_numbers<[1], [0], [0], [1], [0, 0, 1, 1], [], []>} : vector<141x25xf32>, vector<25x50xf32>, vector<141x50xf32> -> vector<141x50xf32>
    %54 = arith.addf %49, %53 : vector<141x50xf32>
    %55 = vector.extract_strided_slice %40 {offsets = [13, 0], sizes = [141, 25], strides = [1, 1]} : vector<176x25xf32> to vector<141x25xf32>
    %c3 = arith.constant 3 : index
    %c0_29 = arith.constant 0 : index
    %c0_30 = arith.constant 0 : index
    %56 = vector.load %arg7[%c3, %c0_29, %c0_30] : memref<9x25x50xf32, #tpu.memory_space<vmem>>, vector<1x25x50xf32>
    %57 = vector.shape_cast %56 : vector<1x25x50xf32> to vector<25x50xf32>
    %cst_31 = arith.constant dense<0.000000e+00> : vector<141x50xf32>
    %58 = tpu.matmul %55, %57, %cst_31 {dimension_numbers = #tpu.dot_dimension_numbers<[1], [0], [0], [1], [0, 0, 1, 1], [], []>} : vector<141x25xf32>, vector<25x50xf32>, vector<141x50xf32> -> vector<141x50xf32>
    %59 = arith.addf %54, %58 : vector<141x50xf32>
    %60 = vector.extract_strided_slice %40 {offsets = [14, 0], sizes = [141, 25], strides = [1, 1]} : vector<176x25xf32> to vector<141x25xf32>
    %c4 = arith.constant 4 : index
    %c0_32 = arith.constant 0 : index
    %c0_33 = arith.constant 0 : index
    %61 = vector.load %arg7[%c4, %c0_32, %c0_33] : memref<9x25x50xf32, #tpu.memory_space<vmem>>, vector<1x25x50xf32>
    %62 = vector.shape_cast %61 : vector<1x25x50xf32> to vector<25x50xf32>
    %cst_34 = arith.constant dense<0.000000e+00> : vector<141x50xf32>
    %63 = tpu.matmul %60, %62, %cst_34 {dimension_numbers = #tpu.dot_dimension_numbers<[1], [0], [0], [1], [0, 0, 1, 1], [], []>} : vector<141x25xf32>, vector<25x50xf32>, vector<141x50xf32> -> vector<141x50xf32>
    %64 = arith.addf %59, %63 : vector<141x50xf32>
    %65 = vector.extract_strided_slice %40 {offsets = [15, 0], sizes = [141, 25], strides = [1, 1]} : vector<176x25xf32> to vector<141x25xf32>
    %c5 = arith.constant 5 : index
    %c0_35 = arith.constant 0 : index
    %c0_36 = arith.constant 0 : index
    %66 = vector.load %arg7[%c5, %c0_35, %c0_36] : memref<9x25x50xf32, #tpu.memory_space<vmem>>, vector<1x25x50xf32>
    %67 = vector.shape_cast %66 : vector<1x25x50xf32> to vector<25x50xf32>
    %cst_37 = arith.constant dense<0.000000e+00> : vector<141x50xf32>
    %68 = tpu.matmul %65, %67, %cst_37 {dimension_numbers = #tpu.dot_dimension_numbers<[1], [0], [0], [1], [0, 0, 1, 1], [], []>} : vector<141x25xf32>, vector<25x50xf32>, vector<141x50xf32> -> vector<141x50xf32>
    %69 = arith.addf %64, %68 : vector<141x50xf32>
    %70 = vector.extract_strided_slice %40 {offsets = [26, 0], sizes = [141, 25], strides = [1, 1]} : vector<176x25xf32> to vector<141x25xf32>
    %c6 = arith.constant 6 : index
    %c0_38 = arith.constant 0 : index
    %c0_39 = arith.constant 0 : index
    %71 = vector.load %arg7[%c6, %c0_38, %c0_39] : memref<9x25x50xf32, #tpu.memory_space<vmem>>, vector<1x25x50xf32>
    %72 = vector.shape_cast %71 : vector<1x25x50xf32> to vector<25x50xf32>
    %cst_40 = arith.constant dense<0.000000e+00> : vector<141x50xf32>
    %73 = tpu.matmul %70, %72, %cst_40 {dimension_numbers = #tpu.dot_dimension_numbers<[1], [0], [0], [1], [0, 0, 1, 1], [], []>} : vector<141x25xf32>, vector<25x50xf32>, vector<141x50xf32> -> vector<141x50xf32>
    %74 = arith.addf %69, %73 : vector<141x50xf32>
    %75 = vector.extract_strided_slice %40 {offsets = [27, 0], sizes = [141, 25], strides = [1, 1]} : vector<176x25xf32> to vector<141x25xf32>
    %c7 = arith.constant 7 : index
    %c0_41 = arith.constant 0 : index
    %c0_42 = arith.constant 0 : index
    %76 = vector.load %arg7[%c7, %c0_41, %c0_42] : memref<9x25x50xf32, #tpu.memory_space<vmem>>, vector<1x25x50xf32>
    %77 = vector.shape_cast %76 : vector<1x25x50xf32> to vector<25x50xf32>
    %cst_43 = arith.constant dense<0.000000e+00> : vector<141x50xf32>
    %78 = tpu.matmul %75, %77, %cst_43 {dimension_numbers = #tpu.dot_dimension_numbers<[1], [0], [0], [1], [0, 0, 1, 1], [], []>} : vector<141x25xf32>, vector<25x50xf32>, vector<141x50xf32> -> vector<141x50xf32>
    %79 = arith.addf %74, %78 : vector<141x50xf32>
    %80 = vector.extract_strided_slice %40 {offsets = [28, 0], sizes = [141, 25], strides = [1, 1]} : vector<176x25xf32> to vector<141x25xf32>
    %c8 = arith.constant 8 : index
    %c0_44 = arith.constant 0 : index
    %c0_45 = arith.constant 0 : index
    %81 = vector.load %arg7[%c8, %c0_44, %c0_45] : memref<9x25x50xf32, #tpu.memory_space<vmem>>, vector<1x25x50xf32>
    %82 = vector.shape_cast %81 : vector<1x25x50xf32> to vector<25x50xf32>
    %cst_46 = arith.constant dense<0.000000e+00> : vector<141x50xf32>
    %83 = tpu.matmul %80, %82, %cst_46 {dimension_numbers = #tpu.dot_dimension_numbers<[1], [0], [0], [1], [0, 0, 1, 1], [], []>} : vector<141x25xf32>, vector<25x50xf32>, vector<141x50xf32> -> vector<141x50xf32>
    %84 = arith.addf %79, %83 : vector<141x50xf32>
    %c0_47 = arith.constant 0 : index
    %c0_48 = arith.constant 0 : index
    %85 = vector.load %arg8[%c0_47, %c0_48] : memref<1x50xf32, #tpu.memory_space<vmem>>, vector<1x50xf32>
    %86 = vector.broadcast %85 : vector<1x50xf32> to vector<141x50xf32>
    %87 = arith.addf %84, %86 : vector<141x50xf32>
    %c0_49 = arith.constant 0 : index
    %c0_50 = arith.constant 0 : index
    %88 = vector.load %arg11[%c0_49, %c0_50] : memref<1x141xf32, #tpu.memory_space<vmem>>, vector<1x141xf32>
    %cst_51 = arith.constant dense<0.000000e+00> : vector<1x50xf32>
    %89 = tpu.matmul %88, %87, %cst_51 {dimension_numbers = #tpu.dot_dimension_numbers<[1], [0], [0], [1], [0, 0, 1, 1], [], []>} : vector<1x141xf32>, vector<141x50xf32>, vector<1x50xf32> -> vector<1x50xf32>
    %cst_52 = arith.constant 0.00826446246 : f32
    %90 = vector.broadcast %cst_52 : f32 to vector<1x50xf32>
    %91 = arith.mulf %89, %90 : vector<1x50xf32>
    %92 = vector.broadcast %91 : vector<1x50xf32> to vector<141x50xf32>
    %93 = arith.subf %87, %92 : vector<141x50xf32>
    %c0_53 = arith.constant 0 : index
    %c0_54 = arith.constant 0 : index
    %94 = vector.load %arg11[%c0_53, %c0_54] : memref<1x141xf32, #tpu.memory_space<vmem>>, vector<1x141xf32>
    %95 = arith.mulf %93, %93 : vector<141x50xf32>
    %cst_55 = arith.constant dense<0.000000e+00> : vector<1x50xf32>
    %96 = tpu.matmul %94, %95, %cst_55 {dimension_numbers = #tpu.dot_dimension_numbers<[1], [0], [0], [1], [0, 0, 1, 1], [], []>} : vector<1x141xf32>, vector<141x50xf32>, vector<1x50xf32> -> vector<1x50xf32>
    %cst_56 = arith.constant 0.00826446246 : f32
    %97 = vector.broadcast %cst_56 : f32 to vector<1x50xf32>
    %98 = arith.mulf %96, %97 : vector<1x50xf32>
    %cst_57 = arith.constant 9.99999974E-6 : f32
    %99 = vector.broadcast %cst_57 : f32 to vector<1x50xf32>
    %100 = arith.addf %98, %99 : vector<1x50xf32>
    %101 = math.rsqrt %100 : vector<1x50xf32>
    %102 = vector.broadcast %101 : vector<1x50xf32> to vector<141x50xf32>
    %103 = arith.mulf %93, %102 : vector<141x50xf32>
    %c0_58 = arith.constant 0 : index
    %c0_59 = arith.constant 0 : index
    %104 = vector.load %arg9[%c0_58, %c0_59] : memref<1x50xf32, #tpu.memory_space<vmem>>, vector<1x50xf32>
    %105 = vector.broadcast %104 : vector<1x50xf32> to vector<141x50xf32>
    %106 = arith.mulf %103, %105 : vector<141x50xf32>
    %c0_60 = arith.constant 0 : index
    %c0_61 = arith.constant 0 : index
    %107 = vector.load %arg10[%c0_60, %c0_61] : memref<1x50xf32, #tpu.memory_space<vmem>>, vector<1x50xf32>
    %108 = vector.broadcast %107 : vector<1x50xf32> to vector<141x50xf32>
    %109 = arith.addf %106, %108 : vector<141x50xf32>
    %cst_62 = arith.constant 0.000000e+00 : f32
    %110 = vector.broadcast %cst_62 : f32 to vector<141x50xf32>
    %111 = arith.maximumf %109, %110 : vector<141x50xf32>
    %112 = vector.extract_strided_slice %111 {offsets = [0, 0], sizes = [127, 50], strides = [1, 1]} : vector<141x50xf32> to vector<127x50xf32>
    %113 = vector.extract_strided_slice %111 {offsets = [1, 0], sizes = [127, 50], strides = [1, 1]} : vector<141x50xf32> to vector<127x50xf32>
    %114 = arith.maximumf %112, %113 : vector<127x50xf32>
    %115 = vector.extract_strided_slice %111 {offsets = [13, 0], sizes = [127, 50], strides = [1, 1]} : vector<141x50xf32> to vector<127x50xf32>
    %116 = vector.extract_strided_slice %111 {offsets = [14, 0], sizes = [127, 50], strides = [1, 1]} : vector<141x50xf32> to vector<127x50xf32>
    %117 = arith.maximumf %115, %116 : vector<127x50xf32>
    %118 = arith.maximumf %114, %117 : vector<127x50xf32>
    %c0_i32_63 = arith.constant 0 : i32
    %119 = tpu.memref_slice %arg25[%c0_i32_63] : memref<2x!tpu.dma_semaphore, #tpu.memory_space<semaphore_mem>> -> memref<1x!tpu.dma_semaphore, #tpu.memory_space<semaphore_mem>>
    %120 = tpu.memref_squeeze %119 : memref<1x!tpu.dma_semaphore, #tpu.memory_space<semaphore_mem>> -> memref<!tpu.dma_semaphore, #tpu.memory_space<semaphore_mem>>
    tpu.wait_dma2 semaphore(%120 : memref<!tpu.dma_semaphore, #tpu.memory_space<semaphore_mem>>) src(%arg12 : memref<25x50x1024xbf16, #tpu.memory_space<any>>) dst(%arg23 : memref<25x50x1024xbf16, #tpu.memory_space<vmem>>)
    %c0_64 = arith.constant 0 : index
    %c0_65 = arith.constant 0 : index
    %121 = vector.load %arg14[%c0_64, %c0_65] : memref<1x1024xf32, #tpu.memory_space<vmem>>, vector<1x1024xf32>
    %122 = vector.extract_strided_slice %118 {offsets = [0, 0], sizes = [1, 50], strides = [1, 1]} : vector<127x50xf32> to vector<1x50xf32>
    %123 = arith.truncf %122 : vector<1x50xf32> to vector<1x50xbf16>
    %c0_66 = arith.constant 0 : index
    %c0_67 = arith.constant 0 : index
    %c0_68 = arith.constant 0 : index
    %124 = vector.load %arg23[%c0_66, %c0_67, %c0_68] : memref<25x50x1024xbf16, #tpu.memory_space<vmem>>, vector<1x50x1024xbf16>
    %125 = vector.shape_cast %124 : vector<1x50x1024xbf16> to vector<50x1024xbf16>
    %cst_69 = arith.constant dense<0.000000e+00> : vector<1x1024xf32>
    %126 = tpu.matmul %123, %125, %cst_69 {dimension_numbers = #tpu.dot_dimension_numbers<[1], [0], [0], [1], [0, 0, 1, 1], [], []>} : vector<1x50xbf16>, vector<50x1024xbf16>, vector<1x1024xf32> -> vector<1x1024xf32>
    %127 = arith.addf %121, %126 : vector<1x1024xf32>
    %128 = vector.extract_strided_slice %118 {offsets = [2, 0], sizes = [1, 50], strides = [1, 1]} : vector<127x50xf32> to vector<1x50xf32>
    %129 = arith.truncf %128 : vector<1x50xf32> to vector<1x50xbf16>
    %c1_70 = arith.constant 1 : index
    %c0_71 = arith.constant 0 : index
    %c0_72 = arith.constant 0 : index
    %130 = vector.load %arg23[%c1_70, %c0_71, %c0_72] : memref<25x50x1024xbf16, #tpu.memory_space<vmem>>, vector<1x50x1024xbf16>
    %131 = vector.shape_cast %130 : vector<1x50x1024xbf16> to vector<50x1024xbf16>
    %cst_73 = arith.constant dense<0.000000e+00> : vector<1x1024xf32>
    %132 = tpu.matmul %129, %131, %cst_73 {dimension_numbers = #tpu.dot_dimension_numbers<[1], [0], [0], [1], [0, 0, 1, 1], [], []>} : vector<1x50xbf16>, vector<50x1024xbf16>, vector<1x1024xf32> -> vector<1x1024xf32>
    %133 = arith.addf %127, %132 : vector<1x1024xf32>
    %134 = vector.extract_strided_slice %118 {offsets = [4, 0], sizes = [1, 50], strides = [1, 1]} : vector<127x50xf32> to vector<1x50xf32>
    %135 = arith.truncf %134 : vector<1x50xf32> to vector<1x50xbf16>
    %c2_74 = arith.constant 2 : index
    %c0_75 = arith.constant 0 : index
    %c0_76 = arith.constant 0 : index
    %136 = vector.load %arg23[%c2_74, %c0_75, %c0_76] : memref<25x50x1024xbf16, #tpu.memory_space<vmem>>, vector<1x50x1024xbf16>
    %137 = vector.shape_cast %136 : vector<1x50x1024xbf16> to vector<50x1024xbf16>
    %cst_77 = arith.constant dense<0.000000e+00> : vector<1x1024xf32>
    %138 = tpu.matmul %135, %137, %cst_77 {dimension_numbers = #tpu.dot_dimension_numbers<[1], [0], [0], [1], [0, 0, 1, 1], [], []>} : vector<1x50xbf16>, vector<50x1024xbf16>, vector<1x1024xf32> -> vector<1x1024xf32>
    %139 = arith.addf %133, %138 : vector<1x1024xf32>
    %140 = vector.extract_strided_slice %118 {offsets = [6, 0], sizes = [1, 50], strides = [1, 1]} : vector<127x50xf32> to vector<1x50xf32>
    %141 = arith.truncf %140 : vector<1x50xf32> to vector<1x50xbf16>
    %c3_78 = arith.constant 3 : index
    %c0_79 = arith.constant 0 : index
    %c0_80 = arith.constant 0 : index
    %142 = vector.load %arg23[%c3_78, %c0_79, %c0_80] : memref<25x50x1024xbf16, #tpu.memory_space<vmem>>, vector<1x50x1024xbf16>
    %143 = vector.shape_cast %142 : vector<1x50x1024xbf16> to vector<50x1024xbf16>
    %cst_81 = arith.constant dense<0.000000e+00> : vector<1x1024xf32>
    %144 = tpu.matmul %141, %143, %cst_81 {dimension_numbers = #tpu.dot_dimension_numbers<[1], [0], [0], [1], [0, 0, 1, 1], [], []>} : vector<1x50xbf16>, vector<50x1024xbf16>, vector<1x1024xf32> -> vector<1x1024xf32>
    %145 = arith.addf %139, %144 : vector<1x1024xf32>
    %146 = vector.extract_strided_slice %118 {offsets = [8, 0], sizes = [1, 50], strides = [1, 1]} : vector<127x50xf32> to vector<1x50xf32>
    %147 = arith.truncf %146 : vector<1x50xf32> to vector<1x50xbf16>
    %c4_82 = arith.constant 4 : index
    %c0_83 = arith.constant 0 : index
    %c0_84 = arith.constant 0 : index
    %148 = vector.load %arg23[%c4_82, %c0_83, %c0_84] : memref<25x50x1024xbf16, #tpu.memory_space<vmem>>, vector<1x50x1024xbf16>
    %149 = vector.shape_cast %148 : vector<1x50x1024xbf16> to vector<50x1024xbf16>
    %cst_85 = arith.constant dense<0.000000e+00> : vector<1x1024xf32>
    %150 = tpu.matmul %147, %149, %cst_85 {dimension_numbers = #tpu.dot_dimension_numbers<[1], [0], [0], [1], [0, 0, 1, 1], [], []>} : vector<1x50xbf16>, vector<50x1024xbf16>, vector<1x1024xf32> -> vector<1x1024xf32>
    %151 = arith.addf %145, %150 : vector<1x1024xf32>
    %152 = vector.extract_strided_slice %118 {offsets = [26, 0], sizes = [1, 50], strides = [1, 1]} : vector<127x50xf32> to vector<1x50xf32>
    %153 = arith.truncf %152 : vector<1x50xf32> to vector<1x50xbf16>
    %c5_86 = arith.constant 5 : index
    %c0_87 = arith.constant 0 : index
    %c0_88 = arith.constant 0 : index
    %154 = vector.load %arg23[%c5_86, %c0_87, %c0_88] : memref<25x50x1024xbf16, #tpu.memory_space<vmem>>, vector<1x50x1024xbf16>
    %155 = vector.shape_cast %154 : vector<1x50x1024xbf16> to vector<50x1024xbf16>
    %cst_89 = arith.constant dense<0.000000e+00> : vector<1x1024xf32>
    %156 = tpu.matmul %153, %155, %cst_89 {dimension_numbers = #tpu.dot_dimension_numbers<[1], [0], [0], [1], [0, 0, 1, 1], [], []>} : vector<1x50xbf16>, vector<50x1024xbf16>, vector<1x1024xf32> -> vector<1x1024xf32>
    %157 = arith.addf %151, %156 : vector<1x1024xf32>
    %158 = vector.extract_strided_slice %118 {offsets = [28, 0], sizes = [1, 50], strides = [1, 1]} : vector<127x50xf32> to vector<1x50xf32>
    %159 = arith.truncf %158 : vector<1x50xf32> to vector<1x50xbf16>
    %c6_90 = arith.constant 6 : index
    %c0_91 = arith.constant 0 : index
    %c0_92 = arith.constant 0 : index
    %160 = vector.load %arg23[%c6_90, %c0_91, %c0_92] : memref<25x50x1024xbf16, #tpu.memory_space<vmem>>, vector<1x50x1024xbf16>
    %161 = vector.shape_cast %160 : vector<1x50x1024xbf16> to vector<50x1024xbf16>
    %cst_93 = arith.constant dense<0.000000e+00> : vector<1x1024xf32>
    %162 = tpu.matmul %159, %161, %cst_93 {dimension_numbers = #tpu.dot_dimension_numbers<[1], [0], [0], [1], [0, 0, 1, 1], [], []>} : vector<1x50xbf16>, vector<50x1024xbf16>, vector<1x1024xf32> -> vector<1x1024xf32>
    %163 = arith.addf %157, %162 : vector<1x1024xf32>
    %164 = vector.extract_strided_slice %118 {offsets = [30, 0], sizes = [1, 50], strides = [1, 1]} : vector<127x50xf32> to vector<1x50xf32>
    %165 = arith.truncf %164 : vector<1x50xf32> to vector<1x50xbf16>
    %c7_94 = arith.constant 7 : index
    %c0_95 = arith.constant 0 : index
    %c0_96 = arith.constant 0 : index
    %166 = vector.load %arg23[%c7_94, %c0_95, %c0_96] : memref<25x50x1024xbf16, #tpu.memory_space<vmem>>, vector<1x50x1024xbf16>
    %167 = vector.shape_cast %166 : vector<1x50x1024xbf16> to vector<50x1024xbf16>
    %cst_97 = arith.constant dense<0.000000e+00> : vector<1x1024xf32>
    %168 = tpu.matmul %165, %167, %cst_97 {dimension_numbers = #tpu.dot_dimension_numbers<[1], [0], [0], [1], [0, 0, 1, 1], [], []>} : vector<1x50xbf16>, vector<50x1024xbf16>, vector<1x1024xf32> -> vector<1x1024xf32>
    %169 = arith.addf %163, %168 : vector<1x1024xf32>
    %170 = vector.extract_strided_slice %118 {offsets = [32, 0], sizes = [1, 50], strides = [1, 1]} : vector<127x50xf32> to vector<1x50xf32>
    %171 = arith.truncf %170 : vector<1x50xf32> to vector<1x50xbf16>
    %c8_98 = arith.constant 8 : index
    %c0_99 = arith.constant 0 : index
    %c0_100 = arith.constant 0 : index
    %172 = vector.load %arg23[%c8_98, %c0_99, %c0_100] : memref<25x50x1024xbf16, #tpu.memory_space<vmem>>, vector<1x50x1024xbf16>
    %173 = vector.shape_cast %172 : vector<1x50x1024xbf16> to vector<50x1024xbf16>
    %cst_101 = arith.constant dense<0.000000e+00> : vector<1x1024xf32>
    %174 = tpu.matmul %171, %173, %cst_101 {dimension_numbers = #tpu.dot_dimension_numbers<[1], [0], [0], [1], [0, 0, 1, 1], [], []>} : vector<1x50xbf16>, vector<50x1024xbf16>, vector<1x1024xf32> -> vector<1x1024xf32>
    %175 = arith.addf %169, %174 : vector<1x1024xf32>
    %176 = vector.extract_strided_slice %118 {offsets = [34, 0], sizes = [1, 50], strides = [1, 1]} : vector<127x50xf32> to vector<1x50xf32>
    %177 = arith.truncf %176 : vector<1x50xf32> to vector<1x50xbf16>
    %c9 = arith.constant 9 : index
    %c0_102 = arith.constant 0 : index
    %c0_103 = arith.constant 0 : index
    %178 = vector.load %arg23[%c9, %c0_102, %c0_103] : memref<25x50x1024xbf16, #tpu.memory_space<vmem>>, vector<1x50x1024xbf16>
    %179 = vector.shape_cast %178 : vector<1x50x1024xbf16> to vector<50x1024xbf16>
    %cst_104 = arith.constant dense<0.000000e+00> : vector<1x1024xf32>
    %180 = tpu.matmul %177, %179, %cst_104 {dimension_numbers = #tpu.dot_dimension_numbers<[1], [0], [0], [1], [0, 0, 1, 1], [], []>} : vector<1x50xbf16>, vector<50x1024xbf16>, vector<1x1024xf32> -> vector<1x1024xf32>
    %181 = arith.addf %175, %180 : vector<1x1024xf32>
    %182 = vector.extract_strided_slice %118 {offsets = [52, 0], sizes = [1, 50], strides = [1, 1]} : vector<127x50xf32> to vector<1x50xf32>
    %183 = arith.truncf %182 : vector<1x50xf32> to vector<1x50xbf16>
    %c10 = arith.constant 10 : index
    %c0_105 = arith.constant 0 : index
    %c0_106 = arith.constant 0 : index
    %184 = vector.load %arg23[%c10, %c0_105, %c0_106] : memref<25x50x1024xbf16, #tpu.memory_space<vmem>>, vector<1x50x1024xbf16>
    %185 = vector.shape_cast %184 : vector<1x50x1024xbf16> to vector<50x1024xbf16>
    %cst_107 = arith.constant dense<0.000000e+00> : vector<1x1024xf32>
    %186 = tpu.matmul %183, %185, %cst_107 {dimension_numbers = #tpu.dot_dimension_numbers<[1], [0], [0], [1], [0, 0, 1, 1], [], []>} : vector<1x50xbf16>, vector<50x1024xbf16>, vector<1x1024xf32> -> vector<1x1024xf32>
    %187 = arith.addf %181, %186 : vector<1x1024xf32>
    %188 = vector.extract_strided_slice %118 {offsets = [54, 0], sizes = [1, 50], strides = [1, 1]} : vector<127x50xf32> to vector<1x50xf32>
    %189 = arith.truncf %188 : vector<1x50xf32> to vector<1x50xbf16>
    %c11 = arith.constant 11 : index
    %c0_108 = arith.constant 0 : index
    %c0_109 = arith.constant 0 : index
    %190 = vector.load %arg23[%c11, %c0_108, %c0_109] : memref<25x50x1024xbf16, #tpu.memory_space<vmem>>, vector<1x50x1024xbf16>
    %191 = vector.shape_cast %190 : vector<1x50x1024xbf16> to vector<50x1024xbf16>
    %cst_110 = arith.constant dense<0.000000e+00> : vector<1x1024xf32>
    %192 = tpu.matmul %189, %191, %cst_110 {dimension_numbers = #tpu.dot_dimension_numbers<[1], [0], [0], [1], [0, 0, 1, 1], [], []>} : vector<1x50xbf16>, vector<50x1024xbf16>, vector<1x1024xf32> -> vector<1x1024xf32>
    %193 = arith.addf %187, %192 : vector<1x1024xf32>
    %194 = vector.extract_strided_slice %118 {offsets = [56, 0], sizes = [1, 50], strides = [1, 1]} : vector<127x50xf32> to vector<1x50xf32>
    %195 = arith.truncf %194 : vector<1x50xf32> to vector<1x50xbf16>
    %c12 = arith.constant 12 : index
    %c0_111 = arith.constant 0 : index
    %c0_112 = arith.constant 0 : index
    %196 = vector.load %arg23[%c12, %c0_111, %c0_112] : memref<25x50x1024xbf16, #tpu.memory_space<vmem>>, vector<1x50x1024xbf16>
    %197 = vector.shape_cast %196 : vector<1x50x1024xbf16> to vector<50x1024xbf16>
    %cst_113 = arith.constant dense<0.000000e+00> : vector<1x1024xf32>
    %198 = tpu.matmul %195, %197, %cst_113 {dimension_numbers = #tpu.dot_dimension_numbers<[1], [0], [0], [1], [0, 0, 1, 1], [], []>} : vector<1x50xbf16>, vector<50x1024xbf16>, vector<1x1024xf32> -> vector<1x1024xf32>
    %199 = arith.addf %193, %198 : vector<1x1024xf32>
    %200 = vector.extract_strided_slice %118 {offsets = [58, 0], sizes = [1, 50], strides = [1, 1]} : vector<127x50xf32> to vector<1x50xf32>
    %201 = arith.truncf %200 : vector<1x50xf32> to vector<1x50xbf16>
    %c13 = arith.constant 13 : index
    %c0_114 = arith.constant 0 : index
    %c0_115 = arith.constant 0 : index
    %202 = vector.load %arg23[%c13, %c0_114, %c0_115] : memref<25x50x1024xbf16, #tpu.memory_space<vmem>>, vector<1x50x1024xbf16>
    %203 = vector.shape_cast %202 : vector<1x50x1024xbf16> to vector<50x1024xbf16>
    %cst_116 = arith.constant dense<0.000000e+00> : vector<1x1024xf32>
    %204 = tpu.matmul %201, %203, %cst_116 {dimension_numbers = #tpu.dot_dimension_numbers<[1], [0], [0], [1], [0, 0, 1, 1], [], []>} : vector<1x50xbf16>, vector<50x1024xbf16>, vector<1x1024xf32> -> vector<1x1024xf32>
    %205 = arith.addf %199, %204 : vector<1x1024xf32>
    %206 = vector.extract_strided_slice %118 {offsets = [60, 0], sizes = [1, 50], strides = [1, 1]} : vector<127x50xf32> to vector<1x50xf32>
    %207 = arith.truncf %206 : vector<1x50xf32> to vector<1x50xbf16>
    %c14 = arith.constant 14 : index
    %c0_117 = arith.constant 0 : index
    %c0_118 = arith.constant 0 : index
    %208 = vector.load %arg23[%c14, %c0_117, %c0_118] : memref<25x50x1024xbf16, #tpu.memory_space<vmem>>, vector<1x50x1024xbf16>
    %209 = vector.shape_cast %208 : vector<1x50x1024xbf16> to vector<50x1024xbf16>
    %cst_119 = arith.constant dense<0.000000e+00> : vector<1x1024xf32>
    %210 = tpu.matmul %207, %209, %cst_119 {dimension_numbers = #tpu.dot_dimension_numbers<[1], [0], [0], [1], [0, 0, 1, 1], [], []>} : vector<1x50xbf16>, vector<50x1024xbf16>, vector<1x1024xf32> -> vector<1x1024xf32>
    %211 = arith.addf %205, %210 : vector<1x1024xf32>
    %212 = vector.extract_strided_slice %118 {offsets = [78, 0], sizes = [1, 50], strides = [1, 1]} : vector<127x50xf32> to vector<1x50xf32>
    %213 = arith.truncf %212 : vector<1x50xf32> to vector<1x50xbf16>
    %c15 = arith.constant 15 : index
    %c0_120 = arith.constant 0 : index
    %c0_121 = arith.constant 0 : index
    %214 = vector.load %arg23[%c15, %c0_120, %c0_121] : memref<25x50x1024xbf16, #tpu.memory_space<vmem>>, vector<1x50x1024xbf16>
    %215 = vector.shape_cast %214 : vector<1x50x1024xbf16> to vector<50x1024xbf16>
    %cst_122 = arith.constant dense<0.000000e+00> : vector<1x1024xf32>
    %216 = tpu.matmul %213, %215, %cst_122 {dimension_numbers = #tpu.dot_dimension_numbers<[1], [0], [0], [1], [0, 0, 1, 1], [], []>} : vector<1x50xbf16>, vector<50x1024xbf16>, vector<1x1024xf32> -> vector<1x1024xf32>
    %217 = arith.addf %211, %216 : vector<1x1024xf32>
    %218 = vector.extract_strided_slice %118 {offsets = [80, 0], sizes = [1, 50], strides = [1, 1]} : vector<127x50xf32> to vector<1x50xf32>
    %219 = arith.truncf %218 : vector<1x50xf32> to vector<1x50xbf16>
    %c16 = arith.constant 16 : index
    %c0_123 = arith.constant 0 : index
    %c0_124 = arith.constant 0 : index
    %220 = vector.load %arg23[%c16, %c0_123, %c0_124] : memref<25x50x1024xbf16, #tpu.memory_space<vmem>>, vector<1x50x1024xbf16>
    %221 = vector.shape_cast %220 : vector<1x50x1024xbf16> to vector<50x1024xbf16>
    %cst_125 = arith.constant dense<0.000000e+00> : vector<1x1024xf32>
    %222 = tpu.matmul %219, %221, %cst_125 {dimension_numbers = #tpu.dot_dimension_numbers<[1], [0], [0], [1], [0, 0, 1, 1], [], []>} : vector<1x50xbf16>, vector<50x1024xbf16>, vector<1x1024xf32> -> vector<1x1024xf32>
    %223 = arith.addf %217, %222 : vector<1x1024xf32>
    %224 = vector.extract_strided_slice %118 {offsets = [82, 0], sizes = [1, 50], strides = [1, 1]} : vector<127x50xf32> to vector<1x50xf32>
    %225 = arith.truncf %224 : vector<1x50xf32> to vector<1x50xbf16>
    %c17 = arith.constant 17 : index
    %c0_126 = arith.constant 0 : index
    %c0_127 = arith.constant 0 : index
    %226 = vector.load %arg23[%c17, %c0_126, %c0_127] : memref<25x50x1024xbf16, #tpu.memory_space<vmem>>, vector<1x50x1024xbf16>
    %227 = vector.shape_cast %226 : vector<1x50x1024xbf16> to vector<50x1024xbf16>
    %cst_128 = arith.constant dense<0.000000e+00> : vector<1x1024xf32>
    %228 = tpu.matmul %225, %227, %cst_128 {dimension_numbers = #tpu.dot_dimension_numbers<[1], [0], [0], [1], [0, 0, 1, 1], [], []>} : vector<1x50xbf16>, vector<50x1024xbf16>, vector<1x1024xf32> -> vector<1x1024xf32>
    %229 = arith.addf %223, %228 : vector<1x1024xf32>
    %230 = vector.extract_strided_slice %118 {offsets = [84, 0], sizes = [1, 50], strides = [1, 1]} : vector<127x50xf32> to vector<1x50xf32>
    %231 = arith.truncf %230 : vector<1x50xf32> to vector<1x50xbf16>
    %c18 = arith.constant 18 : index
    %c0_129 = arith.constant 0 : index
    %c0_130 = arith.constant 0 : index
    %232 = vector.load %arg23[%c18, %c0_129, %c0_130] : memref<25x50x1024xbf16, #tpu.memory_space<vmem>>, vector<1x50x1024xbf16>
    %233 = vector.shape_cast %232 : vector<1x50x1024xbf16> to vector<50x1024xbf16>
    %cst_131 = arith.constant dense<0.000000e+00> : vector<1x1024xf32>
    %234 = tpu.matmul %231, %233, %cst_131 {dimension_numbers = #tpu.dot_dimension_numbers<[1], [0], [0], [1], [0, 0, 1, 1], [], []>} : vector<1x50xbf16>, vector<50x1024xbf16>, vector<1x1024xf32> -> vector<1x1024xf32>
    %235 = arith.addf %229, %234 : vector<1x1024xf32>
    %236 = vector.extract_strided_slice %118 {offsets = [86, 0], sizes = [1, 50], strides = [1, 1]} : vector<127x50xf32> to vector<1x50xf32>
    %237 = arith.truncf %236 : vector<1x50xf32> to vector<1x50xbf16>
    %c19 = arith.constant 19 : index
    %c0_132 = arith.constant 0 : index
    %c0_133 = arith.constant 0 : index
    %238 = vector.load %arg23[%c19, %c0_132, %c0_133] : memref<25x50x1024xbf16, #tpu.memory_space<vmem>>, vector<1x50x1024xbf16>
    %239 = vector.shape_cast %238 : vector<1x50x1024xbf16> to vector<50x1024xbf16>
    %cst_134 = arith.constant dense<0.000000e+00> : vector<1x1024xf32>
    %240 = tpu.matmul %237, %239, %cst_134 {dimension_numbers = #tpu.dot_dimension_numbers<[1], [0], [0], [1], [0, 0, 1, 1], [], []>} : vector<1x50xbf16>, vector<50x1024xbf16>, vector<1x1024xf32> -> vector<1x1024xf32>
    %241 = arith.addf %235, %240 : vector<1x1024xf32>
    %242 = vector.extract_strided_slice %118 {offsets = [104, 0], sizes = [1, 50], strides = [1, 1]} : vector<127x50xf32> to vector<1x50xf32>
    %243 = arith.truncf %242 : vector<1x50xf32> to vector<1x50xbf16>
    %c20 = arith.constant 20 : index
    %c0_135 = arith.constant 0 : index
    %c0_136 = arith.constant 0 : index
    %244 = vector.load %arg23[%c20, %c0_135, %c0_136] : memref<25x50x1024xbf16, #tpu.memory_space<vmem>>, vector<1x50x1024xbf16>
    %245 = vector.shape_cast %244 : vector<1x50x1024xbf16> to vector<50x1024xbf16>
    %cst_137 = arith.constant dense<0.000000e+00> : vector<1x1024xf32>
    %246 = tpu.matmul %243, %245, %cst_137 {dimension_numbers = #tpu.dot_dimension_numbers<[1], [0], [0], [1], [0, 0, 1, 1], [], []>} : vector<1x50xbf16>, vector<50x1024xbf16>, vector<1x1024xf32> -> vector<1x1024xf32>
    %247 = arith.addf %241, %246 : vector<1x1024xf32>
    %248 = vector.extract_strided_slice %118 {offsets = [106, 0], sizes = [1, 50], strides = [1, 1]} : vector<127x50xf32> to vector<1x50xf32>
    %249 = arith.truncf %248 : vector<1x50xf32> to vector<1x50xbf16>
    %c21 = arith.constant 21 : index
    %c0_138 = arith.constant 0 : index
    %c0_139 = arith.constant 0 : index
    %250 = vector.load %arg23[%c21, %c0_138, %c0_139] : memref<25x50x1024xbf16, #tpu.memory_space<vmem>>, vector<1x50x1024xbf16>
    %251 = vector.shape_cast %250 : vector<1x50x1024xbf16> to vector<50x1024xbf16>
    %cst_140 = arith.constant dense<0.000000e+00> : vector<1x1024xf32>
    %252 = tpu.matmul %249, %251, %cst_140 {dimension_numbers = #tpu.dot_dimension_numbers<[1], [0], [0], [1], [0, 0, 1, 1], [], []>} : vector<1x50xbf16>, vector<50x1024xbf16>, vector<1x1024xf32> -> vector<1x1024xf32>
    %253 = arith.addf %247, %252 : vector<1x1024xf32>
    %254 = vector.extract_strided_slice %118 {offsets = [108, 0], sizes = [1, 50], strides = [1, 1]} : vector<127x50xf32> to vector<1x50xf32>
    %255 = arith.truncf %254 : vector<1x50xf32> to vector<1x50xbf16>
    %c22 = arith.constant 22 : index
    %c0_141 = arith.constant 0 : index
    %c0_142 = arith.constant 0 : index
    %256 = vector.load %arg23[%c22, %c0_141, %c0_142] : memref<25x50x1024xbf16, #tpu.memory_space<vmem>>, vector<1x50x1024xbf16>
    %257 = vector.shape_cast %256 : vector<1x50x1024xbf16> to vector<50x1024xbf16>
    %cst_143 = arith.constant dense<0.000000e+00> : vector<1x1024xf32>
    %258 = tpu.matmul %255, %257, %cst_143 {dimension_numbers = #tpu.dot_dimension_numbers<[1], [0], [0], [1], [0, 0, 1, 1], [], []>} : vector<1x50xbf16>, vector<50x1024xbf16>, vector<1x1024xf32> -> vector<1x1024xf32>
    %259 = arith.addf %253, %258 : vector<1x1024xf32>
    %260 = vector.extract_strided_slice %118 {offsets = [110, 0], sizes = [1, 50], strides = [1, 1]} : vector<127x50xf32> to vector<1x50xf32>
    %261 = arith.truncf %260 : vector<1x50xf32> to vector<1x50xbf16>
    %c23 = arith.constant 23 : index
    %c0_144 = arith.constant 0 : index
    %c0_145 = arith.constant 0 : index
    %262 = vector.load %arg23[%c23, %c0_144, %c0_145] : memref<25x50x1024xbf16, #tpu.memory_space<vmem>>, vector<1x50x1024xbf16>
    %263 = vector.shape_cast %262 : vector<1x50x1024xbf16> to vector<50x1024xbf16>
    %cst_146 = arith.constant dense<0.000000e+00> : vector<1x1024xf32>
    %264 = tpu.matmul %261, %263, %cst_146 {dimension_numbers = #tpu.dot_dimension_numbers<[1], [0], [0], [1], [0, 0, 1, 1], [], []>} : vector<1x50xbf16>, vector<50x1024xbf16>, vector<1x1024xf32> -> vector<1x1024xf32>
    %265 = arith.addf %259, %264 : vector<1x1024xf32>
    %266 = vector.extract_strided_slice %118 {offsets = [112, 0], sizes = [1, 50], strides = [1, 1]} : vector<127x50xf32> to vector<1x50xf32>
    %267 = arith.truncf %266 : vector<1x50xf32> to vector<1x50xbf16>
    %c24 = arith.constant 24 : index
    %c0_147 = arith.constant 0 : index
    %c0_148 = arith.constant 0 : index
    %268 = vector.load %arg23[%c24, %c0_147, %c0_148] : memref<25x50x1024xbf16, #tpu.memory_space<vmem>>, vector<1x50x1024xbf16>
    %269 = vector.shape_cast %268 : vector<1x50x1024xbf16> to vector<50x1024xbf16>
    %cst_149 = arith.constant dense<0.000000e+00> : vector<1x1024xf32>
    %270 = tpu.matmul %267, %269, %cst_149 {dimension_numbers = #tpu.dot_dimension_numbers<[1], [0], [0], [1], [0, 0, 1, 1], [], []>} : vector<1x50xbf16>, vector<50x1024xbf16>, vector<1x1024xf32> -> vector<1x1024xf32>
    %271 = arith.addf %265, %270 : vector<1x1024xf32>
    %cst_150 = arith.constant 0.000000e+00 : f32
    %272 = vector.broadcast %cst_150 : f32 to vector<1x1024xf32>
    %273 = arith.maximumf %271, %272 : vector<1x1024xf32>
    %c1_i32_151 = arith.constant 1 : i32
    %274 = tpu.memref_slice %arg25[%c1_i32_151] : memref<2x!tpu.dma_semaphore, #tpu.memory_space<semaphore_mem>> -> memref<1x!tpu.dma_semaphore, #tpu.memory_space<semaphore_mem>>
    %275 = tpu.memref_squeeze %274 : memref<1x!tpu.dma_semaphore, #tpu.memory_space<semaphore_mem>> -> memref<!tpu.dma_semaphore, #tpu.memory_space<semaphore_mem>>
    tpu.wait_dma2 semaphore(%275 : memref<!tpu.dma_semaphore, #tpu.memory_space<semaphore_mem>>) src(%arg13 : memref<1024x128xbf16, #tpu.memory_space<any>>) dst(%arg24 : memref<1024x128xbf16, #tpu.memory_space<vmem>>)
    %276 = arith.truncf %273 : vector<1x1024xf32> to vector<1x1024xbf16>
    %c0_152 = arith.constant 0 : index
    %c0_153 = arith.constant 0 : index
    %277 = vector.load %arg24[%c0_152, %c0_153] : memref<1024x128xbf16, #tpu.memory_space<vmem>>, vector<1024x128xbf16>
    %cst_154 = arith.constant dense<0.000000e+00> : vector<1x128xf32>
    %278 = tpu.matmul %276, %277, %cst_154 {dimension_numbers = #tpu.dot_dimension_numbers<[1], [0], [0], [1], [0, 0, 1, 1], [], []>} : vector<1x1024xbf16>, vector<1024x128xbf16>, vector<1x128xf32> -> vector<1x128xf32>
    %c0_155 = arith.constant 0 : index
    %c0_156 = arith.constant 0 : index
    %279 = vector.load %arg15[%c0_155, %c0_156] : memref<1x128xf32, #tpu.memory_space<vmem>>, vector<1x128xf32>
    %280 = arith.addf %278, %279 : vector<1x128xf32>
    %cst_157 = arith.constant 0.000000e+00 : f32
    %281 = vector.broadcast %cst_157 : f32 to vector<1x128xf32>
    %282 = arith.maximumf %280, %281 : vector<1x128xf32>
    %283 = arith.truncf %282 : vector<1x128xf32> to vector<1x128xbf16>
    %c0_158 = arith.constant 0 : index
    %c0_159 = arith.constant 0 : index
    %284 = vector.load %arg16[%c0_158, %c0_159] : memref<128x128xbf16, #tpu.memory_space<vmem>>, vector<128x128xbf16>
    %cst_160 = arith.constant dense<0.000000e+00> : vector<1x128xf32>
    %285 = tpu.matmul %283, %284, %cst_160 {dimension_numbers = #tpu.dot_dimension_numbers<[1], [0], [0], [1], [0, 0, 1, 1], [], []>} : vector<1x128xbf16>, vector<128x128xbf16>, vector<1x128xf32> -> vector<1x128xf32>
    %c0_161 = arith.constant 0 : index
    %c0_162 = arith.constant 0 : index
    %286 = vector.load %arg17[%c0_161, %c0_162] : memref<1x128xf32, #tpu.memory_space<vmem>>, vector<1x128xf32>
    %287 = arith.addf %285, %286 : vector<1x128xf32>
    %c0_163 = arith.constant 0 : index
    %c0_164 = arith.constant 0 : index
    %288 = vector.load %arg1[%c0_163, %c0_164] : memref<1x72xf32, #tpu.memory_space<vmem>>, vector<1x72xf32>
    %289 = arith.truncf %288 : vector<1x72xf32> to vector<1x72xbf16>
    %c0_165 = arith.constant 0 : index
    %c0_166 = arith.constant 0 : index
    %290 = vector.load %arg18[%c0_165, %c0_166] : memref<72x128xbf16, #tpu.memory_space<vmem>>, vector<72x128xbf16>
    %cst_167 = arith.constant dense<0.000000e+00> : vector<1x128xf32>
    %291 = tpu.matmul %289, %290, %cst_167 {dimension_numbers = #tpu.dot_dimension_numbers<[1], [0], [0], [1], [0, 0, 1, 1], [], []>} : vector<1x72xbf16>, vector<72x128xbf16>, vector<1x128xf32> -> vector<1x128xf32>
    %c0_168 = arith.constant 0 : index
    %c0_169 = arith.constant 0 : index
    %292 = vector.load %arg19[%c0_168, %c0_169] : memref<1x128xf32, #tpu.memory_space<vmem>>, vector<1x128xf32>
    %293 = arith.addf %291, %292 : vector<1x128xf32>
    %cst_170 = arith.constant 0.000000e+00 : f32
    %294 = vector.broadcast %cst_170 : f32 to vector<1x128xf32>
    %295 = arith.maximumf %293, %294 : vector<1x128xf32>
    %296 = tpu.concatenate %287, %295 in 1 : vector<1x128xf32>, vector<1x128xf32> -> vector<1x256xf32>
    %297 = arith.truncf %296 : vector<1x256xf32> to vector<1x256xbf16>
    %c0_171 = arith.constant 0 : index
    %c0_172 = arith.constant 0 : index
    %298 = vector.load %arg20[%c0_171, %c0_172] : memref<256x128xbf16, #tpu.memory_space<vmem>>, vector<256x128xbf16>
    %cst_173 = arith.constant dense<0.000000e+00> : vector<1x128xf32>
    %299 = tpu.matmul %297, %298, %cst_173 {dimension_numbers = #tpu.dot_dimension_numbers<[1], [0], [0], [1], [0, 0, 1, 1], [], []>} : vector<1x256xbf16>, vector<256x128xbf16>, vector<1x128xf32> -> vector<1x128xf32>
    %c0_174 = arith.constant 0 : index
    %c0_175 = arith.constant 0 : index
    %300 = vector.load %arg21[%c0_174, %c0_175] : memref<1x128xf32, #tpu.memory_space<vmem>>, vector<1x128xf32>
    %301 = arith.addf %299, %300 : vector<1x128xf32>
    %cst_176 = arith.constant 0.000000e+00 : f32
    %302 = vector.broadcast %cst_176 : f32 to vector<1x128xf32>
    %303 = arith.maximumf %301, %302 : vector<1x128xf32>
    %c0_177 = arith.constant 0 : index
    %c0_178 = arith.constant 0 : index
    %304 = vector.load %arg22[%c0_177, %c0_178] : memref<1x128xf32, #tpu.memory_space<vmem>>, vector<1x128xf32>
    tpu.vector_store %arg22[%c0_177, %c0_178], %303 {strides = array<i32>} : memref<1x128xf32, #tpu.memory_space<vmem>>, vector<1x128xf32>,
    return
  }
}

</mosaic_0001>

<llo_original>
// kernel: value_net_forward.1
$region0: #{value_net_forward.1}
  #allocation0 [shape = 'u32[]', space=smem, size = 0x4, offset = 0x4, fixed_abs, tag = 'smem constant byte address 0x4 - core index']
  #allocation1 [shape = 'u32[72,128]{1,0:T(1,128)}', space=vmem, size = 0x9000, scoped, tag = 'internal scratch']
  #allocation2 [shape = 'bf16[25,50,1024]{2,1,0:T(8,128)(2,1)}', space=vmem, size = 0x2bc000, scoped, tag = 'scratch operand']
  #allocation3 [shape = 'bf16[1024,128]{1,0:T(8,128)(2,1)}', space=vmem, size = 0x40000, scoped, tag = 'scratch operand']
  #allocation4 [shape = 's32[2]{0}', space=sflag, size = 0x8, scoped, tag = 'scratch operand']
  #allocation33 [shape = 's32[]', space=sflag, size = 0x4, offset = 0, fixed_abs, tag = 'sflag constant byte address 0x0 - dummy sync flag']
  #allocation34 [shape = 's32[]', space=sflag, size = 0x4, offset = 0, fixed_abs, tag = 'sflag constant byte address 0x0 - dummy sync flag']
  #allocation35 [shape = 'u32[]', space=smem, size = 0x4, offset = 0x44, fixed_abs, tag = 'smem constant byte address 0x44 - assertion arg 0']
  #allocation36 [shape = 'u32[]', space=smem, size = 0x4, offset = 0x48, fixed_abs, tag = 'smem constant byte address 0x48 - assertion arg 1']
  #allocation37 [shape = 's32[]', space=sflag, size = 0x4, offset = 0, fixed_abs, tag = 'sflag constant byte address 0x0 - dummy sync flag']
  #allocation38 [shape = 's32[]', space=sflag, size = 0x4, offset = 0, fixed_abs, tag = 'sflag constant byte address 0x0 - dummy sync flag']
  %s0 = inlined_call_operand.vmem [shape: f32[704,9], index: 0, kind: input, shape index: {}]
  %s1 = inlined_call_operand.vmem [shape: f32[1,72], index: 1, kind: input, shape index: {}]
  %s2 = inlined_call_operand.hbm [shape: f32[9,25], index: 2, kind: input, shape index: {}]
  %s3 = inlined_call_operand.hbm [shape: f32[1,25], index: 3, kind: input, shape index: {}]
  %s4 = inlined_call_operand.hbm [shape: f32[1,25], index: 4, kind: input, shape index: {}]
  %s5 = inlined_call_operand.hbm [shape: f32[1,25], index: 5, kind: input, shape index: {}]
  %s6 = inlined_call_operand.hbm [shape: f32[1,704], index: 6, kind: input, shape index: {}]
  %s7 = inlined_call_operand.hbm [shape: f32[9,25,50], index: 7, kind: input, shape index: {}]
  %s8 = inlined_call_operand.hbm [shape: f32[1,50], index: 8, kind: input, shape index: {}]
  %s9 = inlined_call_operand.hbm [shape: f32[1,50], index: 9, kind: input, shape index: {}]
  %s10 = inlined_call_operand.hbm [shape: f32[1,50], index: 10, kind: input, shape index: {}]
  %s11 = inlined_call_operand.hbm [shape: f32[1,141], index: 11, kind: input, shape index: {}]
  %s12 = inlined_call_operand.hbm [shape: bf16[25,50,1024], index: 12, kind: input, shape index: {}]
  %s13 = inlined_call_operand.hbm [shape: bf16[1024,128], index: 13, kind: input, shape index: {}]
  %s14 = inlined_call_operand.hbm [shape: f32[1,1024], index: 14, kind: input, shape index: {}]
  %s15 = inlined_call_operand.hbm [shape: f32[1,128], index: 15, kind: input, shape index: {}]
  %s16 = inlined_call_operand.hbm [shape: bf16[128,128], index: 16, kind: input, shape index: {}]
  %s17 = inlined_call_operand.hbm [shape: f32[1,128], index: 17, kind: input, shape index: {}]
  %s18 = inlined_call_operand.hbm [shape: bf16[72,128], index: 18, kind: input, shape index: {}]
  %s19 = inlined_call_operand.hbm [shape: f32[1,128], index: 19, kind: input, shape index: {}]
  %s20 = inlined_call_operand.hbm [shape: bf16[256,128], index: 20, kind: input, shape index: {}]
  %s21 = inlined_call_operand.hbm [shape: f32[1,128], index: 21, kind: input, shape index: {}]
  %s22 = inlined_call_operand.vmem [shape: f32[1,128], index: 22, kind: output, shape index: {}]
  %s23 = sld [smem:[#allocation0]]
  $region170: #{value_net_forward.1} parent=0
    _
  %s25 = ssub.s32 1, %s23
  %s26 = scalar_select 0, %s25, %s23
  $region1: #{value_net_forward.1} parent=0
    #allocation5 [shape = 'u8[8192]{0}', space=vmem, size = 0x2000, scoped, tag = 'input window, operand 2, single buffered']
    #allocation6 [shape = 's32[1]{0}', space=sflag, size = 0x4, scoped, tag = 'scoped memory for value_net_forward.1']
    #allocation7 [shape = 'u8[512]{0}', space=vmem, size = 0x400, scoped, tag = 'input window, operand 3, single buffered']
    #allocation8 [shape = 's32[1]{0}', space=sflag, size = 0x4, scoped, tag = 'scoped memory for value_net_forward.1']
    #allocation9 [shape = 'u8[512]{0}', space=vmem, size = 0x400, scoped, tag = 'input window, operand 4, single buffered']
    #allocation10 [shape = 'u8[512]{0}', space=vmem, size = 0x400, scoped, tag = 'input window, operand 5, single buffered']
    #allocation11 [shape = 's32[1]{0}', space=sflag, size = 0x4, scoped, tag = 'scoped memory for value_net_forward.1']
    #allocation12 [shape = 'u8[3072]{0}', space=vmem, size = 0xc00, scoped, tag = 'input window, operand 6, single buffered']
    #allocation13 [shape = 'u8[147456]{0}', space=vmem, size = 0x24000, scoped, tag = 'input window, operand 7, single buffered']
    #allocation14 [shape = 's32[1]{0}', space=sflag, size = 0x4, scoped, tag = 'scoped memory for value_net_forward.1']
    #allocation15 [shape = 'u8[512]{0}', space=vmem, size = 0x400, scoped, tag = 'input window, operand 8, single buffered']
    #allocation16 [shape = 'u8[512]{0}', space=vmem, size = 0x400, scoped, tag = 'input window, operand 9, single buffered']
    #allocation17 [shape = 's32[1]{0}', space=sflag, size = 0x4, scoped, tag = 'scoped memory for value_net_forward.1']
    #allocation18 [shape = 'u8[512]{0}', space=vmem, size = 0x400, scoped, tag = 'input window, operand 10, single buffered']
    #allocation19 [shape = 'u8[1024]{0}', space=vmem, size = 0x400, scoped, tag = 'input window, operand 11, single buffered']
    #allocation20 [shape = 's32[1]{0}', space=sflag, size = 0x4, scoped, tag = 'scoped memory for value_net_forward.1']
    #allocation21 [shape = 'u8[4096]{0}', space=vmem, size = 0x1000, scoped, tag = 'input window, operand 14, single buffered']
    #allocation22 [shape = 'u8[512]{0}', space=vmem, size = 0x400, scoped, tag = 'input window, operand 15, single buffered']
    #allocation23 [shape = 's32[1]{0}', space=sflag, size = 0x4, scoped, tag = 'scoped memory for value_net_forward.1']
    #allocation24 [shape = 'u8[32768]{0}', space=vmem, size = 0x8000, scoped, tag = 'input window, operand 16, single buffered']
    #allocation25 [shape = 'u8[512]{0}', space=vmem, size = 0x400, scoped, tag = 'input window, operand 17, single buffered']
    #allocation26 [shape = 's32[1]{0}', space=sflag, size = 0x4, scoped, tag = 'scoped memory for value_net_forward.1']
    #allocation27 [shape = 'u8[18432]{0}', space=vmem, size = 0x4800, scoped, tag = 'input window, operand 18, single buffered']
    #allocation28 [shape = 'u8[512]{0}', space=vmem, size = 0x400, scoped, tag = 'input window, operand 19, single buffered']
    #allocation29 [shape = 's32[1]{0}', space=sflag, size = 0x4, scoped, tag = 'scoped memory for value_net_forward.1']
    #allocation30 [shape = 'u8[65536]{0}', space=vmem, size = 0x10000, scoped, tag = 'input window, operand 20, single buffered']
    #allocation31 [shape = 'u8[512]{0}', space=vmem, size = 0x400, scoped, tag = 'input window, operand 21, single buffered']
    #allocation32 [shape = 's32[1]{0}', space=sflag, size = 0x4, scoped, tag = 'scoped memory for value_net_forward.1']
    %27 = vsyncpa [#allocation6], 0
    %28 = vsyncpa [#allocation8], 0
    %29 = vsyncpa [#allocation11], 0
    %30 = vsyncpa [#allocation14], 0
    %31 = vsyncpa [#allocation17], 0
    %32 = vsyncpa [#allocation20], 0
    %33 = vsyncpa [#allocation23], 0
    %34 = vsyncpa [#allocation26], 0
    %35 = vsyncpa [#allocation29], 0
    %36 = vsyncpa [#allocation32], 0
    // Predicated region
    $region2: #{value_net_forward.1} parent=1 // pred_check
      _
    $region3: #{value_net_forward.1} parent=1 // pred_check_branch
      %38 = sbr.rel (0) target = $region5
    $region4: #{value_net_forward.1} parent=1 // pred_region
      _
    $region5: #{value_net_forward.1} parent=1 // pred_fallthru
      _
    // Predicated region
    $region6: #{value_net_forward.1} parent=1 // pred_check
      _
    $region7: #{value_net_forward.1} parent=1 // pred_check_branch
      %40 = sbr.rel (0) target = $region9
    $region8: #{value_net_forward.1} parent=1 // pred_region
      _
    $region9: #{value_net_forward.1} parent=1 // pred_fallthru
      _
    // Predicated region
    $region10: #{value_net_forward.1} parent=1 // pred_check
      _
    $region11: #{value_net_forward.1} parent=1 // pred_check_branch
      %42 = sbr.rel (0) target = $region13
    $region12: #{value_net_forward.1} parent=1 // pred_region
      %44 = vsyncadd [#allocation6], 0
      %s45 = sshll.u32 %s2, 4
      %s46 = int_to_ptr.hbm [resolvable:$true] %s45
      %s47 = sshll.u32 [#allocation5], 4
      %s48 = int_to_ptr.vmem [resolvable:$true] %s47
      %53 = dma.hbm_to_vmem [thread:$0]  %s46, 256, %s48, [#allocation6], 128, 128, 8
    $region13: #{value_net_forward.1} parent=1 // pred_fallthru
      _
    // Predicated region
    $region14: #{value_net_forward.1} parent=1 // pred_check
      _
    $region15: #{value_net_forward.1} parent=1 // pred_check_branch
      %55 = sbr.rel (0) target = $region17
    $region16: #{value_net_forward.1} parent=1 // pred_region
      %57 = vsyncadd [#allocation8], 0
      %s59 = sshll.u32 %s3, 4
      %s60 = int_to_ptr.hbm [resolvable:$true] %s59
      %s61 = sshll.u32 [#allocation7], 4
      %s62 = int_to_ptr.vmem [resolvable:$true] %s61
      %64 = dma.hbm_to_vmem [thread:$0]  %s60, 16, %s62, [#allocation8]
    $region17: #{value_net_forward.1} parent=1 // pred_fallthru
      _
    // Predicated region
    $region18: #{value_net_forward.1} parent=1 // pred_check
      _
    $region19: #{value_net_forward.1} parent=1 // pred_check_branch
      %66 = sbr.rel (0) target = $region21
    $region20: #{value_net_forward.1} parent=1 // pred_region
      %68 = vsyncadd [#allocation8], 0
      %s70 = sshll.u32 %s4, 4
      %s71 = int_to_ptr.hbm [resolvable:$true] %s70
      %s72 = sshll.u32 [#allocation9], 4
      %s73 = int_to_ptr.vmem [resolvable:$true] %s72
      %75 = dma.hbm_to_vmem [thread:$0]  %s71, 16, %s73, [#allocation8]
    $region21: #{value_net_forward.1} parent=1 // pred_fallthru
      _
    // Predicated region
    $region22: #{value_net_forward.1} parent=1 // pred_check
      _
    $region23: #{value_net_forward.1} parent=1 // pred_check_branch
      %77 = sbr.rel (0) target = $region25
    $region24: #{value_net_forward.1} parent=1 // pred_region
      %79 = vsyncadd [#allocation11], 0
      %s81 = sshll.u32 %s5, 4
      %s82 = int_to_ptr.hbm [resolvable:$true] %s81
      %s83 = sshll.u32 [#allocation10], 4
      %s84 = int_to_ptr.vmem [resolvable:$true] %s83
      %86 = dma.hbm_to_vmem [thread:$0]  %s82, 16, %s84, [#allocation11]
    $region25: #{value_net_forward.1} parent=1 // pred_fallthru
      _
    // Predicated region
    $region26: #{value_net_forward.1} parent=1 // pred_check
      _
    $region27: #{value_net_forward.1} parent=1 // pred_check_branch
      %88 = sbr.rel (0) target = $region29
    $region28: #{value_net_forward.1} parent=1 // pred_region
      %90 = vsyncadd [#allocation11], 0
      %s92 = sshll.u32 %s6, 4
      %s93 = int_to_ptr.hbm [resolvable:$true] %s92
      %s94 = sshll.u32 [#allocation12], 4
      %s95 = int_to_ptr.vmem [resolvable:$true] %s94
      %97 = dma.hbm_to_vmem [thread:$0]  %s93, 96, %s95, [#allocation11]
    $region29: #{value_net_forward.1} parent=1 // pred_fallthru
      _
    // Predicated region
    $region30: #{value_net_forward.1} parent=1 // pred_check
      _
    $region31: #{value_net_forward.1} parent=1 // pred_check_branch
      %99 = sbr.rel (0) target = $region33
    $region32: #{value_net_forward.1} parent=1 // pred_region
      %101 = vsyncadd [#allocation14], 0
      %s102 = sshll.u32 %s7, 4
      %s103 = int_to_ptr.hbm [resolvable:$true] %s102
      %s104 = sshll.u32 [#allocation13], 4
      %s105 = int_to_ptr.vmem [resolvable:$true] %s104
      %110 = dma.hbm_to_vmem [thread:$0]  %s103, 4608, %s105, [#allocation14], 128, 128, 8
    $region33: #{value_net_forward.1} parent=1 // pred_fallthru
      _
    // Predicated region
    $region34: #{value_net_forward.1} parent=1 // pred_check
      _
    $region35: #{value_net_forward.1} parent=1 // pred_check_branch
      %112 = sbr.rel (0) target = $region37
    $region36: #{value_net_forward.1} parent=1 // pred_region
      %114 = vsyncadd [#allocation14], 0
      %s116 = sshll.u32 %s8, 4
      %s117 = int_to_ptr.hbm [resolvable:$true] %s116
      %s118 = sshll.u32 [#allocation15], 4
      %s119 = int_to_ptr.vmem [resolvable:$true] %s118
      %121 = dma.hbm_to_vmem [thread:$0]  %s117, 16, %s119, [#allocation14]
    $region37: #{value_net_forward.1} parent=1 // pred_fallthru
      _
    // Predicated region
    $region38: #{value_net_forward.1} parent=1 // pred_check
      _
    $region39: #{value_net_forward.1} parent=1 // pred_check_branch
      %123 = sbr.rel (0) target = $region41
    $region40: #{value_net_forward.1} parent=1 // pred_region
      %125 = vsyncadd [#allocation17], 0
      %s127 = sshll.u32 %s9, 4
      %s128 = int_to_ptr.hbm [resolvable:$true] %s127
      %s129 = sshll.u32 [#allocation16], 4
      %s130 = int_to_ptr.vmem [resolvable:$true] %s129
      %132 = dma.hbm_to_vmem [thread:$0]  %s128, 16, %s130, [#allocation17]
    $region41: #{value_net_forward.1} parent=1 // pred_fallthru
      _
    // Predicated region
    $region42: #{value_net_forward.1} parent=1 // pred_check
      _
    $region43: #{value_net_forward.1} parent=1 // pred_check_branch
      %134 = sbr.rel (0) target = $region45
    $region44: #{value_net_forward.1} parent=1 // pred_region
      %136 = vsyncadd [#allocation17], 0
      %s138 = sshll.u32 %s10, 4
      %s139 = int_to_ptr.hbm [resolvable:$true] %s138
      %s140 = sshll.u32 [#allocation18], 4
      %s141 = int_to_ptr.vmem [resolvable:$true] %s140
      %143 = dma.hbm_to_vmem [thread:$0]  %s139, 16, %s141, [#allocation17]
    $region45: #{value_net_forward.1} parent=1 // pred_fallthru
      _
    // Predicated region
    $region46: #{value_net_forward.1} parent=1 // pred_check
      _
    $region47: #{value_net_forward.1} parent=1 // pred_check_branch
      %145 = sbr.rel (0) target = $region49
    $region48: #{value_net_forward.1} parent=1 // pred_region
      %147 = vsyncadd [#allocation20], 0
      %s149 = sshll.u32 %s11, 4
      %s150 = int_to_ptr.hbm [resolvable:$true] %s149
      %s151 = sshll.u32 [#allocation19], 4
      %s152 = int_to_ptr.vmem [resolvable:$true] %s151
      %154 = dma.hbm_to_vmem [thread:$0]  %s150, 32, %s152, [#allocation20]
    $region49: #{value_net_forward.1} parent=1 // pred_fallthru
      _
    // Predicated region
    $region50: #{value_net_forward.1} parent=1 // pred_check
      _
    $region51: #{value_net_forward.1} parent=1 // pred_check_branch
      %156 = sbr.rel (0) target = $region53
    $region52: #{value_net_forward.1} parent=1 // pred_region
      %158 = vsyncadd [#allocation20], 0
      %s160 = sshll.u32 %s14, 4
      %s161 = int_to_ptr.hbm [resolvable:$true] %s160
      %s162 = sshll.u32 [#allocation21], 4
      %s163 = int_to_ptr.vmem [resolvable:$true] %s162
      %165 = dma.hbm_to_vmem [thread:$0]  %s161, 128, %s163, [#allocation20]
    $region53: #{value_net_forward.1} parent=1 // pred_fallthru
      _
    // Predicated region
    $region54: #{value_net_forward.1} parent=1 // pred_check
      _
    $region55: #{value_net_forward.1} parent=1 // pred_check_branch
      %167 = sbr.rel (0) target = $region57
    $region56: #{value_net_forward.1} parent=1 // pred_region
      %169 = vsyncadd [#allocation23], 0
      %s171 = sshll.u32 %s15, 4
      %s172 = int_to_ptr.hbm [resolvable:$true] %s171
      %s173 = sshll.u32 [#allocation22], 4
      %s174 = int_to_ptr.vmem [resolvable:$true] %s173
      %176 = dma.hbm_to_vmem [thread:$0]  %s172, 16, %s174, [#allocation23]
    $region57: #{value_net_forward.1} parent=1 // pred_fallthru
      _
    // Predicated region
    $region58: #{value_net_forward.1} parent=1 // pred_check
      _
    $region59: #{value_net_forward.1} parent=1 // pred_check_branch
      %178 = sbr.rel (0) target = $region61
    $region60: #{value_net_forward.1} parent=1 // pred_region
      %180 = vsyncadd [#allocation23], 0
      %s181 = sshll.u32 %s16, 4
      %s182 = int_to_ptr.hbm [resolvable:$true] %s181
      %s183 = sshll.u32 [#allocation24], 4
      %s184 = int_to_ptr.vmem [resolvable:$true] %s183
      %189 = dma.hbm_to_vmem [thread:$0]  %s182, 1024, %s184, [#allocation23], 64, 64, 4
    $region61: #{value_net_forward.1} parent=1 // pred_fallthru
      _
    // Predicated region
    $region62: #{value_net_forward.1} parent=1 // pred_check
      _
    $region63: #{value_net_forward.1} parent=1 // pred_check_branch
      %191 = sbr.rel (0) target = $region65
    $region64: #{value_net_forward.1} parent=1 // pred_region
      %193 = vsyncadd [#allocation26], 0
      %s195 = sshll.u32 %s17, 4
      %s196 = int_to_ptr.hbm [resolvable:$true] %s195
      %s197 = sshll.u32 [#allocation25], 4
      %s198 = int_to_ptr.vmem [resolvable:$true] %s197
      %200 = dma.hbm_to_vmem [thread:$0]  %s196, 16, %s198, [#allocation26]
    $region65: #{value_net_forward.1} parent=1 // pred_fallthru
      _
    // Predicated region
    $region66: #{value_net_forward.1} parent=1 // pred_check
      _
    $region67: #{value_net_forward.1} parent=1 // pred_check_branch
      %202 = sbr.rel (0) target = $region69
    $region68: #{value_net_forward.1} parent=1 // pred_region
      %204 = vsyncadd [#allocation26], 0
      %s205 = sshll.u32 %s18, 4
      %s206 = int_to_ptr.hbm [resolvable:$true] %s205
      %s207 = sshll.u32 [#allocation27], 4
      %s208 = int_to_ptr.vmem [resolvable:$true] %s207
      %213 = dma.hbm_to_vmem [thread:$0]  %s206, 576, %s208, [#allocation26], 64, 64, 4
    $region69: #{value_net_forward.1} parent=1 // pred_fallthru
      _
    // Predicated region
    $region70: #{value_net_forward.1} parent=1 // pred_check
      _
    $region71: #{value_net_forward.1} parent=1 // pred_check_branch
      %215 = sbr.rel (0) target = $region73
    $region72: #{value_net_forward.1} parent=1 // pred_region
      %217 = vsyncadd [#allocation29], 0
      %s219 = sshll.u32 %s19, 4
      %s220 = int_to_ptr.hbm [resolvable:$true] %s219
      %s221 = sshll.u32 [#allocation28], 4
      %s222 = int_to_ptr.vmem [resolvable:$true] %s221
      %224 = dma.hbm_to_vmem [thread:$0]  %s220, 16, %s222, [#allocation29]
    $region73: #{value_net_forward.1} parent=1 // pred_fallthru
      _
    // Predicated region
    $region74: #{value_net_forward.1} parent=1 // pred_check
      _
    $region75: #{value_net_forward.1} parent=1 // pred_check_branch
      %226 = sbr.rel (0) target = $region77
    $region76: #{value_net_forward.1} parent=1 // pred_region
      %228 = vsyncadd [#allocation29], 0
      %s229 = sshll.u32 %s20, 4
      %s230 = int_to_ptr.hbm [resolvable:$true] %s229
      %s231 = sshll.u32 [#allocation30], 4
      %s232 = int_to_ptr.vmem [resolvable:$true] %s231
      %237 = dma.hbm_to_vmem [thread:$0]  %s230, 2048, %s232, [#allocation29], 64, 64, 4
    $region77: #{value_net_forward.1} parent=1 // pred_fallthru
      _
    // Predicated region
    $region78: #{value_net_forward.1} parent=1 // pred_check
      _
    $region79: #{value_net_forward.1} parent=1 // pred_check_branch
      %239 = sbr.rel (0) target = $region81
    $region80: #{value_net_forward.1} parent=1 // pred_region
      %241 = vsyncadd [#allocation32], 0
      %s243 = sshll.u32 %s21, 4
      %s244 = int_to_ptr.hbm [resolvable:$true] %s243
      %s245 = sshll.u32 [#allocation31], 4
      %s246 = int_to_ptr.vmem [resolvable:$true] %s245
      %248 = dma.hbm_to_vmem [thread:$0]  %s244, 16, %s246, [#allocation32]
    $region81: #{value_net_forward.1} parent=1 // pred_fallthru
      _
    // Predicated region
    $region82: #{value_net_forward.1} parent=1 // pred_check
      _
    $region83: #{value_net_forward.1} parent=1 // pred_check_branch
      %250 = sbr.rel (0) target = $region85
    $region84: #{value_net_forward.1} parent=1 // pred_region
      %252 = dma.done [#allocation6], 256
    $region85: #{value_net_forward.1} parent=1 // pred_fallthru
      _
    // Predicated region
    $region86: #{value_net_forward.1} parent=1 // pred_check
      _
    $region87: #{value_net_forward.1} parent=1 // pred_check_branch
      %254 = sbr.rel (0) target = $region89
    $region88: #{value_net_forward.1} parent=1 // pred_region
      %256 = dma.done [#allocation8], 16
    $region89: #{value_net_forward.1} parent=1 // pred_fallthru
      _
    // Predicated region
    $region90: #{value_net_forward.1} parent=1 // pred_check
      _
    $region91: #{value_net_forward.1} parent=1 // pred_check_branch
      %258 = sbr.rel (0) target = $region93
    $region92: #{value_net_forward.1} parent=1 // pred_region
      %260 = dma.done [#allocation8], 16
    $region93: #{value_net_forward.1} parent=1 // pred_fallthru
      _
    // Predicated region
    $region94: #{value_net_forward.1} parent=1 // pred_check
      _
    $region95: #{value_net_forward.1} parent=1 // pred_check_branch
      %262 = sbr.rel (0) target = $region97
    $region96: #{value_net_forward.1} parent=1 // pred_region
      %264 = dma.done [#allocation11], 16
    $region97: #{value_net_forward.1} parent=1 // pred_fallthru
      _
    // Predicated region
    $region98: #{value_net_forward.1} parent=1 // pred_check
      _
    $region99: #{value_net_forward.1} parent=1 // pred_check_branch
      %266 = sbr.rel (0) target = $region101
    $region100: #{value_net_forward.1} parent=1 // pred_region
      %268 = dma.done [#allocation11], 96
    $region101: #{value_net_forward.1} parent=1 // pred_fallthru
      _
    // Predicated region
    $region102: #{value_net_forward.1} parent=1 // pred_check
      _
    $region103: #{value_net_forward.1} parent=1 // pred_check_branch
      %270 = sbr.rel (0) target = $region105
    $region104: #{value_net_forward.1} parent=1 // pred_region
      %272 = dma.done [#allocation14], 4608
    $region105: #{value_net_forward.1} parent=1 // pred_fallthru
      _
    // Predicated region
    $region106: #{value_net_forward.1} parent=1 // pred_check
      _
    $region107: #{value_net_forward.1} parent=1 // pred_check_branch
      %274 = sbr.rel (0) target = $region109
    $region108: #{value_net_forward.1} parent=1 // pred_region
      %276 = dma.done [#allocation14], 16
    $region109: #{value_net_forward.1} parent=1 // pred_fallthru
      _
    // Predicated region
    $region110: #{value_net_forward.1} parent=1 // pred_check
      _
    $region111: #{value_net_forward.1} parent=1 // pred_check_branch
      %278 = sbr.rel (0) target = $region113
    $region112: #{value_net_forward.1} parent=1 // pred_region
      %280 = dma.done [#allocation17], 16
    $region113: #{value_net_forward.1} parent=1 // pred_fallthru
      _
    // Predicated region
    $region114: #{value_net_forward.1} parent=1 // pred_check
      _
    $region115: #{value_net_forward.1} parent=1 // pred_check_branch
      %282 = sbr.rel (0) target = $region117
    $region116: #{value_net_forward.1} parent=1 // pred_region
      %284 = dma.done [#allocation17], 16
    $region117: #{value_net_forward.1} parent=1 // pred_fallthru
      _
    // Predicated region
    $region118: #{value_net_forward.1} parent=1 // pred_check
      _
    $region119: #{value_net_forward.1} parent=1 // pred_check_branch
      %286 = sbr.rel (0) target = $region121
    $region120: #{value_net_forward.1} parent=1 // pred_region
      %288 = dma.done [#allocation20], 32
    $region121: #{value_net_forward.1} parent=1 // pred_fallthru
      _
    // Predicated region
    $region122: #{value_net_forward.1} parent=1 // pred_check
      _
    $region123: #{value_net_forward.1} parent=1 // pred_check_branch
      %290 = sbr.rel (0) target = $region125
    $region124: #{value_net_forward.1} parent=1 // pred_region
      %292 = dma.done [#allocation20], 128
    $region125: #{value_net_forward.1} parent=1 // pred_fallthru
      _
    // Predicated region
    $region126: #{value_net_forward.1} parent=1 // pred_check
      _
    $region127: #{value_net_forward.1} parent=1 // pred_check_branch
      %294 = sbr.rel (0) target = $region129
    $region128: #{value_net_forward.1} parent=1 // pred_region
      %296 = dma.done [#allocation23], 16
    $region129: #{value_net_forward.1} parent=1 // pred_fallthru
      _
    // Predicated region
    $region130: #{value_net_forward.1} parent=1 // pred_check
      _
    $region131: #{value_net_forward.1} parent=1 // pred_check_branch
      %298 = sbr.rel (0) target = $region133
    $region132: #{value_net_forward.1} parent=1 // pred_region
      %300 = dma.done [#allocation23], 1024
    $region133: #{value_net_forward.1} parent=1 // pred_fallthru
      _
    // Predicated region
    $region134: #{value_net_forward.1} parent=1 // pred_check
      _
    $region135: #{value_net_forward.1} parent=1 // pred_check_branch
      %302 = sbr.rel (0) target = $region137
    $region136: #{value_net_forward.1} parent=1 // pred_region
      %304 = dma.done [#allocation26], 16
    $region137: #{value_net_forward.1} parent=1 // pred_fallthru
      _
    // Predicated region
    $region138: #{value_net_forward.1} parent=1 // pred_check
      _
    $region139: #{value_net_forward.1} parent=1 // pred_check_branch
      %306 = sbr.rel (0) target = $region141
    $region140: #{value_net_forward.1} parent=1 // pred_region
      %308 = dma.done [#allocation26], 576
    $region141: #{value_net_forward.1} parent=1 // pred_fallthru
      _
    // Predicated region
    $region142: #{value_net_forward.1} parent=1 // pred_check
      _
    $region143: #{value_net_forward.1} parent=1 // pred_check_branch
      %310 = sbr.rel (0) target = $region145
    $region144: #{value_net_forward.1} parent=1 // pred_region
      %312 = dma.done [#allocation29], 16
    $region145: #{value_net_forward.1} parent=1 // pred_fallthru
      _
    // Predicated region
    $region146: #{value_net_forward.1} parent=1 // pred_check
      _
    $region147: #{value_net_forward.1} parent=1 // pred_check_branch
      %314 = sbr.rel (0) target = $region149
    $region148: #{value_net_forward.1} parent=1 // pred_region
      %316 = dma.done [#allocation29], 2048
    $region149: #{value_net_forward.1} parent=1 // pred_fallthru
      _
    // Predicated region
    $region150: #{value_net_forward.1} parent=1 // pred_check
      _
    $region151: #{value_net_forward.1} parent=1 // pred_check_branch
      %318 = sbr.rel (0) target = $region153
    $region152: #{value_net_forward.1} parent=1 // pred_region
      %320 = dma.done [#allocation32], 16
    $region153: #{value_net_forward.1} parent=1 // pred_fallthru
      _
    // Predicated region
    $region154: #{value_net_forward.1} parent=1 // pred_check
      _
    $region155: #{value_net_forward.1} parent=1 // pred_check_branch
      %323 = sbr.rel target = $region157
    $region156: #{value_net_forward.1} parent=1 // pred_region
      %324 = sst [smem:[#allocation35]] [#allocation34]
      %325 = sst [smem:[#allocation36]] [#allocation33]
    $region157: #{value_net_forward.1} parent=1 // pred_fallthru
      _
    %327 = shalt.err (0)
    %s329 = sshll.u32 %s12, 4
    %s330 = int_to_ptr.hbm [resolvable:$true] %s329
    %s331 = sshll.u32 [#allocation2], 4
    %s332 = int_to_ptr.vmem [resolvable:$true] %s331
    %334 = dma.hbm_to_vmem [thread:$0]  %s330, 89600, %s332, [#allocation4]
    %s335 = scalar_lea.sflag [#allocation4], 1
    // Predicated region
    $region158: #{value_net_forward.1} parent=1 // pred_check
      _
    $region159: #{value_net_forward.1} parent=1 // pred_check_branch
      %337 = sbr.rel target = $region161
    $region160: #{value_net_forward.1} parent=1 // pred_region
      %338 = sst [smem:[#allocation35]] [#allocation38]
      %339 = sst [smem:[#allocation36]] [#allocation37]
    $region161: #{value_net_forward.1} parent=1 // pred_fallthru
      _
    %341 = shalt.err (0)
    %s343 = sshll.u32 %s13, 4
    %s344 = int_to_ptr.hbm [resolvable:$true] %s343
    %s345 = sshll.u32 [#allocation3], 4
    %s346 = int_to_ptr.vmem [resolvable:$true] %s345
    %348 = dma.hbm_to_vmem [thread:$0]  %s344, 8192, %s346, %s335
    %v349 = vld [vmem:[%s0] sm:$0xff]
    %v350 = vld [vmem:[%s0 + $0x8] sm:$0xff]
    %v351 = vld [vmem:[%s0 + $0x10] sm:$0xff]
    %v352 = vld [vmem:[%s0 + $0x18] sm:$0xff]
    %v353 = vld [vmem:[%s0 + $0x20] sm:$0xff]
    %v354 = vld [vmem:[%s0 + $0x28] sm:$0xff]
    %v355 = vld [vmem:[%s0 + $0x30] sm:$0xff]
    %v356 = vld [vmem:[%s0 + $0x38] sm:$0xff]
    %v357 = vld [vmem:[%s0 + $0x40] sm:$0xff]
    %v358 = vld [vmem:[%s0 + $0x48] sm:$0xff]
    %v359 = vld [vmem:[%s0 + $0x50] sm:$0xff]
    %v360 = vld [vmem:[%s0 + $0x58] sm:$0xff]
    %v361 = vld [vmem:[%s0 + $0x60] sm:$0xff]
    %v362 = vld [vmem:[%s0 + $0x68] sm:$0xff]
    %v363 = vld [vmem:[%s0 + $0x70] sm:$0xff]
    %v364 = vld [vmem:[%s0 + $0x78] sm:$0xff]
    %v365 = vld [vmem:[%s0 + $0x80] sm:$0xff]
    %v366 = vld [vmem:[%s0 + $0x88] sm:$0xff]
    %v367 = vld [vmem:[%s0 + $0x90] sm:$0xff]
    %v368 = vld [vmem:[%s0 + $0x98] sm:$0xff]
    %v369 = vld [vmem:[%s0 + $0xa0] sm:$0xff]
    %v370 = vld [vmem:[%s0 + $0xa8] sm:$0xff]
    %v371 = vld [vmem:[%s0 + $0xb0] sm:$0xff]
    %v372 = vld [vmem:[%s0 + $0xb8] sm:$0xff]
    %v373 = vld [vmem:[%s0 + $0xc0] sm:$0xff]
    %v374 = vld [vmem:[%s0 + $0xc8] sm:$0xff]
    %v375 = vld [vmem:[%s0 + $0xd0] sm:$0xff]
    %v376 = vld [vmem:[%s0 + $0xd8] sm:$0xff]
    %v377 = vld [vmem:[%s0 + $0xe0] sm:$0xff]
    %v378 = vld [vmem:[%s0 + $0xe8] sm:$0xff]
    %v379 = vld [vmem:[%s0 + $0xf0] sm:$0xff]
    %v380 = vld [vmem:[%s0 + $0xf8] sm:$0xff]
    %v381 = vld [vmem:[%s0 + $0x100] sm:$0xff]
    %v382 = vld [vmem:[%s0 + $0x108] sm:$0xff]
    %v383 = vld [vmem:[%s0 + $0x110] sm:$0xff]
    %v384 = vld [vmem:[%s0 + $0x118] sm:$0xff]
    %v385 = vld [vmem:[%s0 + $0x120] sm:$0xff]
    %v386 = vld [vmem:[%s0 + $0x128] sm:$0xff]
    %v387 = vld [vmem:[%s0 + $0x130] sm:$0xff]
    %v388 = vld [vmem:[%s0 + $0x138] sm:$0xff]
    %v389 = vld [vmem:[%s0 + $0x140] sm:$0xff]
    %v390 = vld [vmem:[%s0 + $0x148] sm:$0xff]
    %v391 = vld [vmem:[%s0 + $0x150] sm:$0xff]
    %v392 = vld [vmem:[%s0 + $0x158] sm:$0xff]
    %v393 = vld [vmem:[%s0 + $0x160] sm:$0xff]
    %v394 = vld [vmem:[%s0 + $0x168] sm:$0xff]
    %v395 = vld [vmem:[%s0 + $0x170] sm:$0xff]
    %v396 = vld [vmem:[%s0 + $0x178] sm:$0xff]
    %v397 = vld [vmem:[%s0 + $0x180] sm:$0xff]
    %v398 = vld [vmem:[%s0 + $0x188] sm:$0xff]
    %v399 = vld [vmem:[%s0 + $0x190] sm:$0xff]
    %v400 = vld [vmem:[%s0 + $0x198] sm:$0xff]
    %v401 = vld [vmem:[%s0 + $0x1a0] sm:$0xff]
    %v402 = vld [vmem:[%s0 + $0x1a8] sm:$0xff]
    %v403 = vld [vmem:[%s0 + $0x1b0] sm:$0xff]
    %v404 = vld [vmem:[%s0 + $0x1b8] sm:$0xff]
    %v405 = vld [vmem:[%s0 + $0x1c0] sm:$0xff]
    %v406 = vld [vmem:[%s0 + $0x1c8] sm:$0xff]
    %v407 = vld [vmem:[%s0 + $0x1d0] sm:$0xff]
    %v408 = vld [vmem:[%s0 + $0x1d8] sm:$0xff]
    %v409 = vld [vmem:[%s0 + $0x1e0] sm:$0xff]
    %v410 = vld [vmem:[%s0 + $0x1e8] sm:$0xff]
    %v411 = vld [vmem:[%s0 + $0x1f0] sm:$0xff]
    %v412 = vld [vmem:[%s0 + $0x1f8] sm:$0xff]
    %v413 = vld [vmem:[%s0 + $0x200] sm:$0xff]
    %v414 = vld [vmem:[%s0 + $0x208] sm:$0xff]
    %v415 = vld [vmem:[%s0 + $0x210] sm:$0xff]
    %v416 = vld [vmem:[%s0 + $0x218] sm:$0xff]
    %v417 = vld [vmem:[%s0 + $0x220] sm:$0xff]
    %v418 = vld [vmem:[%s0 + $0x228] sm:$0xff]
    %v419 = vld [vmem:[%s0 + $0x230] sm:$0xff]
    %v420 = vld [vmem:[%s0 + $0x238] sm:$0xff]
    %v421 = vld [vmem:[%s0 + $0x240] sm:$0xff]
    %v422 = vld [vmem:[%s0 + $0x248] sm:$0xff]
    %v423 = vld [vmem:[%s0 + $0x250] sm:$0xff]
    %v424 = vld [vmem:[%s0 + $0x258] sm:$0xff]
    %v425 = vld [vmem:[%s0 + $0x260] sm:$0xff]
    %v426 = vld [vmem:[%s0 + $0x268] sm:$0xff]
    %v427 = vld [vmem:[%s0 + $0x270] sm:$0xff]
    %v428 = vld [vmem:[%s0 + $0x278] sm:$0xff]
    %v429 = vld [vmem:[%s0 + $0x280] sm:$0xff]
    %v430 = vld [vmem:[%s0 + $0x288] sm:$0xff]
    %v431 = vld [vmem:[%s0 + $0x290] sm:$0xff]
    %v432 = vld [vmem:[%s0 + $0x298] sm:$0xff]
    %v433 = vld [vmem:[%s0 + $0x2a0] sm:$0xff]
    %v434 = vld [vmem:[%s0 + $0x2a8] sm:$0xff]
    %v435 = vld [vmem:[%s0 + $0x2b0] sm:$0xff]
    %v436 = vld [vmem:[%s0 + $0x2b8] sm:$0xff]
    %v437 = vld [vmem:[#allocation5] sm:$0xff]
    %v438 = vld [vmem:[#allocation5 + $0x8] sm:$0x1]
    %v439 = vld [vmem:[#allocation7] sm:$0x1]
    %v441 = vperm.slane %v439, 0
    %vm443 = vcmask 72704
    %v445 = vsel %vm443, %v349, 0
    %v448 = vsel %vm443, %v350, 0
    %v451 = vsel %vm443, %v351, 0
    %v454 = vsel %vm443, %v352, 0
    %v457 = vsel %vm443, %v353, 0
    %v460 = vsel %vm443, %v354, 0
    %v463 = vsel %vm443, %v355, 0
    %v466 = vsel %vm443, %v356, 0
    %v469 = vsel %vm443, %v357, 0
    %v472 = vsel %vm443, %v358, 0
    %v475 = vsel %vm443, %v359, 0
    %v478 = vsel %vm443, %v360, 0
    %v481 = vsel %vm443, %v361, 0
    %v484 = vsel %vm443, %v362, 0
    %v487 = vsel %vm443, %v363, 0
    %v490 = vsel %vm443, %v364, 0
    %v493 = vsel %vm443, %v365, 0
    %v496 = vsel %vm443, %v366, 0
    %v499 = vsel %vm443, %v367, 0
    %v502 = vsel %vm443, %v368, 0
    %v505 = vsel %vm443, %v369, 0
    %v508 = vsel %vm443, %v370, 0
    %v511 = vsel %vm443, %v371, 0
    %v514 = vsel %vm443, %v372, 0
    %v517 = vsel %vm443, %v373, 0
    %v520 = vsel %vm443, %v374, 0
    %v523 = vsel %vm443, %v375, 0
    %v526 = vsel %vm443, %v376, 0
    %v529 = vsel %vm443, %v377, 0
    %v532 = vsel %vm443, %v378, 0
    %v535 = vsel %vm443, %v379, 0
    %v538 = vsel %vm443, %v380, 0
    %v541 = vsel %vm443, %v381, 0
    %v544 = vsel %vm443, %v382, 0
    %v547 = vsel %vm443, %v383, 0
    %v550 = vsel %vm443, %v384, 0
    %v553 = vsel %vm443, %v385, 0
    %v556 = vsel %vm443, %v386, 0
    %v559 = vsel %vm443, %v387, 0
    %v562 = vsel %vm443, %v388, 0
    %v565 = vsel %vm443, %v389, 0
    %v568 = vsel %vm443, %v390, 0
    %v571 = vsel %vm443, %v391, 0
    %v574 = vsel %vm443, %v392, 0
    %v577 = vsel %vm443, %v393, 0
    %v580 = vsel %vm443, %v394, 0
    %v583 = vsel %vm443, %v395, 0
    %v586 = vsel %vm443, %v396, 0
    %v589 = vsel %vm443, %v397, 0
    %v592 = vsel %vm443, %v398, 0
    %v595 = vsel %vm443, %v399, 0
    %v598 = vsel %vm443, %v400, 0
    %v601 = vsel %vm443, %v401, 0
    %v604 = vsel %vm443, %v402, 0
    %v607 = vsel %vm443, %v403, 0
    %v610 = vsel %vm443, %v404, 0
    %v613 = vsel %vm443, %v405, 0
    %v616 = vsel %vm443, %v406, 0
    %v619 = vsel %vm443, %v407, 0
    %v622 = vsel %vm443, %v408, 0
    %v625 = vsel %vm443, %v409, 0
    %v628 = vsel %vm443, %v410, 0
    %v631 = vsel %vm443, %v411, 0
    %v634 = vsel %vm443, %v412, 0
    %v637 = vsel %vm443, %v413, 0
    %v640 = vsel %vm443, %v414, 0
    %v643 = vsel %vm443, %v415, 0
    %v646 = vsel %vm443, %v416, 0
    %v649 = vsel %vm443, %v417, 0
    %v652 = vsel %vm443, %v418, 0
    %v655 = vsel %vm443, %v419, 0
    %v658 = vsel %vm443, %v420, 0
    %v661 = vsel %vm443, %v421, 0
    %v664 = vsel %vm443, %v422, 0
    %v667 = vsel %vm443, %v423, 0
    %v670 = vsel %vm443, %v424, 0
    %v673 = vsel %vm443, %v425, 0
    %v676 = vsel %vm443, %v426, 0
    %v679 = vsel %vm443, %v427, 0
    %v682 = vsel %vm443, %v428, 0
    %v685 = vsel %vm443, %v429, 0
    %v688 = vsel %vm443, %v430, 0
    %v691 = vsel %vm443, %v431, 0
    %v694 = vsel %vm443, %v432, 0
    %v697 = vsel %vm443, %v433, 0
    %v700 = vsel %vm443, %v434, 0
    %v703 = vsel %vm443, %v435, 0
    %v706 = vsel %vm443, %v436, 0
    %vm708 = vcmask 1040384
    %v710 = vsel %vm708, %v438, 0
    %712 = vmatpush.msra.mxu0 0.0
    %713 = vmatpush.msra.mxu0 0.0
    %714 = vmatpush.msra.mxu0 0.0
    %715 = vmatpush.msra.mxu0 0.0
    %716 = vmatpush.msra.mxu0 0.0
    %717 = vmatpush.msra.mxu0 0.0
    %718 = vmatpush.msra.mxu0 0.0
    %719 = vmatpush.msra.mxu0 0.0
    %720 = vmatpush.msra.mxu0 0.0
    %721 = vmatpush.msra.mxu0 0.0
    %722 = vmatpush.msra.mxu0 0.0
    %723 = vmatpush.msra.mxu0 0.0
    %724 = vmatpush.msra.mxu0 0.0
    %725 = vmatpush.msra.mxu0 0.0
    %726 = vmatpush.msra.mxu0 %v710
    %727 = vmatpush.msra.mxu0 %v437
    %728 = vmatmul.f32.gmra.mxu0 %v445
    %v729 = vpop.f32.mrf.mxu0
    %v730 = vadd.f32 %v441, %v729
    %731 = vmatmul.f32.gmra.mxu0 %v448
    %v732 = vpop.f32.mrf.mxu0
    %v733 = vadd.f32 %v441, %v732
    %734 = vmatmul.f32.gmra.mxu0 %v451
    %v735 = vpop.f32.mrf.mxu0
    %v736 = vadd.f32 %v441, %v735
    %737 = vmatmul.f32.gmra.mxu0 %v454
    %v738 = vpop.f32.mrf.mxu0
    %v739 = vadd.f32 %v441, %v738
    %740 = vmatmul.f32.gmra.mxu0 %v457
    %v741 = vpop.f32.mrf.mxu0
    %v742 = vadd.f32 %v441, %v741
    %743 = vmatmul.f32.gmra.mxu0 %v460
    %v744 = vpop.f32.mrf.mxu0
    %v745 = vadd.f32 %v441, %v744
    %746 = vmatmul.f32.gmra.mxu0 %v463
    %v747 = vpop.f32.mrf.mxu0
    %v748 = vadd.f32 %v441, %v747
    %749 = vmatmul.f32.gmra.mxu0 %v466
    %v750 = vpop.f32.mrf.mxu0
    %v751 = vadd.f32 %v441, %v750
    %752 = vmatmul.f32.gmra.mxu0 %v469
    %v753 = vpop.f32.mrf.mxu0
    %v754 = vadd.f32 %v441, %v753
    %755 = vmatmul.f32.gmra.mxu0 %v472
    %v756 = vpop.f32.mrf.mxu0
    %v757 = vadd.f32 %v441, %v756
    %758 = vmatmul.f32.gmra.mxu0 %v475
    %v759 = vpop.f32.mrf.mxu0
    %v760 = vadd.f32 %v441, %v759
    %761 = vmatmul.f32.gmra.mxu0 %v478
    %v762 = vpop.f32.mrf.mxu0
    %v763 = vadd.f32 %v441, %v762
    %764 = vmatmul.f32.gmra.mxu0 %v481
    %v765 = vpop.f32.mrf.mxu0
    %v766 = vadd.f32 %v441, %v765
    %767 = vmatmul.f32.gmra.mxu0 %v484
    %v768 = vpop.f32.mrf.mxu0
    %v769 = vadd.f32 %v441, %v768
    %770 = vmatmul.f32.gmra.mxu0 %v487
    %v771 = vpop.f32.mrf.mxu0
    %v772 = vadd.f32 %v441, %v771
    %773 = vmatmul.f32.gmra.mxu0 %v490
    %v774 = vpop.f32.mrf.mxu0
    %v775 = vadd.f32 %v441, %v774
    %776 = vmatmul.f32.gmra.mxu0 %v493
    %v777 = vpop.f32.mrf.mxu0
    %v778 = vadd.f32 %v441, %v777
    %779 = vmatmul.f32.gmra.mxu0 %v496
    %v780 = vpop.f32.mrf.mxu0
    %v781 = vadd.f32 %v441, %v780
    %782 = vmatmul.f32.gmra.mxu0 %v499
    %v783 = vpop.f32.mrf.mxu0
    %v784 = vadd.f32 %v441, %v783
    %785 = vmatmul.f32.gmra.mxu0 %v502
    %v786 = vpop.f32.mrf.mxu0
    %v787 = vadd.f32 %v441, %v786
    %788 = vmatmul.f32.gmra.mxu0 %v505
    %v789 = vpop.f32.mrf.mxu0
    %v790 = vadd.f32 %v441, %v789
    %791 = vmatmul.f32.gmra.mxu0 %v508
    %v792 = vpop.f32.mrf.mxu0
    %v793 = vadd.f32 %v441, %v792
    %794 = vmatmul.f32.gmra.mxu0 %v511
    %v795 = vpop.f32.mrf.mxu0
    %v796 = vadd.f32 %v441, %v795
    %797 = vmatmul.f32.gmra.mxu0 %v514
    %v798 = vpop.f32.mrf.mxu0
    %v799 = vadd.f32 %v441, %v798
    %800 = vmatmul.f32.gmra.mxu0 %v517
    %v801 = vpop.f32.mrf.mxu0
    %v802 = vadd.f32 %v441, %v801
    %803 = vmatmul.f32.gmra.mxu0 %v520
    %v804 = vpop.f32.mrf.mxu0
    %v805 = vadd.f32 %v441, %v804
    %806 = vmatmul.f32.gmra.mxu0 %v523
    %v807 = vpop.f32.mrf.mxu0
    %v808 = vadd.f32 %v441, %v807
    %809 = vmatmul.f32.gmra.mxu0 %v526
    %v810 = vpop.f32.mrf.mxu0
    %v811 = vadd.f32 %v441, %v810
    %812 = vmatmul.f32.gmra.mxu0 %v529
    %v813 = vpop.f32.mrf.mxu0
    %v814 = vadd.f32 %v441, %v813
    %815 = vmatmul.f32.gmra.mxu0 %v532
    %v816 = vpop.f32.mrf.mxu0
    %v817 = vadd.f32 %v441, %v816
    %818 = vmatmul.f32.gmra.mxu0 %v535
    %v819 = vpop.f32.mrf.mxu0
    %v820 = vadd.f32 %v441, %v819
    %821 = vmatmul.f32.gmra.mxu0 %v538
    %v822 = vpop.f32.mrf.mxu0
    %v823 = vadd.f32 %v441, %v822
    %824 = vmatmul.f32.gmra.mxu0 %v541
    %v825 = vpop.f32.mrf.mxu0
    %v826 = vadd.f32 %v441, %v825
    %827 = vmatmul.f32.gmra.mxu0 %v544
    %v828 = vpop.f32.mrf.mxu0
    %v829 = vadd.f32 %v441, %v828
    %830 = vmatmul.f32.gmra.mxu0 %v547
    %v831 = vpop.f32.mrf.mxu0
    %v832 = vadd.f32 %v441, %v831
    %833 = vmatmul.f32.gmra.mxu0 %v550
    %v834 = vpop.f32.mrf.mxu0
    %v835 = vadd.f32 %v441, %v834
    %836 = vmatmul.f32.gmra.mxu0 %v553
    %v837 = vpop.f32.mrf.mxu0
    %v838 = vadd.f32 %v441, %v837
    %839 = vmatmul.f32.gmra.mxu0 %v556
    %v840 = vpop.f32.mrf.mxu0
    %v841 = vadd.f32 %v441, %v840
    %842 = vmatmul.f32.gmra.mxu0 %v559
    %v843 = vpop.f32.mrf.mxu0
    %v844 = vadd.f32 %v441, %v843
    %845 = vmatmul.f32.gmra.mxu0 %v562
    %v846 = vpop.f32.mrf.mxu0
    %v847 = vadd.f32 %v441, %v846
    %848 = vmatmul.f32.gmra.mxu0 %v565
    %v849 = vpop.f32.mrf.mxu0
    %v850 = vadd.f32 %v441, %v849
    %851 = vmatmul.f32.gmra.mxu0 %v568
    %v852 = vpop.f32.mrf.mxu0
    %v853 = vadd.f32 %v441, %v852
    %854 = vmatmul.f32.gmra.mxu0 %v571
    %v855 = vpop.f32.mrf.mxu0
    %v856 = vadd.f32 %v441, %v855
    %857 = vmatmul.f32.gmra.mxu0 %v574
    %v858 = vpop.f32.mrf.mxu0
    %v859 = vadd.f32 %v441, %v858
    %860 = vmatmul.f32.gmra.mxu0 %v577
    %v861 = vpop.f32.mrf.mxu0
    %v862 = vadd.f32 %v441, %v861
    %863 = vmatmul.f32.gmra.mxu0 %v580
    %v864 = vpop.f32.mrf.mxu0
    %v865 = vadd.f32 %v441, %v864
    %866 = vmatmul.f32.gmra.mxu0 %v583
    %v867 = vpop.f32.mrf.mxu0
    %v868 = vadd.f32 %v441, %v867
    %869 = vmatmul.f32.gmra.mxu0 %v586
    %v870 = vpop.f32.mrf.mxu0
    %v871 = vadd.f32 %v441, %v870
    %872 = vmatmul.f32.gmra.mxu0 %v589
    %v873 = vpop.f32.mrf.mxu0
    %v874 = vadd.f32 %v441, %v873
    %875 = vmatmul.f32.gmra.mxu0 %v592
    %v876 = vpop.f32.mrf.mxu0
    %v877 = vadd.f32 %v441, %v876
    %878 = vmatmul.f32.gmra.mxu0 %v595
    %v879 = vpop.f32.mrf.mxu0
    %v880 = vadd.f32 %v441, %v879
    %881 = vmatmul.f32.gmra.mxu0 %v598
    %v882 = vpop.f32.mrf.mxu0
    %v883 = vadd.f32 %v441, %v882
    %884 = vmatmul.f32.gmra.mxu0 %v601
    %v885 = vpop.f32.mrf.mxu0
    %v886 = vadd.f32 %v441, %v885
    %887 = vmatmul.f32.gmra.mxu0 %v604
    %v888 = vpop.f32.mrf.mxu0
    %v889 = vadd.f32 %v441, %v888
    %890 = vmatmul.f32.gmra.mxu0 %v607
    %v891 = vpop.f32.mrf.mxu0
    %v892 = vadd.f32 %v441, %v891
    %893 = vmatmul.f32.gmra.mxu0 %v610
    %v894 = vpop.f32.mrf.mxu0
    %v895 = vadd.f32 %v441, %v894
    %896 = vmatmul.f32.gmra.mxu0 %v613
    %v897 = vpop.f32.mrf.mxu0
    %v898 = vadd.f32 %v441, %v897
    %899 = vmatmul.f32.gmra.mxu0 %v616
    %v900 = vpop.f32.mrf.mxu0
    %v901 = vadd.f32 %v441, %v900
    %902 = vmatmul.f32.gmra.mxu0 %v619
    %v903 = vpop.f32.mrf.mxu0
    %v904 = vadd.f32 %v441, %v903
    %905 = vmatmul.f32.gmra.mxu0 %v622
    %v906 = vpop.f32.mrf.mxu0
    %v907 = vadd.f32 %v441, %v906
    %908 = vmatmul.f32.gmra.mxu0 %v625
    %v909 = vpop.f32.mrf.mxu0
    %v910 = vadd.f32 %v441, %v909
    %911 = vmatmul.f32.gmra.mxu0 %v628
    %v912 = vpop.f32.mrf.mxu0
    %v913 = vadd.f32 %v441, %v912
    %914 = vmatmul.f32.gmra.mxu0 %v631
    %v915 = vpop.f32.mrf.mxu0
    %v916 = vadd.f32 %v441, %v915
    %917 = vmatmul.f32.gmra.mxu0 %v634
    %v918 = vpop.f32.mrf.mxu0
    %v919 = vadd.f32 %v441, %v918
    %920 = vmatmul.f32.gmra.mxu0 %v637
    %v921 = vpop.f32.mrf.mxu0
    %v922 = vadd.f32 %v441, %v921
    %923 = vmatmul.f32.gmra.mxu0 %v640
    %v924 = vpop.f32.mrf.mxu0
    %v925 = vadd.f32 %v441, %v924
    %926 = vmatmul.f32.gmra.mxu0 %v643
    %v927 = vpop.f32.mrf.mxu0
    %v928 = vadd.f32 %v441, %v927
    %929 = vmatmul.f32.gmra.mxu0 %v646
    %v930 = vpop.f32.mrf.mxu0
    %v931 = vadd.f32 %v441, %v930
    %932 = vmatmul.f32.gmra.mxu0 %v649
    %v933 = vpop.f32.mrf.mxu0
    %v934 = vadd.f32 %v441, %v933
    %935 = vmatmul.f32.gmra.mxu0 %v652
    %v936 = vpop.f32.mrf.mxu0
    %v937 = vadd.f32 %v441, %v936
    %938 = vmatmul.f32.gmra.mxu0 %v655
    %v939 = vpop.f32.mrf.mxu0
    %v940 = vadd.f32 %v441, %v939
    %941 = vmatmul.f32.gmra.mxu0 %v658
    %v942 = vpop.f32.mrf.mxu0
    %v943 = vadd.f32 %v441, %v942
    %944 = vmatmul.f32.gmra.mxu0 %v661
    %v945 = vpop.f32.mrf.mxu0
    %v946 = vadd.f32 %v441, %v945
    %947 = vmatmul.f32.gmra.mxu0 %v664
    %v948 = vpop.f32.mrf.mxu0
    %v949 = vadd.f32 %v441, %v948
    %950 = vmatmul.f32.gmra.mxu0 %v667
    %v951 = vpop.f32.mrf.mxu0
    %v952 = vadd.f32 %v441, %v951
    %953 = vmatmul.f32.gmra.mxu0 %v670
    %v954 = vpop.f32.mrf.mxu0
    %v955 = vadd.f32 %v441, %v954
    %956 = vmatmul.f32.gmra.mxu0 %v673
    %v957 = vpop.f32.mrf.mxu0
    %v958 = vadd.f32 %v441, %v957
    %959 = vmatmul.f32.gmra.mxu0 %v676
    %v960 = vpop.f32.mrf.mxu0
    %v961 = vadd.f32 %v441, %v960
    %962 = vmatmul.f32.gmra.mxu0 %v679
    %v963 = vpop.f32.mrf.mxu0
    %v964 = vadd.f32 %v441, %v963
    %965 = vmatmul.f32.gmra.mxu0 %v682
    %v966 = vpop.f32.mrf.mxu0
    %v967 = vadd.f32 %v441, %v966
    %968 = vmatmul.f32.gmra.mxu0 %v685
    %v969 = vpop.f32.mrf.mxu0
    %v970 = vadd.f32 %v441, %v969
    %971 = vmatmul.f32.gmra.mxu0 %v688
    %v972 = vpop.f32.mrf.mxu0
    %v973 = vadd.f32 %v441, %v972
    %974 = vmatmul.f32.gmra.mxu0 %v691
    %v975 = vpop.f32.mrf.mxu0
    %v976 = vadd.f32 %v441, %v975
    %977 = vmatmul.f32.gmra.mxu0 %v694
    %v978 = vpop.f32.mrf.mxu0
    %v979 = vadd.f32 %v441, %v978
    %980 = vmatmul.f32.gmra.mxu0 %v697
    %v981 = vpop.f32.mrf.mxu0
    %v982 = vadd.f32 %v441, %v981
    %983 = vmatmul.f32.gmra.mxu0 %v700
    %v984 = vpop.f32.mrf.mxu0
    %v985 = vadd.f32 %v441, %v984
    %986 = vmatmul.f32.gmra.mxu0 %v703
    %v987 = vpop.f32.mrf.mxu0
    %v988 = vadd.f32 %v441, %v987
    %989 = vmatmul.f32.gmra.mxu0 %v706
    %v990 = vpop.f32.mrf.mxu0
    %v991 = vadd.f32 %v441, %v990
    %992 = vdwg.mxu0
    %v993 = vld [vmem:[#allocation12] sm:$0x3f]
    %v995 = vperm.slane %v993, 0
    %v996 = vperm.slane %v993, 1
    %v997 = vperm.slane %v993, 2
    %v998 = vperm.slane %v993, 3
    %v999 = vperm.slane %v993, 4
    %v1000 = vperm.slane %v993, 5
    %vm1006 = vcmask 523264
    %v1007 = vsel %vm1006, %v1000, 0
    %1009 = vmatpush.msra.mxu0 %v775
    %1010 = vmatpush.msra.mxu0 %v772
    %1011 = vmatpush.msra.mxu0 %v769
    %1012 = vmatpush.msra.mxu0 %v766
    %1013 = vmatpush.msra.mxu0 %v763
    %1014 = vmatpush.msra.mxu0 %v760
    %1015 = vmatpush.msra.mxu0 %v757
    %1016 = vmatpush.msra.mxu0 %v754
    %1017 = vmatpush.msra.mxu0 %v751
    %1018 = vmatpush.msra.mxu0 %v748
    %1019 = vmatpush.msra.mxu0 %v745
    %1020 = vmatpush.msra.mxu0 %v742
    %1021 = vmatpush.msra.mxu0 %v739
    %1022 = vmatpush.msra.mxu0 %v736
    %1023 = vmatpush.msra.mxu0 %v733
    %1024 = vmatpush.msra.mxu0 %v730
    %1025 = vmatmul.f32.gmra.mxu0 %v995
    %v1026 = vpop.f32.mrf.mxu0
    %v1027 = vadd.f32 0.0, %v1026
    %1028 = vdwg.mxu0
    %1029 = vmatpush.msra.mxu0 %v823
    %1030 = vmatpush.msra.mxu0 %v820
    %1031 = vmatpush.msra.mxu0 %v817
    %1032 = vmatpush.msra.mxu0 %v814
    %1033 = vmatpush.msra.mxu0 %v811
    %1034 = vmatpush.msra.mxu0 %v808
    %1035 = vmatpush.msra.mxu0 %v805
    %1036 = vmatpush.msra.mxu0 %v802
    %1037 = vmatpush.msra.mxu0 %v799
    %1038 = vmatpush.msra.mxu0 %v796
    %1039 = vmatpush.msra.mxu0 %v793
    %1040 = vmatpush.msra.mxu0 %v790
    %1041 = vmatpush.msra.mxu0 %v787
    %1042 = vmatpush.msra.mxu0 %v784
    %1043 = vmatpush.msra.mxu0 %v781
    %1044 = vmatpush.msra.mxu0 %v778
    %1045 = vmatmul.f32.gmra.mxu0 %v996
    %v1046 = vpop.f32.mrf.mxu0
    %v1047 = vadd.f32 %v1027, %v1046
    %1048 = vdwg.mxu0
    %1049 = vmatpush.msra.mxu0 %v871
    %1050 = vmatpush.msra.mxu0 %v868
    %1051 = vmatpush.msra.mxu0 %v865
    %1052 = vmatpush.msra.mxu0 %v862
    %1053 = vmatpush.msra.mxu0 %v859
    %1054 = vmatpush.msra.mxu0 %v856
    %1055 = vmatpush.msra.mxu0 %v853
    %1056 = vmatpush.msra.mxu0 %v850
    %1057 = vmatpush.msra.mxu0 %v847
    %1058 = vmatpush.msra.mxu0 %v844
    %1059 = vmatpush.msra.mxu0 %v841
    %1060 = vmatpush.msra.mxu0 %v838
    %1061 = vmatpush.msra.mxu0 %v835
    %1062 = vmatpush.msra.mxu0 %v832
    %1063 = vmatpush.msra.mxu0 %v829
    %1064 = vmatpush.msra.mxu0 %v826
    %1065 = vmatmul.f32.gmra.mxu0 %v997
    %v1066 = vpop.f32.mrf.mxu0
    %v1067 = vadd.f32 %v1047, %v1066
    %1068 = vdwg.mxu0
    %1069 = vmatpush.msra.mxu0 %v919
    %1070 = vmatpush.msra.mxu0 %v916
    %1071 = vmatpush.msra.mxu0 %v913
    %1072 = vmatpush.msra.mxu0 %v910
    %1073 = vmatpush.msra.mxu0 %v907
    %1074 = vmatpush.msra.mxu0 %v904
    %1075 = vmatpush.msra.mxu0 %v901
    %1076 = vmatpush.msra.mxu0 %v898
    %1077 = vmatpush.msra.mxu0 %v895
    %1078 = vmatpush.msra.mxu0 %v892
    %1079 = vmatpush.msra.mxu0 %v889
    %1080 = vmatpush.msra.mxu0 %v886
    %1081 = vmatpush.msra.mxu0 %v883
    %1082 = vmatpush.msra.mxu0 %v880
    %1083 = vmatpush.msra.mxu0 %v877
    %1084 = vmatpush.msra.mxu0 %v874
    %1085 = vmatmul.f32.gmra.mxu0 %v998
    %v1086 = vpop.f32.mrf.mxu0
    %v1087 = vadd.f32 %v1067, %v1086
    %1088 = vdwg.mxu0
    %1089 = vmatpush.msra.mxu0 %v967
    %1090 = vmatpush.msra.mxu0 %v964
    %1091 = vmatpush.msra.mxu0 %v961
    %1092 = vmatpush.msra.mxu0 %v958
    %1093 = vmatpush.msra.mxu0 %v955
    %1094 = vmatpush.msra.mxu0 %v952
    %1095 = vmatpush.msra.mxu0 %v949
    %1096 = vmatpush.msra.mxu0 %v946
    %1097 = vmatpush.msra.mxu0 %v943
    %1098 = vmatpush.msra.mxu0 %v940
    %1099 = vmatpush.msra.mxu0 %v937
    %1100 = vmatpush.msra.mxu0 %v934
    %1101 = vmatpush.msra.mxu0 %v931
    %1102 = vmatpush.msra.mxu0 %v928
    %1103 = vmatpush.msra.mxu0 %v925
    %1104 = vmatpush.msra.mxu0 %v922
    %1105 = vmatmul.f32.gmra.mxu0 %v999
    %v1106 = vpop.f32.mrf.mxu0
    %v1107 = vadd.f32 %v1087, %v1106
    %1108 = vdwg.mxu0
    %1109 = vmatpush.msra.mxu0 0.0
    %1110 = vmatpush.msra.mxu0 0.0
    %1111 = vmatpush.msra.mxu0 0.0
    %1112 = vmatpush.msra.mxu0 0.0
    %1113 = vmatpush.msra.mxu0 0.0
    %1114 = vmatpush.msra.mxu0 0.0
    %1115 = vmatpush.msra.mxu0 0.0
    %1116 = vmatpush.msra.mxu0 0.0
    %1117 = vmatpush.msra.mxu0 %v991
    %1118 = vmatpush.msra.mxu0 %v988
    %1119 = vmatpush.msra.mxu0 %v985
    %1120 = vmatpush.msra.mxu0 %v982
    %1121 = vmatpush.msra.mxu0 %v979
    %1122 = vmatpush.msra.mxu0 %v976
    %1123 = vmatpush.msra.mxu0 %v973
    %1124 = vmatpush.msra.mxu0 %v970
    %1125 = vmatmul.f32.gmra.mxu0 %v1007
    %v1126 = vpop.f32.mrf.mxu0
    %v1127 = vadd.f32 %v1107, %v1126
    %1128 = vdwg.mxu0
    %v1129 = vmul.f32 %v1127, 0.00147929
    %v1130 = vperm.slane %v1129, 0
    %v1131 = vsub.f32 %v730, %v1130
    %v1132 = vsub.f32 %v733, %v1130
    %v1133 = vsub.f32 %v736, %v1130
    %v1134 = vsub.f32 %v739, %v1130
    %v1135 = vsub.f32 %v742, %v1130
    %v1136 = vsub.f32 %v745, %v1130
    %v1137 = vsub.f32 %v748, %v1130
    %v1138 = vsub.f32 %v751, %v1130
    %v1139 = vsub.f32 %v754, %v1130
    %v1140 = vsub.f32 %v757, %v1130
    %v1141 = vsub.f32 %v760, %v1130
    %v1142 = vsub.f32 %v763, %v1130
    %v1143 = vsub.f32 %v766, %v1130
    %v1144 = vsub.f32 %v769, %v1130
    %v1145 = vsub.f32 %v772, %v1130
    %v1146 = vsub.f32 %v775, %v1130
    %v1147 = vsub.f32 %v778, %v1130
    %v1148 = vsub.f32 %v781, %v1130
    %v1149 = vsub.f32 %v784, %v1130
    %v1150 = vsub.f32 %v787, %v1130
    %v1151 = vsub.f32 %v790, %v1130
    %v1152 = vsub.f32 %v793, %v1130
    %v1153 = vsub.f32 %v796, %v1130
    %v1154 = vsub.f32 %v799, %v1130
    %v1155 = vsub.f32 %v802, %v1130
    %v1156 = vsub.f32 %v805, %v1130
    %v1157 = vsub.f32 %v808, %v1130
    %v1158 = vsub.f32 %v811, %v1130
    %v1159 = vsub.f32 %v814, %v1130
    %v1160 = vsub.f32 %v817, %v1130
    %v1161 = vsub.f32 %v820, %v1130
    %v1162 = vsub.f32 %v823, %v1130
    %v1163 = vsub.f32 %v826, %v1130
    %v1164 = vsub.f32 %v829, %v1130
    %v1165 = vsub.f32 %v832, %v1130
    %v1166 = vsub.f32 %v835, %v1130
    %v1167 = vsub.f32 %v838, %v1130
    %v1168 = vsub.f32 %v841, %v1130
    %v1169 = vsub.f32 %v844, %v1130
    %v1170 = vsub.f32 %v847, %v1130
    %v1171 = vsub.f32 %v850, %v1130
    %v1172 = vsub.f32 %v853, %v1130
    %v1173 = vsub.f32 %v856, %v1130
    %v1174 = vsub.f32 %v859, %v1130
    %v1175 = vsub.f32 %v862, %v1130
    %v1176 = vsub.f32 %v865, %v1130
    %v1177 = vsub.f32 %v868, %v1130
    %v1178 = vsub.f32 %v871, %v1130
    %v1179 = vsub.f32 %v874, %v1130
    %v1180 = vsub.f32 %v877, %v1130
    %v1181 = vsub.f32 %v880, %v1130
    %v1182 = vsub.f32 %v883, %v1130
    %v1183 = vsub.f32 %v886, %v1130
    %v1184 = vsub.f32 %v889, %v1130
    %v1185 = vsub.f32 %v892, %v1130
    %v1186 = vsub.f32 %v895, %v1130
    %v1187 = vsub.f32 %v898, %v1130
    %v1188 = vsub.f32 %v901, %v1130
    %v1189 = vsub.f32 %v904, %v1130
    %v1190 = vsub.f32 %v907, %v1130
    %v1191 = vsub.f32 %v910, %v1130
    %v1192 = vsub.f32 %v913, %v1130
    %v1193 = vsub.f32 %v916, %v1130
    %v1194 = vsub.f32 %v919, %v1130
    %v1195 = vsub.f32 %v922, %v1130
    %v1196 = vsub.f32 %v925, %v1130
    %v1197 = vsub.f32 %v928, %v1130
    %v1198 = vsub.f32 %v931, %v1130
    %v1199 = vsub.f32 %v934, %v1130
    %v1200 = vsub.f32 %v937, %v1130
    %v1201 = vsub.f32 %v940, %v1130
    %v1202 = vsub.f32 %v943, %v1130
    %v1203 = vsub.f32 %v946, %v1130
    %v1204 = vsub.f32 %v949, %v1130
    %v1205 = vsub.f32 %v952, %v1130
    %v1206 = vsub.f32 %v955, %v1130
    %v1207 = vsub.f32 %v958, %v1130
    %v1208 = vsub.f32 %v961, %v1130
    %v1209 = vsub.f32 %v964, %v1130
    %v1210 = vsub.f32 %v967, %v1130
    %v1211 = vsub.f32 %v970, %v1130
    %v1212 = vsub.f32 %v973, %v1130
    %v1213 = vsub.f32 %v976, %v1130
    %v1214 = vsub.f32 %v979, %v1130
    %v1215 = vsub.f32 %v982, %v1130
    %v1216 = vsub.f32 %v985, %v1130
    %v1217 = vsub.f32 %v988, %v1130
    %v1218 = vsub.f32 %v991, %v1130
    %v1219 = vmul.f32 %v1131, %v1131
    %v1220 = vmul.f32 %v1132, %v1132
    %v1221 = vmul.f32 %v1133, %v1133
    %v1222 = vmul.f32 %v1134, %v1134
    %v1223 = vmul.f32 %v1135, %v1135
    %v1224 = vmul.f32 %v1136, %v1136
    %v1225 = vmul.f32 %v1137, %v1137
    %v1226 = vmul.f32 %v1138, %v1138
    %v1227 = vmul.f32 %v1139, %v1139
    %v1228 = vmul.f32 %v1140, %v1140
    %v1229 = vmul.f32 %v1141, %v1141
    %v1230 = vmul.f32 %v1142, %v1142
    %v1231 = vmul.f32 %v1143, %v1143
    %v1232 = vmul.f32 %v1144, %v1144
    %v1233 = vmul.f32 %v1145, %v1145
    %v1234 = vmul.f32 %v1146, %v1146
    %v1235 = vmul.f32 %v1147, %v1147
    %v1236 = vmul.f32 %v1148, %v1148
    %v1237 = vmul.f32 %v1149, %v1149
    %v1238 = vmul.f32 %v1150, %v1150
    %v1239 = vmul.f32 %v1151, %v1151
    %v1240 = vmul.f32 %v1152, %v1152
    %v1241 = vmul.f32 %v1153, %v1153
    %v1242 = vmul.f32 %v1154, %v1154
    %v1243 = vmul.f32 %v1155, %v1155
    %v1244 = vmul.f32 %v1156, %v1156
    %v1245 = vmul.f32 %v1157, %v1157
    %v1246 = vmul.f32 %v1158, %v1158
    %v1247 = vmul.f32 %v1159, %v1159
    %v1248 = vmul.f32 %v1160, %v1160
    %v1249 = vmul.f32 %v1161, %v1161
    %v1250 = vmul.f32 %v1162, %v1162
    %v1251 = vmul.f32 %v1163, %v1163
    %v1252 = vmul.f32 %v1164, %v1164
    %v1253 = vmul.f32 %v1165, %v1165
    %v1254 = vmul.f32 %v1166, %v1166
    %v1255 = vmul.f32 %v1167, %v1167
    %v1256 = vmul.f32 %v1168, %v1168
    %v1257 = vmul.f32 %v1169, %v1169
    %v1258 = vmul.f32 %v1170, %v1170
    %v1259 = vmul.f32 %v1171, %v1171
    %v1260 = vmul.f32 %v1172, %v1172
    %v1261 = vmul.f32 %v1173, %v1173
    %v1262 = vmul.f32 %v1174, %v1174
    %v1263 = vmul.f32 %v1175, %v1175
    %v1264 = vmul.f32 %v1176, %v1176
    %v1265 = vmul.f32 %v1177, %v1177
    %v1266 = vmul.f32 %v1178, %v1178
    %v1267 = vmul.f32 %v1179, %v1179
    %v1268 = vmul.f32 %v1180, %v1180
    %v1269 = vmul.f32 %v1181, %v1181
    %v1270 = vmul.f32 %v1182, %v1182
    %v1271 = vmul.f32 %v1183, %v1183
    %v1272 = vmul.f32 %v1184, %v1184
    %v1273 = vmul.f32 %v1185, %v1185
    %v1274 = vmul.f32 %v1186, %v1186
    %v1275 = vmul.f32 %v1187, %v1187
    %v1276 = vmul.f32 %v1188, %v1188
    %v1277 = vmul.f32 %v1189, %v1189
    %v1278 = vmul.f32 %v1190, %v1190
    %v1279 = vmul.f32 %v1191, %v1191
    %v1280 = vmul.f32 %v1192, %v1192
    %v1281 = vmul.f32 %v1193, %v1193
    %v1282 = vmul.f32 %v1194, %v1194
    %v1283 = vmul.f32 %v1195, %v1195
    %v1284 = vmul.f32 %v1196, %v1196
    %v1285 = vmul.f32 %v1197, %v1197
    %v1286 = vmul.f32 %v1198, %v1198
    %v1287 = vmul.f32 %v1199, %v1199
    %v1288 = vmul.f32 %v1200, %v1200
    %v1289 = vmul.f32 %v1201, %v1201
    %v1290 = vmul.f32 %v1202, %v1202
    %v1291 = vmul.f32 %v1203, %v1203
    %v1292 = vmul.f32 %v1204, %v1204
    %v1293 = vmul.f32 %v1205, %v1205
    %v1294 = vmul.f32 %v1206, %v1206
    %v1295 = vmul.f32 %v1207, %v1207
    %v1296 = vmul.f32 %v1208, %v1208
    %v1297 = vmul.f32 %v1209, %v1209
    %v1298 = vmul.f32 %v1210, %v1210
    %v1299 = vmul.f32 %v1211, %v1211
    %v1300 = vmul.f32 %v1212, %v1212
    %v1301 = vmul.f32 %v1213, %v1213
    %v1302 = vmul.f32 %v1214, %v1214
    %v1303 = vmul.f32 %v1215, %v1215
    %v1304 = vmul.f32 %v1216, %v1216
    %v1305 = vmul.f32 %v1217, %v1217
    %v1306 = vmul.f32 %v1218, %v1218
    %1307 = vmatpush.msra.mxu0 %v1234
    %1308 = vmatpush.msra.mxu0 %v1233
    %1309 = vmatpush.msra.mxu0 %v1232
    %1310 = vmatpush.msra.mxu0 %v1231
    %1311 = vmatpush.msra.mxu0 %v1230
    %1312 = vmatpush.msra.mxu0 %v1229
    %1313 = vmatpush.msra.mxu0 %v1228
    %1314 = vmatpush.msra.mxu0 %v1227
    %1315 = vmatpush.msra.mxu0 %v1226
    %1316 = vmatpush.msra.mxu0 %v1225
    %1317 = vmatpush.msra.mxu0 %v1224
    %1318 = vmatpush.msra.mxu0 %v1223
    %1319 = vmatpush.msra.mxu0 %v1222
    %1320 = vmatpush.msra.mxu0 %v1221
    %1321 = vmatpush.msra.mxu0 %v1220
    %1322 = vmatpush.msra.mxu0 %v1219
    %1323 = vmatmul.f32.gmra.mxu0 %v995
    %v1324 = vpop.f32.mrf.mxu0
    %v1325 = vadd.f32 0.0, %v1324
    %1326 = vdwg.mxu0
    %1327 = vmatpush.msra.mxu0 %v1250
    %1328 = vmatpush.msra.mxu0 %v1249
    %1329 = vmatpush.msra.mxu0 %v1248
    %1330 = vmatpush.msra.mxu0 %v1247
    %1331 = vmatpush.msra.mxu0 %v1246
    %1332 = vmatpush.msra.mxu0 %v1245
    %1333 = vmatpush.msra.mxu0 %v1244
    %1334 = vmatpush.msra.mxu0 %v1243
    %1335 = vmatpush.msra.mxu0 %v1242
    %1336 = vmatpush.msra.mxu0 %v1241
    %1337 = vmatpush.msra.mxu0 %v1240
    %1338 = vmatpush.msra.mxu0 %v1239
    %1339 = vmatpush.msra.mxu0 %v1238
    %1340 = vmatpush.msra.mxu0 %v1237
    %1341 = vmatpush.msra.mxu0 %v1236
    %1342 = vmatpush.msra.mxu0 %v1235
    %1343 = vmatmul.f32.gmra.mxu0 %v996
    %v1344 = vpop.f32.mrf.mxu0
    %v1345 = vadd.f32 %v1325, %v1344
    %1346 = vdwg.mxu0
    %1347 = vmatpush.msra.mxu0 %v1266
    %1348 = vmatpush.msra.mxu0 %v1265
    %1349 = vmatpush.msra.mxu0 %v1264
    %1350 = vmatpush.msra.mxu0 %v1263
    %1351 = vmatpush.msra.mxu0 %v1262
    %1352 = vmatpush.msra.mxu0 %v1261
    %1353 = vmatpush.msra.mxu0 %v1260
    %1354 = vmatpush.msra.mxu0 %v1259
    %1355 = vmatpush.msra.mxu0 %v1258
    %1356 = vmatpush.msra.mxu0 %v1257
    %1357 = vmatpush.msra.mxu0 %v1256
    %1358 = vmatpush.msra.mxu0 %v1255
    %1359 = vmatpush.msra.mxu0 %v1254
    %1360 = vmatpush.msra.mxu0 %v1253
    %1361 = vmatpush.msra.mxu0 %v1252
    %1362 = vmatpush.msra.mxu0 %v1251
    %1363 = vmatmul.f32.gmra.mxu0 %v997
    %v1364 = vpop.f32.mrf.mxu0
    %v1365 = vadd.f32 %v1345, %v1364
    %1366 = vdwg.mxu0
    %1367 = vmatpush.msra.mxu0 %v1282
    %1368 = vmatpush.msra.mxu0 %v1281
    %1369 = vmatpush.msra.mxu0 %v1280
    %1370 = vmatpush.msra.mxu0 %v1279
    %1371 = vmatpush.msra.mxu0 %v1278
    %1372 = vmatpush.msra.mxu0 %v1277
    %1373 = vmatpush.msra.mxu0 %v1276
    %1374 = vmatpush.msra.mxu0 %v1275
    %1375 = vmatpush.msra.mxu0 %v1274
    %1376 = vmatpush.msra.mxu0 %v1273
    %1377 = vmatpush.msra.mxu0 %v1272
    %1378 = vmatpush.msra.mxu0 %v1271
    %1379 = vmatpush.msra.mxu0 %v1270
    %1380 = vmatpush.msra.mxu0 %v1269
    %1381 = vmatpush.msra.mxu0 %v1268
    %1382 = vmatpush.msra.mxu0 %v1267
    %1383 = vmatmul.f32.gmra.mxu0 %v998
    %v1384 = vpop.f32.mrf.mxu0
    %v1385 = vadd.f32 %v1365, %v1384
    %1386 = vdwg.mxu0
    %1387 = vmatpush.msra.mxu0 %v1298
    %1388 = vmatpush.msra.mxu0 %v1297
    %1389 = vmatpush.msra.mxu0 %v1296
    %1390 = vmatpush.msra.mxu0 %v1295
    %1391 = vmatpush.msra.mxu0 %v1294
    %1392 = vmatpush.msra.mxu0 %v1293
    %1393 = vmatpush.msra.mxu0 %v1292
    %1394 = vmatpush.msra.mxu0 %v1291
    %1395 = vmatpush.msra.mxu0 %v1290
    %1396 = vmatpush.msra.mxu0 %v1289
    %1397 = vmatpush.msra.mxu0 %v1288
    %1398 = vmatpush.msra.mxu0 %v1287
    %1399 = vmatpush.msra.mxu0 %v1286
    %1400 = vmatpush.msra.mxu0 %v1285
    %1401 = vmatpush.msra.mxu0 %v1284
    %1402 = vmatpush.msra.mxu0 %v1283
    %1403 = vmatmul.f32.gmra.mxu0 %v999
    %v1404 = vpop.f32.mrf.mxu0
    %v1405 = vadd.f32 %v1385, %v1404
    %1406 = vdwg.mxu0
    %1407 = vmatpush.msra.mxu0 0.0
    %1408 = vmatpush.msra.mxu0 0.0
    %1409 = vmatpush.msra.mxu0 0.0
    %1410 = vmatpush.msra.mxu0 0.0
    %1411 = vmatpush.msra.mxu0 0.0
    %1412 = vmatpush.msra.mxu0 0.0
    %1413 = vmatpush.msra.mxu0 0.0
    %1414 = vmatpush.msra.mxu0 0.0
    %1415 = vmatpush.msra.mxu0 %v1306
    %1416 = vmatpush.msra.mxu0 %v1305
    %1417 = vmatpush.msra.mxu0 %v1304
    %1418 = vmatpush.msra.mxu0 %v1303
    %1419 = vmatpush.msra.mxu0 %v1302
    %1420 = vmatpush.msra.mxu0 %v1301
    %1421 = vmatpush.msra.mxu0 %v1300
    %1422 = vmatpush.msra.mxu0 %v1299
    %1423 = vmatmul.f32.gmra.mxu0 %v1007
    %v1424 = vpop.f32.mrf.mxu0
    %v1425 = vadd.f32 %v1405, %v1424
    %1426 = vdwg.mxu0
    %v1427 = vmul.f32 %v1425, 0.00147929
    %v1428 = vadd.f32 %v1427, 1e-05
    %v1429 = vrsqrt.pop %v1428
    %v1430 = vmul.f32 %v1429, %v1428
    %v1431 = vmul.f32 %v1430, %v1429
    %v1432 = vmul.f32 0.5, %v1431
    %v1433 = vsub.f32 1.5, %v1432
    %v1434 = vmul.f32 %v1429, %v1433
    %vm1435 = vweird.f32 %v1428
    %vm1436 = vweird.f32 %v1429
    %vm1437 = vmor %vm1435, %vm1436
    %v1438 = vsel %vm1437, %v1429, %v1434
    %v1439 = vperm.slane %v1438, 0
    %v1440 = vmul.f32 %v1131, %v1439
    %v1441 = vmul.f32 %v1132, %v1439
    %v1442 = vmul.f32 %v1133, %v1439
    %v1443 = vmul.f32 %v1134, %v1439
    %v1444 = vmul.f32 %v1135, %v1439
    %v1445 = vmul.f32 %v1136, %v1439
    %v1446 = vmul.f32 %v1137, %v1439
    %v1447 = vmul.f32 %v1138, %v1439
    %v1448 = vmul.f32 %v1139, %v1439
    %v1449 = vmul.f32 %v1140, %v1439
    %v1450 = vmul.f32 %v1141, %v1439
    %v1451 = vmul.f32 %v1142, %v1439
    %v1452 = vmul.f32 %v1143, %v1439
    %v1453 = vmul.f32 %v1144, %v1439
    %v1454 = vmul.f32 %v1145, %v1439
    %v1455 = vmul.f32 %v1146, %v1439
    %v1456 = vmul.f32 %v1147, %v1439
    %v1457 = vmul.f32 %v1148, %v1439
    %v1458 = vmul.f32 %v1149, %v1439
    %v1459 = vmul.f32 %v1150, %v1439
    %v1460 = vmul.f32 %v1151, %v1439
    %v1461 = vmul.f32 %v1152, %v1439
    %v1462 = vmul.f32 %v1153, %v1439
    %v1463 = vmul.f32 %v1154, %v1439
    %v1464 = vmul.f32 %v1155, %v1439
    %v1465 = vmul.f32 %v1156, %v1439
    %v1466 = vmul.f32 %v1157, %v1439
    %v1467 = vmul.f32 %v1158, %v1439
    %v1468 = vmul.f32 %v1159, %v1439
    %v1469 = vmul.f32 %v1160, %v1439
    %v1470 = vmul.f32 %v1161, %v1439
    %v1471 = vmul.f32 %v1162, %v1439
    %v1472 = vmul.f32 %v1163, %v1439
    %v1473 = vmul.f32 %v1164, %v1439
    %v1474 = vmul.f32 %v1165, %v1439
    %v1475 = vmul.f32 %v1166, %v1439
    %v1476 = vmul.f32 %v1167, %v1439
    %v1477 = vmul.f32 %v1168, %v1439
    %v1478 = vmul.f32 %v1169, %v1439
    %v1479 = vmul.f32 %v1170, %v1439
    %v1480 = vmul.f32 %v1171, %v1439
    %v1481 = vmul.f32 %v1172, %v1439
    %v1482 = vmul.f32 %v1173, %v1439
    %v1483 = vmul.f32 %v1174, %v1439
    %v1484 = vmul.f32 %v1175, %v1439
    %v1485 = vmul.f32 %v1176, %v1439
    %v1486 = vmul.f32 %v1177, %v1439
    %v1487 = vmul.f32 %v1178, %v1439
    %v1488 = vmul.f32 %v1179, %v1439
    %v1489 = vmul.f32 %v1180, %v1439
    %v1490 = vmul.f32 %v1181, %v1439
    %v1491 = vmul.f32 %v1182, %v1439
    %v1492 = vmul.f32 %v1183, %v1439
    %v1493 = vmul.f32 %v1184, %v1439
    %v1494 = vmul.f32 %v1185, %v1439
    %v1495 = vmul.f32 %v1186, %v1439
    %v1496 = vmul.f32 %v1187, %v1439
    %v1497 = vmul.f32 %v1188, %v1439
    %v1498 = vmul.f32 %v1189, %v1439
    %v1499 = vmul.f32 %v1190, %v1439
    %v1500 = vmul.f32 %v1191, %v1439
    %v1501 = vmul.f32 %v1192, %v1439
    %v1502 = vmul.f32 %v1193, %v1439
    %v1503 = vmul.f32 %v1194, %v1439
    %v1504 = vmul.f32 %v1195, %v1439
    %v1505 = vmul.f32 %v1196, %v1439
    %v1506 = vmul.f32 %v1197, %v1439
    %v1507 = vmul.f32 %v1198, %v1439
    %v1508 = vmul.f32 %v1199, %v1439
    %v1509 = vmul.f32 %v1200, %v1439
    %v1510 = vmul.f32 %v1201, %v1439
    %v1511 = vmul.f32 %v1202, %v1439
    %v1512 = vmul.f32 %v1203, %v1439
    %v1513 = vmul.f32 %v1204, %v1439
    %v1514 = vmul.f32 %v1205, %v1439
    %v1515 = vmul.f32 %v1206, %v1439
    %v1516 = vmul.f32 %v1207, %v1439
    %v1517 = vmul.f32 %v1208, %v1439
    %v1518 = vmul.f32 %v1209, %v1439
    %v1519 = vmul.f32 %v1210, %v1439
    %v1520 = vmul.f32 %v1211, %v1439
    %v1521 = vmul.f32 %v1212, %v1439
    %v1522 = vmul.f32 %v1213, %v1439
    %v1523 = vmul.f32 %v1214, %v1439
    %v1524 = vmul.f32 %v1215, %v1439
    %v1525 = vmul.f32 %v1216, %v1439
    %v1526 = vmul.f32 %v1217, %v1439
    %v1527 = vmul.f32 %v1218, %v1439
    %v1528 = vld [vmem:[#allocation9] sm:$0x1]
    %v1530 = vperm.slane %v1528, 0
    %v1532 = vmul.f32 %v1440, %v1530
    %v1533 = vmul.f32 %v1441, %v1530
    %v1534 = vmul.f32 %v1442, %v1530
    %v1535 = vmul.f32 %v1443, %v1530
    %v1536 = vmul.f32 %v1444, %v1530
    %v1537 = vmul.f32 %v1445, %v1530
    %v1538 = vmul.f32 %v1446, %v1530
    %v1539 = vmul.f32 %v1447, %v1530
    %v1540 = vmul.f32 %v1448, %v1530
    %v1541 = vmul.f32 %v1449, %v1530
    %v1542 = vmul.f32 %v1450, %v1530
    %v1543 = vmul.f32 %v1451, %v1530
    %v1544 = vmul.f32 %v1452, %v1530
    %v1545 = vmul.f32 %v1453, %v1530
    %v1546 = vmul.f32 %v1454, %v1530
    %v1547 = vmul.f32 %v1455, %v1530
    %v1548 = vmul.f32 %v1456, %v1530
    %v1549 = vmul.f32 %v1457, %v1530
    %v1550 = vmul.f32 %v1458, %v1530
    %v1551 = vmul.f32 %v1459, %v1530
    %v1552 = vmul.f32 %v1460, %v1530
    %v1553 = vmul.f32 %v1461, %v1530
    %v1554 = vmul.f32 %v1462, %v1530
    %v1555 = vmul.f32 %v1463, %v1530
    %v1556 = vmul.f32 %v1464, %v1530
    %v1557 = vmul.f32 %v1465, %v1530
    %v1558 = vmul.f32 %v1466, %v1530
    %v1559 = vmul.f32 %v1467, %v1530
    %v1560 = vmul.f32 %v1468, %v1530
    %v1561 = vmul.f32 %v1469, %v1530
    %v1562 = vmul.f32 %v1470, %v1530
    %v1563 = vmul.f32 %v1471, %v1530
    %v1564 = vmul.f32 %v1472, %v1530
    %v1565 = vmul.f32 %v1473, %v1530
    %v1566 = vmul.f32 %v1474, %v1530
    %v1567 = vmul.f32 %v1475, %v1530
    %v1568 = vmul.f32 %v1476, %v1530
    %v1569 = vmul.f32 %v1477, %v1530
    %v1570 = vmul.f32 %v1478, %v1530
    %v1571 = vmul.f32 %v1479, %v1530
    %v1572 = vmul.f32 %v1480, %v1530
    %v1573 = vmul.f32 %v1481, %v1530
    %v1574 = vmul.f32 %v1482, %v1530
    %v1575 = vmul.f32 %v1483, %v1530
    %v1576 = vmul.f32 %v1484, %v1530
    %v1577 = vmul.f32 %v1485, %v1530
    %v1578 = vmul.f32 %v1486, %v1530
    %v1579 = vmul.f32 %v1487, %v1530
    %v1580 = vmul.f32 %v1488, %v1530
    %v1581 = vmul.f32 %v1489, %v1530
    %v1582 = vmul.f32 %v1490, %v1530
    %v1583 = vmul.f32 %v1491, %v1530
    %v1584 = vmul.f32 %v1492, %v1530
    %v1585 = vmul.f32 %v1493, %v1530
    %v1586 = vmul.f32 %v1494, %v1530
    %v1587 = vmul.f32 %v1495, %v1530
    %v1588 = vmul.f32 %v1496, %v1530
    %v1589 = vmul.f32 %v1497, %v1530
    %v1590 = vmul.f32 %v1498, %v1530
    %v1591 = vmul.f32 %v1499, %v1530
    %v1592 = vmul.f32 %v1500, %v1530
    %v1593 = vmul.f32 %v1501, %v1530
    %v1594 = vmul.f32 %v1502, %v1530
    %v1595 = vmul.f32 %v1503, %v1530
    %v1596 = vmul.f32 %v1504, %v1530
    %v1597 = vmul.f32 %v1505, %v1530
    %v1598 = vmul.f32 %v1506, %v1530
    %v1599 = vmul.f32 %v1507, %v1530
    %v1600 = vmul.f32 %v1508, %v1530
    %v1601 = vmul.f32 %v1509, %v1530
    %v1602 = vmul.f32 %v1510, %v1530
    %v1603 = vmul.f32 %v1511, %v1530
    %v1604 = vmul.f32 %v1512, %v1530
    %v1605 = vmul.f32 %v1513, %v1530
    %v1606 = vmul.f32 %v1514, %v1530
    %v1607 = vmul.f32 %v1515, %v1530
    %v1608 = vmul.f32 %v1516, %v1530
    %v1609 = vmul.f32 %v1517, %v1530
    %v1610 = vmul.f32 %v1518, %v1530
    %v1611 = vmul.f32 %v1519, %v1530
    %v1612 = vmul.f32 %v1520, %v1530
    %v1613 = vmul.f32 %v1521, %v1530
    %v1614 = vmul.f32 %v1522, %v1530
    %v1615 = vmul.f32 %v1523, %v1530
    %v1616 = vmul.f32 %v1524, %v1530
    %v1617 = vmul.f32 %v1525, %v1530
    %v1618 = vmul.f32 %v1526, %v1530
    %v1619 = vmul.f32 %v1527, %v1530
    %v1620 = vld [vmem:[#allocation10] sm:$0x1]
    %v1622 = vperm.slane %v1620, 0
    %v1624 = vadd.f32 %v1532, %v1622
    %v1625 = vadd.f32 %v1533, %v1622
    %v1626 = vadd.f32 %v1534, %v1622
    %v1627 = vadd.f32 %v1535, %v1622
    %v1628 = vadd.f32 %v1536, %v1622
    %v1629 = vadd.f32 %v1537, %v1622
    %v1630 = vadd.f32 %v1538, %v1622
    %v1631 = vadd.f32 %v1539, %v1622
    %v1632 = vadd.f32 %v1540, %v1622
    %v1633 = vadd.f32 %v1541, %v1622
    %v1634 = vadd.f32 %v1542, %v1622
    %v1635 = vadd.f32 %v1543, %v1622
    %v1636 = vadd.f32 %v1544, %v1622
    %v1637 = vadd.f32 %v1545, %v1622
    %v1638 = vadd.f32 %v1546, %v1622
    %v1639 = vadd.f32 %v1547, %v1622
    %v1640 = vadd.f32 %v1548, %v1622
    %v1641 = vadd.f32 %v1549, %v1622
    %v1642 = vadd.f32 %v1550, %v1622
    %v1643 = vadd.f32 %v1551, %v1622
    %v1644 = vadd.f32 %v1552, %v1622
    %v1645 = vadd.f32 %v1553, %v1622
    %v1646 = vadd.f32 %v1554, %v1622
    %v1647 = vadd.f32 %v1555, %v1622
    %v1648 = vadd.f32 %v1556, %v1622
    %v1649 = vadd.f32 %v1557, %v1622
    %v1650 = vadd.f32 %v1558, %v1622
    %v1651 = vadd.f32 %v1559, %v1622
    %v1652 = vadd.f32 %v1560, %v1622
    %v1653 = vadd.f32 %v1561, %v1622
    %v1654 = vadd.f32 %v1562, %v1622
    %v1655 = vadd.f32 %v1563, %v1622
    %v1656 = vadd.f32 %v1564, %v1622
    %v1657 = vadd.f32 %v1565, %v1622
    %v1658 = vadd.f32 %v1566, %v1622
    %v1659 = vadd.f32 %v1567, %v1622
    %v1660 = vadd.f32 %v1568, %v1622
    %v1661 = vadd.f32 %v1569, %v1622
    %v1662 = vadd.f32 %v1570, %v1622
    %v1663 = vadd.f32 %v1571, %v1622
    %v1664 = vadd.f32 %v1572, %v1622
    %v1665 = vadd.f32 %v1573, %v1622
    %v1666 = vadd.f32 %v1574, %v1622
    %v1667 = vadd.f32 %v1575, %v1622
    %v1668 = vadd.f32 %v1576, %v1622
    %v1669 = vadd.f32 %v1577, %v1622
    %v1670 = vadd.f32 %v1578, %v1622
    %v1671 = vadd.f32 %v1579, %v1622
    %v1672 = vadd.f32 %v1580, %v1622
    %v1673 = vadd.f32 %v1581, %v1622
    %v1674 = vadd.f32 %v1582, %v1622
    %v1675 = vadd.f32 %v1583, %v1622
    %v1676 = vadd.f32 %v1584, %v1622
    %v1677 = vadd.f32 %v1585, %v1622
    %v1678 = vadd.f32 %v1586, %v1622
    %v1679 = vadd.f32 %v1587, %v1622
    %v1680 = vadd.f32 %v1588, %v1622
    %v1681 = vadd.f32 %v1589, %v1622
    %v1682 = vadd.f32 %v1590, %v1622
    %v1683 = vadd.f32 %v1591, %v1622
    %v1684 = vadd.f32 %v1592, %v1622
    %v1685 = vadd.f32 %v1593, %v1622
    %v1686 = vadd.f32 %v1594, %v1622
    %v1687 = vadd.f32 %v1595, %v1622
    %v1688 = vadd.f32 %v1596, %v1622
    %v1689 = vadd.f32 %v1597, %v1622
    %v1690 = vadd.f32 %v1598, %v1622
    %v1691 = vadd.f32 %v1599, %v1622
    %v1692 = vadd.f32 %v1600, %v1622
    %v1693 = vadd.f32 %v1601, %v1622
    %v1694 = vadd.f32 %v1602, %v1622
    %v1695 = vadd.f32 %v1603, %v1622
    %v1696 = vadd.f32 %v1604, %v1622
    %v1697 = vadd.f32 %v1605, %v1622
    %v1698 = vadd.f32 %v1606, %v1622
    %v1699 = vadd.f32 %v1607, %v1622
    %v1700 = vadd.f32 %v1608, %v1622
    %v1701 = vadd.f32 %v1609, %v1622
    %v1702 = vadd.f32 %v1610, %v1622
    %v1703 = vadd.f32 %v1611, %v1622
    %v1704 = vadd.f32 %v1612, %v1622
    %v1705 = vadd.f32 %v1613, %v1622
    %v1706 = vadd.f32 %v1614, %v1622
    %v1707 = vadd.f32 %v1615, %v1622
    %v1708 = vadd.f32 %v1616, %v1622
    %v1709 = vadd.f32 %v1617, %v1622
    %v1710 = vadd.f32 %v1618, %v1622
    %v1711 = vadd.f32 %v1619, %v1622
    %v1712 = vmax.f32 %v1624, 0.0
    %v1713 = vmax.f32 %v1625, 0.0
    %v1714 = vmax.f32 %v1626, 0.0
    %v1715 = vmax.f32 %v1627, 0.0
    %v1716 = vmax.f32 %v1628, 0.0
    %v1717 = vmax.f32 %v1629, 0.0
    %v1718 = vmax.f32 %v1630, 0.0
    %v1719 = vmax.f32 %v1631, 0.0
    %v1720 = vmax.f32 %v1632, 0.0
    %v1721 = vmax.f32 %v1633, 0.0
    %v1722 = vmax.f32 %v1634, 0.0
    %v1723 = vmax.f32 %v1635, 0.0
    %v1724 = vmax.f32 %v1636, 0.0
    %v1725 = vmax.f32 %v1637, 0.0
    %v1726 = vmax.f32 %v1638, 0.0
    %v1727 = vmax.f32 %v1639, 0.0
    %v1728 = vmax.f32 %v1640, 0.0
    %v1729 = vmax.f32 %v1641, 0.0
    %v1730 = vmax.f32 %v1642, 0.0
    %v1731 = vmax.f32 %v1643, 0.0
    %v1732 = vmax.f32 %v1644, 0.0
    %v1733 = vmax.f32 %v1645, 0.0
    %v1734 = vmax.f32 %v1646, 0.0
    %v1735 = vmax.f32 %v1647, 0.0
    %v1736 = vmax.f32 %v1648, 0.0
    %v1737 = vmax.f32 %v1649, 0.0
    %v1738 = vmax.f32 %v1650, 0.0
    %v1739 = vmax.f32 %v1651, 0.0
    %v1740 = vmax.f32 %v1652, 0.0
    %v1741 = vmax.f32 %v1653, 0.0
    %v1742 = vmax.f32 %v1654, 0.0
    %v1743 = vmax.f32 %v1655, 0.0
    %v1744 = vmax.f32 %v1656, 0.0
    %v1745 = vmax.f32 %v1657, 0.0
    %v1746 = vmax.f32 %v1658, 0.0
    %v1747 = vmax.f32 %v1659, 0.0
    %v1748 = vmax.f32 %v1660, 0.0
    %v1749 = vmax.f32 %v1661, 0.0
    %v1750 = vmax.f32 %v1662, 0.0
    %v1751 = vmax.f32 %v1663, 0.0
    %v1752 = vmax.f32 %v1664, 0.0
    %v1753 = vmax.f32 %v1665, 0.0
    %v1754 = vmax.f32 %v1666, 0.0
    %v1755 = vmax.f32 %v1667, 0.0
    %v1756 = vmax.f32 %v1668, 0.0
    %v1757 = vmax.f32 %v1669, 0.0
    %v1758 = vmax.f32 %v1670, 0.0
    %v1759 = vmax.f32 %v1671, 0.0
    %v1760 = vmax.f32 %v1672, 0.0
    %v1761 = vmax.f32 %v1673, 0.0
    %v1762 = vmax.f32 %v1674, 0.0
    %v1763 = vmax.f32 %v1675, 0.0
    %v1764 = vmax.f32 %v1676, 0.0
    %v1765 = vmax.f32 %v1677, 0.0
    %v1766 = vmax.f32 %v1678, 0.0
    %v1767 = vmax.f32 %v1679, 0.0
    %v1768 = vmax.f32 %v1680, 0.0
    %v1769 = vmax.f32 %v1681, 0.0
    %v1770 = vmax.f32 %v1682, 0.0
    %v1771 = vmax.f32 %v1683, 0.0
    %v1772 = vmax.f32 %v1684, 0.0
    %v1773 = vmax.f32 %v1685, 0.0
    %v1774 = vmax.f32 %v1686, 0.0
    %v1775 = vmax.f32 %v1687, 0.0
    %v1776 = vmax.f32 %v1688, 0.0
    %v1777 = vmax.f32 %v1689, 0.0
    %v1778 = vmax.f32 %v1690, 0.0
    %v1779 = vmax.f32 %v1691, 0.0
    %v1780 = vmax.f32 %v1692, 0.0
    %v1781 = vmax.f32 %v1693, 0.0
    %v1782 = vmax.f32 %v1694, 0.0
    %v1783 = vmax.f32 %v1695, 0.0
    %v1784 = vmax.f32 %v1696, 0.0
    %v1785 = vmax.f32 %v1697, 0.0
    %v1786 = vmax.f32 %v1698, 0.0
    %v1787 = vmax.f32 %v1699, 0.0
    %v1788 = vmax.f32 %v1700, 0.0
    %v1789 = vmax.f32 %v1701, 0.0
    %v1790 = vmax.f32 %v1702, 0.0
    %v1791 = vmax.f32 %v1703, 0.0
    %v1792 = vmax.f32 %v1704, 0.0
    %v1793 = vmax.f32 %v1705, 0.0
    %v1794 = vmax.f32 %v1706, 0.0
    %v1795 = vmax.f32 %v1707, 0.0
    %v1796 = vmax.f32 %v1708, 0.0
    %v1797 = vmax.f32 %v1709, 0.0
    %v1798 = vmax.f32 %v1710, 0.0
    %v1799 = vmax.f32 %v1711, 0.0
    %v1800 = vmax.f32 %v1712, %v1734
    %v1801 = vmax.f32 %v1713, %v1735
    %v1802 = vmax.f32 %v1714, %v1736
    %v1803 = vmax.f32 %v1715, %v1737
    %v1804 = vmax.f32 %v1716, %v1738
    %v1805 = vmax.f32 %v1717, %v1739
    %v1806 = vmax.f32 %v1718, %v1740
    %v1807 = vmax.f32 %v1719, %v1741
    %v1808 = vmax.f32 %v1720, %v1742
    %v1809 = vmax.f32 %v1721, %v1743
    %v1810 = vmax.f32 %v1722, %v1744
    %v1811 = vmax.f32 %v1723, %v1745
    %v1812 = vmax.f32 %v1724, %v1746
    %v1813 = vmax.f32 %v1725, %v1747
    %v1814 = vmax.f32 %v1726, %v1748
    %v1815 = vmax.f32 %v1727, %v1749
    %v1816 = vmax.f32 %v1728, %v1750
    %v1817 = vmax.f32 %v1729, %v1751
    %v1818 = vmax.f32 %v1730, %v1752
    %v1819 = vmax.f32 %v1731, %v1753
    %v1820 = vmax.f32 %v1732, %v1754
    %v1821 = vmax.f32 %v1733, %v1755
    %v1822 = vmax.f32 %v1756, %v1778
    %v1823 = vmax.f32 %v1757, %v1779
    %v1824 = vmax.f32 %v1758, %v1780
    %v1825 = vmax.f32 %v1759, %v1781
    %v1826 = vmax.f32 %v1760, %v1782
    %v1827 = vmax.f32 %v1761, %v1783
    %v1828 = vmax.f32 %v1762, %v1784
    %v1829 = vmax.f32 %v1763, %v1785
    %v1830 = vmax.f32 %v1764, %v1786
    %v1831 = vmax.f32 %v1765, %v1787
    %v1832 = vmax.f32 %v1766, %v1788
    %v1833 = vmax.f32 %v1767, %v1789
    %v1834 = vmax.f32 %v1768, %v1790
    %v1835 = vmax.f32 %v1769, %v1791
    %v1836 = vmax.f32 %v1770, %v1792
    %v1837 = vmax.f32 %v1771, %v1793
    %v1838 = vmax.f32 %v1772, %v1794
    %v1839 = vmax.f32 %v1773, %v1795
    %v1840 = vmax.f32 %v1774, %v1796
    %v1841 = vmax.f32 %v1775, %v1797
    %v1842 = vmax.f32 %v1776, %v1798
    %v1843 = vmax.f32 %v1777, %v1799
    %v1844 = vmax.f32 %v1800, %v1822
    %v1845 = vmax.f32 %v1801, %v1823
    %v1846 = vmax.f32 %v1802, %v1824
    %v1847 = vmax.f32 %v1803, %v1825
    %v1848 = vmax.f32 %v1804, %v1826
    %v1849 = vmax.f32 %v1805, %v1827
    %v1850 = vmax.f32 %v1806, %v1828
    %v1851 = vmax.f32 %v1807, %v1829
    %v1852 = vmax.f32 %v1808, %v1830
    %v1853 = vmax.f32 %v1809, %v1831
    %v1854 = vmax.f32 %v1810, %v1832
    %v1855 = vmax.f32 %v1811, %v1833
    %v1856 = vmax.f32 %v1812, %v1834
    %v1857 = vmax.f32 %v1813, %v1835
    %v1858 = vmax.f32 %v1814, %v1836
    %v1859 = vmax.f32 %v1815, %v1837
    %v1860 = vmax.f32 %v1816, %v1838
    %v1861 = vmax.f32 %v1817, %v1839
    %v1862 = vmax.f32 %v1818, %v1840
    %v1863 = vmax.f32 %v1819, %v1841
    %v1864 = vmax.f32 %v1820, %v1842
    %v1865 = vmax.f32 %v1821, %v1843
    %v1866 = vld [vmem:[#allocation13] sm:$0xff]
    %v1867 = vld [vmem:[#allocation13 + $0x8] sm:$0xff]
    %v1868 = vld [vmem:[#allocation13 + $0x10] sm:$0xff]
    %v1869 = vld [vmem:[#allocation13 + $0x18] sm:$0x1]
    %s1870 = scalar_lea.vmem [#allocation13], 32
    %v1871 = vld [vmem:[%s1870] sm:$0xff]
    %v1872 = vld [vmem:[%s1870 + $0x8] sm:$0xff]
    %v1873 = vld [vmem:[%s1870 + $0x10] sm:$0xff]
    %v1874 = vld [vmem:[%s1870 + $0x18] sm:$0x1]
    %vm1893 = vcmask 1046528
    %v1894 = vrot.slane %v1844, 1
    %v1895 = vrot.slane %v1845, 1
    %v1896 = vsel %vm1893, %v1894, %v1895
    %v1897 = vrot.slane %v1846, 1
    %v1898 = vsel %vm1893, %v1895, %v1897
    %v1899 = vrot.slane %v1847, 1
    %v1900 = vsel %vm1893, %v1897, %v1899
    %v1901 = vrot.slane %v1848, 1
    %v1902 = vsel %vm1893, %v1899, %v1901
    %v1903 = vrot.slane %v1849, 1
    %v1904 = vsel %vm1893, %v1901, %v1903
    %v1905 = vrot.slane %v1850, 1
    %v1906 = vsel %vm1893, %v1903, %v1905
    %v1907 = vrot.slane %v1851, 1
    %v1908 = vsel %vm1893, %v1905, %v1907
    %v1909 = vrot.slane %v1852, 1
    %v1910 = vsel %vm1893, %v1907, %v1909
    %v1911 = vrot.slane %v1853, 1
    %v1912 = vsel %vm1893, %v1909, %v1911
    %v1913 = vrot.slane %v1854, 1
    %v1914 = vsel %vm1893, %v1911, %v1913
    %v1915 = vrot.slane %v1855, 1
    %v1916 = vsel %vm1893, %v1913, %v1915
    %v1917 = vrot.slane %v1856, 1
    %v1918 = vsel %vm1893, %v1915, %v1917
    %v1919 = vrot.slane %v1857, 1
    %v1920 = vsel %vm1893, %v1917, %v1919
    %v1921 = vrot.slane %v1858, 1
    %v1922 = vsel %vm1893, %v1919, %v1921
    %v1923 = vrot.slane %v1859, 1
    %v1924 = vsel %vm1893, %v1921, %v1923
    %v1925 = vrot.slane %v1860, 1
    %v1926 = vsel %vm1893, %v1923, %v1925
    %v1927 = vrot.slane %v1861, 1
    %v1928 = vsel %vm1893, %v1925, %v1927
    %vm1929 = vcmask 203776
    %v1930 = vsel %vm1929, %v1896, 0
    %v1932 = vsel %vm1929, %v1898, 0
    %v1934 = vsel %vm1929, %v1900, 0
    %v1936 = vsel %vm1929, %v1902, 0
    %v1938 = vsel %vm1929, %v1904, 0
    %v1940 = vsel %vm1929, %v1906, 0
    %v1942 = vsel %vm1929, %v1908, 0
    %v1944 = vsel %vm1929, %v1910, 0
    %v1946 = vsel %vm1929, %v1912, 0
    %v1948 = vsel %vm1929, %v1914, 0
    %v1950 = vsel %vm1929, %v1916, 0
    %v1952 = vsel %vm1929, %v1918, 0
    %v1954 = vsel %vm1929, %v1920, 0
    %v1956 = vsel %vm1929, %v1922, 0
    %v1958 = vsel %vm1929, %v1924, 0
    %v1960 = vsel %vm1929, %v1926, 0
    %v1962 = vsel %vm1929, %v1928, 0
    %v1964 = vsel %vm1929, %v1927, 0
    %v1967 = vsel %vm708, %v1874, 0
    %1969 = vmatpush.msra.mxu0 0.0
    %1970 = vmatpush.msra.mxu0 0.0
    %1971 = vmatpush.msra.mxu0 0.0
    %1972 = vmatpush.msra.mxu0 0.0
    %1973 = vmatpush.msra.mxu0 0.0
    %1974 = vmatpush.msra.mxu0 0.0
    %1975 = vmatpush.msra.mxu0 0.0
    %1976 = vmatpush.msra.mxu0 0.0
    %1977 = vmatpush.msra.mxu0 0.0
    %1978 = vmatpush.msra.mxu0 0.0
    %1979 = vmatpush.msra.mxu0 0.0
    %1980 = vmatpush.msra.mxu0 0.0
    %1981 = vmatpush.msra.mxu0 %v1967
    %1982 = vmatpush.msra.mxu0 %v1873
    %1983 = vmatpush.msra.mxu0 %v1872
    %1984 = vmatpush.msra.mxu0 %v1871
    %1985 = vmatmul.f32.gmra.mxu0 %v1930
    %v1986 = vpop.f32.mrf.mxu0
    %v1987 = vadd.f32 0.0, %v1986
    %1988 = vmatmul.f32.gmra.mxu0 %v1932
    %v1989 = vpop.f32.mrf.mxu0
    %v1990 = vadd.f32 0.0, %v1989
    %1991 = vmatmul.f32.gmra.mxu0 %v1934
    %v1992 = vpop.f32.mrf.mxu0
    %v1993 = vadd.f32 0.0, %v1992
    %1994 = vmatmul.f32.gmra.mxu0 %v1936
    %v1995 = vpop.f32.mrf.mxu0
    %v1996 = vadd.f32 0.0, %v1995
    %1997 = vmatmul.f32.gmra.mxu0 %v1938
    %v1998 = vpop.f32.mrf.mxu0
    %v1999 = vadd.f32 0.0, %v1998
    %2000 = vmatmul.f32.gmra.mxu0 %v1940
    %v2001 = vpop.f32.mrf.mxu0
    %v2002 = vadd.f32 0.0, %v2001
    %2003 = vmatmul.f32.gmra.mxu0 %v1942
    %v2004 = vpop.f32.mrf.mxu0
    %v2005 = vadd.f32 0.0, %v2004
    %2006 = vmatmul.f32.gmra.mxu0 %v1944
    %v2007 = vpop.f32.mrf.mxu0
    %v2008 = vadd.f32 0.0, %v2007
    %2009 = vmatmul.f32.gmra.mxu0 %v1946
    %v2010 = vpop.f32.mrf.mxu0
    %v2011 = vadd.f32 0.0, %v2010
    %2012 = vmatmul.f32.gmra.mxu0 %v1948
    %v2013 = vpop.f32.mrf.mxu0
    %v2014 = vadd.f32 0.0, %v2013
    %2015 = vmatmul.f32.gmra.mxu0 %v1950
    %v2016 = vpop.f32.mrf.mxu0
    %v2017 = vadd.f32 0.0, %v2016
    %2018 = vmatmul.f32.gmra.mxu0 %v1952
    %v2019 = vpop.f32.mrf.mxu0
    %v2020 = vadd.f32 0.0, %v2019
    %2021 = vmatmul.f32.gmra.mxu0 %v1954
    %v2022 = vpop.f32.mrf.mxu0
    %v2023 = vadd.f32 0.0, %v2022
    %2024 = vmatmul.f32.gmra.mxu0 %v1956
    %v2025 = vpop.f32.mrf.mxu0
    %v2026 = vadd.f32 0.0, %v2025
    %2027 = vmatmul.f32.gmra.mxu0 %v1958
    %v2028 = vpop.f32.mrf.mxu0
    %v2029 = vadd.f32 0.0, %v2028
    %2030 = vmatmul.f32.gmra.mxu0 %v1960
    %v2031 = vpop.f32.mrf.mxu0
    %v2032 = vadd.f32 0.0, %v2031
    %2033 = vmatmul.f32.gmra.mxu0 %v1962
    %v2034 = vpop.f32.mrf.mxu0
    %v2035 = vadd.f32 0.0, %v2034
    %2036 = vmatmul.f32.gmra.mxu0 %v1964
    %v2037 = vpop.f32.mrf.mxu0
    %v2038 = vadd.f32 0.0, %v2037
    %2039 = vdwg.mxu0
    %v2040 = vsel %vm1929, %v1844, 0
    %v2042 = vsel %vm1929, %v1845, 0
    %v2044 = vsel %vm1929, %v1846, 0
    %v2046 = vsel %vm1929, %v1847, 0
    %v2048 = vsel %vm1929, %v1848, 0
    %v2050 = vsel %vm1929, %v1849, 0
    %v2052 = vsel %vm1929, %v1850, 0
    %v2054 = vsel %vm1929, %v1851, 0
    %v2056 = vsel %vm1929, %v1852, 0
    %v2058 = vsel %vm1929, %v1853, 0
    %v2060 = vsel %vm1929, %v1854, 0
    %v2062 = vsel %vm1929, %v1855, 0
    %v2064 = vsel %vm1929, %v1856, 0
    %v2066 = vsel %vm1929, %v1857, 0
    %v2068 = vsel %vm1929, %v1858, 0
    %v2070 = vsel %vm1929, %v1859, 0
    %v2072 = vsel %vm1929, %v1860, 0
    %v2074 = vsel %vm1929, %v1861, 0
    %v2077 = vsel %vm708, %v1869, 0
    %2079 = vmatpush.msra.mxu0 0.0
    %2080 = vmatpush.msra.mxu0 0.0
    %2081 = vmatpush.msra.mxu0 0.0
    %2082 = vmatpush.msra.mxu0 0.0
    %2083 = vmatpush.msra.mxu0 0.0
    %2084 = vmatpush.msra.mxu0 0.0
    %2085 = vmatpush.msra.mxu0 0.0
    %2086 = vmatpush.msra.mxu0 0.0
    %2087 = vmatpush.msra.mxu0 0.0
    %2088 = vmatpush.msra.mxu0 0.0
    %2089 = vmatpush.msra.mxu0 0.0
    %2090 = vmatpush.msra.mxu0 0.0
    %2091 = vmatpush.msra.mxu0 %v2077
    %2092 = vmatpush.msra.mxu0 %v1868
    %2093 = vmatpush.msra.mxu0 %v1867
    %2094 = vmatpush.msra.mxu0 %v1866
    %2095 = vmatmul.f32.gmra.mxu0 %v2040
    %v2096 = vpop.f32.mrf.mxu0
    %v2097 = vadd.f32 %v1987, %v2096
    %2098 = vmatmul.f32.gmra.mxu0 %v2042
    %v2099 = vpop.f32.mrf.mxu0
    %v2100 = vadd.f32 %v1990, %v2099
    %2101 = vmatmul.f32.gmra.mxu0 %v2044
    %v2102 = vpop.f32.mrf.mxu0
    %v2103 = vadd.f32 %v1993, %v2102
    %2104 = vmatmul.f32.gmra.mxu0 %v2046
    %v2105 = vpop.f32.mrf.mxu0
    %v2106 = vadd.f32 %v1996, %v2105
    %2107 = vmatmul.f32.gmra.mxu0 %v2048
    %v2108 = vpop.f32.mrf.mxu0
    %v2109 = vadd.f32 %v1999, %v2108
    %2110 = vmatmul.f32.gmra.mxu0 %v2050
    %v2111 = vpop.f32.mrf.mxu0
    %v2112 = vadd.f32 %v2002, %v2111
    %2113 = vmatmul.f32.gmra.mxu0 %v2052
    %v2114 = vpop.f32.mrf.mxu0
    %v2115 = vadd.f32 %v2005, %v2114
    %2116 = vmatmul.f32.gmra.mxu0 %v2054
    %v2117 = vpop.f32.mrf.mxu0
    %v2118 = vadd.f32 %v2008, %v2117
    %2119 = vmatmul.f32.gmra.mxu0 %v2056
    %v2120 = vpop.f32.mrf.mxu0
    %v2121 = vadd.f32 %v2011, %v2120
    %2122 = vmatmul.f32.gmra.mxu0 %v2058
    %v2123 = vpop.f32.mrf.mxu0
    %v2124 = vadd.f32 %v2014, %v2123
    %2125 = vmatmul.f32.gmra.mxu0 %v2060
    %v2126 = vpop.f32.mrf.mxu0
    %v2127 = vadd.f32 %v2017, %v2126
    %2128 = vmatmul.f32.gmra.mxu0 %v2062
    %v2129 = vpop.f32.mrf.mxu0
    %v2130 = vadd.f32 %v2020, %v2129
    %2131 = vmatmul.f32.gmra.mxu0 %v2064
    %v2132 = vpop.f32.mrf.mxu0
    %v2133 = vadd.f32 %v2023, %v2132
    %2134 = vmatmul.f32.gmra.mxu0 %v2066
    %v2135 = vpop.f32.mrf.mxu0
    %v2136 = vadd.f32 %v2026, %v2135
    %2137 = vmatmul.f32.gmra.mxu0 %v2068
    %v2138 = vpop.f32.mrf.mxu0
    %v2139 = vadd.f32 %v2029, %v2138
    %2140 = vmatmul.f32.gmra.mxu0 %v2070
    %v2141 = vpop.f32.mrf.mxu0
    %v2142 = vadd.f32 %v2032, %v2141
    %2143 = vmatmul.f32.gmra.mxu0 %v2072
    %v2144 = vpop.f32.mrf.mxu0
    %v2145 = vadd.f32 %v2035, %v2144
    %2146 = vmatmul.f32.gmra.mxu0 %v2074
    %v2147 = vpop.f32.mrf.mxu0
    %v2148 = vadd.f32 %v2038, %v2147
    %2149 = vdwg.mxu0
    %s2150 = scalar_lea.vmem [#allocation13], 64
    %v2151 = vld [vmem:[%s2150] sm:$0xff]
    %v2152 = vld [vmem:[%s2150 + $0x8] sm:$0xff]
    %v2153 = vld [vmem:[%s2150 + $0x10] sm:$0xff]
    %v2154 = vld [vmem:[%s2150 + $0x18] sm:$0x1]
    %vm2155 = vcmask 1045504
    %v2156 = vrot.slane %v1844, 2
    %v2157 = vrot.slane %v1845, 2
    %v2158 = vsel %vm2155, %v2156, %v2157
    %v2159 = vrot.slane %v1846, 2
    %v2160 = vsel %vm2155, %v2157, %v2159
    %v2161 = vrot.slane %v1847, 2
    %v2162 = vsel %vm2155, %v2159, %v2161
    %v2163 = vrot.slane %v1848, 2
    %v2164 = vsel %vm2155, %v2161, %v2163
    %v2165 = vrot.slane %v1849, 2
    %v2166 = vsel %vm2155, %v2163, %v2165
    %v2167 = vrot.slane %v1850, 2
    %v2168 = vsel %vm2155, %v2165, %v2167
    %v2169 = vrot.slane %v1851, 2
    %v2170 = vsel %vm2155, %v2167, %v2169
    %v2171 = vrot.slane %v1852, 2
    %v2172 = vsel %vm2155, %v2169, %v2171
    %v2173 = vrot.slane %v1853, 2
    %v2174 = vsel %vm2155, %v2171, %v2173
    %v2175 = vrot.slane %v1854, 2
    %v2176 = vsel %vm2155, %v2173, %v2175
    %v2177 = vrot.slane %v1855, 2
    %v2178 = vsel %vm2155, %v2175, %v2177
    %v2179 = vrot.slane %v1856, 2
    %v2180 = vsel %vm2155, %v2177, %v2179
    %v2181 = vrot.slane %v1857, 2
    %v2182 = vsel %vm2155, %v2179, %v2181
    %v2183 = vrot.slane %v1858, 2
    %v2184 = vsel %vm2155, %v2181, %v2183
    %v2185 = vrot.slane %v1859, 2
    %v2186 = vsel %vm2155, %v2183, %v2185
    %v2187 = vrot.slane %v1860, 2
    %v2188 = vsel %vm2155, %v2185, %v2187
    %v2189 = vrot.slane %v1861, 2
    %v2190 = vsel %vm2155, %v2187, %v2189
    %v2191 = vsel %vm1929, %v2158, 0
    %v2193 = vsel %vm1929, %v2160, 0
    %v2195 = vsel %vm1929, %v2162, 0
    %v2197 = vsel %vm1929, %v2164, 0
    %v2199 = vsel %vm1929, %v2166, 0
    %v2201 = vsel %vm1929, %v2168, 0
    %v2203 = vsel %vm1929, %v2170, 0
    %v2205 = vsel %vm1929, %v2172, 0
    %v2207 = vsel %vm1929, %v2174, 0
    %v2209 = vsel %vm1929, %v2176, 0
    %v2211 = vsel %vm1929, %v2178, 0
    %v2213 = vsel %vm1929, %v2180, 0
    %v2215 = vsel %vm1929, %v2182, 0
    %v2217 = vsel %vm1929, %v2184, 0
    %v2219 = vsel %vm1929, %v2186, 0
    %v2221 = vsel %vm1929, %v2188, 0
    %v2223 = vsel %vm1929, %v2190, 0
    %v2225 = vsel %vm1929, %v2189, 0
    %v2228 = vsel %vm708, %v2154, 0
    %2230 = vmatpush.msra.mxu0 0.0
    %2231 = vmatpush.msra.mxu0 0.0
    %2232 = vmatpush.msra.mxu0 0.0
    %2233 = vmatpush.msra.mxu0 0.0
    %2234 = vmatpush.msra.mxu0 0.0
    %2235 = vmatpush.msra.mxu0 0.0
    %2236 = vmatpush.msra.mxu0 0.0
    %2237 = vmatpush.msra.mxu0 0.0
    %2238 = vmatpush.msra.mxu0 0.0
    %2239 = vmatpush.msra.mxu0 0.0
    %2240 = vmatpush.msra.mxu0 0.0
    %2241 = vmatpush.msra.mxu0 0.0
    %2242 = vmatpush.msra.mxu0 %v2228
    %2243 = vmatpush.msra.mxu0 %v2153
    %2244 = vmatpush.msra.mxu0 %v2152
    %2245 = vmatpush.msra.mxu0 %v2151
    %2246 = vmatmul.f32.gmra.mxu0 %v2191
    %v2247 = vpop.f32.mrf.mxu0
    %v2248 = vadd.f32 0.0, %v2247
    %2249 = vmatmul.f32.gmra.mxu0 %v2193
    %v2250 = vpop.f32.mrf.mxu0
    %v2251 = vadd.f32 0.0, %v2250
    %2252 = vmatmul.f32.gmra.mxu0 %v2195
    %v2253 = vpop.f32.mrf.mxu0
    %v2254 = vadd.f32 0.0, %v2253
    %2255 = vmatmul.f32.gmra.mxu0 %v2197
    %v2256 = vpop.f32.mrf.mxu0
    %v2257 = vadd.f32 0.0, %v2256
    %2258 = vmatmul.f32.gmra.mxu0 %v2199
    %v2259 = vpop.f32.mrf.mxu0
    %v2260 = vadd.f32 0.0, %v2259
    %2261 = vmatmul.f32.gmra.mxu0 %v2201
    %v2262 = vpop.f32.mrf.mxu0
    %v2263 = vadd.f32 0.0, %v2262
    %2264 = vmatmul.f32.gmra.mxu0 %v2203
    %v2265 = vpop.f32.mrf.mxu0
    %v2266 = vadd.f32 0.0, %v2265
    %2267 = vmatmul.f32.gmra.mxu0 %v2205
    %v2268 = vpop.f32.mrf.mxu0
    %v2269 = vadd.f32 0.0, %v2268
    %2270 = vmatmul.f32.gmra.mxu0 %v2207
    %v2271 = vpop.f32.mrf.mxu0
    %v2272 = vadd.f32 0.0, %v2271
    %2273 = vmatmul.f32.gmra.mxu0 %v2209
    %v2274 = vpop.f32.mrf.mxu0
    %v2275 = vadd.f32 0.0, %v2274
    %2276 = vmatmul.f32.gmra.mxu0 %v2211
    %v2277 = vpop.f32.mrf.mxu0
    %v2278 = vadd.f32 0.0, %v2277
    %2279 = vmatmul.f32.gmra.mxu0 %v2213
    %v2280 = vpop.f32.mrf.mxu0
    %v2281 = vadd.f32 0.0, %v2280
    %2282 = vmatmul.f32.gmra.mxu0 %v2215
    %v2283 = vpop.f32.mrf.mxu0
    %v2284 = vadd.f32 0.0, %v2283
    %2285 = vmatmul.f32.gmra.mxu0 %v2217
    %v2286 = vpop.f32.mrf.mxu0
    %v2287 = vadd.f32 0.0, %v2286
    %2288 = vmatmul.f32.gmra.mxu0 %v2219
    %v2289 = vpop.f32.mrf.mxu0
    %v2290 = vadd.f32 0.0, %v2289
    %2291 = vmatmul.f32.gmra.mxu0 %v2221
    %v2292 = vpop.f32.mrf.mxu0
    %v2293 = vadd.f32 0.0, %v2292
    %2294 = vmatmul.f32.gmra.mxu0 %v2223
    %v2295 = vpop.f32.mrf.mxu0
    %v2296 = vadd.f32 0.0, %v2295
    %2297 = vmatmul.f32.gmra.mxu0 %v2225
    %v2298 = vpop.f32.mrf.mxu0
    %v2299 = vadd.f32 0.0, %v2298
    %2300 = vdwg.mxu0
    %v2301 = vadd.f32 %v2097, %v2248
    %v2302 = vadd.f32 %v2100, %v2251
    %v2303 = vadd.f32 %v2103, %v2254
    %v2304 = vadd.f32 %v2106, %v2257
    %v2305 = vadd.f32 %v2109, %v2260
    %v2306 = vadd.f32 %v2112, %v2263
    %v2307 = vadd.f32 %v2115, %v2266
    %v2308 = vadd.f32 %v2118, %v2269
    %v2309 = vadd.f32 %v2121, %v2272
    %v2310 = vadd.f32 %v2124, %v2275
    %v2311 = vadd.f32 %v2127, %v2278
    %v2312 = vadd.f32 %v2130, %v2281
    %v2313 = vadd.f32 %v2133, %v2284
    %v2314 = vadd.f32 %v2136, %v2287
    %v2315 = vadd.f32 %v2139, %v2290
    %v2316 = vadd.f32 %v2142, %v2293
    %v2317 = vadd.f32 %v2145, %v2296
    %v2318 = vadd.f32 %v2148, %v2299
    %s2319 = scalar_lea.vmem [#allocation13], 96
    %v2320 = vld [vmem:[%s2319] sm:$0xff]
    %v2321 = vld [vmem:[%s2319 + $0x8] sm:$0xff]
    %v2322 = vld [vmem:[%s2319 + $0x10] sm:$0xff]
    %v2323 = vld [vmem:[%s2319 + $0x18] sm:$0x1]
    %vm2326 = vcmask 1042432
    %v2327 = vrot.slane %v1845, 5
    %v2328 = vrot.slane %v1846, 5
    %v2329 = vsel %vm2326, %v2327, %v2328
    %v2330 = vrot.slane %v1847, 5
    %v2331 = vsel %vm2326, %v2328, %v2330
    %v2332 = vrot.slane %v1848, 5
    %v2333 = vsel %vm2326, %v2330, %v2332
    %v2334 = vrot.slane %v1849, 5
    %v2335 = vsel %vm2326, %v2332, %v2334
    %v2336 = vrot.slane %v1850, 5
    %v2337 = vsel %vm2326, %v2334, %v2336
    %v2338 = vrot.slane %v1851, 5
    %v2339 = vsel %vm2326, %v2336, %v2338
    %v2340 = vrot.slane %v1852, 5
    %v2341 = vsel %vm2326, %v2338, %v2340
    %v2342 = vrot.slane %v1853, 5
    %v2343 = vsel %vm2326, %v2340, %v2342
    %v2344 = vrot.slane %v1854, 5
    %v2345 = vsel %vm2326, %v2342, %v2344
    %v2346 = vrot.slane %v1855, 5
    %v2347 = vsel %vm2326, %v2344, %v2346
    %v2348 = vrot.slane %v1856, 5
    %v2349 = vsel %vm2326, %v2346, %v2348
    %v2350 = vrot.slane %v1857, 5
    %v2351 = vsel %vm2326, %v2348, %v2350
    %v2352 = vrot.slane %v1858, 5
    %v2353 = vsel %vm2326, %v2350, %v2352
    %v2354 = vrot.slane %v1859, 5
    %v2355 = vsel %vm2326, %v2352, %v2354
    %v2356 = vrot.slane %v1860, 5
    %v2357 = vsel %vm2326, %v2354, %v2356
    %v2358 = vrot.slane %v1861, 5
    %v2359 = vsel %vm2326, %v2356, %v2358
    %v2360 = vrot.slane %v1862, 5
    %v2361 = vsel %vm2326, %v2358, %v2360
    %v2362 = vrot.slane %v1863, 5
    %v2363 = vsel %vm2326, %v2360, %v2362
    %v2364 = vsel %vm1929, %v2329, 0
    %v2366 = vsel %vm1929, %v2331, 0
    %v2368 = vsel %vm1929, %v2333, 0
    %v2370 = vsel %vm1929, %v2335, 0
    %v2372 = vsel %vm1929, %v2337, 0
    %v2374 = vsel %vm1929, %v2339, 0
    %v2376 = vsel %vm1929, %v2341, 0
    %v2378 = vsel %vm1929, %v2343, 0
    %v2380 = vsel %vm1929, %v2345, 0
    %v2382 = vsel %vm1929, %v2347, 0
    %v2384 = vsel %vm1929, %v2349, 0
    %v2386 = vsel %vm1929, %v2351, 0
    %v2388 = vsel %vm1929, %v2353, 0
    %v2390 = vsel %vm1929, %v2355, 0
    %v2392 = vsel %vm1929, %v2357, 0
    %v2394 = vsel %vm1929, %v2359, 0
    %v2396 = vsel %vm1929, %v2361, 0
    %v2398 = vsel %vm1929, %v2363, 0
    %v2401 = vsel %vm708, %v2323, 0
    %2403 = vmatpush.msra.mxu0 0.0
    %2404 = vmatpush.msra.mxu0 0.0
    %2405 = vmatpush.msra.mxu0 0.0
    %2406 = vmatpush.msra.mxu0 0.0
    %2407 = vmatpush.msra.mxu0 0.0
    %2408 = vmatpush.msra.mxu0 0.0
    %2409 = vmatpush.msra.mxu0 0.0
    %2410 = vmatpush.msra.mxu0 0.0
    %2411 = vmatpush.msra.mxu0 0.0
    %2412 = vmatpush.msra.mxu0 0.0
    %2413 = vmatpush.msra.mxu0 0.0
    %2414 = vmatpush.msra.mxu0 0.0
    %2415 = vmatpush.msra.mxu0 %v2401
    %2416 = vmatpush.msra.mxu0 %v2322
    %2417 = vmatpush.msra.mxu0 %v2321
    %2418 = vmatpush.msra.mxu0 %v2320
    %2419 = vmatmul.f32.gmra.mxu0 %v2364
    %v2420 = vpop.f32.mrf.mxu0
    %v2421 = vadd.f32 0.0, %v2420
    %2422 = vmatmul.f32.gmra.mxu0 %v2366
    %v2423 = vpop.f32.mrf.mxu0
    %v2424 = vadd.f32 0.0, %v2423
    %2425 = vmatmul.f32.gmra.mxu0 %v2368
    %v2426 = vpop.f32.mrf.mxu0
    %v2427 = vadd.f32 0.0, %v2426
    %2428 = vmatmul.f32.gmra.mxu0 %v2370
    %v2429 = vpop.f32.mrf.mxu0
    %v2430 = vadd.f32 0.0, %v2429
    %2431 = vmatmul.f32.gmra.mxu0 %v2372
    %v2432 = vpop.f32.mrf.mxu0
    %v2433 = vadd.f32 0.0, %v2432
    %2434 = vmatmul.f32.gmra.mxu0 %v2374
    %v2435 = vpop.f32.mrf.mxu0
    %v2436 = vadd.f32 0.0, %v2435
    %2437 = vmatmul.f32.gmra.mxu0 %v2376
    %v2438 = vpop.f32.mrf.mxu0
    %v2439 = vadd.f32 0.0, %v2438
    %2440 = vmatmul.f32.gmra.mxu0 %v2378
    %v2441 = vpop.f32.mrf.mxu0
    %v2442 = vadd.f32 0.0, %v2441
    %2443 = vmatmul.f32.gmra.mxu0 %v2380
    %v2444 = vpop.f32.mrf.mxu0
    %v2445 = vadd.f32 0.0, %v2444
    %2446 = vmatmul.f32.gmra.mxu0 %v2382
    %v2447 = vpop.f32.mrf.mxu0
    %v2448 = vadd.f32 0.0, %v2447
    %2449 = vmatmul.f32.gmra.mxu0 %v2384
    %v2450 = vpop.f32.mrf.mxu0
    %v2451 = vadd.f32 0.0, %v2450
    %2452 = vmatmul.f32.gmra.mxu0 %v2386
    %v2453 = vpop.f32.mrf.mxu0
    %v2454 = vadd.f32 0.0, %v2453
    %2455 = vmatmul.f32.gmra.mxu0 %v2388
    %v2456 = vpop.f32.mrf.mxu0
    %v2457 = vadd.f32 0.0, %v2456
    %2458 = vmatmul.f32.gmra.mxu0 %v2390
    %v2459 = vpop.f32.mrf.mxu0
    %v2460 = vadd.f32 0.0, %v2459
    %2461 = vmatmul.f32.gmra.mxu0 %v2392
    %v2462 = vpop.f32.mrf.mxu0
    %v2463 = vadd.f32 0.0, %v2462
    %2464 = vmatmul.f32.gmra.mxu0 %v2394
    %v2465 = vpop.f32.mrf.mxu0
    %v2466 = vadd.f32 0.0, %v2465
    %2467 = vmatmul.f32.gmra.mxu0 %v2396
    %v2468 = vpop.f32.mrf.mxu0
    %v2469 = vadd.f32 0.0, %v2468
    %2470 = vmatmul.f32.gmra.mxu0 %v2398
    %v2471 = vpop.f32.mrf.mxu0
    %v2472 = vadd.f32 0.0, %v2471
    %2473 = vdwg.mxu0
    %v2474 = vadd.f32 %v2301, %v2421
    %v2475 = vadd.f32 %v2302, %v2424
    %v2476 = vadd.f32 %v2303, %v2427
    %v2477 = vadd.f32 %v2304, %v2430
    %v2478 = vadd.f32 %v2305, %v2433
    %v2479 = vadd.f32 %v2306, %v2436
    %v2480 = vadd.f32 %v2307, %v2439
    %v2481 = vadd.f32 %v2308, %v2442
    %v2482 = vadd.f32 %v2309, %v2445
    %v2483 = vadd.f32 %v2310, %v2448
    %v2484 = vadd.f32 %v2311, %v2451
    %v2485 = vadd.f32 %v2312, %v2454
    %v2486 = vadd.f32 %v2313, %v2457
    %v2487 = vadd.f32 %v2314, %v2460
    %v2488 = vadd.f32 %v2315, %v2463
    %v2489 = vadd.f32 %v2316, %v2466
    %v2490 = vadd.f32 %v2317, %v2469
    %v2491 = vadd.f32 %v2318, %v2472
    %s2492 = scalar_lea.vmem [#allocation13], 128
    %v2493 = vld [vmem:[%s2492] sm:$0xff]
    %v2494 = vld [vmem:[%s2492 + $0x8] sm:$0xff]
    %v2495 = vld [vmem:[%s2492 + $0x10] sm:$0xff]
    %v2496 = vld [vmem:[%s2492 + $0x18] sm:$0x1]
    %vm2497 = vcmask 1041408
    %v2498 = vrot.slane %v1845, 6
    %v2499 = vrot.slane %v1846, 6
    %v2500 = vsel %vm2497, %v2498, %v2499
    %v2501 = vrot.slane %v1847, 6
    %v2502 = vsel %vm2497, %v2499, %v2501
    %v2503 = vrot.slane %v1848, 6
    %v2504 = vsel %vm2497, %v2501, %v2503
    %v2505 = vrot.slane %v1849, 6
    %v2506 = vsel %vm2497, %v2503, %v2505
    %v2507 = vrot.slane %v1850, 6
    %v2508 = vsel %vm2497, %v2505, %v2507
    %v2509 = vrot.slane %v1851, 6
    %v2510 = vsel %vm2497, %v2507, %v2509
    %v2511 = vrot.slane %v1852, 6
    %v2512 = vsel %vm2497, %v2509, %v2511
    %v2513 = vrot.slane %v1853, 6
    %v2514 = vsel %vm2497, %v2511, %v2513
    %v2515 = vrot.slane %v1854, 6
    %v2516 = vsel %vm2497, %v2513, %v2515
    %v2517 = vrot.slane %v1855, 6
    %v2518 = vsel %vm2497, %v2515, %v2517
    %v2519 = vrot.slane %v1856, 6
    %v2520 = vsel %vm2497, %v2517, %v2519
    %v2521 = vrot.slane %v1857, 6
    %v2522 = vsel %vm2497, %v2519, %v2521
    %v2523 = vrot.slane %v1858, 6
    %v2524 = vsel %vm2497, %v2521, %v2523
    %v2525 = vrot.slane %v1859, 6
    %v2526 = vsel %vm2497, %v2523, %v2525
    %v2527 = vrot.slane %v1860, 6
    %v2528 = vsel %vm2497, %v2525, %v2527
    %v2529 = vrot.slane %v1861, 6
    %v2530 = vsel %vm2497, %v2527, %v2529
    %v2531 = vrot.slane %v1862, 6
    %v2532 = vsel %vm2497, %v2529, %v2531
    %v2533 = vrot.slane %v1863, 6
    %v2534 = vsel %vm2497, %v2531, %v2533
    %v2535 = vsel %vm1929, %v2500, 0
    %v2537 = vsel %vm1929, %v2502, 0
    %v2539 = vsel %vm1929, %v2504, 0
    %v2541 = vsel %vm1929, %v2506, 0
    %v2543 = vsel %vm1929, %v2508, 0
    %v2545 = vsel %vm1929, %v2510, 0
    %v2547 = vsel %vm1929, %v2512, 0
    %v2549 = vsel %vm1929, %v2514, 0
    %v2551 = vsel %vm1929, %v2516, 0
    %v2553 = vsel %vm1929, %v2518, 0
    %v2555 = vsel %vm1929, %v2520, 0
    %v2557 = vsel %vm1929, %v2522, 0
    %v2559 = vsel %vm1929, %v2524, 0
    %v2561 = vsel %vm1929, %v2526, 0
    %v2563 = vsel %vm1929, %v2528, 0
    %v2565 = vsel %vm1929, %v2530, 0
    %v2567 = vsel %vm1929, %v2532, 0
    %v2569 = vsel %vm1929, %v2534, 0
    %v2572 = vsel %vm708, %v2496, 0
    %2574 = vmatpush.msra.mxu0 0.0
    %2575 = vmatpush.msra.mxu0 0.0
    %2576 = vmatpush.msra.mxu0 0.0
    %2577 = vmatpush.msra.mxu0 0.0
    %2578 = vmatpush.msra.mxu0 0.0
    %2579 = vmatpush.msra.mxu0 0.0
    %2580 = vmatpush.msra.mxu0 0.0
    %2581 = vmatpush.msra.mxu0 0.0
    %2582 = vmatpush.msra.mxu0 0.0
    %2583 = vmatpush.msra.mxu0 0.0
    %2584 = vmatpush.msra.mxu0 0.0
    %2585 = vmatpush.msra.mxu0 0.0
    %2586 = vmatpush.msra.mxu0 %v2572
    %2587 = vmatpush.msra.mxu0 %v2495
    %2588 = vmatpush.msra.mxu0 %v2494
    %2589 = vmatpush.msra.mxu0 %v2493
    %2590 = vmatmul.f32.gmra.mxu0 %v2535
    %v2591 = vpop.f32.mrf.mxu0
    %v2592 = vadd.f32 0.0, %v2591
    %2593 = vmatmul.f32.gmra.mxu0 %v2537
    %v2594 = vpop.f32.mrf.mxu0
    %v2595 = vadd.f32 0.0, %v2594
    %2596 = vmatmul.f32.gmra.mxu0 %v2539
    %v2597 = vpop.f32.mrf.mxu0
    %v2598 = vadd.f32 0.0, %v2597
    %2599 = vmatmul.f32.gmra.mxu0 %v2541
    %v2600 = vpop.f32.mrf.mxu0
    %v2601 = vadd.f32 0.0, %v2600
    %2602 = vmatmul.f32.gmra.mxu0 %v2543
    %v2603 = vpop.f32.mrf.mxu0
    %v2604 = vadd.f32 0.0, %v2603
    %2605 = vmatmul.f32.gmra.mxu0 %v2545
    %v2606 = vpop.f32.mrf.mxu0
    %v2607 = vadd.f32 0.0, %v2606
    %2608 = vmatmul.f32.gmra.mxu0 %v2547
    %v2609 = vpop.f32.mrf.mxu0
    %v2610 = vadd.f32 0.0, %v2609
    %2611 = vmatmul.f32.gmra.mxu0 %v2549
    %v2612 = vpop.f32.mrf.mxu0
    %v2613 = vadd.f32 0.0, %v2612
    %2614 = vmatmul.f32.gmra.mxu0 %v2551
    %v2615 = vpop.f32.mrf.mxu0
    %v2616 = vadd.f32 0.0, %v2615
    %2617 = vmatmul.f32.gmra.mxu0 %v2553
    %v2618 = vpop.f32.mrf.mxu0
    %v2619 = vadd.f32 0.0, %v2618
    %2620 = vmatmul.f32.gmra.mxu0 %v2555
    %v2621 = vpop.f32.mrf.mxu0
    %v2622 = vadd.f32 0.0, %v2621
    %2623 = vmatmul.f32.gmra.mxu0 %v2557
    %v2624 = vpop.f32.mrf.mxu0
    %v2625 = vadd.f32 0.0, %v2624
    %2626 = vmatmul.f32.gmra.mxu0 %v2559
    %v2627 = vpop.f32.mrf.mxu0
    %v2628 = vadd.f32 0.0, %v2627
    %2629 = vmatmul.f32.gmra.mxu0 %v2561
    %v2630 = vpop.f32.mrf.mxu0
    %v2631 = vadd.f32 0.0, %v2630
    %2632 = vmatmul.f32.gmra.mxu0 %v2563
    %v2633 = vpop.f32.mrf.mxu0
    %v2634 = vadd.f32 0.0, %v2633
    %2635 = vmatmul.f32.gmra.mxu0 %v2565
    %v2636 = vpop.f32.mrf.mxu0
    %v2637 = vadd.f32 0.0, %v2636
    %2638 = vmatmul.f32.gmra.mxu0 %v2567
    %v2639 = vpop.f32.mrf.mxu0
    %v2640 = vadd.f32 0.0, %v2639
    %2641 = vmatmul.f32.gmra.mxu0 %v2569
    %v2642 = vpop.f32.mrf.mxu0
    %v2643 = vadd.f32 0.0, %v2642
    %2644 = vdwg.mxu0
    %v2645 = vadd.f32 %v2474, %v2592
    %v2646 = vadd.f32 %v2475, %v2595
    %v2647 = vadd.f32 %v2476, %v2598
    %v2648 = vadd.f32 %v2477, %v2601
    %v2649 = vadd.f32 %v2478, %v2604
    %v2650 = vadd.f32 %v2479, %v2607
    %v2651 = vadd.f32 %v2480, %v2610
    %v2652 = vadd.f32 %v2481, %v2613
    %v2653 = vadd.f32 %v2482, %v2616
    %v2654 = vadd.f32 %v2483, %v2619
    %v2655 = vadd.f32 %v2484, %v2622
    %v2656 = vadd.f32 %v2485, %v2625
    %v2657 = vadd.f32 %v2486, %v2628
    %v2658 = vadd.f32 %v2487, %v2631
    %v2659 = vadd.f32 %v2488, %v2634
    %v2660 = vadd.f32 %v2489, %v2637
    %v2661 = vadd.f32 %v2490, %v2640
    %v2662 = vadd.f32 %v2491, %v2643
    %s2663 = scalar_lea.vmem [#allocation13], 160
    %v2664 = vld [vmem:[%s2663] sm:$0xff]
    %v2665 = vld [vmem:[%s2663 + $0x8] sm:$0xff]
    %v2666 = vld [vmem:[%s2663 + $0x10] sm:$0xff]
    %v2667 = vld [vmem:[%s2663 + $0x18] sm:$0x1]
    %v2668 = vrot.slane %v1845, 7
    %v2669 = vrot.slane %v1846, 7
    %v2670 = vsel %vm708, %v2668, %v2669
    %v2671 = vrot.slane %v1847, 7
    %v2672 = vsel %vm708, %v2669, %v2671
    %v2673 = vrot.slane %v1848, 7
    %v2674 = vsel %vm708, %v2671, %v2673
    %v2675 = vrot.slane %v1849, 7
    %v2676 = vsel %vm708, %v2673, %v2675
    %v2677 = vrot.slane %v1850, 7
    %v2678 = vsel %vm708, %v2675, %v2677
    %v2679 = vrot.slane %v1851, 7
    %v2680 = vsel %vm708, %v2677, %v2679
    %v2681 = vrot.slane %v1852, 7
    %v2682 = vsel %vm708, %v2679, %v2681
    %v2683 = vrot.slane %v1853, 7
    %v2684 = vsel %vm708, %v2681, %v2683
    %v2685 = vrot.slane %v1854, 7
    %v2686 = vsel %vm708, %v2683, %v2685
    %v2687 = vrot.slane %v1855, 7
    %v2688 = vsel %vm708, %v2685, %v2687
    %v2689 = vrot.slane %v1856, 7
    %v2690 = vsel %vm708, %v2687, %v2689
    %v2691 = vrot.slane %v1857, 7
    %v2692 = vsel %vm708, %v2689, %v2691
    %v2693 = vrot.slane %v1858, 7
    %v2694 = vsel %vm708, %v2691, %v2693
    %v2695 = vrot.slane %v1859, 7
    %v2696 = vsel %vm708, %v2693, %v2695
    %v2697 = vrot.slane %v1860, 7
    %v2698 = vsel %vm708, %v2695, %v2697
    %v2699 = vrot.slane %v1861, 7
    %v2700 = vsel %vm708, %v2697, %v2699
    %v2701 = vrot.slane %v1862, 7
    %v2702 = vsel %vm708, %v2699, %v2701
    %v2703 = vrot.slane %v1863, 7
    %v2704 = vsel %vm708, %v2701, %v2703
    %v2705 = vsel %vm1929, %v2670, 0
    %v2707 = vsel %vm1929, %v2672, 0
    %v2709 = vsel %vm1929, %v2674, 0
    %v2711 = vsel %vm1929, %v2676, 0
    %v2713 = vsel %vm1929, %v2678, 0
    %v2715 = vsel %vm1929, %v2680, 0
    %v2717 = vsel %vm1929, %v2682, 0
    %v2719 = vsel %vm1929, %v2684, 0
    %v2721 = vsel %vm1929, %v2686, 0
    %v2723 = vsel %vm1929, %v2688, 0
    %v2725 = vsel %vm1929, %v2690, 0
    %v2727 = vsel %vm1929, %v2692, 0
    %v2729 = vsel %vm1929, %v2694, 0
    %v2731 = vsel %vm1929, %v2696, 0
    %v2733 = vsel %vm1929, %v2698, 0
    %v2735 = vsel %vm1929, %v2700, 0
    %v2737 = vsel %vm1929, %v2702, 0
    %v2739 = vsel %vm1929, %v2704, 0
    %v2742 = vsel %vm708, %v2667, 0
    %2744 = vmatpush.msra.mxu0 0.0
    %2745 = vmatpush.msra.mxu0 0.0
    %2746 = vmatpush.msra.mxu0 0.0
    %2747 = vmatpush.msra.mxu0 0.0
    %2748 = vmatpush.msra.mxu0 0.0
    %2749 = vmatpush.msra.mxu0 0.0
    %2750 = vmatpush.msra.mxu0 0.0
    %2751 = vmatpush.msra.mxu0 0.0
    %2752 = vmatpush.msra.mxu0 0.0
    %2753 = vmatpush.msra.mxu0 0.0
    %2754 = vmatpush.msra.mxu0 0.0
    %2755 = vmatpush.msra.mxu0 0.0
    %2756 = vmatpush.msra.mxu0 %v2742
    %2757 = vmatpush.msra.mxu0 %v2666
    %2758 = vmatpush.msra.mxu0 %v2665
    %2759 = vmatpush.msra.mxu0 %v2664
    %2760 = vmatmul.f32.gmra.mxu0 %v2705
    %v2761 = vpop.f32.mrf.mxu0
    %v2762 = vadd.f32 0.0, %v2761
    %2763 = vmatmul.f32.gmra.mxu0 %v2707
    %v2764 = vpop.f32.mrf.mxu0
    %v2765 = vadd.f32 0.0, %v2764
    %2766 = vmatmul.f32.gmra.mxu0 %v2709
    %v2767 = vpop.f32.mrf.mxu0
    %v2768 = vadd.f32 0.0, %v2767
    %2769 = vmatmul.f32.gmra.mxu0 %v2711
    %v2770 = vpop.f32.mrf.mxu0
    %v2771 = vadd.f32 0.0, %v2770
    %2772 = vmatmul.f32.gmra.mxu0 %v2713
    %v2773 = vpop.f32.mrf.mxu0
    %v2774 = vadd.f32 0.0, %v2773
    %2775 = vmatmul.f32.gmra.mxu0 %v2715
    %v2776 = vpop.f32.mrf.mxu0
    %v2777 = vadd.f32 0.0, %v2776
    %2778 = vmatmul.f32.gmra.mxu0 %v2717
    %v2779 = vpop.f32.mrf.mxu0
    %v2780 = vadd.f32 0.0, %v2779
    %2781 = vmatmul.f32.gmra.mxu0 %v2719
    %v2782 = vpop.f32.mrf.mxu0
    %v2783 = vadd.f32 0.0, %v2782
    %2784 = vmatmul.f32.gmra.mxu0 %v2721
    %v2785 = vpop.f32.mrf.mxu0
    %v2786 = vadd.f32 0.0, %v2785
    %2787 = vmatmul.f32.gmra.mxu0 %v2723
    %v2788 = vpop.f32.mrf.mxu0
    %v2789 = vadd.f32 0.0, %v2788
    %2790 = vmatmul.f32.gmra.mxu0 %v2725
    %v2791 = vpop.f32.mrf.mxu0
    %v2792 = vadd.f32 0.0, %v2791
    %2793 = vmatmul.f32.gmra.mxu0 %v2727
    %v2794 = vpop.f32.mrf.mxu0
    %v2795 = vadd.f32 0.0, %v2794
    %2796 = vmatmul.f32.gmra.mxu0 %v2729
    %v2797 = vpop.f32.mrf.mxu0
    %v2798 = vadd.f32 0.0, %v2797
    %2799 = vmatmul.f32.gmra.mxu0 %v2731
    %v2800 = vpop.f32.mrf.mxu0
    %v2801 = vadd.f32 0.0, %v2800
    %2802 = vmatmul.f32.gmra.mxu0 %v2733
    %v2803 = vpop.f32.mrf.mxu0
    %v2804 = vadd.f32 0.0, %v2803
    %2805 = vmatmul.f32.gmra.mxu0 %v2735
    %v2806 = vpop.f32.mrf.mxu0
    %v2807 = vadd.f32 0.0, %v2806
    %2808 = vmatmul.f32.gmra.mxu0 %v2737
    %v2809 = vpop.f32.mrf.mxu0
    %v2810 = vadd.f32 0.0, %v2809
    %2811 = vmatmul.f32.gmra.mxu0 %v2739
    %v2812 = vpop.f32.mrf.mxu0
    %v2813 = vadd.f32 0.0, %v2812
    %2814 = vdwg.mxu0
    %v2815 = vadd.f32 %v2645, %v2762
    %v2816 = vadd.f32 %v2646, %v2765
    %v2817 = vadd.f32 %v2647, %v2768
    %v2818 = vadd.f32 %v2648, %v2771
    %v2819 = vadd.f32 %v2649, %v2774
    %v2820 = vadd.f32 %v2650, %v2777
    %v2821 = vadd.f32 %v2651, %v2780
    %v2822 = vadd.f32 %v2652, %v2783
    %v2823 = vadd.f32 %v2653, %v2786
    %v2824 = vadd.f32 %v2654, %v2789
    %v2825 = vadd.f32 %v2655, %v2792
    %v2826 = vadd.f32 %v2656, %v2795
    %v2827 = vadd.f32 %v2657, %v2798
    %v2828 = vadd.f32 %v2658, %v2801
    %v2829 = vadd.f32 %v2659, %v2804
    %v2830 = vadd.f32 %v2660, %v2807
    %v2831 = vadd.f32 %v2661, %v2810
    %v2832 = vadd.f32 %v2662, %v2813
    %s2833 = scalar_lea.vmem [#allocation13], 192
    %v2834 = vld [vmem:[%s2833] sm:$0xff]
    %v2835 = vld [vmem:[%s2833 + $0x8] sm:$0xff]
    %v2836 = vld [vmem:[%s2833 + $0x10] sm:$0xff]
    %v2837 = vld [vmem:[%s2833 + $0x18] sm:$0x1]
    %v2839 = vrot.slane %v1862, 2
    %v2840 = vsel %vm2155, %v2189, %v2839
    %v2841 = vrot.slane %v1863, 2
    %v2842 = vsel %vm2155, %v2839, %v2841
    %v2843 = vrot.slane %v1864, 2
    %v2844 = vsel %vm2155, %v2841, %v2843
    %v2845 = vsel %vm1929, %v2840, 0
    %v2847 = vsel %vm1929, %v2842, 0
    %v2849 = vsel %vm1929, %v2844, 0
    %v2851 = vsel %vm1929, %v2843, 0
    %v2854 = vsel %vm708, %v2837, 0
    %2856 = vmatpush.msra.mxu0 0.0
    %2857 = vmatpush.msra.mxu0 0.0
    %2858 = vmatpush.msra.mxu0 0.0
    %2859 = vmatpush.msra.mxu0 0.0
    %2860 = vmatpush.msra.mxu0 0.0
    %2861 = vmatpush.msra.mxu0 0.0
    %2862 = vmatpush.msra.mxu0 0.0
    %2863 = vmatpush.msra.mxu0 0.0
    %2864 = vmatpush.msra.mxu0 0.0
    %2865 = vmatpush.msra.mxu0 0.0
    %2866 = vmatpush.msra.mxu0 0.0
    %2867 = vmatpush.msra.mxu0 0.0
    %2868 = vmatpush.msra.mxu0 %v2854
    %2869 = vmatpush.msra.mxu0 %v2836
    %2870 = vmatpush.msra.mxu0 %v2835
    %2871 = vmatpush.msra.mxu0 %v2834
    %2872 = vmatmul.f32.gmra.mxu0 %v2197
    %v2873 = vpop.f32.mrf.mxu0
    %v2874 = vadd.f32 0.0, %v2873
    %2875 = vmatmul.f32.gmra.mxu0 %v2199
    %v2876 = vpop.f32.mrf.mxu0
    %v2877 = vadd.f32 0.0, %v2876
    %2878 = vmatmul.f32.gmra.mxu0 %v2201
    %v2879 = vpop.f32.mrf.mxu0
    %v2880 = vadd.f32 0.0, %v2879
    %2881 = vmatmul.f32.gmra.mxu0 %v2203
    %v2882 = vpop.f32.mrf.mxu0
    %v2883 = vadd.f32 0.0, %v2882
    %2884 = vmatmul.f32.gmra.mxu0 %v2205
    %v2885 = vpop.f32.mrf.mxu0
    %v2886 = vadd.f32 0.0, %v2885
    %2887 = vmatmul.f32.gmra.mxu0 %v2207
    %v2888 = vpop.f32.mrf.mxu0
    %v2889 = vadd.f32 0.0, %v2888
    %2890 = vmatmul.f32.gmra.mxu0 %v2209
    %v2891 = vpop.f32.mrf.mxu0
    %v2892 = vadd.f32 0.0, %v2891
    %2893 = vmatmul.f32.gmra.mxu0 %v2211
    %v2894 = vpop.f32.mrf.mxu0
    %v2895 = vadd.f32 0.0, %v2894
    %2896 = vmatmul.f32.gmra.mxu0 %v2213
    %v2897 = vpop.f32.mrf.mxu0
    %v2898 = vadd.f32 0.0, %v2897
    %2899 = vmatmul.f32.gmra.mxu0 %v2215
    %v2900 = vpop.f32.mrf.mxu0
    %v2901 = vadd.f32 0.0, %v2900
    %2902 = vmatmul.f32.gmra.mxu0 %v2217
    %v2903 = vpop.f32.mrf.mxu0
    %v2904 = vadd.f32 0.0, %v2903
    %2905 = vmatmul.f32.gmra.mxu0 %v2219
    %v2906 = vpop.f32.mrf.mxu0
    %v2907 = vadd.f32 0.0, %v2906
    %2908 = vmatmul.f32.gmra.mxu0 %v2221
    %v2909 = vpop.f32.mrf.mxu0
    %v2910 = vadd.f32 0.0, %v2909
    %2911 = vmatmul.f32.gmra.mxu0 %v2223
    %v2912 = vpop.f32.mrf.mxu0
    %v2913 = vadd.f32 0.0, %v2912
    %2914 = vmatmul.f32.gmra.mxu0 %v2845
    %v2915 = vpop.f32.mrf.mxu0
    %v2916 = vadd.f32 0.0, %v2915
    %2917 = vmatmul.f32.gmra.mxu0 %v2847
    %v2918 = vpop.f32.mrf.mxu0
    %v2919 = vadd.f32 0.0, %v2918
    %2920 = vmatmul.f32.gmra.mxu0 %v2849
    %v2921 = vpop.f32.mrf.mxu0
    %v2922 = vadd.f32 0.0, %v2921
    %2923 = vmatmul.f32.gmra.mxu0 %v2851
    %v2924 = vpop.f32.mrf.mxu0
    %v2925 = vadd.f32 0.0, %v2924
    %2926 = vdwg.mxu0
    %v2927 = vadd.f32 %v2815, %v2874
    %v2928 = vadd.f32 %v2816, %v2877
    %v2929 = vadd.f32 %v2817, %v2880
    %v2930 = vadd.f32 %v2818, %v2883
    %v2931 = vadd.f32 %v2819, %v2886
    %v2932 = vadd.f32 %v2820, %v2889
    %v2933 = vadd.f32 %v2821, %v2892
    %v2934 = vadd.f32 %v2822, %v2895
    %v2935 = vadd.f32 %v2823, %v2898
    %v2936 = vadd.f32 %v2824, %v2901
    %v2937 = vadd.f32 %v2825, %v2904
    %v2938 = vadd.f32 %v2826, %v2907
    %v2939 = vadd.f32 %v2827, %v2910
    %v2940 = vadd.f32 %v2828, %v2913
    %v2941 = vadd.f32 %v2829, %v2916
    %v2942 = vadd.f32 %v2830, %v2919
    %v2943 = vadd.f32 %v2831, %v2922
    %v2944 = vadd.f32 %v2832, %v2925
    %s2945 = scalar_lea.vmem [#allocation13], 224
    %v2946 = vld [vmem:[%s2945] sm:$0xff]
    %v2947 = vld [vmem:[%s2945 + $0x8] sm:$0xff]
    %v2948 = vld [vmem:[%s2945 + $0x10] sm:$0xff]
    %v2949 = vld [vmem:[%s2945 + $0x18] sm:$0x1]
    %vm2950 = vcmask 1044480
    %v2951 = vrot.slane %v1847, 3
    %v2952 = vrot.slane %v1848, 3
    %v2953 = vsel %vm2950, %v2951, %v2952
    %v2954 = vrot.slane %v1849, 3
    %v2955 = vsel %vm2950, %v2952, %v2954
    %v2956 = vrot.slane %v1850, 3
    %v2957 = vsel %vm2950, %v2954, %v2956
    %v2958 = vrot.slane %v1851, 3
    %v2959 = vsel %vm2950, %v2956, %v2958
    %v2960 = vrot.slane %v1852, 3
    %v2961 = vsel %vm2950, %v2958, %v2960
    %v2962 = vrot.slane %v1853, 3
    %v2963 = vsel %vm2950, %v2960, %v2962
    %v2964 = vrot.slane %v1854, 3
    %v2965 = vsel %vm2950, %v2962, %v2964
    %v2966 = vrot.slane %v1855, 3
    %v2967 = vsel %vm2950, %v2964, %v2966
    %v2968 = vrot.slane %v1856, 3
    %v2969 = vsel %vm2950, %v2966, %v2968
    %v2970 = vrot.slane %v1857, 3
    %v2971 = vsel %vm2950, %v2968, %v2970
    %v2972 = vrot.slane %v1858, 3
    %v2973 = vsel %vm2950, %v2970, %v2972
    %v2974 = vrot.slane %v1859, 3
    %v2975 = vsel %vm2950, %v2972, %v2974
    %v2976 = vrot.slane %v1860, 3
    %v2977 = vsel %vm2950, %v2974, %v2976
    %v2978 = vrot.slane %v1861, 3
    %v2979 = vsel %vm2950, %v2976, %v2978
    %v2980 = vrot.slane %v1862, 3
    %v2981 = vsel %vm2950, %v2978, %v2980
    %v2982 = vrot.slane %v1863, 3
    %v2983 = vsel %vm2950, %v2980, %v2982
    %v2984 = vrot.slane %v1864, 3
    %v2985 = vsel %vm2950, %v2982, %v2984
    %v2986 = vsel %vm1929, %v2953, 0
    %v2988 = vsel %vm1929, %v2955, 0
    %v2990 = vsel %vm1929, %v2957, 0
    %v2992 = vsel %vm1929, %v2959, 0
    %v2994 = vsel %vm1929, %v2961, 0
    %v2996 = vsel %vm1929, %v2963, 0
    %v2998 = vsel %vm1929, %v2965, 0
    %v3000 = vsel %vm1929, %v2967, 0
    %v3002 = vsel %vm1929, %v2969, 0
    %v3004 = vsel %vm1929, %v2971, 0
    %v3006 = vsel %vm1929, %v2973, 0
    %v3008 = vsel %vm1929, %v2975, 0
    %v3010 = vsel %vm1929, %v2977, 0
    %v3012 = vsel %vm1929, %v2979, 0
    %v3014 = vsel %vm1929, %v2981, 0
    %v3016 = vsel %vm1929, %v2983, 0
    %v3018 = vsel %vm1929, %v2985, 0
    %v3020 = vsel %vm1929, %v2984, 0
    %v3023 = vsel %vm708, %v2949, 0
    %3025 = vmatpush.msra.mxu0 0.0
    %3026 = vmatpush.msra.mxu0 0.0
    %3027 = vmatpush.msra.mxu0 0.0
    %3028 = vmatpush.msra.mxu0 0.0
    %3029 = vmatpush.msra.mxu0 0.0
    %3030 = vmatpush.msra.mxu0 0.0
    %3031 = vmatpush.msra.mxu0 0.0
    %3032 = vmatpush.msra.mxu0 0.0
    %3033 = vmatpush.msra.mxu0 0.0
    %3034 = vmatpush.msra.mxu0 0.0
    %3035 = vmatpush.msra.mxu0 0.0
    %3036 = vmatpush.msra.mxu0 0.0
    %3037 = vmatpush.msra.mxu0 %v3023
    %3038 = vmatpush.msra.mxu0 %v2948
    %3039 = vmatpush.msra.mxu0 %v2947
    %3040 = vmatpush.msra.mxu0 %v2946
    %3041 = vmatmul.f32.gmra.mxu0 %v2986
    %v3042 = vpop.f32.mrf.mxu0
    %v3043 = vadd.f32 0.0, %v3042
    %3044 = vmatmul.f32.gmra.mxu0 %v2988
    %v3045 = vpop.f32.mrf.mxu0
    %v3046 = vadd.f32 0.0, %v3045
    %3047 = vmatmul.f32.gmra.mxu0 %v2990
    %v3048 = vpop.f32.mrf.mxu0
    %v3049 = vadd.f32 0.0, %v3048
    %3050 = vmatmul.f32.gmra.mxu0 %v2992
    %v3051 = vpop.f32.mrf.mxu0
    %v3052 = vadd.f32 0.0, %v3051
    %3053 = vmatmul.f32.gmra.mxu0 %v2994
    %v3054 = vpop.f32.mrf.mxu0
    %v3055 = vadd.f32 0.0, %v3054
    %3056 = vmatmul.f32.gmra.mxu0 %v2996
    %v3057 = vpop.f32.mrf.mxu0
    %v3058 = vadd.f32 0.0, %v3057
    %3059 = vmatmul.f32.gmra.mxu0 %v2998
    %v3060 = vpop.f32.mrf.mxu0
    %v3061 = vadd.f32 0.0, %v3060
    %3062 = vmatmul.f32.gmra.mxu0 %v3000
    %v3063 = vpop.f32.mrf.mxu0
    %v3064 = vadd.f32 0.0, %v3063
    %3065 = vmatmul.f32.gmra.mxu0 %v3002
    %v3066 = vpop.f32.mrf.mxu0
    %v3067 = vadd.f32 0.0, %v3066
    %3068 = vmatmul.f32.gmra.mxu0 %v3004
    %v3069 = vpop.f32.mrf.mxu0
    %v3070 = vadd.f32 0.0, %v3069
    %3071 = vmatmul.f32.gmra.mxu0 %v3006
    %v3072 = vpop.f32.mrf.mxu0
    %v3073 = vadd.f32 0.0, %v3072
    %3074 = vmatmul.f32.gmra.mxu0 %v3008
    %v3075 = vpop.f32.mrf.mxu0
    %v3076 = vadd.f32 0.0, %v3075
    %3077 = vmatmul.f32.gmra.mxu0 %v3010
    %v3078 = vpop.f32.mrf.mxu0
    %v3079 = vadd.f32 0.0, %v3078
    %3080 = vmatmul.f32.gmra.mxu0 %v3012
    %v3081 = vpop.f32.mrf.mxu0
    %v3082 = vadd.f32 0.0, %v3081
    %3083 = vmatmul.f32.gmra.mxu0 %v3014
    %v3084 = vpop.f32.mrf.mxu0
    %v3085 = vadd.f32 0.0, %v3084
    %3086 = vmatmul.f32.gmra.mxu0 %v3016
    %v3087 = vpop.f32.mrf.mxu0
    %v3088 = vadd.f32 0.0, %v3087
    %3089 = vmatmul.f32.gmra.mxu0 %v3018
    %v3090 = vpop.f32.mrf.mxu0
    %v3091 = vadd.f32 0.0, %v3090
    %3092 = vmatmul.f32.gmra.mxu0 %v3020
    %v3093 = vpop.f32.mrf.mxu0
    %v3094 = vadd.f32 0.0, %v3093
    %3095 = vdwg.mxu0
    %v3096 = vadd.f32 %v2927, %v3043
    %v3097 = vadd.f32 %v2928, %v3046
    %v3098 = vadd.f32 %v2929, %v3049
    %v3099 = vadd.f32 %v2930, %v3052
    %v3100 = vadd.f32 %v2931, %v3055
    %v3101 = vadd.f32 %v2932, %v3058
    %v3102 = vadd.f32 %v2933, %v3061
    %v3103 = vadd.f32 %v2934, %v3064
    %v3104 = vadd.f32 %v2935, %v3067
    %v3105 = vadd.f32 %v2936, %v3070
    %v3106 = vadd.f32 %v2937, %v3073
    %v3107 = vadd.f32 %v2938, %v3076
    %v3108 = vadd.f32 %v2939, %v3079
    %v3109 = vadd.f32 %v2940, %v3082
    %v3110 = vadd.f32 %v2941, %v3085
    %v3111 = vadd.f32 %v2942, %v3088
    %v3112 = vadd.f32 %v2943, %v3091
    %v3113 = vadd.f32 %v2944, %v3094
    %s3114 = scalar_lea.vmem [#allocation13], 256
    %v3115 = vld [vmem:[%s3114] sm:$0xff]
    %v3116 = vld [vmem:[%s3114 + $0x8] sm:$0xff]
    %v3117 = vld [vmem:[%s3114 + $0x10] sm:$0xff]
    %v3118 = vld [vmem:[%s3114 + $0x18] sm:$0x1]
    %vm3120 = vcmask 1043456
    %v3121 = vrot.slane %v1847, 4
    %v3122 = vrot.slane %v1848, 4
    %v3123 = vsel %vm3120, %v3121, %v3122
    %v3124 = vrot.slane %v1849, 4
    %v3125 = vsel %vm3120, %v3122, %v3124
    %v3126 = vrot.slane %v1850, 4
    %v3127 = vsel %vm3120, %v3124, %v3126
    %v3128 = vrot.slane %v1851, 4
    %v3129 = vsel %vm3120, %v3126, %v3128
    %v3130 = vrot.slane %v1852, 4
    %v3131 = vsel %vm3120, %v3128, %v3130
    %v3132 = vrot.slane %v1853, 4
    %v3133 = vsel %vm3120, %v3130, %v3132
    %v3134 = vrot.slane %v1854, 4
    %v3135 = vsel %vm3120, %v3132, %v3134
    %v3136 = vrot.slane %v1855, 4
    %v3137 = vsel %vm3120, %v3134, %v3136
    %v3138 = vrot.slane %v1856, 4
    %v3139 = vsel %vm3120, %v3136, %v3138
    %v3140 = vrot.slane %v1857, 4
    %v3141 = vsel %vm3120, %v3138, %v3140
    %v3142 = vrot.slane %v1858, 4
    %v3143 = vsel %vm3120, %v3140, %v3142
    %v3144 = vrot.slane %v1859, 4
    %v3145 = vsel %vm3120, %v3142, %v3144
    %v3146 = vrot.slane %v1860, 4
    %v3147 = vsel %vm3120, %v3144, %v3146
    %v3148 = vrot.slane %v1861, 4
    %v3149 = vsel %vm3120, %v3146, %v3148
    %v3150 = vrot.slane %v1862, 4
    %v3151 = vsel %vm3120, %v3148, %v3150
    %v3152 = vrot.slane %v1863, 4
    %v3153 = vsel %vm3120, %v3150, %v3152
    %v3154 = vrot.slane %v1864, 4
    %v3155 = vsel %vm3120, %v3152, %v3154
    %v3156 = vrot.slane %v1865, 4
    %v3157 = vsel %vm3120, %v3154, %v3156
    %v3158 = vsel %vm1929, %v3123, 0
    %v3160 = vsel %vm1929, %v3125, 0
    %v3162 = vsel %vm1929, %v3127, 0
    %v3164 = vsel %vm1929, %v3129, 0
    %v3166 = vsel %vm1929, %v3131, 0
    %v3168 = vsel %vm1929, %v3133, 0
    %v3170 = vsel %vm1929, %v3135, 0
    %v3172 = vsel %vm1929, %v3137, 0
    %v3174 = vsel %vm1929, %v3139, 0
    %v3176 = vsel %vm1929, %v3141, 0
    %v3178 = vsel %vm1929, %v3143, 0
    %v3180 = vsel %vm1929, %v3145, 0
    %v3182 = vsel %vm1929, %v3147, 0
    %v3184 = vsel %vm1929, %v3149, 0
    %v3186 = vsel %vm1929, %v3151, 0
    %v3188 = vsel %vm1929, %v3153, 0
    %v3190 = vsel %vm1929, %v3155, 0
    %v3192 = vsel %vm1929, %v3157, 0
    %v3195 = vsel %vm708, %v3118, 0
    %3197 = vmatpush.msra.mxu0 0.0
    %3198 = vmatpush.msra.mxu0 0.0
    %3199 = vmatpush.msra.mxu0 0.0
    %3200 = vmatpush.msra.mxu0 0.0
    %3201 = vmatpush.msra.mxu0 0.0
    %3202 = vmatpush.msra.mxu0 0.0
    %3203 = vmatpush.msra.mxu0 0.0
    %3204 = vmatpush.msra.mxu0 0.0
    %3205 = vmatpush.msra.mxu0 0.0
    %3206 = vmatpush.msra.mxu0 0.0
    %3207 = vmatpush.msra.mxu0 0.0
    %3208 = vmatpush.msra.mxu0 0.0
    %3209 = vmatpush.msra.mxu0 %v3195
    %3210 = vmatpush.msra.mxu0 %v3117
    %3211 = vmatpush.msra.mxu0 %v3116
    %3212 = vmatpush.msra.mxu0 %v3115
    %3213 = vmatmul.f32.gmra.mxu0 %v3158
    %v3214 = vpop.f32.mrf.mxu0
    %v3215 = vadd.f32 0.0, %v3214
    %3216 = vmatmul.f32.gmra.mxu0 %v3160
    %v3217 = vpop.f32.mrf.mxu0
    %v3218 = vadd.f32 0.0, %v3217
    %3219 = vmatmul.f32.gmra.mxu0 %v3162
    %v3220 = vpop.f32.mrf.mxu0
    %v3221 = vadd.f32 0.0, %v3220
    %3222 = vmatmul.f32.gmra.mxu0 %v3164
    %v3223 = vpop.f32.mrf.mxu0
    %v3224 = vadd.f32 0.0, %v3223
    %3225 = vmatmul.f32.gmra.mxu0 %v3166
    %v3226 = vpop.f32.mrf.mxu0
    %v3227 = vadd.f32 0.0, %v3226
    %3228 = vmatmul.f32.gmra.mxu0 %v3168
    %v3229 = vpop.f32.mrf.mxu0
    %v3230 = vadd.f32 0.0, %v3229
    %3231 = vmatmul.f32.gmra.mxu0 %v3170
    %v3232 = vpop.f32.mrf.mxu0
    %v3233 = vadd.f32 0.0, %v3232
    %3234 = vmatmul.f32.gmra.mxu0 %v3172
    %v3235 = vpop.f32.mrf.mxu0
    %v3236 = vadd.f32 0.0, %v3235
    %3237 = vmatmul.f32.gmra.mxu0 %v3174
    %v3238 = vpop.f32.mrf.mxu0
    %v3239 = vadd.f32 0.0, %v3238
    %3240 = vmatmul.f32.gmra.mxu0 %v3176
    %v3241 = vpop.f32.mrf.mxu0
    %v3242 = vadd.f32 0.0, %v3241
    %3243 = vmatmul.f32.gmra.mxu0 %v3178
    %v3244 = vpop.f32.mrf.mxu0
    %v3245 = vadd.f32 0.0, %v3244
    %3246 = vmatmul.f32.gmra.mxu0 %v3180
    %v3247 = vpop.f32.mrf.mxu0
    %v3248 = vadd.f32 0.0, %v3247
    %3249 = vmatmul.f32.gmra.mxu0 %v3182
    %v3250 = vpop.f32.mrf.mxu0
    %v3251 = vadd.f32 0.0, %v3250
    %3252 = vmatmul.f32.gmra.mxu0 %v3184
    %v3253 = vpop.f32.mrf.mxu0
    %v3254 = vadd.f32 0.0, %v3253
    %3255 = vmatmul.f32.gmra.mxu0 %v3186
    %v3256 = vpop.f32.mrf.mxu0
    %v3257 = vadd.f32 0.0, %v3256
    %3258 = vmatmul.f32.gmra.mxu0 %v3188
    %v3259 = vpop.f32.mrf.mxu0
    %v3260 = vadd.f32 0.0, %v3259
    %3261 = vmatmul.f32.gmra.mxu0 %v3190
    %v3262 = vpop.f32.mrf.mxu0
    %v3263 = vadd.f32 0.0, %v3262
    %3264 = vmatmul.f32.gmra.mxu0 %v3192
    %v3265 = vpop.f32.mrf.mxu0
    %v3266 = vadd.f32 0.0, %v3265
    %3267 = vdwg.mxu0
    %v3268 = vadd.f32 %v3096, %v3215
    %v3269 = vadd.f32 %v3097, %v3218
    %v3270 = vadd.f32 %v3098, %v3221
    %v3271 = vadd.f32 %v3099, %v3224
    %v3272 = vadd.f32 %v3100, %v3227
    %v3273 = vadd.f32 %v3101, %v3230
    %v3274 = vadd.f32 %v3102, %v3233
    %v3275 = vadd.f32 %v3103, %v3236
    %v3276 = vadd.f32 %v3104, %v3239
    %v3277 = vadd.f32 %v3105, %v3242
    %v3278 = vadd.f32 %v3106, %v3245
    %v3279 = vadd.f32 %v3107, %v3248
    %v3280 = vadd.f32 %v3108, %v3251
    %v3281 = vadd.f32 %v3109, %v3254
    %v3282 = vadd.f32 %v3110, %v3257
    %v3283 = vadd.f32 %v3111, %v3260
    %v3284 = vadd.f32 %v3112, %v3263
    %v3285 = vadd.f32 %v3113, %v3266
    %v3286 = vld [vmem:[#allocation15] sm:$0x1]
    %v3288 = vperm.slane %v3286, 0
    %v3290 = vadd.f32 %v3268, %v3288
    %v3291 = vadd.f32 %v3269, %v3288
    %v3292 = vadd.f32 %v3270, %v3288
    %v3293 = vadd.f32 %v3271, %v3288
    %v3294 = vadd.f32 %v3272, %v3288
    %v3295 = vadd.f32 %v3273, %v3288
    %v3296 = vadd.f32 %v3274, %v3288
    %v3297 = vadd.f32 %v3275, %v3288
    %v3298 = vadd.f32 %v3276, %v3288
    %v3299 = vadd.f32 %v3277, %v3288
    %v3300 = vadd.f32 %v3278, %v3288
    %v3301 = vadd.f32 %v3279, %v3288
    %v3302 = vadd.f32 %v3280, %v3288
    %v3303 = vadd.f32 %v3281, %v3288
    %v3304 = vadd.f32 %v3282, %v3288
    %v3305 = vadd.f32 %v3283, %v3288
    %v3306 = vadd.f32 %v3284, %v3288
    %v3307 = vadd.f32 %v3285, %v3288
    %v3308 = vld [vmem:[#allocation19] sm:$0x3]
    %v3310 = vperm.slane %v3308, 0
    %v3311 = vperm.slane %v3308, 1
    %vm3313 = vcmask 105472
    %v3314 = vsel %vm3313, %v3311, 0
    %v3317 = vsel %vm2950, %v3307, 0
    %3319 = vmatpush.msra.mxu0 %v3305
    %3320 = vmatpush.msra.mxu0 %v3304
    %3321 = vmatpush.msra.mxu0 %v3303
    %3322 = vmatpush.msra.mxu0 %v3302
    %3323 = vmatpush.msra.mxu0 %v3301
    %3324 = vmatpush.msra.mxu0 %v3300
    %3325 = vmatpush.msra.mxu0 %v3299
    %3326 = vmatpush.msra.mxu0 %v3298
    %3327 = vmatpush.msra.mxu0 %v3297
    %3328 = vmatpush.msra.mxu0 %v3296
    %3329 = vmatpush.msra.mxu0 %v3295
    %3330 = vmatpush.msra.mxu0 %v3294
    %3331 = vmatpush.msra.mxu0 %v3293
    %3332 = vmatpush.msra.mxu0 %v3292
    %3333 = vmatpush.msra.mxu0 %v3291
    %3334 = vmatpush.msra.mxu0 %v3290
    %3335 = vmatmul.f32.gmra.mxu0 %v3310
    %v3336 = vpop.f32.mrf.mxu0
    %v3337 = vadd.f32 0.0, %v3336
    %3338 = vdwg.mxu0
    %3339 = vmatpush.msra.mxu0 0.0
    %3340 = vmatpush.msra.mxu0 0.0
    %3341 = vmatpush.msra.mxu0 0.0
    %3342 = vmatpush.msra.mxu0 0.0
    %3343 = vmatpush.msra.mxu0 0.0
    %3344 = vmatpush.msra.mxu0 0.0
    %3345 = vmatpush.msra.mxu0 0.0
    %3346 = vmatpush.msra.mxu0 0.0
    %3347 = vmatpush.msra.mxu0 0.0
    %3348 = vmatpush.msra.mxu0 0.0
    %3349 = vmatpush.msra.mxu0 0.0
    %3350 = vmatpush.msra.mxu0 0.0
    %3351 = vmatpush.msra.mxu0 0.0
    %3352 = vmatpush.msra.mxu0 0.0
    %3353 = vmatpush.msra.mxu0 %v3317
    %3354 = vmatpush.msra.mxu0 %v3306
    %3355 = vmatmul.f32.gmra.mxu0 %v3314
    %v3356 = vpop.f32.mrf.mxu0
    %v3357 = vadd.f32 %v3337, %v3356
    %3358 = vdwg.mxu0
    %v3359 = vmul.f32 %v3357, 0.008264462
    %v3360 = vperm.slane %v3359, 0
    %v3361 = vsub.f32 %v3290, %v3360
    %v3362 = vsub.f32 %v3291, %v3360
    %v3363 = vsub.f32 %v3292, %v3360
    %v3364 = vsub.f32 %v3293, %v3360
    %v3365 = vsub.f32 %v3294, %v3360
    %v3366 = vsub.f32 %v3295, %v3360
    %v3367 = vsub.f32 %v3296, %v3360
    %v3368 = vsub.f32 %v3297, %v3360
    %v3369 = vsub.f32 %v3298, %v3360
    %v3370 = vsub.f32 %v3299, %v3360
    %v3371 = vsub.f32 %v3300, %v3360
    %v3372 = vsub.f32 %v3301, %v3360
    %v3373 = vsub.f32 %v3302, %v3360
    %v3374 = vsub.f32 %v3303, %v3360
    %v3375 = vsub.f32 %v3304, %v3360
    %v3376 = vsub.f32 %v3305, %v3360
    %v3377 = vsub.f32 %v3306, %v3360
    %v3378 = vsub.f32 %v3307, %v3360
    %v3379 = vmul.f32 %v3361, %v3361
    %v3380 = vmul.f32 %v3362, %v3362
    %v3381 = vmul.f32 %v3363, %v3363
    %v3382 = vmul.f32 %v3364, %v3364
    %v3383 = vmul.f32 %v3365, %v3365
    %v3384 = vmul.f32 %v3366, %v3366
    %v3385 = vmul.f32 %v3367, %v3367
    %v3386 = vmul.f32 %v3368, %v3368
    %v3387 = vmul.f32 %v3369, %v3369
    %v3388 = vmul.f32 %v3370, %v3370
    %v3389 = vmul.f32 %v3371, %v3371
    %v3390 = vmul.f32 %v3372, %v3372
    %v3391 = vmul.f32 %v3373, %v3373
    %v3392 = vmul.f32 %v3374, %v3374
    %v3393 = vmul.f32 %v3375, %v3375
    %v3394 = vmul.f32 %v3376, %v3376
    %v3395 = vmul.f32 %v3377, %v3377
    %v3396 = vmul.f32 %v3378, %v3378
    %v3398 = vsel %vm2950, %v3396, 0
    %3400 = vmatpush.msra.mxu0 %v3394
    %3401 = vmatpush.msra.mxu0 %v3393
    %3402 = vmatpush.msra.mxu0 %v3392
    %3403 = vmatpush.msra.mxu0 %v3391
    %3404 = vmatpush.msra.mxu0 %v3390
    %3405 = vmatpush.msra.mxu0 %v3389
    %3406 = vmatpush.msra.mxu0 %v3388
    %3407 = vmatpush.msra.mxu0 %v3387
    %3408 = vmatpush.msra.mxu0 %v3386
    %3409 = vmatpush.msra.mxu0 %v3385
    %3410 = vmatpush.msra.mxu0 %v3384
    %3411 = vmatpush.msra.mxu0 %v3383
    %3412 = vmatpush.msra.mxu0 %v3382
    %3413 = vmatpush.msra.mxu0 %v3381
    %3414 = vmatpush.msra.mxu0 %v3380
    %3415 = vmatpush.msra.mxu0 %v3379
    %3416 = vmatmul.f32.gmra.mxu0 %v3310
    %v3417 = vpop.f32.mrf.mxu0
    %v3418 = vadd.f32 0.0, %v3417
    %3419 = vdwg.mxu0
    %3420 = vmatpush.msra.mxu0 0.0
    %3421 = vmatpush.msra.mxu0 0.0
    %3422 = vmatpush.msra.mxu0 0.0
    %3423 = vmatpush.msra.mxu0 0.0
    %3424 = vmatpush.msra.mxu0 0.0
    %3425 = vmatpush.msra.mxu0 0.0
    %3426 = vmatpush.msra.mxu0 0.0
    %3427 = vmatpush.msra.mxu0 0.0
    %3428 = vmatpush.msra.mxu0 0.0
    %3429 = vmatpush.msra.mxu0 0.0
    %3430 = vmatpush.msra.mxu0 0.0
    %3431 = vmatpush.msra.mxu0 0.0
    %3432 = vmatpush.msra.mxu0 0.0
    %3433 = vmatpush.msra.mxu0 0.0
    %3434 = vmatpush.msra.mxu0 %v3398
    %3435 = vmatpush.msra.mxu0 %v3395
    %3436 = vmatmul.f32.gmra.mxu0 %v3314
    %v3437 = vpop.f32.mrf.mxu0
    %v3438 = vadd.f32 %v3418, %v3437
    %3439 = vdwg.mxu0
    %v3440 = vmul.f32 %v3438, 0.008264462
    %v3441 = vadd.f32 %v3440, 1e-05
    %v3442 = vrsqrt.pop %v3441
    %v3443 = vmul.f32 %v3442, %v3441
    %v3444 = vmul.f32 %v3443, %v3442
    %v3445 = vmul.f32 0.5, %v3444
    %v3446 = vsub.f32 1.5, %v3445
    %v3447 = vmul.f32 %v3442, %v3446
    %vm3448 = vweird.f32 %v3441
    %vm3449 = vweird.f32 %v3442
    %vm3450 = vmor %vm3448, %vm3449
    %v3451 = vsel %vm3450, %v3442, %v3447
    %v3452 = vperm.slane %v3451, 0
    %v3453 = vmul.f32 %v3361, %v3452
    %v3454 = vmul.f32 %v3362, %v3452
    %v3455 = vmul.f32 %v3363, %v3452
    %v3456 = vmul.f32 %v3364, %v3452
    %v3457 = vmul.f32 %v3365, %v3452
    %v3458 = vmul.f32 %v3366, %v3452
    %v3459 = vmul.f32 %v3367, %v3452
    %v3460 = vmul.f32 %v3368, %v3452
    %v3461 = vmul.f32 %v3369, %v3452
    %v3462 = vmul.f32 %v3370, %v3452
    %v3463 = vmul.f32 %v3371, %v3452
    %v3464 = vmul.f32 %v3372, %v3452
    %v3465 = vmul.f32 %v3373, %v3452
    %v3466 = vmul.f32 %v3374, %v3452
    %v3467 = vmul.f32 %v3375, %v3452
    %v3468 = vmul.f32 %v3376, %v3452
    %v3469 = vmul.f32 %v3377, %v3452
    %v3470 = vmul.f32 %v3378, %v3452
    %v3471 = vld [vmem:[#allocation16] sm:$0x1]
    %v3473 = vperm.slane %v3471, 0
    %v3475 = vmul.f32 %v3453, %v3473
    %v3476 = vmul.f32 %v3454, %v3473
    %v3477 = vmul.f32 %v3455, %v3473
    %v3478 = vmul.f32 %v3456, %v3473
    %v3479 = vmul.f32 %v3457, %v3473
    %v3480 = vmul.f32 %v3458, %v3473
    %v3481 = vmul.f32 %v3459, %v3473
    %v3482 = vmul.f32 %v3460, %v3473
    %v3483 = vmul.f32 %v3461, %v3473
    %v3484 = vmul.f32 %v3462, %v3473
    %v3485 = vmul.f32 %v3463, %v3473
    %v3486 = vmul.f32 %v3464, %v3473
    %v3487 = vmul.f32 %v3465, %v3473
    %v3488 = vmul.f32 %v3466, %v3473
    %v3489 = vmul.f32 %v3467, %v3473
    %v3490 = vmul.f32 %v3468, %v3473
    %v3491 = vmul.f32 %v3469, %v3473
    %v3492 = vmul.f32 %v3470, %v3473
    %v3493 = vld [vmem:[#allocation18] sm:$0x1]
    %v3495 = vperm.slane %v3493, 0
    %v3497 = vadd.f32 %v3475, %v3495
    %v3498 = vadd.f32 %v3476, %v3495
    %v3499 = vadd.f32 %v3477, %v3495
    %v3500 = vadd.f32 %v3478, %v3495
    %v3501 = vadd.f32 %v3479, %v3495
    %v3502 = vadd.f32 %v3480, %v3495
    %v3503 = vadd.f32 %v3481, %v3495
    %v3504 = vadd.f32 %v3482, %v3495
    %v3505 = vadd.f32 %v3483, %v3495
    %v3506 = vadd.f32 %v3484, %v3495
    %v3507 = vadd.f32 %v3485, %v3495
    %v3508 = vadd.f32 %v3486, %v3495
    %v3509 = vadd.f32 %v3487, %v3495
    %v3510 = vadd.f32 %v3488, %v3495
    %v3511 = vadd.f32 %v3489, %v3495
    %v3512 = vadd.f32 %v3490, %v3495
    %v3513 = vadd.f32 %v3491, %v3495
    %v3514 = vadd.f32 %v3492, %v3495
    %v3515 = vmax.f32 %v3497, 0.0
    %v3516 = vmax.f32 %v3498, 0.0
    %v3517 = vmax.f32 %v3499, 0.0
    %v3518 = vmax.f32 %v3500, 0.0
    %v3519 = vmax.f32 %v3501, 0.0
    %v3520 = vmax.f32 %v3502, 0.0
    %v3521 = vmax.f32 %v3503, 0.0
    %v3522 = vmax.f32 %v3504, 0.0
    %v3523 = vmax.f32 %v3505, 0.0
    %v3524 = vmax.f32 %v3506, 0.0
    %v3525 = vmax.f32 %v3507, 0.0
    %v3526 = vmax.f32 %v3508, 0.0
    %v3527 = vmax.f32 %v3509, 0.0
    %v3528 = vmax.f32 %v3510, 0.0
    %v3529 = vmax.f32 %v3511, 0.0
    %v3530 = vmax.f32 %v3512, 0.0
    %v3531 = vmax.f32 %v3513, 0.0
    %v3532 = vmax.f32 %v3514, 0.0
    %v3548 = vrot.slane %v3515, 1
    %v3549 = vrot.slane %v3516, 1
    %v3550 = vsel %vm1893, %v3548, %v3549
    %v3551 = vrot.slane %v3517, 1
    %v3552 = vsel %vm1893, %v3549, %v3551
    %v3553 = vrot.slane %v3518, 1
    %v3554 = vrot.slane %v3519, 1
    %v3555 = vsel %vm1893, %v3553, %v3554
    %v3556 = vrot.slane %v3520, 1
    %v3557 = vsel %vm1893, %v3554, %v3556
    %v3558 = vrot.slane %v3521, 1
    %v3559 = vrot.slane %v3522, 1
    %v3560 = vsel %vm1893, %v3558, %v3559
    %v3561 = vrot.slane %v3523, 1
    %v3562 = vsel %vm1893, %v3559, %v3561
    %v3563 = vrot.slane %v3524, 1
    %v3564 = vrot.slane %v3525, 1
    %v3565 = vsel %vm1893, %v3563, %v3564
    %v3566 = vrot.slane %v3526, 1
    %v3567 = vsel %vm1893, %v3564, %v3566
    %v3568 = vrot.slane %v3528, 1
    %v3569 = vrot.slane %v3529, 1
    %v3570 = vsel %vm1893, %v3568, %v3569
    %v3571 = vrot.slane %v3530, 1
    %v3572 = vsel %vm1893, %v3569, %v3571
    %v3583 = vmax.f32 %v3515, %v3550
    %v3584 = vmax.f32 %v3516, %v3552
    %v3585 = vmax.f32 %v3518, %v3555
    %v3586 = vmax.f32 %v3519, %v3557
    %v3587 = vmax.f32 %v3521, %v3560
    %v3588 = vmax.f32 %v3522, %v3562
    %v3589 = vmax.f32 %v3524, %v3565
    %v3590 = vmax.f32 %v3525, %v3567
    %v3591 = vmax.f32 %v3528, %v3570
    %v3592 = vmax.f32 %v3529, %v3572
    %v3596 = vsel %vm1893, %v3551, %v3553
    %v3597 = vsel %vm1893, %v3556, %v3558
    %v3598 = vsel %vm1893, %v3561, %v3563
    %v3599 = vrot.slane %v3527, 1
    %v3600 = vsel %vm1893, %v3566, %v3599
    %v3601 = vsel %vm1893, %v3599, %v3568
    %v3602 = vrot.slane %v3531, 1
    %v3603 = vsel %vm1893, %v3571, %v3602
    %v3604 = vrot.slane %v3532, 1
    %v3605 = vsel %vm1893, %v3602, %v3604
    %v3613 = vmax.f32 %v3517, %v3596
    %v3614 = vmax.f32 %v3520, %v3597
    %v3615 = vmax.f32 %v3523, %v3598
    %v3616 = vmax.f32 %v3526, %v3600
    %v3617 = vmax.f32 %v3527, %v3601
    %v3618 = vmax.f32 %v3530, %v3603
    %v3619 = vmax.f32 %v3531, %v3605
    %v3635 = vrot.slane %v3584, 5
    %v3636 = vrot.slane %v3613, 5
    %v3637 = vsel %vm2326, %v3635, %v3636
    %v3638 = vrot.slane %v3585, 5
    %v3639 = vsel %vm2326, %v3636, %v3638
    %v3640 = vrot.slane %v3586, 5
    %v3641 = vrot.slane %v3614, 5
    %v3642 = vsel %vm2326, %v3640, %v3641
    %v3643 = vrot.slane %v3587, 5
    %v3644 = vsel %vm2326, %v3641, %v3643
    %v3645 = vrot.slane %v3588, 5
    %v3646 = vrot.slane %v3615, 5
    %v3647 = vsel %vm2326, %v3645, %v3646
    %v3648 = vrot.slane %v3589, 5
    %v3649 = vsel %vm2326, %v3646, %v3648
    %v3650 = vrot.slane %v3590, 5
    %v3651 = vrot.slane %v3616, 5
    %v3652 = vsel %vm2326, %v3650, %v3651
    %v3653 = vrot.slane %v3617, 5
    %v3654 = vsel %vm2326, %v3651, %v3653
    %v3655 = vrot.slane %v3592, 5
    %v3656 = vrot.slane %v3618, 5
    %v3657 = vsel %vm2326, %v3655, %v3656
    %v3658 = vrot.slane %v3619, 5
    %v3659 = vsel %vm2326, %v3656, %v3658
    %v3670 = vmax.f32 %v3583, %v3637
    %v3671 = vmax.f32 %v3584, %v3639
    %v3672 = vmax.f32 %v3585, %v3642
    %v3673 = vmax.f32 %v3586, %v3644
    %v3674 = vmax.f32 %v3587, %v3647
    %v3675 = vmax.f32 %v3588, %v3649
    %v3676 = vmax.f32 %v3589, %v3652
    %v3677 = vmax.f32 %v3590, %v3654
    %v3678 = vmax.f32 %v3591, %v3657
    %v3679 = vmax.f32 %v3592, %v3659
    %s3680 = smul.u32 4, 25
    %s3681 = smul.u32 %s3680, 7
    %s3682 = smul.u32 %s3681, 8
    %s3683 = sshll.u32 %s3682, 4
    %3684 = dma.done [#allocation4], %s3683
    %v3685 = vld [vmem:[#allocation21] sm:$0xff]
    %v3686 = vpack.c.bf16 %v3670, %v3670
    %v3687 = vld [vmem:[#allocation2] sm:$0xff]
    %v3688 = vld [vmem:[#allocation2 + $0x8] sm:$0xff]
    %v3689 = vld [vmem:[#allocation2 + $0x10] sm:$0xff]
    %v3690 = vld [vmem:[#allocation2 + $0x18] sm:$0xff]
    %v3691 = vld [vmem:[#allocation2 + $0x20] sm:$0xff]
    %v3692 = vld [vmem:[#allocation2 + $0x28] sm:$0xff]
    %v3693 = vld [vmem:[#allocation2 + $0x30] sm:$0xff]
    %v3694 = vld [vmem:[#allocation2 + $0x38] sm:$0xff]
    %v3695 = vld [vmem:[#allocation2 + $0x40] sm:$0xff]
    %v3696 = vld [vmem:[#allocation2 + $0x48] sm:$0xff]
    %v3697 = vld [vmem:[#allocation2 + $0x50] sm:$0xff]
    %v3698 = vld [vmem:[#allocation2 + $0x58] sm:$0xff]
    %v3699 = vld [vmem:[#allocation2 + $0x60] sm:$0xff]
    %v3700 = vld [vmem:[#allocation2 + $0x68] sm:$0xff]
    %v3701 = vld [vmem:[#allocation2 + $0x70] sm:$0xff]
    %v3702 = vld [vmem:[#allocation2 + $0x78] sm:$0xff]
    %v3703 = vld [vmem:[#allocation2 + $0x80] sm:$0xff]
    %v3704 = vld [vmem:[#allocation2 + $0x88] sm:$0xff]
    %v3705 = vld [vmem:[#allocation2 + $0x90] sm:$0xff]
    %v3706 = vld [vmem:[#allocation2 + $0x98] sm:$0xff]
    %v3707 = vld [vmem:[#allocation2 + $0xa0] sm:$0xff]
    %v3708 = vld [vmem:[#allocation2 + $0xa8] sm:$0xff]
    %v3709 = vld [vmem:[#allocation2 + $0xb0] sm:$0xff]
    %v3710 = vld [vmem:[#allocation2 + $0xb8] sm:$0xff]
    %v3711 = vld [vmem:[#allocation2 + $0xc0] sm:$0x11]
    %v3712 = vld [vmem:[#allocation2 + $0xc8] sm:$0x11]
    %v3713 = vld [vmem:[#allocation2 + $0xd0] sm:$0x11]
    %v3714 = vld [vmem:[#allocation2 + $0xd8] sm:$0x11]
    %v3743 = vunpack.c.l.b16 %v3687
    %v3744 = vunpack.c.h.b16 %v3687
    %v3745 = vunpack.c.l.b16 %v3688
    %v3746 = vunpack.c.h.b16 %v3688
    %v3747 = vunpack.c.l.b16 %v3689
    %v3748 = vunpack.c.h.b16 %v3689
    %v3749 = vunpack.c.l.b16 %v3690
    %v3750 = vunpack.c.h.b16 %v3690
    %v3751 = vunpack.c.l.b16 %v3691
    %v3752 = vunpack.c.h.b16 %v3691
    %v3753 = vunpack.c.l.b16 %v3692
    %v3754 = vunpack.c.h.b16 %v3692
    %v3755 = vunpack.c.l.b16 %v3693
    %v3756 = vunpack.c.h.b16 %v3693
    %v3757 = vunpack.c.l.b16 %v3694
    %v3758 = vunpack.c.h.b16 %v3694
    %v3759 = vunpack.c.l.b16 %v3695
    %v3760 = vunpack.c.h.b16 %v3695
    %v3761 = vunpack.c.l.b16 %v3696
    %v3762 = vunpack.c.h.b16 %v3696
    %v3763 = vunpack.c.l.b16 %v3697
    %v3764 = vunpack.c.h.b16 %v3697
    %v3765 = vunpack.c.l.b16 %v3698
    %v3766 = vunpack.c.h.b16 %v3698
    %v3767 = vunpack.c.l.b16 %v3699
    %v3768 = vunpack.c.h.b16 %v3699
    %v3769 = vunpack.c.l.b16 %v3700
    %v3770 = vunpack.c.h.b16 %v3700
    %v3771 = vunpack.c.l.b16 %v3701
    %v3772 = vunpack.c.h.b16 %v3701
    %v3773 = vunpack.c.l.b16 %v3702
    %v3774 = vunpack.c.h.b16 %v3702
    %v3775 = vunpack.c.l.b16 %v3703
    %v3776 = vunpack.c.h.b16 %v3703
    %v3777 = vunpack.c.l.b16 %v3704
    %v3778 = vunpack.c.h.b16 %v3704
    %v3779 = vunpack.c.l.b16 %v3705
    %v3780 = vunpack.c.h.b16 %v3705
    %v3781 = vunpack.c.l.b16 %v3706
    %v3782 = vunpack.c.h.b16 %v3706
    %v3783 = vunpack.c.l.b16 %v3707
    %v3784 = vunpack.c.h.b16 %v3707
    %v3785 = vunpack.c.l.b16 %v3708
    %v3786 = vunpack.c.h.b16 %v3708
    %v3787 = vunpack.c.l.b16 %v3709
    %v3788 = vunpack.c.h.b16 %v3709
    %v3789 = vunpack.c.l.b16 %v3710
    %v3790 = vunpack.c.h.b16 %v3710
    %v3791 = vunpack.c.l.b16 %v3711
    %v3792 = vunpack.c.h.b16 %v3711
    %v3793 = vunpack.c.l.b16 %v3712
    %v3794 = vunpack.c.h.b16 %v3712
    %v3795 = vunpack.c.l.b16 %v3713
    %v3796 = vunpack.c.h.b16 %v3713
    %v3797 = vunpack.c.l.b16 %v3714
    %v3798 = vunpack.c.h.b16 %v3714
    %v3799 = vpack.c.b16 %v3751, %v3743
    %v3800 = vpack.c.b16 %v3752, %v3744
    %v3801 = vpack.c.b16 %v3753, %v3745
    %v3802 = vpack.c.b16 %v3754, %v3746
    %v3803 = vpack.c.b16 %v3755, %v3747
    %v3804 = vpack.c.b16 %v3756, %v3748
    %v3805 = vpack.c.b16 %v3757, %v3749
    %v3806 = vpack.c.b16 %v3758, %v3750
    %v3807 = vpack.c.b16 %v3767, %v3759
    %v3808 = vpack.c.b16 %v3768, %v3760
    %v3809 = vpack.c.b16 %v3769, %v3761
    %v3810 = vpack.c.b16 %v3770, %v3762
    %v3811 = vpack.c.b16 %v3771, %v3763
    %v3812 = vpack.c.b16 %v3772, %v3764
    %v3813 = vpack.c.b16 %v3773, %v3765
    %v3814 = vpack.c.b16 %v3774, %v3766
    %v3815 = vpack.c.b16 %v3783, %v3775
    %v3816 = vpack.c.b16 %v3784, %v3776
    %v3817 = vpack.c.b16 %v3785, %v3777
    %v3818 = vpack.c.b16 %v3786, %v3778
    %v3819 = vpack.c.b16 %v3787, %v3779
    %v3820 = vpack.c.b16 %v3788, %v3780
    %v3821 = vpack.c.b16 %v3789, %v3781
    %v3822 = vpack.c.b16 %v3790, %v3782
    %v3823 = vpack.c.b16 %v3791, %v3791
    %v3824 = vpack.c.b16 %v3792, %v3792
    %v3825 = vpack.c.b16 %v3793, %v3793
    %v3826 = vpack.c.b16 %v3794, %v3794
    %v3827 = vpack.c.b16 %v3795, %v3795
    %v3828 = vpack.c.b16 %v3796, %v3796
    %v3829 = vpack.c.b16 %v3797, %v3797
    %v3830 = vpack.c.b16 %v3798, %v3798
    %vm3855 = vcmask 408576
    %v3857 = vsel %vm3855, %v3686, 0
    %v3860 = vsel %vm708, %v3823, 0
    %v3863 = vsel %vm708, %v3824, 0
    %v3866 = vsel %vm708, %v3825, 0
    %v3869 = vsel %vm708, %v3826, 0
    %v3872 = vsel %vm708, %v3827, 0
    %v3875 = vsel %vm708, %v3828, 0
    %v3878 = vsel %vm708, %v3829, 0
    %v3881 = vsel %vm708, %v3830, 0
    %3883 = vmatpush.bf16.msra.mxu0 0
    %3884 = vmatpush.bf16.msra.mxu0 0
    %3885 = vmatpush.bf16.msra.mxu0 0
    %3886 = vmatpush.bf16.msra.mxu0 0
    %3887 = vmatpush.bf16.msra.mxu0 %v3860
    %3888 = vmatpush.bf16.msra.mxu0 %v3815
    %3889 = vmatpush.bf16.msra.mxu0 %v3807
    %3890 = vmatpush.bf16.msra.mxu0 %v3799
    %3891 = vmatmul.bf16.gmra.mxu0 %v3857
    %v3892 = vpop.f32.mrf.mxu0
    %v3893 = vadd.f32 0.0, %v3892
    %v3894 = vpop.f32.mrf.mxu0
    %3895 = vdwg.mxu0
    %3896 = vmatpush.bf16.msra.mxu0 0
    %3897 = vmatpush.bf16.msra.mxu0 0
    %3898 = vmatpush.bf16.msra.mxu0 0
    %3899 = vmatpush.bf16.msra.mxu0 0
    %3900 = vmatpush.bf16.msra.mxu0 %v3863
    %3901 = vmatpush.bf16.msra.mxu0 %v3816
    %3902 = vmatpush.bf16.msra.mxu0 %v3808
    %3903 = vmatpush.bf16.msra.mxu0 %v3800
    %3904 = vmatmul.bf16.gmra.mxu0 %v3857
    %v3905 = vpop.f32.mrf.mxu0
    %v3906 = vadd.f32 0.0, %v3905
    %v3907 = vpop.f32.mrf.mxu0
    %3908 = vdwg.mxu0
    %3909 = vmatpush.bf16.msra.mxu0 0
    %3910 = vmatpush.bf16.msra.mxu0 0
    %3911 = vmatpush.bf16.msra.mxu0 0
    %3912 = vmatpush.bf16.msra.mxu0 0
    %3913 = vmatpush.bf16.msra.mxu0 %v3866
    %3914 = vmatpush.bf16.msra.mxu0 %v3817
    %3915 = vmatpush.bf16.msra.mxu0 %v3809
    %3916 = vmatpush.bf16.msra.mxu0 %v3801
    %3917 = vmatmul.bf16.gmra.mxu0 %v3857
    %v3918 = vpop.f32.mrf.mxu0
    %v3919 = vadd.f32 0.0, %v3918
    %v3920 = vpop.f32.mrf.mxu0
    %3921 = vdwg.mxu0
    %3922 = vmatpush.bf16.msra.mxu0 0
    %3923 = vmatpush.bf16.msra.mxu0 0
    %3924 = vmatpush.bf16.msra.mxu0 0
    %3925 = vmatpush.bf16.msra.mxu0 0
    %3926 = vmatpush.bf16.msra.mxu0 %v3869
    %3927 = vmatpush.bf16.msra.mxu0 %v3818
    %3928 = vmatpush.bf16.msra.mxu0 %v3810
    %3929 = vmatpush.bf16.msra.mxu0 %v3802
    %3930 = vmatmul.bf16.gmra.mxu0 %v3857
    %v3931 = vpop.f32.mrf.mxu0
    %v3932 = vadd.f32 0.0, %v3931
    %v3933 = vpop.f32.mrf.mxu0
    %3934 = vdwg.mxu0
    %3935 = vmatpush.bf16.msra.mxu0 0
    %3936 = vmatpush.bf16.msra.mxu0 0
    %3937 = vmatpush.bf16.msra.mxu0 0
    %3938 = vmatpush.bf16.msra.mxu0 0
    %3939 = vmatpush.bf16.msra.mxu0 %v3872
    %3940 = vmatpush.bf16.msra.mxu0 %v3819
    %3941 = vmatpush.bf16.msra.mxu0 %v3811
    %3942 = vmatpush.bf16.msra.mxu0 %v3803
    %3943 = vmatmul.bf16.gmra.mxu0 %v3857
    %v3944 = vpop.f32.mrf.mxu0
    %v3945 = vadd.f32 0.0, %v3944
    %v3946 = vpop.f32.mrf.mxu0
    %3947 = vdwg.mxu0
    %3948 = vmatpush.bf16.msra.mxu0 0
    %3949 = vmatpush.bf16.msra.mxu0 0
    %3950 = vmatpush.bf16.msra.mxu0 0
    %3951 = vmatpush.bf16.msra.mxu0 0
    %3952 = vmatpush.bf16.msra.mxu0 %v3875
    %3953 = vmatpush.bf16.msra.mxu0 %v3820
    %3954 = vmatpush.bf16.msra.mxu0 %v3812
    %3955 = vmatpush.bf16.msra.mxu0 %v3804
    %3956 = vmatmul.bf16.gmra.mxu0 %v3857
    %v3957 = vpop.f32.mrf.mxu0
    %v3958 = vadd.f32 0.0, %v3957
    %v3959 = vpop.f32.mrf.mxu0
    %3960 = vdwg.mxu0
    %3961 = vmatpush.bf16.msra.mxu0 0
    %3962 = vmatpush.bf16.msra.mxu0 0
    %3963 = vmatpush.bf16.msra.mxu0 0
    %3964 = vmatpush.bf16.msra.mxu0 0
    %3965 = vmatpush.bf16.msra.mxu0 %v3878
    %3966 = vmatpush.bf16.msra.mxu0 %v3821
    %3967 = vmatpush.bf16.msra.mxu0 %v3813
    %3968 = vmatpush.bf16.msra.mxu0 %v3805
    %3969 = vmatmul.bf16.gmra.mxu0 %v3857
    %v3970 = vpop.f32.mrf.mxu0
    %v3971 = vadd.f32 0.0, %v3970
    %v3972 = vpop.f32.mrf.mxu0
    %3973 = vdwg.mxu0
    %3974 = vmatpush.bf16.msra.mxu0 0
    %3975 = vmatpush.bf16.msra.mxu0 0
    %3976 = vmatpush.bf16.msra.mxu0 0
    %3977 = vmatpush.bf16.msra.mxu0 0
    %3978 = vmatpush.bf16.msra.mxu0 %v3881
    %3979 = vmatpush.bf16.msra.mxu0 %v3822
    %3980 = vmatpush.bf16.msra.mxu0 %v3814
    %3981 = vmatpush.bf16.msra.mxu0 %v3806
    %3982 = vmatmul.bf16.gmra.mxu0 %v3857
    %v3983 = vpop.f32.mrf.mxu0
    %v3984 = vadd.f32 0.0, %v3983
    %v3985 = vpop.f32.mrf.mxu0
    %3986 = vdwg.mxu0
    %v3995 = vrot.slane %v3906, 7
    %v3996 = vrot.slane %v3919, 6
    %v3997 = vrot.slane %v3932, 5
    %v3998 = vrot.slane %v3945, 4
    %v3999 = vrot.slane %v3958, 3
    %v4000 = vrot.slane %v3971, 2
    %v4001 = vrot.slane %v3984, 1
    %v4002 = vsel %vm708, %v3893, %v3995
    %vm4003 = vcmask 1042434
    %v4004 = vsel %vm4003, %v3996, %v3997
    %v4005 = vsel %vm2497, %v4002, %v4004
    %vm4006 = vcmask 1044484
    %v4007 = vsel %vm4006, %v3998, %v3999
    %vm4008 = vcmask 1046534
    %v4009 = vsel %vm4008, %v4000, %v4001
    %vm4010 = vcmask 1045508
    %v4011 = vsel %vm4010, %v4007, %v4009
    %v4012 = vsel %vm3120, %v4005, %v4011
    %v4014 = vadd.f32 %v3685, %v4012
    %s4015 = scalar_lea.vmem [#allocation2], 224
    %v4016 = vld [vmem:[%s4015] sm:$0xff]
    %v4017 = vld [vmem:[%s4015 + $0x8] sm:$0xff]
    %v4018 = vld [vmem:[%s4015 + $0x10] sm:$0xff]
    %v4019 = vld [vmem:[%s4015 + $0x18] sm:$0xff]
    %v4020 = vld [vmem:[%s4015 + $0x20] sm:$0xff]
    %v4021 = vld [vmem:[%s4015 + $0x28] sm:$0xff]
    %v4022 = vld [vmem:[%s4015 + $0x30] sm:$0xff]
    %v4023 = vld [vmem:[%s4015 + $0x38] sm:$0xff]
    %v4024 = vld [vmem:[%s4015 + $0x40] sm:$0xff]
    %v4025 = vld [vmem:[%s4015 + $0x48] sm:$0xff]
    %v4026 = vld [vmem:[%s4015 + $0x50] sm:$0xff]
    %v4027 = vld [vmem:[%s4015 + $0x58] sm:$0xff]
    %v4028 = vld [vmem:[%s4015 + $0x60] sm:$0xff]
    %v4029 = vld [vmem:[%s4015 + $0x68] sm:$0xff]
    %v4030 = vld [vmem:[%s4015 + $0x70] sm:$0xff]
    %v4031 = vld [vmem:[%s4015 + $0x78] sm:$0xff]
    %v4032 = vld [vmem:[%s4015 + $0x80] sm:$0xff]
    %v4033 = vld [vmem:[%s4015 + $0x88] sm:$0xff]
    %v4034 = vld [vmem:[%s4015 + $0x90] sm:$0xff]
    %v4035 = vld [vmem:[%s4015 + $0x98] sm:$0xff]
    %v4036 = vld [vmem:[%s4015 + $0xa0] sm:$0xff]
    %v4037 = vld [vmem:[%s4015 + $0xa8] sm:$0xff]
    %v4038 = vld [vmem:[%s4015 + $0xb0] sm:$0xff]
    %v4039 = vld [vmem:[%s4015 + $0xb8] sm:$0xff]
    %v4040 = vld [vmem:[%s4015 + $0xc0] sm:$0x11]
    %v4041 = vld [vmem:[%s4015 + $0xc8] sm:$0x11]
    %v4042 = vld [vmem:[%s4015 + $0xd0] sm:$0x11]
    %v4043 = vld [vmem:[%s4015 + $0xd8] sm:$0x11]
    %v4045 = vrot.slane %v3686, 1
    %v4074 = vunpack.c.l.b16 %v4016
    %v4075 = vunpack.c.h.b16 %v4016
    %v4076 = vunpack.c.l.b16 %v4017
    %v4077 = vunpack.c.h.b16 %v4017
    %v4078 = vunpack.c.l.b16 %v4018
    %v4079 = vunpack.c.h.b16 %v4018
    %v4080 = vunpack.c.l.b16 %v4019
    %v4081 = vunpack.c.h.b16 %v4019
    %v4082 = vunpack.c.l.b16 %v4020
    %v4083 = vunpack.c.h.b16 %v4020
    %v4084 = vunpack.c.l.b16 %v4021
    %v4085 = vunpack.c.h.b16 %v4021
    %v4086 = vunpack.c.l.b16 %v4022
    %v4087 = vunpack.c.h.b16 %v4022
    %v4088 = vunpack.c.l.b16 %v4023
    %v4089 = vunpack.c.h.b16 %v4023
    %v4090 = vunpack.c.l.b16 %v4024
    %v4091 = vunpack.c.h.b16 %v4024
    %v4092 = vunpack.c.l.b16 %v4025
    %v4093 = vunpack.c.h.b16 %v4025
    %v4094 = vunpack.c.l.b16 %v4026
    %v4095 = vunpack.c.h.b16 %v4026
    %v4096 = vunpack.c.l.b16 %v4027
    %v4097 = vunpack.c.h.b16 %v4027
    %v4098 = vunpack.c.l.b16 %v4028
    %v4099 = vunpack.c.h.b16 %v4028
    %v4100 = vunpack.c.l.b16 %v4029
    %v4101 = vunpack.c.h.b16 %v4029
    %v4102 = vunpack.c.l.b16 %v4030
    %v4103 = vunpack.c.h.b16 %v4030
    %v4104 = vunpack.c.l.b16 %v4031
    %v4105 = vunpack.c.h.b16 %v4031
    %v4106 = vunpack.c.l.b16 %v4032
    %v4107 = vunpack.c.h.b16 %v4032
    %v4108 = vunpack.c.l.b16 %v4033
    %v4109 = vunpack.c.h.b16 %v4033
    %v4110 = vunpack.c.l.b16 %v4034
    %v4111 = vunpack.c.h.b16 %v4034
    %v4112 = vunpack.c.l.b16 %v4035
    %v4113 = vunpack.c.h.b16 %v4035
    %v4114 = vunpack.c.l.b16 %v4036
    %v4115 = vunpack.c.h.b16 %v4036
    %v4116 = vunpack.c.l.b16 %v4037
    %v4117 = vunpack.c.h.b16 %v4037
    %v4118 = vunpack.c.l.b16 %v4038
    %v4119 = vunpack.c.h.b16 %v4038
    %v4120 = vunpack.c.l.b16 %v4039
    %v4121 = vunpack.c.h.b16 %v4039
    %v4122 = vunpack.c.l.b16 %v4040
    %v4123 = vunpack.c.h.b16 %v4040
    %v4124 = vunpack.c.l.b16 %v4041
    %v4125 = vunpack.c.h.b16 %v4041
    %v4126 = vunpack.c.l.b16 %v4042
    %v4127 = vunpack.c.h.b16 %v4042
    %v4128 = vunpack.c.l.b16 %v4043
    %v4129 = vunpack.c.h.b16 %v4043
    %v4130 = vpack.c.b16 %v4082, %v4074
    %v4131 = vpack.c.b16 %v4083, %v4075
    %v4132 = vpack.c.b16 %v4084, %v4076
    %v4133 = vpack.c.b16 %v4085, %v4077
    %v4134 = vpack.c.b16 %v4086, %v4078
    %v4135 = vpack.c.b16 %v4087, %v4079
    %v4136 = vpack.c.b16 %v4088, %v4080
    %v4137 = vpack.c.b16 %v4089, %v4081
    %v4138 = vpack.c.b16 %v4098, %v4090
    %v4139 = vpack.c.b16 %v4099, %v4091
    %v4140 = vpack.c.b16 %v4100, %v4092
    %v4141 = vpack.c.b16 %v4101, %v4093
    %v4142 = vpack.c.b16 %v4102, %v4094
    %v4143 = vpack.c.b16 %v4103, %v4095
    %v4144 = vpack.c.b16 %v4104, %v4096
    %v4145 = vpack.c.b16 %v4105, %v4097
    %v4146 = vpack.c.b16 %v4114, %v4106
    %v4147 = vpack.c.b16 %v4115, %v4107
    %v4148 = vpack.c.b16 %v4116, %v4108
    %v4149 = vpack.c.b16 %v4117, %v4109
    %v4150 = vpack.c.b16 %v4118, %v4110
    %v4151 = vpack.c.b16 %v4119, %v4111
    %v4152 = vpack.c.b16 %v4120, %v4112
    %v4153 = vpack.c.b16 %v4121, %v4113
    %v4154 = vpack.c.b16 %v4122, %v4122
    %v4155 = vpack.c.b16 %v4123, %v4123
    %v4156 = vpack.c.b16 %v4124, %v4124
    %v4157 = vpack.c.b16 %v4125, %v4125
    %v4158 = vpack.c.b16 %v4126, %v4126
    %v4159 = vpack.c.b16 %v4127, %v4127
    %v4160 = vpack.c.b16 %v4128, %v4128
    %v4161 = vpack.c.b16 %v4129, %v4129
    %v4187 = vsel %vm3855, %v4045, 0
    %v4190 = vsel %vm708, %v4154, 0
    %v4193 = vsel %vm708, %v4155, 0
    %v4196 = vsel %vm708, %v4156, 0
    %v4199 = vsel %vm708, %v4157, 0
    %v4202 = vsel %vm708, %v4158, 0
    %v4205 = vsel %vm708, %v4159, 0
    %v4208 = vsel %vm708, %v4160, 0
    %v4211 = vsel %vm708, %v4161, 0
    %4213 = vmatpush.bf16.msra.mxu0 0
    %4214 = vmatpush.bf16.msra.mxu0 0
    %4215 = vmatpush.bf16.msra.mxu0 0
    %4216 = vmatpush.bf16.msra.mxu0 0
    %4217 = vmatpush.bf16.msra.mxu0 %v4190
    %4218 = vmatpush.bf16.msra.mxu0 %v4146
    %4219 = vmatpush.bf16.msra.mxu0 %v4138
    %4220 = vmatpush.bf16.msra.mxu0 %v4130
    %4221 = vmatmul.bf16.gmra.mxu0 %v4187
    %v4222 = vpop.f32.mrf.mxu0
    %v4223 = vadd.f32 0.0, %v4222
    %v4224 = vpop.f32.mrf.mxu0
    %4225 = vdwg.mxu0
    %4226 = vmatpush.bf16.msra.mxu0 0
    %4227 = vmatpush.bf16.msra.mxu0 0
    %4228 = vmatpush.bf16.msra.mxu0 0
    %4229 = vmatpush.bf16.msra.mxu0 0
    %4230 = vmatpush.bf16.msra.mxu0 %v4193
    %4231 = vmatpush.bf16.msra.mxu0 %v4147
    %4232 = vmatpush.bf16.msra.mxu0 %v4139
    %4233 = vmatpush.bf16.msra.mxu0 %v4131
    %4234 = vmatmul.bf16.gmra.mxu0 %v4187
    %v4235 = vpop.f32.mrf.mxu0
    %v4236 = vadd.f32 0.0, %v4235
    %v4237 = vpop.f32.mrf.mxu0
    %4238 = vdwg.mxu0
    %4239 = vmatpush.bf16.msra.mxu0 0
    %4240 = vmatpush.bf16.msra.mxu0 0
    %4241 = vmatpush.bf16.msra.mxu0 0
    %4242 = vmatpush.bf16.msra.mxu0 0
    %4243 = vmatpush.bf16.msra.mxu0 %v4196
    %4244 = vmatpush.bf16.msra.mxu0 %v4148
    %4245 = vmatpush.bf16.msra.mxu0 %v4140
    %4246 = vmatpush.bf16.msra.mxu0 %v4132
    %4247 = vmatmul.bf16.gmra.mxu0 %v4187
    %v4248 = vpop.f32.mrf.mxu0
    %v4249 = vadd.f32 0.0, %v4248
    %v4250 = vpop.f32.mrf.mxu0
    %4251 = vdwg.mxu0
    %4252 = vmatpush.bf16.msra.mxu0 0
    %4253 = vmatpush.bf16.msra.mxu0 0
    %4254 = vmatpush.bf16.msra.mxu0 0
    %4255 = vmatpush.bf16.msra.mxu0 0
    %4256 = vmatpush.bf16.msra.mxu0 %v4199
    %4257 = vmatpush.bf16.msra.mxu0 %v4149
    %4258 = vmatpush.bf16.msra.mxu0 %v4141
    %4259 = vmatpush.bf16.msra.mxu0 %v4133
    %4260 = vmatmul.bf16.gmra.mxu0 %v4187
    %v4261 = vpop.f32.mrf.mxu0
    %v4262 = vadd.f32 0.0, %v4261
    %v4263 = vpop.f32.mrf.mxu0
    %4264 = vdwg.mxu0
    %4265 = vmatpush.bf16.msra.mxu0 0
    %4266 = vmatpush.bf16.msra.mxu0 0
    %4267 = vmatpush.bf16.msra.mxu0 0
    %4268 = vmatpush.bf16.msra.mxu0 0
    %4269 = vmatpush.bf16.msra.mxu0 %v4202
    %4270 = vmatpush.bf16.msra.mxu0 %v4150
    %4271 = vmatpush.bf16.msra.mxu0 %v4142
    %4272 = vmatpush.bf16.msra.mxu0 %v4134
    %4273 = vmatmul.bf16.gmra.mxu0 %v4187
    %v4274 = vpop.f32.mrf.mxu0
    %v4275 = vadd.f32 0.0, %v4274
    %v4276 = vpop.f32.mrf.mxu0
    %4277 = vdwg.mxu0
    %4278 = vmatpush.bf16.msra.mxu0 0
    %4279 = vmatpush.bf16.msra.mxu0 0
    %4280 = vmatpush.bf16.msra.mxu0 0
    %4281 = vmatpush.bf16.msra.mxu0 0
    %4282 = vmatpush.bf16.msra.mxu0 %v4205
    %4283 = vmatpush.bf16.msra.mxu0 %v4151
    %4284 = vmatpush.bf16.msra.mxu0 %v4143
    %4285 = vmatpush.bf16.msra.mxu0 %v4135
    %4286 = vmatmul.bf16.gmra.mxu0 %v4187
    %v4287 = vpop.f32.mrf.mxu0
    %v4288 = vadd.f32 0.0, %v4287
    %v4289 = vpop.f32.mrf.mxu0
    %4290 = vdwg.mxu0
    %4291 = vmatpush.bf16.msra.mxu0 0
    %4292 = vmatpush.bf16.msra.mxu0 0
    %4293 = vmatpush.bf16.msra.mxu0 0
    %4294 = vmatpush.bf16.msra.mxu0 0
    %4295 = vmatpush.bf16.msra.mxu0 %v4208
    %4296 = vmatpush.bf16.msra.mxu0 %v4152
    %4297 = vmatpush.bf16.msra.mxu0 %v4144
    %4298 = vmatpush.bf16.msra.mxu0 %v4136
    %4299 = vmatmul.bf16.gmra.mxu0 %v4187
    %v4300 = vpop.f32.mrf.mxu0
    %v4301 = vadd.f32 0.0, %v4300
    %v4302 = vpop.f32.mrf.mxu0
    %4303 = vdwg.mxu0
    %4304 = vmatpush.bf16.msra.mxu0 0
    %4305 = vmatpush.bf16.msra.mxu0 0
    %4306 = vmatpush.bf16.msra.mxu0 0
    %4307 = vmatpush.bf16.msra.mxu0 0
    %4308 = vmatpush.bf16.msra.mxu0 %v4211
    %4309 = vmatpush.bf16.msra.mxu0 %v4153
    %4310 = vmatpush.bf16.msra.mxu0 %v4145
    %4311 = vmatpush.bf16.msra.mxu0 %v4137
    %4312 = vmatmul.bf16.gmra.mxu0 %v4187
    %v4313 = vpop.f32.mrf.mxu0
    %v4314 = vadd.f32 0.0, %v4313
    %v4315 = vpop.f32.mrf.mxu0
    %4316 = vdwg.mxu0
    %v4325 = vrot.slane %v4236, 7
    %v4326 = vrot.slane %v4249, 6
    %v4327 = vrot.slane %v4262, 5
    %v4328 = vrot.slane %v4275, 4
    %v4329 = vrot.slane %v4288, 3
    %v4330 = vrot.slane %v4301, 2
    %v4331 = vrot.slane %v4314, 1
    %v4332 = vsel %vm708, %v4223, %v4325
    %v4333 = vsel %vm4003, %v4326, %v4327
    %v4334 = vsel %vm2497, %v4332, %v4333
    %v4335 = vsel %vm4006, %v4328, %v4329
    %v4336 = vsel %vm4008, %v4330, %v4331
    %v4337 = vsel %vm4010, %v4335, %v4336
    %v4338 = vsel %vm3120, %v4334, %v4337
    %v4340 = vadd.f32 %v4014, %v4338
    %s4341 = scalar_lea.vmem [#allocation2], 448
    %v4342 = vld [vmem:[%s4341] sm:$0xff]
    %v4343 = vld [vmem:[%s4341 + $0x8] sm:$0xff]
    %v4344 = vld [vmem:[%s4341 + $0x10] sm:$0xff]
    %v4345 = vld [vmem:[%s4341 + $0x18] sm:$0xff]
    %v4346 = vld [vmem:[%s4341 + $0x20] sm:$0xff]
    %v4347 = vld [vmem:[%s4341 + $0x28] sm:$0xff]
    %v4348 = vld [vmem:[%s4341 + $0x30] sm:$0xff]
    %v4349 = vld [vmem:[%s4341 + $0x38] sm:$0xff]
    %v4350 = vld [vmem:[%s4341 + $0x40] sm:$0xff]
    %v4351 = vld [vmem:[%s4341 + $0x48] sm:$0xff]
    %v4352 = vld [vmem:[%s4341 + $0x50] sm:$0xff]
    %v4353 = vld [vmem:[%s4341 + $0x58] sm:$0xff]
    %v4354 = vld [vmem:[%s4341 + $0x60] sm:$0xff]
    %v4355 = vld [vmem:[%s4341 + $0x68] sm:$0xff]
    %v4356 = vld [vmem:[%s4341 + $0x70] sm:$0xff]
    %v4357 = vld [vmem:[%s4341 + $0x78] sm:$0xff]
    %v4358 = vld [vmem:[%s4341 + $0x80] sm:$0xff]
    %v4359 = vld [vmem:[%s4341 + $0x88] sm:$0xff]
    %v4360 = vld [vmem:[%s4341 + $0x90] sm:$0xff]
    %v4361 = vld [vmem:[%s4341 + $0x98] sm:$0xff]
    %v4362 = vld [vmem:[%s4341 + $0xa0] sm:$0xff]
    %v4363 = vld [vmem:[%s4341 + $0xa8] sm:$0xff]
    %v4364 = vld [vmem:[%s4341 + $0xb0] sm:$0xff]
    %v4365 = vld [vmem:[%s4341 + $0xb8] sm:$0xff]
    %v4366 = vld [vmem:[%s4341 + $0xc0] sm:$0x11]
    %v4367 = vld [vmem:[%s4341 + $0xc8] sm:$0x11]
    %v4368 = vld [vmem:[%s4341 + $0xd0] sm:$0x11]
    %v4369 = vld [vmem:[%s4341 + $0xd8] sm:$0x11]
    %v4370 = vrot.slane %v3686, 2
    %v4399 = vunpack.c.l.b16 %v4342
    %v4400 = vunpack.c.h.b16 %v4342
    %v4401 = vunpack.c.l.b16 %v4343
    %v4402 = vunpack.c.h.b16 %v4343
    %v4403 = vunpack.c.l.b16 %v4344
    %v4404 = vunpack.c.h.b16 %v4344
    %v4405 = vunpack.c.l.b16 %v4345
    %v4406 = vunpack.c.h.b16 %v4345
    %v4407 = vunpack.c.l.b16 %v4346
    %v4408 = vunpack.c.h.b16 %v4346
    %v4409 = vunpack.c.l.b16 %v4347
    %v4410 = vunpack.c.h.b16 %v4347
    %v4411 = vunpack.c.l.b16 %v4348
    %v4412 = vunpack.c.h.b16 %v4348
    %v4413 = vunpack.c.l.b16 %v4349
    %v4414 = vunpack.c.h.b16 %v4349
    %v4415 = vunpack.c.l.b16 %v4350
    %v4416 = vunpack.c.h.b16 %v4350
    %v4417 = vunpack.c.l.b16 %v4351
    %v4418 = vunpack.c.h.b16 %v4351
    %v4419 = vunpack.c.l.b16 %v4352
    %v4420 = vunpack.c.h.b16 %v4352
    %v4421 = vunpack.c.l.b16 %v4353
    %v4422 = vunpack.c.h.b16 %v4353
    %v4423 = vunpack.c.l.b16 %v4354
    %v4424 = vunpack.c.h.b16 %v4354
    %v4425 = vunpack.c.l.b16 %v4355
    %v4426 = vunpack.c.h.b16 %v4355
    %v4427 = vunpack.c.l.b16 %v4356
    %v4428 = vunpack.c.h.b16 %v4356
    %v4429 = vunpack.c.l.b16 %v4357
    %v4430 = vunpack.c.h.b16 %v4357
    %v4431 = vunpack.c.l.b16 %v4358
    %v4432 = vunpack.c.h.b16 %v4358
    %v4433 = vunpack.c.l.b16 %v4359
    %v4434 = vunpack.c.h.b16 %v4359
    %v4435 = vunpack.c.l.b16 %v4360
    %v4436 = vunpack.c.h.b16 %v4360
    %v4437 = vunpack.c.l.b16 %v4361
    %v4438 = vunpack.c.h.b16 %v4361
    %v4439 = vunpack.c.l.b16 %v4362
    %v4440 = vunpack.c.h.b16 %v4362
    %v4441 = vunpack.c.l.b16 %v4363
    %v4442 = vunpack.c.h.b16 %v4363
    %v4443 = vunpack.c.l.b16 %v4364
    %v4444 = vunpack.c.h.b16 %v4364
    %v4445 = vunpack.c.l.b16 %v4365
    %v4446 = vunpack.c.h.b16 %v4365
    %v4447 = vunpack.c.l.b16 %v4366
    %v4448 = vunpack.c.h.b16 %v4366
    %v4449 = vunpack.c.l.b16 %v4367
    %v4450 = vunpack.c.h.b16 %v4367
    %v4451 = vunpack.c.l.b16 %v4368
    %v4452 = vunpack.c.h.b16 %v4368
    %v4453 = vunpack.c.l.b16 %v4369
    %v4454 = vunpack.c.h.b16 %v4369
    %v4455 = vpack.c.b16 %v4407, %v4399
    %v4456 = vpack.c.b16 %v4408, %v4400
    %v4457 = vpack.c.b16 %v4409, %v4401
    %v4458 = vpack.c.b16 %v4410, %v4402
    %v4459 = vpack.c.b16 %v4411, %v4403
    %v4460 = vpack.c.b16 %v4412, %v4404
    %v4461 = vpack.c.b16 %v4413, %v4405
    %v4462 = vpack.c.b16 %v4414, %v4406
    %v4463 = vpack.c.b16 %v4423, %v4415
    %v4464 = vpack.c.b16 %v4424, %v4416
    %v4465 = vpack.c.b16 %v4425, %v4417
    %v4466 = vpack.c.b16 %v4426, %v4418
    %v4467 = vpack.c.b16 %v4427, %v4419
    %v4468 = vpack.c.b16 %v4428, %v4420
    %v4469 = vpack.c.b16 %v4429, %v4421
    %v4470 = vpack.c.b16 %v4430, %v4422
    %v4471 = vpack.c.b16 %v4439, %v4431
    %v4472 = vpack.c.b16 %v4440, %v4432
    %v4473 = vpack.c.b16 %v4441, %v4433
    %v4474 = vpack.c.b16 %v4442, %v4434
    %v4475 = vpack.c.b16 %v4443, %v4435
    %v4476 = vpack.c.b16 %v4444, %v4436
    %v4477 = vpack.c.b16 %v4445, %v4437
    %v4478 = vpack.c.b16 %v4446, %v4438
    %v4479 = vpack.c.b16 %v4447, %v4447
    %v4480 = vpack.c.b16 %v4448, %v4448
    %v4481 = vpack.c.b16 %v4449, %v4449
    %v4482 = vpack.c.b16 %v4450, %v4450
    %v4483 = vpack.c.b16 %v4451, %v4451
    %v4484 = vpack.c.b16 %v4452, %v4452
    %v4485 = vpack.c.b16 %v4453, %v4453
    %v4486 = vpack.c.b16 %v4454, %v4454
    %v4512 = vsel %vm3855, %v4370, 0
    %v4515 = vsel %vm708, %v4479, 0
    %v4518 = vsel %vm708, %v4480, 0
    %v4521 = vsel %vm708, %v4481, 0
    %v4524 = vsel %vm708, %v4482, 0
    %v4527 = vsel %vm708, %v4483, 0
    %v4530 = vsel %vm708, %v4484, 0
    %v4533 = vsel %vm708, %v4485, 0
    %v4536 = vsel %vm708, %v4486, 0
    %4538 = vmatpush.bf16.msra.mxu0 0
    %4539 = vmatpush.bf16.msra.mxu0 0
    %4540 = vmatpush.bf16.msra.mxu0 0
    %4541 = vmatpush.bf16.msra.mxu0 0
    %4542 = vmatpush.bf16.msra.mxu0 %v4515
    %4543 = vmatpush.bf16.msra.mxu0 %v4471
    %4544 = vmatpush.bf16.msra.mxu0 %v4463
    %4545 = vmatpush.bf16.msra.mxu0 %v4455
    %4546 = vmatmul.bf16.gmra.mxu0 %v4512
    %v4547 = vpop.f32.mrf.mxu0
    %v4548 = vadd.f32 0.0, %v4547
    %v4549 = vpop.f32.mrf.mxu0
    %4550 = vdwg.mxu0
    %4551 = vmatpush.bf16.msra.mxu0 0
    %4552 = vmatpush.bf16.msra.mxu0 0
    %4553 = vmatpush.bf16.msra.mxu0 0
    %4554 = vmatpush.bf16.msra.mxu0 0
    %4555 = vmatpush.bf16.msra.mxu0 %v4518
    %4556 = vmatpush.bf16.msra.mxu0 %v4472
    %4557 = vmatpush.bf16.msra.mxu0 %v4464
    %4558 = vmatpush.bf16.msra.mxu0 %v4456
    %4559 = vmatmul.bf16.gmra.mxu0 %v4512
    %v4560 = vpop.f32.mrf.mxu0
    %v4561 = vadd.f32 0.0, %v4560
    %v4562 = vpop.f32.mrf.mxu0
    %4563 = vdwg.mxu0
    %4564 = vmatpush.bf16.msra.mxu0 0
    %4565 = vmatpush.bf16.msra.mxu0 0
    %4566 = vmatpush.bf16.msra.mxu0 0
    %4567 = vmatpush.bf16.msra.mxu0 0
    %4568 = vmatpush.bf16.msra.mxu0 %v4521
    %4569 = vmatpush.bf16.msra.mxu0 %v4473
    %4570 = vmatpush.bf16.msra.mxu0 %v4465
    %4571 = vmatpush.bf16.msra.mxu0 %v4457
    %4572 = vmatmul.bf16.gmra.mxu0 %v4512
    %v4573 = vpop.f32.mrf.mxu0
    %v4574 = vadd.f32 0.0, %v4573
    %v4575 = vpop.f32.mrf.mxu0
    %4576 = vdwg.mxu0
    %4577 = vmatpush.bf16.msra.mxu0 0
    %4578 = vmatpush.bf16.msra.mxu0 0
    %4579 = vmatpush.bf16.msra.mxu0 0
    %4580 = vmatpush.bf16.msra.mxu0 0
    %4581 = vmatpush.bf16.msra.mxu0 %v4524
    %4582 = vmatpush.bf16.msra.mxu0 %v4474
    %4583 = vmatpush.bf16.msra.mxu0 %v4466
    %4584 = vmatpush.bf16.msra.mxu0 %v4458
    %4585 = vmatmul.bf16.gmra.mxu0 %v4512
    %v4586 = vpop.f32.mrf.mxu0
    %v4587 = vadd.f32 0.0, %v4586
    %v4588 = vpop.f32.mrf.mxu0
    %4589 = vdwg.mxu0
    %4590 = vmatpush.bf16.msra.mxu0 0
    %4591 = vmatpush.bf16.msra.mxu0 0
    %4592 = vmatpush.bf16.msra.mxu0 0
    %4593 = vmatpush.bf16.msra.mxu0 0
    %4594 = vmatpush.bf16.msra.mxu0 %v4527
    %4595 = vmatpush.bf16.msra.mxu0 %v4475
    %4596 = vmatpush.bf16.msra.mxu0 %v4467
    %4597 = vmatpush.bf16.msra.mxu0 %v4459
    %4598 = vmatmul.bf16.gmra.mxu0 %v4512
    %v4599 = vpop.f32.mrf.mxu0
    %v4600 = vadd.f32 0.0, %v4599
    %v4601 = vpop.f32.mrf.mxu0
    %4602 = vdwg.mxu0
    %4603 = vmatpush.bf16.msra.mxu0 0
    %4604 = vmatpush.bf16.msra.mxu0 0
    %4605 = vmatpush.bf16.msra.mxu0 0
    %4606 = vmatpush.bf16.msra.mxu0 0
    %4607 = vmatpush.bf16.msra.mxu0 %v4530
    %4608 = vmatpush.bf16.msra.mxu0 %v4476
    %4609 = vmatpush.bf16.msra.mxu0 %v4468
    %4610 = vmatpush.bf16.msra.mxu0 %v4460
    %4611 = vmatmul.bf16.gmra.mxu0 %v4512
    %v4612 = vpop.f32.mrf.mxu0
    %v4613 = vadd.f32 0.0, %v4612
    %v4614 = vpop.f32.mrf.mxu0
    %4615 = vdwg.mxu0
    %4616 = vmatpush.bf16.msra.mxu0 0
    %4617 = vmatpush.bf16.msra.mxu0 0
    %4618 = vmatpush.bf16.msra.mxu0 0
    %4619 = vmatpush.bf16.msra.mxu0 0
    %4620 = vmatpush.bf16.msra.mxu0 %v4533
    %4621 = vmatpush.bf16.msra.mxu0 %v4477
    %4622 = vmatpush.bf16.msra.mxu0 %v4469
    %4623 = vmatpush.bf16.msra.mxu0 %v4461
    %4624 = vmatmul.bf16.gmra.mxu0 %v4512
    %v4625 = vpop.f32.mrf.mxu0
    %v4626 = vadd.f32 0.0, %v4625
    %v4627 = vpop.f32.mrf.mxu0
    %4628 = vdwg.mxu0
    %4629 = vmatpush.bf16.msra.mxu0 0
    %4630 = vmatpush.bf16.msra.mxu0 0
    %4631 = vmatpush.bf16.msra.mxu0 0
    %4632 = vmatpush.bf16.msra.mxu0 0
    %4633 = vmatpush.bf16.msra.mxu0 %v4536
    %4634 = vmatpush.bf16.msra.mxu0 %v4478
    %4635 = vmatpush.bf16.msra.mxu0 %v4470
    %4636 = vmatpush.bf16.msra.mxu0 %v4462
    %4637 = vmatmul.bf16.gmra.mxu0 %v4512
    %v4638 = vpop.f32.mrf.mxu0
    %v4639 = vadd.f32 0.0, %v4638
    %v4640 = vpop.f32.mrf.mxu0
    %4641 = vdwg.mxu0
    %v4650 = vrot.slane %v4561, 7
    %v4651 = vrot.slane %v4574, 6
    %v4652 = vrot.slane %v4587, 5
    %v4653 = vrot.slane %v4600, 4
    %v4654 = vrot.slane %v4613, 3
    %v4655 = vrot.slane %v4626, 2
    %v4656 = vrot.slane %v4639, 1
    %v4657 = vsel %vm708, %v4548, %v4650
    %v4658 = vsel %vm4003, %v4651, %v4652
    %v4659 = vsel %vm2497, %v4657, %v4658
    %v4660 = vsel %vm4006, %v4653, %v4654
    %v4661 = vsel %vm4008, %v4655, %v4656
    %v4662 = vsel %vm4010, %v4660, %v4661
    %v4663 = vsel %vm3120, %v4659, %v4662
    %v4665 = vadd.f32 %v4340, %v4663
    %s4666 = scalar_lea.vmem [#allocation2], 672
    %v4667 = vld [vmem:[%s4666] sm:$0xff]
    %v4668 = vld [vmem:[%s4666 + $0x8] sm:$0xff]
    %v4669 = vld [vmem:[%s4666 + $0x10] sm:$0xff]
    %v4670 = vld [vmem:[%s4666 + $0x18] sm:$0xff]
    %v4671 = vld [vmem:[%s4666 + $0x20] sm:$0xff]
    %v4672 = vld [vmem:[%s4666 + $0x28] sm:$0xff]
    %v4673 = vld [vmem:[%s4666 + $0x30] sm:$0xff]
    %v4674 = vld [vmem:[%s4666 + $0x38] sm:$0xff]
    %v4675 = vld [vmem:[%s4666 + $0x40] sm:$0xff]
    %v4676 = vld [vmem:[%s4666 + $0x48] sm:$0xff]
    %v4677 = vld [vmem:[%s4666 + $0x50] sm:$0xff]
    %v4678 = vld [vmem:[%s4666 + $0x58] sm:$0xff]
    %v4679 = vld [vmem:[%s4666 + $0x60] sm:$0xff]
    %v4680 = vld [vmem:[%s4666 + $0x68] sm:$0xff]
    %v4681 = vld [vmem:[%s4666 + $0x70] sm:$0xff]
    %v4682 = vld [vmem:[%s4666 + $0x78] sm:$0xff]
    %v4683 = vld [vmem:[%s4666 + $0x80] sm:$0xff]
    %v4684 = vld [vmem:[%s4666 + $0x88] sm:$0xff]
    %v4685 = vld [vmem:[%s4666 + $0x90] sm:$0xff]
    %v4686 = vld [vmem:[%s4666 + $0x98] sm:$0xff]
    %v4687 = vld [vmem:[%s4666 + $0xa0] sm:$0xff]
    %v4688 = vld [vmem:[%s4666 + $0xa8] sm:$0xff]
    %v4689 = vld [vmem:[%s4666 + $0xb0] sm:$0xff]
    %v4690 = vld [vmem:[%s4666 + $0xb8] sm:$0xff]
    %v4691 = vld [vmem:[%s4666 + $0xc0] sm:$0x11]
    %v4692 = vld [vmem:[%s4666 + $0xc8] sm:$0x11]
    %v4693 = vld [vmem:[%s4666 + $0xd0] sm:$0x11]
    %v4694 = vld [vmem:[%s4666 + $0xd8] sm:$0x11]
    %v4695 = vrot.slane %v3686, 3
    %v4724 = vunpack.c.l.b16 %v4667
    %v4725 = vunpack.c.h.b16 %v4667
    %v4726 = vunpack.c.l.b16 %v4668
    %v4727 = vunpack.c.h.b16 %v4668
    %v4728 = vunpack.c.l.b16 %v4669
    %v4729 = vunpack.c.h.b16 %v4669
    %v4730 = vunpack.c.l.b16 %v4670
    %v4731 = vunpack.c.h.b16 %v4670
    %v4732 = vunpack.c.l.b16 %v4671
    %v4733 = vunpack.c.h.b16 %v4671
    %v4734 = vunpack.c.l.b16 %v4672
    %v4735 = vunpack.c.h.b16 %v4672
    %v4736 = vunpack.c.l.b16 %v4673
    %v4737 = vunpack.c.h.b16 %v4673
    %v4738 = vunpack.c.l.b16 %v4674
    %v4739 = vunpack.c.h.b16 %v4674
    %v4740 = vunpack.c.l.b16 %v4675
    %v4741 = vunpack.c.h.b16 %v4675
    %v4742 = vunpack.c.l.b16 %v4676
    %v4743 = vunpack.c.h.b16 %v4676
    %v4744 = vunpack.c.l.b16 %v4677
    %v4745 = vunpack.c.h.b16 %v4677
    %v4746 = vunpack.c.l.b16 %v4678
    %v4747 = vunpack.c.h.b16 %v4678
    %v4748 = vunpack.c.l.b16 %v4679
    %v4749 = vunpack.c.h.b16 %v4679
    %v4750 = vunpack.c.l.b16 %v4680
    %v4751 = vunpack.c.h.b16 %v4680
    %v4752 = vunpack.c.l.b16 %v4681
    %v4753 = vunpack.c.h.b16 %v4681
    %v4754 = vunpack.c.l.b16 %v4682
    %v4755 = vunpack.c.h.b16 %v4682
    %v4756 = vunpack.c.l.b16 %v4683
    %v4757 = vunpack.c.h.b16 %v4683
    %v4758 = vunpack.c.l.b16 %v4684
    %v4759 = vunpack.c.h.b16 %v4684
    %v4760 = vunpack.c.l.b16 %v4685
    %v4761 = vunpack.c.h.b16 %v4685
    %v4762 = vunpack.c.l.b16 %v4686
    %v4763 = vunpack.c.h.b16 %v4686
    %v4764 = vunpack.c.l.b16 %v4687
    %v4765 = vunpack.c.h.b16 %v4687
    %v4766 = vunpack.c.l.b16 %v4688
    %v4767 = vunpack.c.h.b16 %v4688
    %v4768 = vunpack.c.l.b16 %v4689
    %v4769 = vunpack.c.h.b16 %v4689
    %v4770 = vunpack.c.l.b16 %v4690
    %v4771 = vunpack.c.h.b16 %v4690
    %v4772 = vunpack.c.l.b16 %v4691
    %v4773 = vunpack.c.h.b16 %v4691
    %v4774 = vunpack.c.l.b16 %v4692
    %v4775 = vunpack.c.h.b16 %v4692
    %v4776 = vunpack.c.l.b16 %v4693
    %v4777 = vunpack.c.h.b16 %v4693
    %v4778 = vunpack.c.l.b16 %v4694
    %v4779 = vunpack.c.h.b16 %v4694
    %v4780 = vpack.c.b16 %v4732, %v4724
    %v4781 = vpack.c.b16 %v4733, %v4725
    %v4782 = vpack.c.b16 %v4734, %v4726
    %v4783 = vpack.c.b16 %v4735, %v4727
    %v4784 = vpack.c.b16 %v4736, %v4728
    %v4785 = vpack.c.b16 %v4737, %v4729
    %v4786 = vpack.c.b16 %v4738, %v4730
    %v4787 = vpack.c.b16 %v4739, %v4731
    %v4788 = vpack.c.b16 %v4748, %v4740
    %v4789 = vpack.c.b16 %v4749, %v4741
    %v4790 = vpack.c.b16 %v4750, %v4742
    %v4791 = vpack.c.b16 %v4751, %v4743
    %v4792 = vpack.c.b16 %v4752, %v4744
    %v4793 = vpack.c.b16 %v4753, %v4745
    %v4794 = vpack.c.b16 %v4754, %v4746
    %v4795 = vpack.c.b16 %v4755, %v4747
    %v4796 = vpack.c.b16 %v4764, %v4756
    %v4797 = vpack.c.b16 %v4765, %v4757
    %v4798 = vpack.c.b16 %v4766, %v4758
    %v4799 = vpack.c.b16 %v4767, %v4759
    %v4800 = vpack.c.b16 %v4768, %v4760
    %v4801 = vpack.c.b16 %v4769, %v4761
    %v4802 = vpack.c.b16 %v4770, %v4762
    %v4803 = vpack.c.b16 %v4771, %v4763
    %v4804 = vpack.c.b16 %v4772, %v4772
    %v4805 = vpack.c.b16 %v4773, %v4773
    %v4806 = vpack.c.b16 %v4774, %v4774
    %v4807 = vpack.c.b16 %v4775, %v4775
    %v4808 = vpack.c.b16 %v4776, %v4776
    %v4809 = vpack.c.b16 %v4777, %v4777
    %v4810 = vpack.c.b16 %v4778, %v4778
    %v4811 = vpack.c.b16 %v4779, %v4779
    %v4837 = vsel %vm3855, %v4695, 0
    %v4840 = vsel %vm708, %v4804, 0
    %v4843 = vsel %vm708, %v4805, 0
    %v4846 = vsel %vm708, %v4806, 0
    %v4849 = vsel %vm708, %v4807, 0
    %v4852 = vsel %vm708, %v4808, 0
    %v4855 = vsel %vm708, %v4809, 0
    %v4858 = vsel %vm708, %v4810, 0
    %v4861 = vsel %vm708, %v4811, 0
    %4863 = vmatpush.bf16.msra.mxu0 0
    %4864 = vmatpush.bf16.msra.mxu0 0
    %4865 = vmatpush.bf16.msra.mxu0 0
    %4866 = vmatpush.bf16.msra.mxu0 0
    %4867 = vmatpush.bf16.msra.mxu0 %v4840
    %4868 = vmatpush.bf16.msra.mxu0 %v4796
    %4869 = vmatpush.bf16.msra.mxu0 %v4788
    %4870 = vmatpush.bf16.msra.mxu0 %v4780
    %4871 = vmatmul.bf16.gmra.mxu0 %v4837
    %v4872 = vpop.f32.mrf.mxu0
    %v4873 = vadd.f32 0.0, %v4872
    %v4874 = vpop.f32.mrf.mxu0
    %4875 = vdwg.mxu0
    %4876 = vmatpush.bf16.msra.mxu0 0
    %4877 = vmatpush.bf16.msra.mxu0 0
    %4878 = vmatpush.bf16.msra.mxu0 0
    %4879 = vmatpush.bf16.msra.mxu0 0
    %4880 = vmatpush.bf16.msra.mxu0 %v4843
    %4881 = vmatpush.bf16.msra.mxu0 %v4797
    %4882 = vmatpush.bf16.msra.mxu0 %v4789
    %4883 = vmatpush.bf16.msra.mxu0 %v4781
    %4884 = vmatmul.bf16.gmra.mxu0 %v4837
    %v4885 = vpop.f32.mrf.mxu0
    %v4886 = vadd.f32 0.0, %v4885
    %v4887 = vpop.f32.mrf.mxu0
    %4888 = vdwg.mxu0
    %4889 = vmatpush.bf16.msra.mxu0 0
    %4890 = vmatpush.bf16.msra.mxu0 0
    %4891 = vmatpush.bf16.msra.mxu0 0
    %4892 = vmatpush.bf16.msra.mxu0 0
    %4893 = vmatpush.bf16.msra.mxu0 %v4846
    %4894 = vmatpush.bf16.msra.mxu0 %v4798
    %4895 = vmatpush.bf16.msra.mxu0 %v4790
    %4896 = vmatpush.bf16.msra.mxu0 %v4782
    %4897 = vmatmul.bf16.gmra.mxu0 %v4837
    %v4898 = vpop.f32.mrf.mxu0
    %v4899 = vadd.f32 0.0, %v4898
    %v4900 = vpop.f32.mrf.mxu0
    %4901 = vdwg.mxu0
    %4902 = vmatpush.bf16.msra.mxu0 0
    %4903 = vmatpush.bf16.msra.mxu0 0
    %4904 = vmatpush.bf16.msra.mxu0 0
    %4905 = vmatpush.bf16.msra.mxu0 0
    %4906 = vmatpush.bf16.msra.mxu0 %v4849
    %4907 = vmatpush.bf16.msra.mxu0 %v4799
    %4908 = vmatpush.bf16.msra.mxu0 %v4791
    %4909 = vmatpush.bf16.msra.mxu0 %v4783
    %4910 = vmatmul.bf16.gmra.mxu0 %v4837
    %v4911 = vpop.f32.mrf.mxu0
    %v4912 = vadd.f32 0.0, %v4911
    %v4913 = vpop.f32.mrf.mxu0
    %4914 = vdwg.mxu0
    %4915 = vmatpush.bf16.msra.mxu0 0
    %4916 = vmatpush.bf16.msra.mxu0 0
    %4917 = vmatpush.bf16.msra.mxu0 0
    %4918 = vmatpush.bf16.msra.mxu0 0
    %4919 = vmatpush.bf16.msra.mxu0 %v4852
    %4920 = vmatpush.bf16.msra.mxu0 %v4800
    %4921 = vmatpush.bf16.msra.mxu0 %v4792
    %4922 = vmatpush.bf16.msra.mxu0 %v4784
    %4923 = vmatmul.bf16.gmra.mxu0 %v4837
    %v4924 = vpop.f32.mrf.mxu0
    %v4925 = vadd.f32 0.0, %v4924
    %v4926 = vpop.f32.mrf.mxu0
    %4927 = vdwg.mxu0
    %4928 = vmatpush.bf16.msra.mxu0 0
    %4929 = vmatpush.bf16.msra.mxu0 0
    %4930 = vmatpush.bf16.msra.mxu0 0
    %4931 = vmatpush.bf16.msra.mxu0 0
    %4932 = vmatpush.bf16.msra.mxu0 %v4855
    %4933 = vmatpush.bf16.msra.mxu0 %v4801
    %4934 = vmatpush.bf16.msra.mxu0 %v4793
    %4935 = vmatpush.bf16.msra.mxu0 %v4785
    %4936 = vmatmul.bf16.gmra.mxu0 %v4837
    %v4937 = vpop.f32.mrf.mxu0
    %v4938 = vadd.f32 0.0, %v4937
    %v4939 = vpop.f32.mrf.mxu0
    %4940 = vdwg.mxu0
    %4941 = vmatpush.bf16.msra.mxu0 0
    %4942 = vmatpush.bf16.msra.mxu0 0
    %4943 = vmatpush.bf16.msra.mxu0 0
    %4944 = vmatpush.bf16.msra.mxu0 0
    %4945 = vmatpush.bf16.msra.mxu0 %v4858
    %4946 = vmatpush.bf16.msra.mxu0 %v4802
    %4947 = vmatpush.bf16.msra.mxu0 %v4794
    %4948 = vmatpush.bf16.msra.mxu0 %v4786
    %4949 = vmatmul.bf16.gmra.mxu0 %v4837
    %v4950 = vpop.f32.mrf.mxu0
    %v4951 = vadd.f32 0.0, %v4950
    %v4952 = vpop.f32.mrf.mxu0
    %4953 = vdwg.mxu0
    %4954 = vmatpush.bf16.msra.mxu0 0
    %4955 = vmatpush.bf16.msra.mxu0 0
    %4956 = vmatpush.bf16.msra.mxu0 0
    %4957 = vmatpush.bf16.msra.mxu0 0
    %4958 = vmatpush.bf16.msra.mxu0 %v4861
    %4959 = vmatpush.bf16.msra.mxu0 %v4803
    %4960 = vmatpush.bf16.msra.mxu0 %v4795
    %4961 = vmatpush.bf16.msra.mxu0 %v4787
    %4962 = vmatmul.bf16.gmra.mxu0 %v4837
    %v4963 = vpop.f32.mrf.mxu0
    %v4964 = vadd.f32 0.0, %v4963
    %v4965 = vpop.f32.mrf.mxu0
    %4966 = vdwg.mxu0
    %v4975 = vrot.slane %v4886, 7
    %v4976 = vrot.slane %v4899, 6
    %v4977 = vrot.slane %v4912, 5
    %v4978 = vrot.slane %v4925, 4
    %v4979 = vrot.slane %v4938, 3
    %v4980 = vrot.slane %v4951, 2
    %v4981 = vrot.slane %v4964, 1
    %v4982 = vsel %vm708, %v4873, %v4975
    %v4983 = vsel %vm4003, %v4976, %v4977
    %v4984 = vsel %vm2497, %v4982, %v4983
    %v4985 = vsel %vm4006, %v4978, %v4979
    %v4986 = vsel %vm4008, %v4980, %v4981
    %v4987 = vsel %vm4010, %v4985, %v4986
    %v4988 = vsel %vm3120, %v4984, %v4987
    %v4990 = vadd.f32 %v4665, %v4988
    %v4991 = vpack.c.bf16 %v3671, %v3671
    %s4992 = scalar_lea.vmem [#allocation2], 896
    %v4993 = vld [vmem:[%s4992] sm:$0xff]
    %v4994 = vld [vmem:[%s4992 + $0x8] sm:$0xff]
    %v4995 = vld [vmem:[%s4992 + $0x10] sm:$0xff]
    %v4996 = vld [vmem:[%s4992 + $0x18] sm:$0xff]
    %v4997 = vld [vmem:[%s4992 + $0x20] sm:$0xff]
    %v4998 = vld [vmem:[%s4992 + $0x28] sm:$0xff]
    %v4999 = vld [vmem:[%s4992 + $0x30] sm:$0xff]
    %v5000 = vld [vmem:[%s4992 + $0x38] sm:$0xff]
    %v5001 = vld [vmem:[%s4992 + $0x40] sm:$0xff]
    %v5002 = vld [vmem:[%s4992 + $0x48] sm:$0xff]
    %v5003 = vld [vmem:[%s4992 + $0x50] sm:$0xff]
    %v5004 = vld [vmem:[%s4992 + $0x58] sm:$0xff]
    %v5005 = vld [vmem:[%s4992 + $0x60] sm:$0xff]
    %v5006 = vld [vmem:[%s4992 + $0x68] sm:$0xff]
    %v5007 = vld [vmem:[%s4992 + $0x70] sm:$0xff]
    %v5008 = vld [vmem:[%s4992 + $0x78] sm:$0xff]
    %v5009 = vld [vmem:[%s4992 + $0x80] sm:$0xff]
    %v5010 = vld [vmem:[%s4992 + $0x88] sm:$0xff]
    %v5011 = vld [vmem:[%s4992 + $0x90] sm:$0xff]
    %v5012 = vld [vmem:[%s4992 + $0x98] sm:$0xff]
    %v5013 = vld [vmem:[%s4992 + $0xa0] sm:$0xff]
    %v5014 = vld [vmem:[%s4992 + $0xa8] sm:$0xff]
    %v5015 = vld [vmem:[%s4992 + $0xb0] sm:$0xff]
    %v5016 = vld [vmem:[%s4992 + $0xb8] sm:$0xff]
    %v5017 = vld [vmem:[%s4992 + $0xc0] sm:$0x11]
    %v5018 = vld [vmem:[%s4992 + $0xc8] sm:$0x11]
    %v5019 = vld [vmem:[%s4992 + $0xd0] sm:$0x11]
    %v5020 = vld [vmem:[%s4992 + $0xd8] sm:$0x11]
    %v5049 = vunpack.c.l.b16 %v4993
    %v5050 = vunpack.c.h.b16 %v4993
    %v5051 = vunpack.c.l.b16 %v4994
    %v5052 = vunpack.c.h.b16 %v4994
    %v5053 = vunpack.c.l.b16 %v4995
    %v5054 = vunpack.c.h.b16 %v4995
    %v5055 = vunpack.c.l.b16 %v4996
    %v5056 = vunpack.c.h.b16 %v4996
    %v5057 = vunpack.c.l.b16 %v4997
    %v5058 = vunpack.c.h.b16 %v4997
    %v5059 = vunpack.c.l.b16 %v4998
    %v5060 = vunpack.c.h.b16 %v4998
    %v5061 = vunpack.c.l.b16 %v4999
    %v5062 = vunpack.c.h.b16 %v4999
    %v5063 = vunpack.c.l.b16 %v5000
    %v5064 = vunpack.c.h.b16 %v5000
    %v5065 = vunpack.c.l.b16 %v5001
    %v5066 = vunpack.c.h.b16 %v5001
    %v5067 = vunpack.c.l.b16 %v5002
    %v5068 = vunpack.c.h.b16 %v5002
    %v5069 = vunpack.c.l.b16 %v5003
    %v5070 = vunpack.c.h.b16 %v5003
    %v5071 = vunpack.c.l.b16 %v5004
    %v5072 = vunpack.c.h.b16 %v5004
    %v5073 = vunpack.c.l.b16 %v5005
    %v5074 = vunpack.c.h.b16 %v5005
    %v5075 = vunpack.c.l.b16 %v5006
    %v5076 = vunpack.c.h.b16 %v5006
    %v5077 = vunpack.c.l.b16 %v5007
    %v5078 = vunpack.c.h.b16 %v5007
    %v5079 = vunpack.c.l.b16 %v5008
    %v5080 = vunpack.c.h.b16 %v5008
    %v5081 = vunpack.c.l.b16 %v5009
    %v5082 = vunpack.c.h.b16 %v5009
    %v5083 = vunpack.c.l.b16 %v5010
    %v5084 = vunpack.c.h.b16 %v5010
    %v5085 = vunpack.c.l.b16 %v5011
    %v5086 = vunpack.c.h.b16 %v5011
    %v5087 = vunpack.c.l.b16 %v5012
    %v5088 = vunpack.c.h.b16 %v5012
    %v5089 = vunpack.c.l.b16 %v5013
    %v5090 = vunpack.c.h.b16 %v5013
    %v5091 = vunpack.c.l.b16 %v5014
    %v5092 = vunpack.c.h.b16 %v5014
    %v5093 = vunpack.c.l.b16 %v5015
    %v5094 = vunpack.c.h.b16 %v5015
    %v5095 = vunpack.c.l.b16 %v5016
    %v5096 = vunpack.c.h.b16 %v5016
    %v5097 = vunpack.c.l.b16 %v5017
    %v5098 = vunpack.c.h.b16 %v5017
    %v5099 = vunpack.c.l.b16 %v5018
    %v5100 = vunpack.c.h.b16 %v5018
    %v5101 = vunpack.c.l.b16 %v5019
    %v5102 = vunpack.c.h.b16 %v5019
    %v5103 = vunpack.c.l.b16 %v5020
    %v5104 = vunpack.c.h.b16 %v5020
    %v5105 = vpack.c.b16 %v5057, %v5049
    %v5106 = vpack.c.b16 %v5058, %v5050
    %v5107 = vpack.c.b16 %v5059, %v5051
    %v5108 = vpack.c.b16 %v5060, %v5052
    %v5109 = vpack.c.b16 %v5061, %v5053
    %v5110 = vpack.c.b16 %v5062, %v5054
    %v5111 = vpack.c.b16 %v5063, %v5055
    %v5112 = vpack.c.b16 %v5064, %v5056
    %v5113 = vpack.c.b16 %v5073, %v5065
    %v5114 = vpack.c.b16 %v5074, %v5066
    %v5115 = vpack.c.b16 %v5075, %v5067
    %v5116 = vpack.c.b16 %v5076, %v5068
    %v5117 = vpack.c.b16 %v5077, %v5069
    %v5118 = vpack.c.b16 %v5078, %v5070
    %v5119 = vpack.c.b16 %v5079, %v5071
    %v5120 = vpack.c.b16 %v5080, %v5072
    %v5121 = vpack.c.b16 %v5089, %v5081
    %v5122 = vpack.c.b16 %v5090, %v5082
    %v5123 = vpack.c.b16 %v5091, %v5083
    %v5124 = vpack.c.b16 %v5092, %v5084
    %v5125 = vpack.c.b16 %v5093, %v5085
    %v5126 = vpack.c.b16 %v5094, %v5086
    %v5127 = vpack.c.b16 %v5095, %v5087
    %v5128 = vpack.c.b16 %v5096, %v5088
    %v5129 = vpack.c.b16 %v5097, %v5097
    %v5130 = vpack.c.b16 %v5098, %v5098
    %v5131 = vpack.c.b16 %v5099, %v5099
    %v5132 = vpack.c.b16 %v5100, %v5100
    %v5133 = vpack.c.b16 %v5101, %v5101
    %v5134 = vpack.c.b16 %v5102, %v5102
    %v5135 = vpack.c.b16 %v5103, %v5103
    %v5136 = vpack.c.b16 %v5104, %v5104
    %v5162 = vsel %vm3855, %v4991, 0
    %v5165 = vsel %vm708, %v5129, 0
    %v5168 = vsel %vm708, %v5130, 0
    %v5171 = vsel %vm708, %v5131, 0
    %v5174 = vsel %vm708, %v5132, 0
    %v5177 = vsel %vm708, %v5133, 0
    %v5180 = vsel %vm708, %v5134, 0
    %v5183 = vsel %vm708, %v5135, 0
    %v5186 = vsel %vm708, %v5136, 0
    %5188 = vmatpush.bf16.msra.mxu0 0
    %5189 = vmatpush.bf16.msra.mxu0 0
    %5190 = vmatpush.bf16.msra.mxu0 0
    %5191 = vmatpush.bf16.msra.mxu0 0
    %5192 = vmatpush.bf16.msra.mxu0 %v5165
    %5193 = vmatpush.bf16.msra.mxu0 %v5121
    %5194 = vmatpush.bf16.msra.mxu0 %v5113
    %5195 = vmatpush.bf16.msra.mxu0 %v5105
    %5196 = vmatmul.bf16.gmra.mxu0 %v5162
    %v5197 = vpop.f32.mrf.mxu0
    %v5198 = vadd.f32 0.0, %v5197
    %v5199 = vpop.f32.mrf.mxu0
    %5200 = vdwg.mxu0
    %5201 = vmatpush.bf16.msra.mxu0 0
    %5202 = vmatpush.bf16.msra.mxu0 0
    %5203 = vmatpush.bf16.msra.mxu0 0
    %5204 = vmatpush.bf16.msra.mxu0 0
    %5205 = vmatpush.bf16.msra.mxu0 %v5168
    %5206 = vmatpush.bf16.msra.mxu0 %v5122
    %5207 = vmatpush.bf16.msra.mxu0 %v5114
    %5208 = vmatpush.bf16.msra.mxu0 %v5106
    %5209 = vmatmul.bf16.gmra.mxu0 %v5162
    %v5210 = vpop.f32.mrf.mxu0
    %v5211 = vadd.f32 0.0, %v5210
    %v5212 = vpop.f32.mrf.mxu0
    %5213 = vdwg.mxu0
    %5214 = vmatpush.bf16.msra.mxu0 0
    %5215 = vmatpush.bf16.msra.mxu0 0
    %5216 = vmatpush.bf16.msra.mxu0 0
    %5217 = vmatpush.bf16.msra.mxu0 0
    %5218 = vmatpush.bf16.msra.mxu0 %v5171
    %5219 = vmatpush.bf16.msra.mxu0 %v5123
    %5220 = vmatpush.bf16.msra.mxu0 %v5115
    %5221 = vmatpush.bf16.msra.mxu0 %v5107
    %5222 = vmatmul.bf16.gmra.mxu0 %v5162
    %v5223 = vpop.f32.mrf.mxu0
    %v5224 = vadd.f32 0.0, %v5223
    %v5225 = vpop.f32.mrf.mxu0
    %5226 = vdwg.mxu0
    %5227 = vmatpush.bf16.msra.mxu0 0
    %5228 = vmatpush.bf16.msra.mxu0 0
    %5229 = vmatpush.bf16.msra.mxu0 0
    %5230 = vmatpush.bf16.msra.mxu0 0
    %5231 = vmatpush.bf16.msra.mxu0 %v5174
    %5232 = vmatpush.bf16.msra.mxu0 %v5124
    %5233 = vmatpush.bf16.msra.mxu0 %v5116
    %5234 = vmatpush.bf16.msra.mxu0 %v5108
    %5235 = vmatmul.bf16.gmra.mxu0 %v5162
    %v5236 = vpop.f32.mrf.mxu0
    %v5237 = vadd.f32 0.0, %v5236
    %v5238 = vpop.f32.mrf.mxu0
    %5239 = vdwg.mxu0
    %5240 = vmatpush.bf16.msra.mxu0 0
    %5241 = vmatpush.bf16.msra.mxu0 0
    %5242 = vmatpush.bf16.msra.mxu0 0
    %5243 = vmatpush.bf16.msra.mxu0 0
    %5244 = vmatpush.bf16.msra.mxu0 %v5177
    %5245 = vmatpush.bf16.msra.mxu0 %v5125
    %5246 = vmatpush.bf16.msra.mxu0 %v5117
    %5247 = vmatpush.bf16.msra.mxu0 %v5109
    %5248 = vmatmul.bf16.gmra.mxu0 %v5162
    %v5249 = vpop.f32.mrf.mxu0
    %v5250 = vadd.f32 0.0, %v5249
    %v5251 = vpop.f32.mrf.mxu0
    %5252 = vdwg.mxu0
    %5253 = vmatpush.bf16.msra.mxu0 0
    %5254 = vmatpush.bf16.msra.mxu0 0
    %5255 = vmatpush.bf16.msra.mxu0 0
    %5256 = vmatpush.bf16.msra.mxu0 0
    %5257 = vmatpush.bf16.msra.mxu0 %v5180
    %5258 = vmatpush.bf16.msra.mxu0 %v5126
    %5259 = vmatpush.bf16.msra.mxu0 %v5118
    %5260 = vmatpush.bf16.msra.mxu0 %v5110
    %5261 = vmatmul.bf16.gmra.mxu0 %v5162
    %v5262 = vpop.f32.mrf.mxu0
    %v5263 = vadd.f32 0.0, %v5262
    %v5264 = vpop.f32.mrf.mxu0
    %5265 = vdwg.mxu0
    %5266 = vmatpush.bf16.msra.mxu0 0
    %5267 = vmatpush.bf16.msra.mxu0 0
    %5268 = vmatpush.bf16.msra.mxu0 0
    %5269 = vmatpush.bf16.msra.mxu0 0
    %5270 = vmatpush.bf16.msra.mxu0 %v5183
    %5271 = vmatpush.bf16.msra.mxu0 %v5127
    %5272 = vmatpush.bf16.msra.mxu0 %v5119
    %5273 = vmatpush.bf16.msra.mxu0 %v5111
    %5274 = vmatmul.bf16.gmra.mxu0 %v5162
    %v5275 = vpop.f32.mrf.mxu0
    %v5276 = vadd.f32 0.0, %v5275
    %v5277 = vpop.f32.mrf.mxu0
    %5278 = vdwg.mxu0
    %5279 = vmatpush.bf16.msra.mxu0 0
    %5280 = vmatpush.bf16.msra.mxu0 0
    %5281 = vmatpush.bf16.msra.mxu0 0
    %5282 = vmatpush.bf16.msra.mxu0 0
    %5283 = vmatpush.bf16.msra.mxu0 %v5186
    %5284 = vmatpush.bf16.msra.mxu0 %v5128
    %5285 = vmatpush.bf16.msra.mxu0 %v5120
    %5286 = vmatpush.bf16.msra.mxu0 %v5112
    %5287 = vmatmul.bf16.gmra.mxu0 %v5162
    %v5288 = vpop.f32.mrf.mxu0
    %v5289 = vadd.f32 0.0, %v5288
    %v5290 = vpop.f32.mrf.mxu0
    %5291 = vdwg.mxu0
    %v5300 = vrot.slane %v5211, 7
    %v5301 = vrot.slane %v5224, 6
    %v5302 = vrot.slane %v5237, 5
    %v5303 = vrot.slane %v5250, 4
    %v5304 = vrot.slane %v5263, 3
    %v5305 = vrot.slane %v5276, 2
    %v5306 = vrot.slane %v5289, 1
    %v5307 = vsel %vm708, %v5198, %v5300
    %v5308 = vsel %vm4003, %v5301, %v5302
    %v5309 = vsel %vm2497, %v5307, %v5308
    %v5310 = vsel %vm4006, %v5303, %v5304
    %v5311 = vsel %vm4008, %v5305, %v5306
    %v5312 = vsel %vm4010, %v5310, %v5311
    %v5313 = vsel %vm3120, %v5309, %v5312
    %v5315 = vadd.f32 %v4990, %v5313
    %v5316 = vpack.c.bf16 %v3672, %v3672
    %s5317 = scalar_lea.vmem [#allocation2], 1120
    %v5318 = vld [vmem:[%s5317] sm:$0xff]
    %v5319 = vld [vmem:[%s5317 + $0x8] sm:$0xff]
    %v5320 = vld [vmem:[%s5317 + $0x10] sm:$0xff]
    %v5321 = vld [vmem:[%s5317 + $0x18] sm:$0xff]
    %v5322 = vld [vmem:[%s5317 + $0x20] sm:$0xff]
    %v5323 = vld [vmem:[%s5317 + $0x28] sm:$0xff]
    %v5324 = vld [vmem:[%s5317 + $0x30] sm:$0xff]
    %v5325 = vld [vmem:[%s5317 + $0x38] sm:$0xff]
    %v5326 = vld [vmem:[%s5317 + $0x40] sm:$0xff]
    %v5327 = vld [vmem:[%s5317 + $0x48] sm:$0xff]
    %v5328 = vld [vmem:[%s5317 + $0x50] sm:$0xff]
    %v5329 = vld [vmem:[%s5317 + $0x58] sm:$0xff]
    %v5330 = vld [vmem:[%s5317 + $0x60] sm:$0xff]
    %v5331 = vld [vmem:[%s5317 + $0x68] sm:$0xff]
    %v5332 = vld [vmem:[%s5317 + $0x70] sm:$0xff]
    %v5333 = vld [vmem:[%s5317 + $0x78] sm:$0xff]
    %v5334 = vld [vmem:[%s5317 + $0x80] sm:$0xff]
    %v5335 = vld [vmem:[%s5317 + $0x88] sm:$0xff]
    %v5336 = vld [vmem:[%s5317 + $0x90] sm:$0xff]
    %v5337 = vld [vmem:[%s5317 + $0x98] sm:$0xff]
    %v5338 = vld [vmem:[%s5317 + $0xa0] sm:$0xff]
    %v5339 = vld [vmem:[%s5317 + $0xa8] sm:$0xff]
    %v5340 = vld [vmem:[%s5317 + $0xb0] sm:$0xff]
    %v5341 = vld [vmem:[%s5317 + $0xb8] sm:$0xff]
    %v5342 = vld [vmem:[%s5317 + $0xc0] sm:$0x11]
    %v5343 = vld [vmem:[%s5317 + $0xc8] sm:$0x11]
    %v5344 = vld [vmem:[%s5317 + $0xd0] sm:$0x11]
    %v5345 = vld [vmem:[%s5317 + $0xd8] sm:$0x11]
    %v5347 = vrot.slane %v5316, 1
    %v5376 = vunpack.c.l.b16 %v5318
    %v5377 = vunpack.c.h.b16 %v5318
    %v5378 = vunpack.c.l.b16 %v5319
    %v5379 = vunpack.c.h.b16 %v5319
    %v5380 = vunpack.c.l.b16 %v5320
    %v5381 = vunpack.c.h.b16 %v5320
    %v5382 = vunpack.c.l.b16 %v5321
    %v5383 = vunpack.c.h.b16 %v5321
    %v5384 = vunpack.c.l.b16 %v5322
    %v5385 = vunpack.c.h.b16 %v5322
    %v5386 = vunpack.c.l.b16 %v5323
    %v5387 = vunpack.c.h.b16 %v5323
    %v5388 = vunpack.c.l.b16 %v5324
    %v5389 = vunpack.c.h.b16 %v5324
    %v5390 = vunpack.c.l.b16 %v5325
    %v5391 = vunpack.c.h.b16 %v5325
    %v5392 = vunpack.c.l.b16 %v5326
    %v5393 = vunpack.c.h.b16 %v5326
    %v5394 = vunpack.c.l.b16 %v5327
    %v5395 = vunpack.c.h.b16 %v5327
    %v5396 = vunpack.c.l.b16 %v5328
    %v5397 = vunpack.c.h.b16 %v5328
    %v5398 = vunpack.c.l.b16 %v5329
    %v5399 = vunpack.c.h.b16 %v5329
    %v5400 = vunpack.c.l.b16 %v5330
    %v5401 = vunpack.c.h.b16 %v5330
    %v5402 = vunpack.c.l.b16 %v5331
    %v5403 = vunpack.c.h.b16 %v5331
    %v5404 = vunpack.c.l.b16 %v5332
    %v5405 = vunpack.c.h.b16 %v5332
    %v5406 = vunpack.c.l.b16 %v5333
    %v5407 = vunpack.c.h.b16 %v5333
    %v5408 = vunpack.c.l.b16 %v5334
    %v5409 = vunpack.c.h.b16 %v5334
    %v5410 = vunpack.c.l.b16 %v5335
    %v5411 = vunpack.c.h.b16 %v5335
    %v5412 = vunpack.c.l.b16 %v5336
    %v5413 = vunpack.c.h.b16 %v5336
    %v5414 = vunpack.c.l.b16 %v5337
    %v5415 = vunpack.c.h.b16 %v5337
    %v5416 = vunpack.c.l.b16 %v5338
    %v5417 = vunpack.c.h.b16 %v5338
    %v5418 = vunpack.c.l.b16 %v5339
    %v5419 = vunpack.c.h.b16 %v5339
    %v5420 = vunpack.c.l.b16 %v5340
    %v5421 = vunpack.c.h.b16 %v5340
    %v5422 = vunpack.c.l.b16 %v5341
    %v5423 = vunpack.c.h.b16 %v5341
    %v5424 = vunpack.c.l.b16 %v5342
    %v5425 = vunpack.c.h.b16 %v5342
    %v5426 = vunpack.c.l.b16 %v5343
    %v5427 = vunpack.c.h.b16 %v5343
    %v5428 = vunpack.c.l.b16 %v5344
    %v5429 = vunpack.c.h.b16 %v5344
    %v5430 = vunpack.c.l.b16 %v5345
    %v5431 = vunpack.c.h.b16 %v5345
    %v5432 = vpack.c.b16 %v5384, %v5376
    %v5433 = vpack.c.b16 %v5385, %v5377
    %v5434 = vpack.c.b16 %v5386, %v5378
    %v5435 = vpack.c.b16 %v5387, %v5379
    %v5436 = vpack.c.b16 %v5388, %v5380
    %v5437 = vpack.c.b16 %v5389, %v5381
    %v5438 = vpack.c.b16 %v5390, %v5382
    %v5439 = vpack.c.b16 %v5391, %v5383
    %v5440 = vpack.c.b16 %v5400, %v5392
    %v5441 = vpack.c.b16 %v5401, %v5393
    %v5442 = vpack.c.b16 %v5402, %v5394
    %v5443 = vpack.c.b16 %v5403, %v5395
    %v5444 = vpack.c.b16 %v5404, %v5396
    %v5445 = vpack.c.b16 %v5405, %v5397
    %v5446 = vpack.c.b16 %v5406, %v5398
    %v5447 = vpack.c.b16 %v5407, %v5399
    %v5448 = vpack.c.b16 %v5416, %v5408
    %v5449 = vpack.c.b16 %v5417, %v5409
    %v5450 = vpack.c.b16 %v5418, %v5410
    %v5451 = vpack.c.b16 %v5419, %v5411
    %v5452 = vpack.c.b16 %v5420, %v5412
    %v5453 = vpack.c.b16 %v5421, %v5413
    %v5454 = vpack.c.b16 %v5422, %v5414
    %v5455 = vpack.c.b16 %v5423, %v5415
    %v5456 = vpack.c.b16 %v5424, %v5424
    %v5457 = vpack.c.b16 %v5425, %v5425
    %v5458 = vpack.c.b16 %v5426, %v5426
    %v5459 = vpack.c.b16 %v5427, %v5427
    %v5460 = vpack.c.b16 %v5428, %v5428
    %v5461 = vpack.c.b16 %v5429, %v5429
    %v5462 = vpack.c.b16 %v5430, %v5430
    %v5463 = vpack.c.b16 %v5431, %v5431
    %v5489 = vsel %vm3855, %v5347, 0
    %v5492 = vsel %vm708, %v5456, 0
    %v5495 = vsel %vm708, %v5457, 0
    %v5498 = vsel %vm708, %v5458, 0
    %v5501 = vsel %vm708, %v5459, 0
    %v5504 = vsel %vm708, %v5460, 0
    %v5507 = vsel %vm708, %v5461, 0
    %v5510 = vsel %vm708, %v5462, 0
    %v5513 = vsel %vm708, %v5463, 0
    %5515 = vmatpush.bf16.msra.mxu0 0
    %5516 = vmatpush.bf16.msra.mxu0 0
    %5517 = vmatpush.bf16.msra.mxu0 0
    %5518 = vmatpush.bf16.msra.mxu0 0
    %5519 = vmatpush.bf16.msra.mxu0 %v5492
    %5520 = vmatpush.bf16.msra.mxu0 %v5448
    %5521 = vmatpush.bf16.msra.mxu0 %v5440
    %5522 = vmatpush.bf16.msra.mxu0 %v5432
    %5523 = vmatmul.bf16.gmra.mxu0 %v5489
    %v5524 = vpop.f32.mrf.mxu0
    %v5525 = vadd.f32 0.0, %v5524
    %v5526 = vpop.f32.mrf.mxu0
    %5527 = vdwg.mxu0
    %5528 = vmatpush.bf16.msra.mxu0 0
    %5529 = vmatpush.bf16.msra.mxu0 0
    %5530 = vmatpush.bf16.msra.mxu0 0
    %5531 = vmatpush.bf16.msra.mxu0 0
    %5532 = vmatpush.bf16.msra.mxu0 %v5495
    %5533 = vmatpush.bf16.msra.mxu0 %v5449
    %5534 = vmatpush.bf16.msra.mxu0 %v5441
    %5535 = vmatpush.bf16.msra.mxu0 %v5433
    %5536 = vmatmul.bf16.gmra.mxu0 %v5489
    %v5537 = vpop.f32.mrf.mxu0
    %v5538 = vadd.f32 0.0, %v5537
    %v5539 = vpop.f32.mrf.mxu0
    %5540 = vdwg.mxu0
    %5541 = vmatpush.bf16.msra.mxu0 0
    %5542 = vmatpush.bf16.msra.mxu0 0
    %5543 = vmatpush.bf16.msra.mxu0 0
    %5544 = vmatpush.bf16.msra.mxu0 0
    %5545 = vmatpush.bf16.msra.mxu0 %v5498
    %5546 = vmatpush.bf16.msra.mxu0 %v5450
    %5547 = vmatpush.bf16.msra.mxu0 %v5442
    %5548 = vmatpush.bf16.msra.mxu0 %v5434
    %5549 = vmatmul.bf16.gmra.mxu0 %v5489
    %v5550 = vpop.f32.mrf.mxu0
    %v5551 = vadd.f32 0.0, %v5550
    %v5552 = vpop.f32.mrf.mxu0
    %5553 = vdwg.mxu0
    %5554 = vmatpush.bf16.msra.mxu0 0
    %5555 = vmatpush.bf16.msra.mxu0 0
    %5556 = vmatpush.bf16.msra.mxu0 0
    %5557 = vmatpush.bf16.msra.mxu0 0
    %5558 = vmatpush.bf16.msra.mxu0 %v5501
    %5559 = vmatpush.bf16.msra.mxu0 %v5451
    %5560 = vmatpush.bf16.msra.mxu0 %v5443
    %5561 = vmatpush.bf16.msra.mxu0 %v5435
    %5562 = vmatmul.bf16.gmra.mxu0 %v5489
    %v5563 = vpop.f32.mrf.mxu0
    %v5564 = vadd.f32 0.0, %v5563
    %v5565 = vpop.f32.mrf.mxu0
    %5566 = vdwg.mxu0
    %5567 = vmatpush.bf16.msra.mxu0 0
    %5568 = vmatpush.bf16.msra.mxu0 0
    %5569 = vmatpush.bf16.msra.mxu0 0
    %5570 = vmatpush.bf16.msra.mxu0 0
    %5571 = vmatpush.bf16.msra.mxu0 %v5504
    %5572 = vmatpush.bf16.msra.mxu0 %v5452
    %5573 = vmatpush.bf16.msra.mxu0 %v5444
    %5574 = vmatpush.bf16.msra.mxu0 %v5436
    %5575 = vmatmul.bf16.gmra.mxu0 %v5489
    %v5576 = vpop.f32.mrf.mxu0
    %v5577 = vadd.f32 0.0, %v5576
    %v5578 = vpop.f32.mrf.mxu0
    %5579 = vdwg.mxu0
    %5580 = vmatpush.bf16.msra.mxu0 0
    %5581 = vmatpush.bf16.msra.mxu0 0
    %5582 = vmatpush.bf16.msra.mxu0 0
    %5583 = vmatpush.bf16.msra.mxu0 0
    %5584 = vmatpush.bf16.msra.mxu0 %v5507
    %5585 = vmatpush.bf16.msra.mxu0 %v5453
    %5586 = vmatpush.bf16.msra.mxu0 %v5445
    %5587 = vmatpush.bf16.msra.mxu0 %v5437
    %5588 = vmatmul.bf16.gmra.mxu0 %v5489
    %v5589 = vpop.f32.mrf.mxu0
    %v5590 = vadd.f32 0.0, %v5589
    %v5591 = vpop.f32.mrf.mxu0
    %5592 = vdwg.mxu0
    %5593 = vmatpush.bf16.msra.mxu0 0
    %5594 = vmatpush.bf16.msra.mxu0 0
    %5595 = vmatpush.bf16.msra.mxu0 0
    %5596 = vmatpush.bf16.msra.mxu0 0
    %5597 = vmatpush.bf16.msra.mxu0 %v5510
    %5598 = vmatpush.bf16.msra.mxu0 %v5454
    %5599 = vmatpush.bf16.msra.mxu0 %v5446
    %5600 = vmatpush.bf16.msra.mxu0 %v5438
    %5601 = vmatmul.bf16.gmra.mxu0 %v5489
    %v5602 = vpop.f32.mrf.mxu0
    %v5603 = vadd.f32 0.0, %v5602
    %v5604 = vpop.f32.mrf.mxu0
    %5605 = vdwg.mxu0
    %5606 = vmatpush.bf16.msra.mxu0 0
    %5607 = vmatpush.bf16.msra.mxu0 0
    %5608 = vmatpush.bf16.msra.mxu0 0
    %5609 = vmatpush.bf16.msra.mxu0 0
    %5610 = vmatpush.bf16.msra.mxu0 %v5513
    %5611 = vmatpush.bf16.msra.mxu0 %v5455
    %5612 = vmatpush.bf16.msra.mxu0 %v5447
    %5613 = vmatpush.bf16.msra.mxu0 %v5439
    %5614 = vmatmul.bf16.gmra.mxu0 %v5489
    %v5615 = vpop.f32.mrf.mxu0
    %v5616 = vadd.f32 0.0, %v5615
    %v5617 = vpop.f32.mrf.mxu0
    %5618 = vdwg.mxu0
    %v5627 = vrot.slane %v5538, 7
    %v5628 = vrot.slane %v5551, 6
    %v5629 = vrot.slane %v5564, 5
    %v5630 = vrot.slane %v5577, 4
    %v5631 = vrot.slane %v5590, 3
    %v5632 = vrot.slane %v5603, 2
    %v5633 = vrot.slane %v5616, 1
    %v5634 = vsel %vm708, %v5525, %v5627
    %v5635 = vsel %vm4003, %v5628, %v5629
    %v5636 = vsel %vm2497, %v5634, %v5635
    %v5637 = vsel %vm4006, %v5630, %v5631
    %v5638 = vsel %vm4008, %v5632, %v5633
    %v5639 = vsel %vm4010, %v5637, %v5638
    %v5640 = vsel %vm3120, %v5636, %v5639
    %v5642 = vadd.f32 %v5315, %v5640
    %s5643 = scalar_lea.vmem [#allocation2], 1344
    %v5644 = vld [vmem:[%s5643] sm:$0xff]
    %v5645 = vld [vmem:[%s5643 + $0x8] sm:$0xff]
    %v5646 = vld [vmem:[%s5643 + $0x10] sm:$0xff]
    %v5647 = vld [vmem:[%s5643 + $0x18] sm:$0xff]
    %v5648 = vld [vmem:[%s5643 + $0x20] sm:$0xff]
    %v5649 = vld [vmem:[%s5643 + $0x28] sm:$0xff]
    %v5650 = vld [vmem:[%s5643 + $0x30] sm:$0xff]
    %v5651 = vld [vmem:[%s5643 + $0x38] sm:$0xff]
    %v5652 = vld [vmem:[%s5643 + $0x40] sm:$0xff]
    %v5653 = vld [vmem:[%s5643 + $0x48] sm:$0xff]
    %v5654 = vld [vmem:[%s5643 + $0x50] sm:$0xff]
    %v5655 = vld [vmem:[%s5643 + $0x58] sm:$0xff]
    %v5656 = vld [vmem:[%s5643 + $0x60] sm:$0xff]
    %v5657 = vld [vmem:[%s5643 + $0x68] sm:$0xff]
    %v5658 = vld [vmem:[%s5643 + $0x70] sm:$0xff]
    %v5659 = vld [vmem:[%s5643 + $0x78] sm:$0xff]
    %v5660 = vld [vmem:[%s5643 + $0x80] sm:$0xff]
    %v5661 = vld [vmem:[%s5643 + $0x88] sm:$0xff]
    %v5662 = vld [vmem:[%s5643 + $0x90] sm:$0xff]
    %v5663 = vld [vmem:[%s5643 + $0x98] sm:$0xff]
    %v5664 = vld [vmem:[%s5643 + $0xa0] sm:$0xff]
    %v5665 = vld [vmem:[%s5643 + $0xa8] sm:$0xff]
    %v5666 = vld [vmem:[%s5643 + $0xb0] sm:$0xff]
    %v5667 = vld [vmem:[%s5643 + $0xb8] sm:$0xff]
    %v5668 = vld [vmem:[%s5643 + $0xc0] sm:$0x11]
    %v5669 = vld [vmem:[%s5643 + $0xc8] sm:$0x11]
    %v5670 = vld [vmem:[%s5643 + $0xd0] sm:$0x11]
    %v5671 = vld [vmem:[%s5643 + $0xd8] sm:$0x11]
    %v5672 = vrot.slane %v5316, 2
    %v5701 = vunpack.c.l.b16 %v5644
    %v5702 = vunpack.c.h.b16 %v5644
    %v5703 = vunpack.c.l.b16 %v5645
    %v5704 = vunpack.c.h.b16 %v5645
    %v5705 = vunpack.c.l.b16 %v5646
    %v5706 = vunpack.c.h.b16 %v5646
    %v5707 = vunpack.c.l.b16 %v5647
    %v5708 = vunpack.c.h.b16 %v5647
    %v5709 = vunpack.c.l.b16 %v5648
    %v5710 = vunpack.c.h.b16 %v5648
    %v5711 = vunpack.c.l.b16 %v5649
    %v5712 = vunpack.c.h.b16 %v5649
    %v5713 = vunpack.c.l.b16 %v5650
    %v5714 = vunpack.c.h.b16 %v5650
    %v5715 = vunpack.c.l.b16 %v5651
    %v5716 = vunpack.c.h.b16 %v5651
    %v5717 = vunpack.c.l.b16 %v5652
    %v5718 = vunpack.c.h.b16 %v5652
    %v5719 = vunpack.c.l.b16 %v5653
    %v5720 = vunpack.c.h.b16 %v5653
    %v5721 = vunpack.c.l.b16 %v5654
    %v5722 = vunpack.c.h.b16 %v5654
    %v5723 = vunpack.c.l.b16 %v5655
    %v5724 = vunpack.c.h.b16 %v5655
    %v5725 = vunpack.c.l.b16 %v5656
    %v5726 = vunpack.c.h.b16 %v5656
    %v5727 = vunpack.c.l.b16 %v5657
    %v5728 = vunpack.c.h.b16 %v5657
    %v5729 = vunpack.c.l.b16 %v5658
    %v5730 = vunpack.c.h.b16 %v5658
    %v5731 = vunpack.c.l.b16 %v5659
    %v5732 = vunpack.c.h.b16 %v5659
    %v5733 = vunpack.c.l.b16 %v5660
    %v5734 = vunpack.c.h.b16 %v5660
    %v5735 = vunpack.c.l.b16 %v5661
    %v5736 = vunpack.c.h.b16 %v5661
    %v5737 = vunpack.c.l.b16 %v5662
    %v5738 = vunpack.c.h.b16 %v5662
    %v5739 = vunpack.c.l.b16 %v5663
    %v5740 = vunpack.c.h.b16 %v5663
    %v5741 = vunpack.c.l.b16 %v5664
    %v5742 = vunpack.c.h.b16 %v5664
    %v5743 = vunpack.c.l.b16 %v5665
    %v5744 = vunpack.c.h.b16 %v5665
    %v5745 = vunpack.c.l.b16 %v5666
    %v5746 = vunpack.c.h.b16 %v5666
    %v5747 = vunpack.c.l.b16 %v5667
    %v5748 = vunpack.c.h.b16 %v5667
    %v5749 = vunpack.c.l.b16 %v5668
    %v5750 = vunpack.c.h.b16 %v5668
    %v5751 = vunpack.c.l.b16 %v5669
    %v5752 = vunpack.c.h.b16 %v5669
    %v5753 = vunpack.c.l.b16 %v5670
    %v5754 = vunpack.c.h.b16 %v5670
    %v5755 = vunpack.c.l.b16 %v5671
    %v5756 = vunpack.c.h.b16 %v5671
    %v5757 = vpack.c.b16 %v5709, %v5701
    %v5758 = vpack.c.b16 %v5710, %v5702
    %v5759 = vpack.c.b16 %v5711, %v5703
    %v5760 = vpack.c.b16 %v5712, %v5704
    %v5761 = vpack.c.b16 %v5713, %v5705
    %v5762 = vpack.c.b16 %v5714, %v5706
    %v5763 = vpack.c.b16 %v5715, %v5707
    %v5764 = vpack.c.b16 %v5716, %v5708
    %v5765 = vpack.c.b16 %v5725, %v5717
    %v5766 = vpack.c.b16 %v5726, %v5718
    %v5767 = vpack.c.b16 %v5727, %v5719
    %v5768 = vpack.c.b16 %v5728, %v5720
    %v5769 = vpack.c.b16 %v5729, %v5721
    %v5770 = vpack.c.b16 %v5730, %v5722
    %v5771 = vpack.c.b16 %v5731, %v5723
    %v5772 = vpack.c.b16 %v5732, %v5724
    %v5773 = vpack.c.b16 %v5741, %v5733
    %v5774 = vpack.c.b16 %v5742, %v5734
    %v5775 = vpack.c.b16 %v5743, %v5735
    %v5776 = vpack.c.b16 %v5744, %v5736
    %v5777 = vpack.c.b16 %v5745, %v5737
    %v5778 = vpack.c.b16 %v5746, %v5738
    %v5779 = vpack.c.b16 %v5747, %v5739
    %v5780 = vpack.c.b16 %v5748, %v5740
    %v5781 = vpack.c.b16 %v5749, %v5749
    %v5782 = vpack.c.b16 %v5750, %v5750
    %v5783 = vpack.c.b16 %v5751, %v5751
    %v5784 = vpack.c.b16 %v5752, %v5752
    %v5785 = vpack.c.b16 %v5753, %v5753
    %v5786 = vpack.c.b16 %v5754, %v5754
    %v5787 = vpack.c.b16 %v5755, %v5755
    %v5788 = vpack.c.b16 %v5756, %v5756
    %v5814 = vsel %vm3855, %v5672, 0
    %v5817 = vsel %vm708, %v5781, 0
    %v5820 = vsel %vm708, %v5782, 0
    %v5823 = vsel %vm708, %v5783, 0
    %v5826 = vsel %vm708, %v5784, 0
    %v5829 = vsel %vm708, %v5785, 0
    %v5832 = vsel %vm708, %v5786, 0
    %v5835 = vsel %vm708, %v5787, 0
    %v5838 = vsel %vm708, %v5788, 0
    %5840 = vmatpush.bf16.msra.mxu0 0
    %5841 = vmatpush.bf16.msra.mxu0 0
    %5842 = vmatpush.bf16.msra.mxu0 0
    %5843 = vmatpush.bf16.msra.mxu0 0
    %5844 = vmatpush.bf16.msra.mxu0 %v5817
    %5845 = vmatpush.bf16.msra.mxu0 %v5773
    %5846 = vmatpush.bf16.msra.mxu0 %v5765
    %5847 = vmatpush.bf16.msra.mxu0 %v5757
    %5848 = vmatmul.bf16.gmra.mxu0 %v5814
    %v5849 = vpop.f32.mrf.mxu0
    %v5850 = vadd.f32 0.0, %v5849
    %v5851 = vpop.f32.mrf.mxu0
    %5852 = vdwg.mxu0
    %5853 = vmatpush.bf16.msra.mxu0 0
    %5854 = vmatpush.bf16.msra.mxu0 0
    %5855 = vmatpush.bf16.msra.mxu0 0
    %5856 = vmatpush.bf16.msra.mxu0 0
    %5857 = vmatpush.bf16.msra.mxu0 %v5820
    %5858 = vmatpush.bf16.msra.mxu0 %v5774
    %5859 = vmatpush.bf16.msra.mxu0 %v5766
    %5860 = vmatpush.bf16.msra.mxu0 %v5758
    %5861 = vmatmul.bf16.gmra.mxu0 %v5814
    %v5862 = vpop.f32.mrf.mxu0
    %v5863 = vadd.f32 0.0, %v5862
    %v5864 = vpop.f32.mrf.mxu0
    %5865 = vdwg.mxu0
    %5866 = vmatpush.bf16.msra.mxu0 0
    %5867 = vmatpush.bf16.msra.mxu0 0
    %5868 = vmatpush.bf16.msra.mxu0 0
    %5869 = vmatpush.bf16.msra.mxu0 0
    %5870 = vmatpush.bf16.msra.mxu0 %v5823
    %5871 = vmatpush.bf16.msra.mxu0 %v5775
    %5872 = vmatpush.bf16.msra.mxu0 %v5767
    %5873 = vmatpush.bf16.msra.mxu0 %v5759
    %5874 = vmatmul.bf16.gmra.mxu0 %v5814
    %v5875 = vpop.f32.mrf.mxu0
    %v5876 = vadd.f32 0.0, %v5875
    %v5877 = vpop.f32.mrf.mxu0
    %5878 = vdwg.mxu0
    %5879 = vmatpush.bf16.msra.mxu0 0
    %5880 = vmatpush.bf16.msra.mxu0 0
    %5881 = vmatpush.bf16.msra.mxu0 0
    %5882 = vmatpush.bf16.msra.mxu0 0
    %5883 = vmatpush.bf16.msra.mxu0 %v5826
    %5884 = vmatpush.bf16.msra.mxu0 %v5776
    %5885 = vmatpush.bf16.msra.mxu0 %v5768
    %5886 = vmatpush.bf16.msra.mxu0 %v5760
    %5887 = vmatmul.bf16.gmra.mxu0 %v5814
    %v5888 = vpop.f32.mrf.mxu0
    %v5889 = vadd.f32 0.0, %v5888
    %v5890 = vpop.f32.mrf.mxu0
    %5891 = vdwg.mxu0
    %5892 = vmatpush.bf16.msra.mxu0 0
    %5893 = vmatpush.bf16.msra.mxu0 0
    %5894 = vmatpush.bf16.msra.mxu0 0
    %5895 = vmatpush.bf16.msra.mxu0 0
    %5896 = vmatpush.bf16.msra.mxu0 %v5829
    %5897 = vmatpush.bf16.msra.mxu0 %v5777
    %5898 = vmatpush.bf16.msra.mxu0 %v5769
    %5899 = vmatpush.bf16.msra.mxu0 %v5761
    %5900 = vmatmul.bf16.gmra.mxu0 %v5814
    %v5901 = vpop.f32.mrf.mxu0
    %v5902 = vadd.f32 0.0, %v5901
    %v5903 = vpop.f32.mrf.mxu0
    %5904 = vdwg.mxu0
    %5905 = vmatpush.bf16.msra.mxu0 0
    %5906 = vmatpush.bf16.msra.mxu0 0
    %5907 = vmatpush.bf16.msra.mxu0 0
    %5908 = vmatpush.bf16.msra.mxu0 0
    %5909 = vmatpush.bf16.msra.mxu0 %v5832
    %5910 = vmatpush.bf16.msra.mxu0 %v5778
    %5911 = vmatpush.bf16.msra.mxu0 %v5770
    %5912 = vmatpush.bf16.msra.mxu0 %v5762
    %5913 = vmatmul.bf16.gmra.mxu0 %v5814
    %v5914 = vpop.f32.mrf.mxu0
    %v5915 = vadd.f32 0.0, %v5914
    %v5916 = vpop.f32.mrf.mxu0
    %5917 = vdwg.mxu0
    %5918 = vmatpush.bf16.msra.mxu0 0
    %5919 = vmatpush.bf16.msra.mxu0 0
    %5920 = vmatpush.bf16.msra.mxu0 0
    %5921 = vmatpush.bf16.msra.mxu0 0
    %5922 = vmatpush.bf16.msra.mxu0 %v5835
    %5923 = vmatpush.bf16.msra.mxu0 %v5779
    %5924 = vmatpush.bf16.msra.mxu0 %v5771
    %5925 = vmatpush.bf16.msra.mxu0 %v5763
    %5926 = vmatmul.bf16.gmra.mxu0 %v5814
    %v5927 = vpop.f32.mrf.mxu0
    %v5928 = vadd.f32 0.0, %v5927
    %v5929 = vpop.f32.mrf.mxu0
    %5930 = vdwg.mxu0
    %5931 = vmatpush.bf16.msra.mxu0 0
    %5932 = vmatpush.bf16.msra.mxu0 0
    %5933 = vmatpush.bf16.msra.mxu0 0
    %5934 = vmatpush.bf16.msra.mxu0 0
    %5935 = vmatpush.bf16.msra.mxu0 %v5838
    %5936 = vmatpush.bf16.msra.mxu0 %v5780
    %5937 = vmatpush.bf16.msra.mxu0 %v5772
    %5938 = vmatpush.bf16.msra.mxu0 %v5764
    %5939 = vmatmul.bf16.gmra.mxu0 %v5814
    %v5940 = vpop.f32.mrf.mxu0
    %v5941 = vadd.f32 0.0, %v5940
    %v5942 = vpop.f32.mrf.mxu0
    %5943 = vdwg.mxu0
    %v5952 = vrot.slane %v5863, 7
    %v5953 = vrot.slane %v5876, 6
    %v5954 = vrot.slane %v5889, 5
    %v5955 = vrot.slane %v5902, 4
    %v5956 = vrot.slane %v5915, 3
    %v5957 = vrot.slane %v5928, 2
    %v5958 = vrot.slane %v5941, 1
    %v5959 = vsel %vm708, %v5850, %v5952
    %v5960 = vsel %vm4003, %v5953, %v5954
    %v5961 = vsel %vm2497, %v5959, %v5960
    %v5962 = vsel %vm4006, %v5955, %v5956
    %v5963 = vsel %vm4008, %v5957, %v5958
    %v5964 = vsel %vm4010, %v5962, %v5963
    %v5965 = vsel %vm3120, %v5961, %v5964
    %v5967 = vadd.f32 %v5642, %v5965
    %s5968 = scalar_lea.vmem [#allocation2], 1568
    %v5969 = vld [vmem:[%s5968] sm:$0xff]
    %v5970 = vld [vmem:[%s5968 + $0x8] sm:$0xff]
    %v5971 = vld [vmem:[%s5968 + $0x10] sm:$0xff]
    %v5972 = vld [vmem:[%s5968 + $0x18] sm:$0xff]
    %v5973 = vld [vmem:[%s5968 + $0x20] sm:$0xff]
    %v5974 = vld [vmem:[%s5968 + $0x28] sm:$0xff]
    %v5975 = vld [vmem:[%s5968 + $0x30] sm:$0xff]
    %v5976 = vld [vmem:[%s5968 + $0x38] sm:$0xff]
    %v5977 = vld [vmem:[%s5968 + $0x40] sm:$0xff]
    %v5978 = vld [vmem:[%s5968 + $0x48] sm:$0xff]
    %v5979 = vld [vmem:[%s5968 + $0x50] sm:$0xff]
    %v5980 = vld [vmem:[%s5968 + $0x58] sm:$0xff]
    %v5981 = vld [vmem:[%s5968 + $0x60] sm:$0xff]
    %v5982 = vld [vmem:[%s5968 + $0x68] sm:$0xff]
    %v5983 = vld [vmem:[%s5968 + $0x70] sm:$0xff]
    %v5984 = vld [vmem:[%s5968 + $0x78] sm:$0xff]
    %v5985 = vld [vmem:[%s5968 + $0x80] sm:$0xff]
    %v5986 = vld [vmem:[%s5968 + $0x88] sm:$0xff]
    %v5987 = vld [vmem:[%s5968 + $0x90] sm:$0xff]
    %v5988 = vld [vmem:[%s5968 + $0x98] sm:$0xff]
    %v5989 = vld [vmem:[%s5968 + $0xa0] sm:$0xff]
    %v5990 = vld [vmem:[%s5968 + $0xa8] sm:$0xff]
    %v5991 = vld [vmem:[%s5968 + $0xb0] sm:$0xff]
    %v5992 = vld [vmem:[%s5968 + $0xb8] sm:$0xff]
    %v5993 = vld [vmem:[%s5968 + $0xc0] sm:$0x11]
    %v5994 = vld [vmem:[%s5968 + $0xc8] sm:$0x11]
    %v5995 = vld [vmem:[%s5968 + $0xd0] sm:$0x11]
    %v5996 = vld [vmem:[%s5968 + $0xd8] sm:$0x11]
    %v5997 = vrot.slane %v5316, 3
    %v6026 = vunpack.c.l.b16 %v5969
    %v6027 = vunpack.c.h.b16 %v5969
    %v6028 = vunpack.c.l.b16 %v5970
    %v6029 = vunpack.c.h.b16 %v5970
    %v6030 = vunpack.c.l.b16 %v5971
    %v6031 = vunpack.c.h.b16 %v5971
    %v6032 = vunpack.c.l.b16 %v5972
    %v6033 = vunpack.c.h.b16 %v5972
    %v6034 = vunpack.c.l.b16 %v5973
    %v6035 = vunpack.c.h.b16 %v5973
    %v6036 = vunpack.c.l.b16 %v5974
    %v6037 = vunpack.c.h.b16 %v5974
    %v6038 = vunpack.c.l.b16 %v5975
    %v6039 = vunpack.c.h.b16 %v5975
    %v6040 = vunpack.c.l.b16 %v5976
    %v6041 = vunpack.c.h.b16 %v5976
    %v6042 = vunpack.c.l.b16 %v5977
    %v6043 = vunpack.c.h.b16 %v5977
    %v6044 = vunpack.c.l.b16 %v5978
    %v6045 = vunpack.c.h.b16 %v5978
    %v6046 = vunpack.c.l.b16 %v5979
    %v6047 = vunpack.c.h.b16 %v5979
    %v6048 = vunpack.c.l.b16 %v5980
    %v6049 = vunpack.c.h.b16 %v5980
    %v6050 = vunpack.c.l.b16 %v5981
    %v6051 = vunpack.c.h.b16 %v5981
    %v6052 = vunpack.c.l.b16 %v5982
    %v6053 = vunpack.c.h.b16 %v5982
    %v6054 = vunpack.c.l.b16 %v5983
    %v6055 = vunpack.c.h.b16 %v5983
    %v6056 = vunpack.c.l.b16 %v5984
    %v6057 = vunpack.c.h.b16 %v5984
    %v6058 = vunpack.c.l.b16 %v5985
    %v6059 = vunpack.c.h.b16 %v5985
    %v6060 = vunpack.c.l.b16 %v5986
    %v6061 = vunpack.c.h.b16 %v5986
    %v6062 = vunpack.c.l.b16 %v5987
    %v6063 = vunpack.c.h.b16 %v5987
    %v6064 = vunpack.c.l.b16 %v5988
    %v6065 = vunpack.c.h.b16 %v5988
    %v6066 = vunpack.c.l.b16 %v5989
    %v6067 = vunpack.c.h.b16 %v5989
    %v6068 = vunpack.c.l.b16 %v5990
    %v6069 = vunpack.c.h.b16 %v5990
    %v6070 = vunpack.c.l.b16 %v5991
    %v6071 = vunpack.c.h.b16 %v5991
    %v6072 = vunpack.c.l.b16 %v5992
    %v6073 = vunpack.c.h.b16 %v5992
    %v6074 = vunpack.c.l.b16 %v5993
    %v6075 = vunpack.c.h.b16 %v5993
    %v6076 = vunpack.c.l.b16 %v5994
    %v6077 = vunpack.c.h.b16 %v5994
    %v6078 = vunpack.c.l.b16 %v5995
    %v6079 = vunpack.c.h.b16 %v5995
    %v6080 = vunpack.c.l.b16 %v5996
    %v6081 = vunpack.c.h.b16 %v5996
    %v6082 = vpack.c.b16 %v6034, %v6026
    %v6083 = vpack.c.b16 %v6035, %v6027
    %v6084 = vpack.c.b16 %v6036, %v6028
    %v6085 = vpack.c.b16 %v6037, %v6029
    %v6086 = vpack.c.b16 %v6038, %v6030
    %v6087 = vpack.c.b16 %v6039, %v6031
    %v6088 = vpack.c.b16 %v6040, %v6032
    %v6089 = vpack.c.b16 %v6041, %v6033
    %v6090 = vpack.c.b16 %v6050, %v6042
    %v6091 = vpack.c.b16 %v6051, %v6043
    %v6092 = vpack.c.b16 %v6052, %v6044
    %v6093 = vpack.c.b16 %v6053, %v6045
    %v6094 = vpack.c.b16 %v6054, %v6046
    %v6095 = vpack.c.b16 %v6055, %v6047
    %v6096 = vpack.c.b16 %v6056, %v6048
    %v6097 = vpack.c.b16 %v6057, %v6049
    %v6098 = vpack.c.b16 %v6066, %v6058
    %v6099 = vpack.c.b16 %v6067, %v6059
    %v6100 = vpack.c.b16 %v6068, %v6060
    %v6101 = vpack.c.b16 %v6069, %v6061
    %v6102 = vpack.c.b16 %v6070, %v6062
    %v6103 = vpack.c.b16 %v6071, %v6063
    %v6104 = vpack.c.b16 %v6072, %v6064
    %v6105 = vpack.c.b16 %v6073, %v6065
    %v6106 = vpack.c.b16 %v6074, %v6074
    %v6107 = vpack.c.b16 %v6075, %v6075
    %v6108 = vpack.c.b16 %v6076, %v6076
    %v6109 = vpack.c.b16 %v6077, %v6077
    %v6110 = vpack.c.b16 %v6078, %v6078
    %v6111 = vpack.c.b16 %v6079, %v6079
    %v6112 = vpack.c.b16 %v6080, %v6080
    %v6113 = vpack.c.b16 %v6081, %v6081
    %v6139 = vsel %vm3855, %v5997, 0
    %v6142 = vsel %vm708, %v6106, 0
    %v6145 = vsel %vm708, %v6107, 0
    %v6148 = vsel %vm708, %v6108, 0
    %v6151 = vsel %vm708, %v6109, 0
    %v6154 = vsel %vm708, %v6110, 0
    %v6157 = vsel %vm708, %v6111, 0
    %v6160 = vsel %vm708, %v6112, 0
    %v6163 = vsel %vm708, %v6113, 0
    %6165 = vmatpush.bf16.msra.mxu0 0
    %6166 = vmatpush.bf16.msra.mxu0 0
    %6167 = vmatpush.bf16.msra.mxu0 0
    %6168 = vmatpush.bf16.msra.mxu0 0
    %6169 = vmatpush.bf16.msra.mxu0 %v6142
    %6170 = vmatpush.bf16.msra.mxu0 %v6098
    %6171 = vmatpush.bf16.msra.mxu0 %v6090
    %6172 = vmatpush.bf16.msra.mxu0 %v6082
    %6173 = vmatmul.bf16.gmra.mxu0 %v6139
    %v6174 = vpop.f32.mrf.mxu0
    %v6175 = vadd.f32 0.0, %v6174
    %v6176 = vpop.f32.mrf.mxu0
    %6177 = vdwg.mxu0
    %6178 = vmatpush.bf16.msra.mxu0 0
    %6179 = vmatpush.bf16.msra.mxu0 0
    %6180 = vmatpush.bf16.msra.mxu0 0
    %6181 = vmatpush.bf16.msra.mxu0 0
    %6182 = vmatpush.bf16.msra.mxu0 %v6145
    %6183 = vmatpush.bf16.msra.mxu0 %v6099
    %6184 = vmatpush.bf16.msra.mxu0 %v6091
    %6185 = vmatpush.bf16.msra.mxu0 %v6083
    %6186 = vmatmul.bf16.gmra.mxu0 %v6139
    %v6187 = vpop.f32.mrf.mxu0
    %v6188 = vadd.f32 0.0, %v6187
    %v6189 = vpop.f32.mrf.mxu0
    %6190 = vdwg.mxu0
    %6191 = vmatpush.bf16.msra.mxu0 0
    %6192 = vmatpush.bf16.msra.mxu0 0
    %6193 = vmatpush.bf16.msra.mxu0 0
    %6194 = vmatpush.bf16.msra.mxu0 0
    %6195 = vmatpush.bf16.msra.mxu0 %v6148
    %6196 = vmatpush.bf16.msra.mxu0 %v6100
    %6197 = vmatpush.bf16.msra.mxu0 %v6092
    %6198 = vmatpush.bf16.msra.mxu0 %v6084
    %6199 = vmatmul.bf16.gmra.mxu0 %v6139
    %v6200 = vpop.f32.mrf.mxu0
    %v6201 = vadd.f32 0.0, %v6200
    %v6202 = vpop.f32.mrf.mxu0
    %6203 = vdwg.mxu0
    %6204 = vmatpush.bf16.msra.mxu0 0
    %6205 = vmatpush.bf16.msra.mxu0 0
    %6206 = vmatpush.bf16.msra.mxu0 0
    %6207 = vmatpush.bf16.msra.mxu0 0
    %6208 = vmatpush.bf16.msra.mxu0 %v6151
    %6209 = vmatpush.bf16.msra.mxu0 %v6101
    %6210 = vmatpush.bf16.msra.mxu0 %v6093
    %6211 = vmatpush.bf16.msra.mxu0 %v6085
    %6212 = vmatmul.bf16.gmra.mxu0 %v6139
    %v6213 = vpop.f32.mrf.mxu0
    %v6214 = vadd.f32 0.0, %v6213
    %v6215 = vpop.f32.mrf.mxu0
    %6216 = vdwg.mxu0
    %6217 = vmatpush.bf16.msra.mxu0 0
    %6218 = vmatpush.bf16.msra.mxu0 0
    %6219 = vmatpush.bf16.msra.mxu0 0
    %6220 = vmatpush.bf16.msra.mxu0 0
    %6221 = vmatpush.bf16.msra.mxu0 %v6154
    %6222 = vmatpush.bf16.msra.mxu0 %v6102
    %6223 = vmatpush.bf16.msra.mxu0 %v6094
    %6224 = vmatpush.bf16.msra.mxu0 %v6086
    %6225 = vmatmul.bf16.gmra.mxu0 %v6139
    %v6226 = vpop.f32.mrf.mxu0
    %v6227 = vadd.f32 0.0, %v6226
    %v6228 = vpop.f32.mrf.mxu0
    %6229 = vdwg.mxu0
    %6230 = vmatpush.bf16.msra.mxu0 0
    %6231 = vmatpush.bf16.msra.mxu0 0
    %6232 = vmatpush.bf16.msra.mxu0 0
    %6233 = vmatpush.bf16.msra.mxu0 0
    %6234 = vmatpush.bf16.msra.mxu0 %v6157
    %6235 = vmatpush.bf16.msra.mxu0 %v6103
    %6236 = vmatpush.bf16.msra.mxu0 %v6095
    %6237 = vmatpush.bf16.msra.mxu0 %v6087
    %6238 = vmatmul.bf16.gmra.mxu0 %v6139
    %v6239 = vpop.f32.mrf.mxu0
    %v6240 = vadd.f32 0.0, %v6239
    %v6241 = vpop.f32.mrf.mxu0
    %6242 = vdwg.mxu0
    %6243 = vmatpush.bf16.msra.mxu0 0
    %6244 = vmatpush.bf16.msra.mxu0 0
    %6245 = vmatpush.bf16.msra.mxu0 0
    %6246 = vmatpush.bf16.msra.mxu0 0
    %6247 = vmatpush.bf16.msra.mxu0 %v6160
    %6248 = vmatpush.bf16.msra.mxu0 %v6104
    %6249 = vmatpush.bf16.msra.mxu0 %v6096
    %6250 = vmatpush.bf16.msra.mxu0 %v6088
    %6251 = vmatmul.bf16.gmra.mxu0 %v6139
    %v6252 = vpop.f32.mrf.mxu0
    %v6253 = vadd.f32 0.0, %v6252
    %v6254 = vpop.f32.mrf.mxu0
    %6255 = vdwg.mxu0
    %6256 = vmatpush.bf16.msra.mxu0 0
    %6257 = vmatpush.bf16.msra.mxu0 0
    %6258 = vmatpush.bf16.msra.mxu0 0
    %6259 = vmatpush.bf16.msra.mxu0 0
    %6260 = vmatpush.bf16.msra.mxu0 %v6163
    %6261 = vmatpush.bf16.msra.mxu0 %v6105
    %6262 = vmatpush.bf16.msra.mxu0 %v6097
    %6263 = vmatpush.bf16.msra.mxu0 %v6089
    %6264 = vmatmul.bf16.gmra.mxu0 %v6139
    %v6265 = vpop.f32.mrf.mxu0
    %v6266 = vadd.f32 0.0, %v6265
    %v6267 = vpop.f32.mrf.mxu0
    %6268 = vdwg.mxu0
    %v6277 = vrot.slane %v6188, 7
    %v6278 = vrot.slane %v6201, 6
    %v6279 = vrot.slane %v6214, 5
    %v6280 = vrot.slane %v6227, 4
    %v6281 = vrot.slane %v6240, 3
    %v6282 = vrot.slane %v6253, 2
    %v6283 = vrot.slane %v6266, 1
    %v6284 = vsel %vm708, %v6175, %v6277
    %v6285 = vsel %vm4003, %v6278, %v6279
    %v6286 = vsel %vm2497, %v6284, %v6285
    %v6287 = vsel %vm4006, %v6280, %v6281
    %v6288 = vsel %vm4008, %v6282, %v6283
    %v6289 = vsel %vm4010, %v6287, %v6288
    %v6290 = vsel %vm3120, %v6286, %v6289
    %v6292 = vadd.f32 %v5967, %v6290
    %v6293 = vpack.c.bf16 %v3673, %v3673
    %s6294 = scalar_lea.vmem [#allocation2], 1792
    %v6295 = vld [vmem:[%s6294] sm:$0xff]
    %v6296 = vld [vmem:[%s6294 + $0x8] sm:$0xff]
    %v6297 = vld [vmem:[%s6294 + $0x10] sm:$0xff]
    %v6298 = vld [vmem:[%s6294 + $0x18] sm:$0xff]
    %v6299 = vld [vmem:[%s6294 + $0x20] sm:$0xff]
    %v6300 = vld [vmem:[%s6294 + $0x28] sm:$0xff]
    %v6301 = vld [vmem:[%s6294 + $0x30] sm:$0xff]
    %v6302 = vld [vmem:[%s6294 + $0x38] sm:$0xff]
    %v6303 = vld [vmem:[%s6294 + $0x40] sm:$0xff]
    %v6304 = vld [vmem:[%s6294 + $0x48] sm:$0xff]
    %v6305 = vld [vmem:[%s6294 + $0x50] sm:$0xff]
    %v6306 = vld [vmem:[%s6294 + $0x58] sm:$0xff]
    %v6307 = vld [vmem:[%s6294 + $0x60] sm:$0xff]
    %v6308 = vld [vmem:[%s6294 + $0x68] sm:$0xff]
    %v6309 = vld [vmem:[%s6294 + $0x70] sm:$0xff]
    %v6310 = vld [vmem:[%s6294 + $0x78] sm:$0xff]
    %v6311 = vld [vmem:[%s6294 + $0x80] sm:$0xff]
    %v6312 = vld [vmem:[%s6294 + $0x88] sm:$0xff]
    %v6313 = vld [vmem:[%s6294 + $0x90] sm:$0xff]
    %v6314 = vld [vmem:[%s6294 + $0x98] sm:$0xff]
    %v6315 = vld [vmem:[%s6294 + $0xa0] sm:$0xff]
    %v6316 = vld [vmem:[%s6294 + $0xa8] sm:$0xff]
    %v6317 = vld [vmem:[%s6294 + $0xb0] sm:$0xff]
    %v6318 = vld [vmem:[%s6294 + $0xb8] sm:$0xff]
    %v6319 = vld [vmem:[%s6294 + $0xc0] sm:$0x11]
    %v6320 = vld [vmem:[%s6294 + $0xc8] sm:$0x11]
    %v6321 = vld [vmem:[%s6294 + $0xd0] sm:$0x11]
    %v6322 = vld [vmem:[%s6294 + $0xd8] sm:$0x11]
    %v6351 = vunpack.c.l.b16 %v6295
    %v6352 = vunpack.c.h.b16 %v6295
    %v6353 = vunpack.c.l.b16 %v6296
    %v6354 = vunpack.c.h.b16 %v6296
    %v6355 = vunpack.c.l.b16 %v6297
    %v6356 = vunpack.c.h.b16 %v6297
    %v6357 = vunpack.c.l.b16 %v6298
    %v6358 = vunpack.c.h.b16 %v6298
    %v6359 = vunpack.c.l.b16 %v6299
    %v6360 = vunpack.c.h.b16 %v6299
    %v6361 = vunpack.c.l.b16 %v6300
    %v6362 = vunpack.c.h.b16 %v6300
    %v6363 = vunpack.c.l.b16 %v6301
    %v6364 = vunpack.c.h.b16 %v6301
    %v6365 = vunpack.c.l.b16 %v6302
    %v6366 = vunpack.c.h.b16 %v6302
    %v6367 = vunpack.c.l.b16 %v6303
    %v6368 = vunpack.c.h.b16 %v6303
    %v6369 = vunpack.c.l.b16 %v6304
    %v6370 = vunpack.c.h.b16 %v6304
    %v6371 = vunpack.c.l.b16 %v6305
    %v6372 = vunpack.c.h.b16 %v6305
    %v6373 = vunpack.c.l.b16 %v6306
    %v6374 = vunpack.c.h.b16 %v6306
    %v6375 = vunpack.c.l.b16 %v6307
    %v6376 = vunpack.c.h.b16 %v6307
    %v6377 = vunpack.c.l.b16 %v6308
    %v6378 = vunpack.c.h.b16 %v6308
    %v6379 = vunpack.c.l.b16 %v6309
    %v6380 = vunpack.c.h.b16 %v6309
    %v6381 = vunpack.c.l.b16 %v6310
    %v6382 = vunpack.c.h.b16 %v6310
    %v6383 = vunpack.c.l.b16 %v6311
    %v6384 = vunpack.c.h.b16 %v6311
    %v6385 = vunpack.c.l.b16 %v6312
    %v6386 = vunpack.c.h.b16 %v6312
    %v6387 = vunpack.c.l.b16 %v6313
    %v6388 = vunpack.c.h.b16 %v6313
    %v6389 = vunpack.c.l.b16 %v6314
    %v6390 = vunpack.c.h.b16 %v6314
    %v6391 = vunpack.c.l.b16 %v6315
    %v6392 = vunpack.c.h.b16 %v6315
    %v6393 = vunpack.c.l.b16 %v6316
    %v6394 = vunpack.c.h.b16 %v6316
    %v6395 = vunpack.c.l.b16 %v6317
    %v6396 = vunpack.c.h.b16 %v6317
    %v6397 = vunpack.c.l.b16 %v6318
    %v6398 = vunpack.c.h.b16 %v6318
    %v6399 = vunpack.c.l.b16 %v6319
    %v6400 = vunpack.c.h.b16 %v6319
    %v6401 = vunpack.c.l.b16 %v6320
    %v6402 = vunpack.c.h.b16 %v6320
    %v6403 = vunpack.c.l.b16 %v6321
    %v6404 = vunpack.c.h.b16 %v6321
    %v6405 = vunpack.c.l.b16 %v6322
    %v6406 = vunpack.c.h.b16 %v6322
    %v6407 = vpack.c.b16 %v6359, %v6351
    %v6408 = vpack.c.b16 %v6360, %v6352
    %v6409 = vpack.c.b16 %v6361, %v6353
    %v6410 = vpack.c.b16 %v6362, %v6354
    %v6411 = vpack.c.b16 %v6363, %v6355
    %v6412 = vpack.c.b16 %v6364, %v6356
    %v6413 = vpack.c.b16 %v6365, %v6357
    %v6414 = vpack.c.b16 %v6366, %v6358
    %v6415 = vpack.c.b16 %v6375, %v6367
    %v6416 = vpack.c.b16 %v6376, %v6368
    %v6417 = vpack.c.b16 %v6377, %v6369
    %v6418 = vpack.c.b16 %v6378, %v6370
    %v6419 = vpack.c.b16 %v6379, %v6371
    %v6420 = vpack.c.b16 %v6380, %v6372
    %v6421 = vpack.c.b16 %v6381, %v6373
    %v6422 = vpack.c.b16 %v6382, %v6374
    %v6423 = vpack.c.b16 %v6391, %v6383
    %v6424 = vpack.c.b16 %v6392, %v6384
    %v6425 = vpack.c.b16 %v6393, %v6385
    %v6426 = vpack.c.b16 %v6394, %v6386
    %v6427 = vpack.c.b16 %v6395, %v6387
    %v6428 = vpack.c.b16 %v6396, %v6388
    %v6429 = vpack.c.b16 %v6397, %v6389
    %v6430 = vpack.c.b16 %v6398, %v6390
    %v6431 = vpack.c.b16 %v6399, %v6399
    %v6432 = vpack.c.b16 %v6400, %v6400
    %v6433 = vpack.c.b16 %v6401, %v6401
    %v6434 = vpack.c.b16 %v6402, %v6402
    %v6435 = vpack.c.b16 %v6403, %v6403
    %v6436 = vpack.c.b16 %v6404, %v6404
    %v6437 = vpack.c.b16 %v6405, %v6405
    %v6438 = vpack.c.b16 %v6406, %v6406
    %v6464 = vsel %vm3855, %v6293, 0
    %v6467 = vsel %vm708, %v6431, 0
    %v6470 = vsel %vm708, %v6432, 0
    %v6473 = vsel %vm708, %v6433, 0
    %v6476 = vsel %vm708, %v6434, 0
    %v6479 = vsel %vm708, %v6435, 0
    %v6482 = vsel %vm708, %v6436, 0
    %v6485 = vsel %vm708, %v6437, 0
    %v6488 = vsel %vm708, %v6438, 0
    %6490 = vmatpush.bf16.msra.mxu0 0
    %6491 = vmatpush.bf16.msra.mxu0 0
    %6492 = vmatpush.bf16.msra.mxu0 0
    %6493 = vmatpush.bf16.msra.mxu0 0
    %6494 = vmatpush.bf16.msra.mxu0 %v6467
    %6495 = vmatpush.bf16.msra.mxu0 %v6423
    %6496 = vmatpush.bf16.msra.mxu0 %v6415
    %6497 = vmatpush.bf16.msra.mxu0 %v6407
    %6498 = vmatmul.bf16.gmra.mxu0 %v6464
    %v6499 = vpop.f32.mrf.mxu0
    %v6500 = vadd.f32 0.0, %v6499
    %v6501 = vpop.f32.mrf.mxu0
    %6502 = vdwg.mxu0
    %6503 = vmatpush.bf16.msra.mxu0 0
    %6504 = vmatpush.bf16.msra.mxu0 0
    %6505 = vmatpush.bf16.msra.mxu0 0
    %6506 = vmatpush.bf16.msra.mxu0 0
    %6507 = vmatpush.bf16.msra.mxu0 %v6470
    %6508 = vmatpush.bf16.msra.mxu0 %v6424
    %6509 = vmatpush.bf16.msra.mxu0 %v6416
    %6510 = vmatpush.bf16.msra.mxu0 %v6408
    %6511 = vmatmul.bf16.gmra.mxu0 %v6464
    %v6512 = vpop.f32.mrf.mxu0
    %v6513 = vadd.f32 0.0, %v6512
    %v6514 = vpop.f32.mrf.mxu0
    %6515 = vdwg.mxu0
    %6516 = vmatpush.bf16.msra.mxu0 0
    %6517 = vmatpush.bf16.msra.mxu0 0
    %6518 = vmatpush.bf16.msra.mxu0 0
    %6519 = vmatpush.bf16.msra.mxu0 0
    %6520 = vmatpush.bf16.msra.mxu0 %v6473
    %6521 = vmatpush.bf16.msra.mxu0 %v6425
    %6522 = vmatpush.bf16.msra.mxu0 %v6417
    %6523 = vmatpush.bf16.msra.mxu0 %v6409
    %6524 = vmatmul.bf16.gmra.mxu0 %v6464
    %v6525 = vpop.f32.mrf.mxu0
    %v6526 = vadd.f32 0.0, %v6525
    %v6527 = vpop.f32.mrf.mxu0
    %6528 = vdwg.mxu0
    %6529 = vmatpush.bf16.msra.mxu0 0
    %6530 = vmatpush.bf16.msra.mxu0 0
    %6531 = vmatpush.bf16.msra.mxu0 0
    %6532 = vmatpush.bf16.msra.mxu0 0
    %6533 = vmatpush.bf16.msra.mxu0 %v6476
    %6534 = vmatpush.bf16.msra.mxu0 %v6426
    %6535 = vmatpush.bf16.msra.mxu0 %v6418
    %6536 = vmatpush.bf16.msra.mxu0 %v6410
    %6537 = vmatmul.bf16.gmra.mxu0 %v6464
    %v6538 = vpop.f32.mrf.mxu0
    %v6539 = vadd.f32 0.0, %v6538
    %v6540 = vpop.f32.mrf.mxu0
    %6541 = vdwg.mxu0
    %6542 = vmatpush.bf16.msra.mxu0 0
    %6543 = vmatpush.bf16.msra.mxu0 0
    %6544 = vmatpush.bf16.msra.mxu0 0
    %6545 = vmatpush.bf16.msra.mxu0 0
    %6546 = vmatpush.bf16.msra.mxu0 %v6479
    %6547 = vmatpush.bf16.msra.mxu0 %v6427
    %6548 = vmatpush.bf16.msra.mxu0 %v6419
    %6549 = vmatpush.bf16.msra.mxu0 %v6411
    %6550 = vmatmul.bf16.gmra.mxu0 %v6464
    %v6551 = vpop.f32.mrf.mxu0
    %v6552 = vadd.f32 0.0, %v6551
    %v6553 = vpop.f32.mrf.mxu0
    %6554 = vdwg.mxu0
    %6555 = vmatpush.bf16.msra.mxu0 0
    %6556 = vmatpush.bf16.msra.mxu0 0
    %6557 = vmatpush.bf16.msra.mxu0 0
    %6558 = vmatpush.bf16.msra.mxu0 0
    %6559 = vmatpush.bf16.msra.mxu0 %v6482
    %6560 = vmatpush.bf16.msra.mxu0 %v6428
    %6561 = vmatpush.bf16.msra.mxu0 %v6420
    %6562 = vmatpush.bf16.msra.mxu0 %v6412
    %6563 = vmatmul.bf16.gmra.mxu0 %v6464
    %v6564 = vpop.f32.mrf.mxu0
    %v6565 = vadd.f32 0.0, %v6564
    %v6566 = vpop.f32.mrf.mxu0
    %6567 = vdwg.mxu0
    %6568 = vmatpush.bf16.msra.mxu0 0
    %6569 = vmatpush.bf16.msra.mxu0 0
    %6570 = vmatpush.bf16.msra.mxu0 0
    %6571 = vmatpush.bf16.msra.mxu0 0
    %6572 = vmatpush.bf16.msra.mxu0 %v6485
    %6573 = vmatpush.bf16.msra.mxu0 %v6429
    %6574 = vmatpush.bf16.msra.mxu0 %v6421
    %6575 = vmatpush.bf16.msra.mxu0 %v6413
    %6576 = vmatmul.bf16.gmra.mxu0 %v6464
    %v6577 = vpop.f32.mrf.mxu0
    %v6578 = vadd.f32 0.0, %v6577
    %v6579 = vpop.f32.mrf.mxu0
    %6580 = vdwg.mxu0
    %6581 = vmatpush.bf16.msra.mxu0 0
    %6582 = vmatpush.bf16.msra.mxu0 0
    %6583 = vmatpush.bf16.msra.mxu0 0
    %6584 = vmatpush.bf16.msra.mxu0 0
    %6585 = vmatpush.bf16.msra.mxu0 %v6488
    %6586 = vmatpush.bf16.msra.mxu0 %v6430
    %6587 = vmatpush.bf16.msra.mxu0 %v6422
    %6588 = vmatpush.bf16.msra.mxu0 %v6414
    %6589 = vmatmul.bf16.gmra.mxu0 %v6464
    %v6590 = vpop.f32.mrf.mxu0
    %v6591 = vadd.f32 0.0, %v6590
    %v6592 = vpop.f32.mrf.mxu0
    %6593 = vdwg.mxu0
    %v6602 = vrot.slane %v6513, 7
    %v6603 = vrot.slane %v6526, 6
    %v6604 = vrot.slane %v6539, 5
    %v6605 = vrot.slane %v6552, 4
    %v6606 = vrot.slane %v6565, 3
    %v6607 = vrot.slane %v6578, 2
    %v6608 = vrot.slane %v6591, 1
    %v6609 = vsel %vm708, %v6500, %v6602
    %v6610 = vsel %vm4003, %v6603, %v6604
    %v6611 = vsel %vm2497, %v6609, %v6610
    %v6612 = vsel %vm4006, %v6605, %v6606
    %v6613 = vsel %vm4008, %v6607, %v6608
    %v6614 = vsel %vm4010, %v6612, %v6613
    %v6615 = vsel %vm3120, %v6611, %v6614
    %v6617 = vadd.f32 %v6292, %v6615
    %s6618 = scalar_lea.vmem [#allocation2], 2016
    %v6619 = vld [vmem:[%s6618] sm:$0xff]
    %v6620 = vld [vmem:[%s6618 + $0x8] sm:$0xff]
    %v6621 = vld [vmem:[%s6618 + $0x10] sm:$0xff]
    %v6622 = vld [vmem:[%s6618 + $0x18] sm:$0xff]
    %v6623 = vld [vmem:[%s6618 + $0x20] sm:$0xff]
    %v6624 = vld [vmem:[%s6618 + $0x28] sm:$0xff]
    %v6625 = vld [vmem:[%s6618 + $0x30] sm:$0xff]
    %v6626 = vld [vmem:[%s6618 + $0x38] sm:$0xff]
    %v6627 = vld [vmem:[%s6618 + $0x40] sm:$0xff]
    %v6628 = vld [vmem:[%s6618 + $0x48] sm:$0xff]
    %v6629 = vld [vmem:[%s6618 + $0x50] sm:$0xff]
    %v6630 = vld [vmem:[%s6618 + $0x58] sm:$0xff]
    %v6631 = vld [vmem:[%s6618 + $0x60] sm:$0xff]
    %v6632 = vld [vmem:[%s6618 + $0x68] sm:$0xff]
    %v6633 = vld [vmem:[%s6618 + $0x70] sm:$0xff]
    %v6634 = vld [vmem:[%s6618 + $0x78] sm:$0xff]
    %v6635 = vld [vmem:[%s6618 + $0x80] sm:$0xff]
    %v6636 = vld [vmem:[%s6618 + $0x88] sm:$0xff]
    %v6637 = vld [vmem:[%s6618 + $0x90] sm:$0xff]
    %v6638 = vld [vmem:[%s6618 + $0x98] sm:$0xff]
    %v6639 = vld [vmem:[%s6618 + $0xa0] sm:$0xff]
    %v6640 = vld [vmem:[%s6618 + $0xa8] sm:$0xff]
    %v6641 = vld [vmem:[%s6618 + $0xb0] sm:$0xff]
    %v6642 = vld [vmem:[%s6618 + $0xb8] sm:$0xff]
    %v6643 = vld [vmem:[%s6618 + $0xc0] sm:$0x11]
    %v6644 = vld [vmem:[%s6618 + $0xc8] sm:$0x11]
    %v6645 = vld [vmem:[%s6618 + $0xd0] sm:$0x11]
    %v6646 = vld [vmem:[%s6618 + $0xd8] sm:$0x11]
    %v6648 = vrot.slane %v6293, 1
    %v6677 = vunpack.c.l.b16 %v6619
    %v6678 = vunpack.c.h.b16 %v6619
    %v6679 = vunpack.c.l.b16 %v6620
    %v6680 = vunpack.c.h.b16 %v6620
    %v6681 = vunpack.c.l.b16 %v6621
    %v6682 = vunpack.c.h.b16 %v6621
    %v6683 = vunpack.c.l.b16 %v6622
    %v6684 = vunpack.c.h.b16 %v6622
    %v6685 = vunpack.c.l.b16 %v6623
    %v6686 = vunpack.c.h.b16 %v6623
    %v6687 = vunpack.c.l.b16 %v6624
    %v6688 = vunpack.c.h.b16 %v6624
    %v6689 = vunpack.c.l.b16 %v6625
    %v6690 = vunpack.c.h.b16 %v6625
    %v6691 = vunpack.c.l.b16 %v6626
    %v6692 = vunpack.c.h.b16 %v6626
    %v6693 = vunpack.c.l.b16 %v6627
    %v6694 = vunpack.c.h.b16 %v6627
    %v6695 = vunpack.c.l.b16 %v6628
    %v6696 = vunpack.c.h.b16 %v6628
    %v6697 = vunpack.c.l.b16 %v6629
    %v6698 = vunpack.c.h.b16 %v6629
    %v6699 = vunpack.c.l.b16 %v6630
    %v6700 = vunpack.c.h.b16 %v6630
    %v6701 = vunpack.c.l.b16 %v6631
    %v6702 = vunpack.c.h.b16 %v6631
    %v6703 = vunpack.c.l.b16 %v6632
    %v6704 = vunpack.c.h.b16 %v6632
    %v6705 = vunpack.c.l.b16 %v6633
    %v6706 = vunpack.c.h.b16 %v6633
    %v6707 = vunpack.c.l.b16 %v6634
    %v6708 = vunpack.c.h.b16 %v6634
    %v6709 = vunpack.c.l.b16 %v6635
    %v6710 = vunpack.c.h.b16 %v6635
    %v6711 = vunpack.c.l.b16 %v6636
    %v6712 = vunpack.c.h.b16 %v6636
    %v6713 = vunpack.c.l.b16 %v6637
    %v6714 = vunpack.c.h.b16 %v6637
    %v6715 = vunpack.c.l.b16 %v6638
    %v6716 = vunpack.c.h.b16 %v6638
    %v6717 = vunpack.c.l.b16 %v6639
    %v6718 = vunpack.c.h.b16 %v6639
    %v6719 = vunpack.c.l.b16 %v6640
    %v6720 = vunpack.c.h.b16 %v6640
    %v6721 = vunpack.c.l.b16 %v6641
    %v6722 = vunpack.c.h.b16 %v6641
    %v6723 = vunpack.c.l.b16 %v6642
    %v6724 = vunpack.c.h.b16 %v6642
    %v6725 = vunpack.c.l.b16 %v6643
    %v6726 = vunpack.c.h.b16 %v6643
    %v6727 = vunpack.c.l.b16 %v6644
    %v6728 = vunpack.c.h.b16 %v6644
    %v6729 = vunpack.c.l.b16 %v6645
    %v6730 = vunpack.c.h.b16 %v6645
    %v6731 = vunpack.c.l.b16 %v6646
    %v6732 = vunpack.c.h.b16 %v6646
    %v6733 = vpack.c.b16 %v6685, %v6677
    %v6734 = vpack.c.b16 %v6686, %v6678
    %v6735 = vpack.c.b16 %v6687, %v6679
    %v6736 = vpack.c.b16 %v6688, %v6680
    %v6737 = vpack.c.b16 %v6689, %v6681
    %v6738 = vpack.c.b16 %v6690, %v6682
    %v6739 = vpack.c.b16 %v6691, %v6683
    %v6740 = vpack.c.b16 %v6692, %v6684
    %v6741 = vpack.c.b16 %v6701, %v6693
    %v6742 = vpack.c.b16 %v6702, %v6694
    %v6743 = vpack.c.b16 %v6703, %v6695
    %v6744 = vpack.c.b16 %v6704, %v6696
    %v6745 = vpack.c.b16 %v6705, %v6697
    %v6746 = vpack.c.b16 %v6706, %v6698
    %v6747 = vpack.c.b16 %v6707, %v6699
    %v6748 = vpack.c.b16 %v6708, %v6700
    %v6749 = vpack.c.b16 %v6717, %v6709
    %v6750 = vpack.c.b16 %v6718, %v6710
    %v6751 = vpack.c.b16 %v6719, %v6711
    %v6752 = vpack.c.b16 %v6720, %v6712
    %v6753 = vpack.c.b16 %v6721, %v6713
    %v6754 = vpack.c.b16 %v6722, %v6714
    %v6755 = vpack.c.b16 %v6723, %v6715
    %v6756 = vpack.c.b16 %v6724, %v6716
    %v6757 = vpack.c.b16 %v6725, %v6725
    %v6758 = vpack.c.b16 %v6726, %v6726
    %v6759 = vpack.c.b16 %v6727, %v6727
    %v6760 = vpack.c.b16 %v6728, %v6728
    %v6761 = vpack.c.b16 %v6729, %v6729
    %v6762 = vpack.c.b16 %v6730, %v6730
    %v6763 = vpack.c.b16 %v6731, %v6731
    %v6764 = vpack.c.b16 %v6732, %v6732
    %v6790 = vsel %vm3855, %v6648, 0
    %v6793 = vsel %vm708, %v6757, 0
    %v6796 = vsel %vm708, %v6758, 0
    %v6799 = vsel %vm708, %v6759, 0
    %v6802 = vsel %vm708, %v6760, 0
    %v6805 = vsel %vm708, %v6761, 0
    %v6808 = vsel %vm708, %v6762, 0
    %v6811 = vsel %vm708, %v6763, 0
    %v6814 = vsel %vm708, %v6764, 0
    %6816 = vmatpush.bf16.msra.mxu0 0
    %6817 = vmatpush.bf16.msra.mxu0 0
    %6818 = vmatpush.bf16.msra.mxu0 0
    %6819 = vmatpush.bf16.msra.mxu0 0
    %6820 = vmatpush.bf16.msra.mxu0 %v6793
    %6821 = vmatpush.bf16.msra.mxu0 %v6749
    %6822 = vmatpush.bf16.msra.mxu0 %v6741
    %6823 = vmatpush.bf16.msra.mxu0 %v6733
    %6824 = vmatmul.bf16.gmra.mxu0 %v6790
    %v6825 = vpop.f32.mrf.mxu0
    %v6826 = vadd.f32 0.0, %v6825
    %v6827 = vpop.f32.mrf.mxu0
    %6828 = vdwg.mxu0
    %6829 = vmatpush.bf16.msra.mxu0 0
    %6830 = vmatpush.bf16.msra.mxu0 0
    %6831 = vmatpush.bf16.msra.mxu0 0
    %6832 = vmatpush.bf16.msra.mxu0 0
    %6833 = vmatpush.bf16.msra.mxu0 %v6796
    %6834 = vmatpush.bf16.msra.mxu0 %v6750
    %6835 = vmatpush.bf16.msra.mxu0 %v6742
    %6836 = vmatpush.bf16.msra.mxu0 %v6734
    %6837 = vmatmul.bf16.gmra.mxu0 %v6790
    %v6838 = vpop.f32.mrf.mxu0
    %v6839 = vadd.f32 0.0, %v6838
    %v6840 = vpop.f32.mrf.mxu0
    %6841 = vdwg.mxu0
    %6842 = vmatpush.bf16.msra.mxu0 0
    %6843 = vmatpush.bf16.msra.mxu0 0
    %6844 = vmatpush.bf16.msra.mxu0 0
    %6845 = vmatpush.bf16.msra.mxu0 0
    %6846 = vmatpush.bf16.msra.mxu0 %v6799
    %6847 = vmatpush.bf16.msra.mxu0 %v6751
    %6848 = vmatpush.bf16.msra.mxu0 %v6743
    %6849 = vmatpush.bf16.msra.mxu0 %v6735
    %6850 = vmatmul.bf16.gmra.mxu0 %v6790
    %v6851 = vpop.f32.mrf.mxu0
    %v6852 = vadd.f32 0.0, %v6851
    %v6853 = vpop.f32.mrf.mxu0
    %6854 = vdwg.mxu0
    %6855 = vmatpush.bf16.msra.mxu0 0
    %6856 = vmatpush.bf16.msra.mxu0 0
    %6857 = vmatpush.bf16.msra.mxu0 0
    %6858 = vmatpush.bf16.msra.mxu0 0
    %6859 = vmatpush.bf16.msra.mxu0 %v6802
    %6860 = vmatpush.bf16.msra.mxu0 %v6752
    %6861 = vmatpush.bf16.msra.mxu0 %v6744
    %6862 = vmatpush.bf16.msra.mxu0 %v6736
    %6863 = vmatmul.bf16.gmra.mxu0 %v6790
    %v6864 = vpop.f32.mrf.mxu0
    %v6865 = vadd.f32 0.0, %v6864
    %v6866 = vpop.f32.mrf.mxu0
    %6867 = vdwg.mxu0
    %6868 = vmatpush.bf16.msra.mxu0 0
    %6869 = vmatpush.bf16.msra.mxu0 0
    %6870 = vmatpush.bf16.msra.mxu0 0
    %6871 = vmatpush.bf16.msra.mxu0 0
    %6872 = vmatpush.bf16.msra.mxu0 %v6805
    %6873 = vmatpush.bf16.msra.mxu0 %v6753
    %6874 = vmatpush.bf16.msra.mxu0 %v6745
    %6875 = vmatpush.bf16.msra.mxu0 %v6737
    %6876 = vmatmul.bf16.gmra.mxu0 %v6790
    %v6877 = vpop.f32.mrf.mxu0
    %v6878 = vadd.f32 0.0, %v6877
    %v6879 = vpop.f32.mrf.mxu0
    %6880 = vdwg.mxu0
    %6881 = vmatpush.bf16.msra.mxu0 0
    %6882 = vmatpush.bf16.msra.mxu0 0
    %6883 = vmatpush.bf16.msra.mxu0 0
    %6884 = vmatpush.bf16.msra.mxu0 0
    %6885 = vmatpush.bf16.msra.mxu0 %v6808
    %6886 = vmatpush.bf16.msra.mxu0 %v6754
    %6887 = vmatpush.bf16.msra.mxu0 %v6746
    %6888 = vmatpush.bf16.msra.mxu0 %v6738
    %6889 = vmatmul.bf16.gmra.mxu0 %v6790
    %v6890 = vpop.f32.mrf.mxu0
    %v6891 = vadd.f32 0.0, %v6890
    %v6892 = vpop.f32.mrf.mxu0
    %6893 = vdwg.mxu0
    %6894 = vmatpush.bf16.msra.mxu0 0
    %6895 = vmatpush.bf16.msra.mxu0 0
    %6896 = vmatpush.bf16.msra.mxu0 0
    %6897 = vmatpush.bf16.msra.mxu0 0
    %6898 = vmatpush.bf16.msra.mxu0 %v6811
    %6899 = vmatpush.bf16.msra.mxu0 %v6755
    %6900 = vmatpush.bf16.msra.mxu0 %v6747
    %6901 = vmatpush.bf16.msra.mxu0 %v6739
    %6902 = vmatmul.bf16.gmra.mxu0 %v6790
    %v6903 = vpop.f32.mrf.mxu0
    %v6904 = vadd.f32 0.0, %v6903
    %v6905 = vpop.f32.mrf.mxu0
    %6906 = vdwg.mxu0
    %6907 = vmatpush.bf16.msra.mxu0 0
    %6908 = vmatpush.bf16.msra.mxu0 0
    %6909 = vmatpush.bf16.msra.mxu0 0
    %6910 = vmatpush.bf16.msra.mxu0 0
    %6911 = vmatpush.bf16.msra.mxu0 %v6814
    %6912 = vmatpush.bf16.msra.mxu0 %v6756
    %6913 = vmatpush.bf16.msra.mxu0 %v6748
    %6914 = vmatpush.bf16.msra.mxu0 %v6740
    %6915 = vmatmul.bf16.gmra.mxu0 %v6790
    %v6916 = vpop.f32.mrf.mxu0
    %v6917 = vadd.f32 0.0, %v6916
    %v6918 = vpop.f32.mrf.mxu0
    %6919 = vdwg.mxu0
    %v6928 = vrot.slane %v6839, 7
    %v6929 = vrot.slane %v6852, 6
    %v6930 = vrot.slane %v6865, 5
    %v6931 = vrot.slane %v6878, 4
    %v6932 = vrot.slane %v6891, 3
    %v6933 = vrot.slane %v6904, 2
    %v6934 = vrot.slane %v6917, 1
    %v6935 = vsel %vm708, %v6826, %v6928
    %v6936 = vsel %vm4003, %v6929, %v6930
    %v6937 = vsel %vm2497, %v6935, %v6936
    %v6938 = vsel %vm4006, %v6931, %v6932
    %v6939 = vsel %vm4008, %v6933, %v6934
    %v6940 = vsel %vm4010, %v6938, %v6939
    %v6941 = vsel %vm3120, %v6937, %v6940
    %v6943 = vadd.f32 %v6617, %v6941
    %v6944 = vpack.c.bf16 %v3674, %v3674
    %s6945 = scalar_lea.vmem [#allocation2], 2240
    %v6946 = vld [vmem:[%s6945] sm:$0xff]
    %v6947 = vld [vmem:[%s6945 + $0x8] sm:$0xff]
    %v6948 = vld [vmem:[%s6945 + $0x10] sm:$0xff]
    %v6949 = vld [vmem:[%s6945 + $0x18] sm:$0xff]
    %v6950 = vld [vmem:[%s6945 + $0x20] sm:$0xff]
    %v6951 = vld [vmem:[%s6945 + $0x28] sm:$0xff]
    %v6952 = vld [vmem:[%s6945 + $0x30] sm:$0xff]
    %v6953 = vld [vmem:[%s6945 + $0x38] sm:$0xff]
    %v6954 = vld [vmem:[%s6945 + $0x40] sm:$0xff]
    %v6955 = vld [vmem:[%s6945 + $0x48] sm:$0xff]
    %v6956 = vld [vmem:[%s6945 + $0x50] sm:$0xff]
    %v6957 = vld [vmem:[%s6945 + $0x58] sm:$0xff]
    %v6958 = vld [vmem:[%s6945 + $0x60] sm:$0xff]
    %v6959 = vld [vmem:[%s6945 + $0x68] sm:$0xff]
    %v6960 = vld [vmem:[%s6945 + $0x70] sm:$0xff]
    %v6961 = vld [vmem:[%s6945 + $0x78] sm:$0xff]
    %v6962 = vld [vmem:[%s6945 + $0x80] sm:$0xff]
    %v6963 = vld [vmem:[%s6945 + $0x88] sm:$0xff]
    %v6964 = vld [vmem:[%s6945 + $0x90] sm:$0xff]
    %v6965 = vld [vmem:[%s6945 + $0x98] sm:$0xff]
    %v6966 = vld [vmem:[%s6945 + $0xa0] sm:$0xff]
    %v6967 = vld [vmem:[%s6945 + $0xa8] sm:$0xff]
    %v6968 = vld [vmem:[%s6945 + $0xb0] sm:$0xff]
    %v6969 = vld [vmem:[%s6945 + $0xb8] sm:$0xff]
    %v6970 = vld [vmem:[%s6945 + $0xc0] sm:$0x11]
    %v6971 = vld [vmem:[%s6945 + $0xc8] sm:$0x11]
    %v6972 = vld [vmem:[%s6945 + $0xd0] sm:$0x11]
    %v6973 = vld [vmem:[%s6945 + $0xd8] sm:$0x11]
    %v6975 = vrot.slane %v6944, 2
    %v7004 = vunpack.c.l.b16 %v6946
    %v7005 = vunpack.c.h.b16 %v6946
    %v7006 = vunpack.c.l.b16 %v6947
    %v7007 = vunpack.c.h.b16 %v6947
    %v7008 = vunpack.c.l.b16 %v6948
    %v7009 = vunpack.c.h.b16 %v6948
    %v7010 = vunpack.c.l.b16 %v6949
    %v7011 = vunpack.c.h.b16 %v6949
    %v7012 = vunpack.c.l.b16 %v6950
    %v7013 = vunpack.c.h.b16 %v6950
    %v7014 = vunpack.c.l.b16 %v6951
    %v7015 = vunpack.c.h.b16 %v6951
    %v7016 = vunpack.c.l.b16 %v6952
    %v7017 = vunpack.c.h.b16 %v6952
    %v7018 = vunpack.c.l.b16 %v6953
    %v7019 = vunpack.c.h.b16 %v6953
    %v7020 = vunpack.c.l.b16 %v6954
    %v7021 = vunpack.c.h.b16 %v6954
    %v7022 = vunpack.c.l.b16 %v6955
    %v7023 = vunpack.c.h.b16 %v6955
    %v7024 = vunpack.c.l.b16 %v6956
    %v7025 = vunpack.c.h.b16 %v6956
    %v7026 = vunpack.c.l.b16 %v6957
    %v7027 = vunpack.c.h.b16 %v6957
    %v7028 = vunpack.c.l.b16 %v6958
    %v7029 = vunpack.c.h.b16 %v6958
    %v7030 = vunpack.c.l.b16 %v6959
    %v7031 = vunpack.c.h.b16 %v6959
    %v7032 = vunpack.c.l.b16 %v6960
    %v7033 = vunpack.c.h.b16 %v6960
    %v7034 = vunpack.c.l.b16 %v6961
    %v7035 = vunpack.c.h.b16 %v6961
    %v7036 = vunpack.c.l.b16 %v6962
    %v7037 = vunpack.c.h.b16 %v6962
    %v7038 = vunpack.c.l.b16 %v6963
    %v7039 = vunpack.c.h.b16 %v6963
    %v7040 = vunpack.c.l.b16 %v6964
    %v7041 = vunpack.c.h.b16 %v6964
    %v7042 = vunpack.c.l.b16 %v6965
    %v7043 = vunpack.c.h.b16 %v6965
    %v7044 = vunpack.c.l.b16 %v6966
    %v7045 = vunpack.c.h.b16 %v6966
    %v7046 = vunpack.c.l.b16 %v6967
    %v7047 = vunpack.c.h.b16 %v6967
    %v7048 = vunpack.c.l.b16 %v6968
    %v7049 = vunpack.c.h.b16 %v6968
    %v7050 = vunpack.c.l.b16 %v6969
    %v7051 = vunpack.c.h.b16 %v6969
    %v7052 = vunpack.c.l.b16 %v6970
    %v7053 = vunpack.c.h.b16 %v6970
    %v7054 = vunpack.c.l.b16 %v6971
    %v7055 = vunpack.c.h.b16 %v6971
    %v7056 = vunpack.c.l.b16 %v6972
    %v7057 = vunpack.c.h.b16 %v6972
    %v7058 = vunpack.c.l.b16 %v6973
    %v7059 = vunpack.c.h.b16 %v6973
    %v7060 = vpack.c.b16 %v7012, %v7004
    %v7061 = vpack.c.b16 %v7013, %v7005
    %v7062 = vpack.c.b16 %v7014, %v7006
    %v7063 = vpack.c.b16 %v7015, %v7007
    %v7064 = vpack.c.b16 %v7016, %v7008
    %v7065 = vpack.c.b16 %v7017, %v7009
    %v7066 = vpack.c.b16 %v7018, %v7010
    %v7067 = vpack.c.b16 %v7019, %v7011
    %v7068 = vpack.c.b16 %v7028, %v7020
    %v7069 = vpack.c.b16 %v7029, %v7021
    %v7070 = vpack.c.b16 %v7030, %v7022
    %v7071 = vpack.c.b16 %v7031, %v7023
    %v7072 = vpack.c.b16 %v7032, %v7024
    %v7073 = vpack.c.b16 %v7033, %v7025
    %v7074 = vpack.c.b16 %v7034, %v7026
    %v7075 = vpack.c.b16 %v7035, %v7027
    %v7076 = vpack.c.b16 %v7044, %v7036
    %v7077 = vpack.c.b16 %v7045, %v7037
    %v7078 = vpack.c.b16 %v7046, %v7038
    %v7079 = vpack.c.b16 %v7047, %v7039
    %v7080 = vpack.c.b16 %v7048, %v7040
    %v7081 = vpack.c.b16 %v7049, %v7041
    %v7082 = vpack.c.b16 %v7050, %v7042
    %v7083 = vpack.c.b16 %v7051, %v7043
    %v7084 = vpack.c.b16 %v7052, %v7052
    %v7085 = vpack.c.b16 %v7053, %v7053
    %v7086 = vpack.c.b16 %v7054, %v7054
    %v7087 = vpack.c.b16 %v7055, %v7055
    %v7088 = vpack.c.b16 %v7056, %v7056
    %v7089 = vpack.c.b16 %v7057, %v7057
    %v7090 = vpack.c.b16 %v7058, %v7058
    %v7091 = vpack.c.b16 %v7059, %v7059
    %v7117 = vsel %vm3855, %v6975, 0
    %v7120 = vsel %vm708, %v7084, 0
    %v7123 = vsel %vm708, %v7085, 0
    %v7126 = vsel %vm708, %v7086, 0
    %v7129 = vsel %vm708, %v7087, 0
    %v7132 = vsel %vm708, %v7088, 0
    %v7135 = vsel %vm708, %v7089, 0
    %v7138 = vsel %vm708, %v7090, 0
    %v7141 = vsel %vm708, %v7091, 0
    %7143 = vmatpush.bf16.msra.mxu0 0
    %7144 = vmatpush.bf16.msra.mxu0 0
    %7145 = vmatpush.bf16.msra.mxu0 0
    %7146 = vmatpush.bf16.msra.mxu0 0
    %7147 = vmatpush.bf16.msra.mxu0 %v7120
    %7148 = vmatpush.bf16.msra.mxu0 %v7076
    %7149 = vmatpush.bf16.msra.mxu0 %v7068
    %7150 = vmatpush.bf16.msra.mxu0 %v7060
    %7151 = vmatmul.bf16.gmra.mxu0 %v7117
    %v7152 = vpop.f32.mrf.mxu0
    %v7153 = vadd.f32 0.0, %v7152
    %v7154 = vpop.f32.mrf.mxu0
    %7155 = vdwg.mxu0
    %7156 = vmatpush.bf16.msra.mxu0 0
    %7157 = vmatpush.bf16.msra.mxu0 0
    %7158 = vmatpush.bf16.msra.mxu0 0
    %7159 = vmatpush.bf16.msra.mxu0 0
    %7160 = vmatpush.bf16.msra.mxu0 %v7123
    %7161 = vmatpush.bf16.msra.mxu0 %v7077
    %7162 = vmatpush.bf16.msra.mxu0 %v7069
    %7163 = vmatpush.bf16.msra.mxu0 %v7061
    %7164 = vmatmul.bf16.gmra.mxu0 %v7117
    %v7165 = vpop.f32.mrf.mxu0
    %v7166 = vadd.f32 0.0, %v7165
    %v7167 = vpop.f32.mrf.mxu0
    %7168 = vdwg.mxu0
    %7169 = vmatpush.bf16.msra.mxu0 0
    %7170 = vmatpush.bf16.msra.mxu0 0
    %7171 = vmatpush.bf16.msra.mxu0 0
    %7172 = vmatpush.bf16.msra.mxu0 0
    %7173 = vmatpush.bf16.msra.mxu0 %v7126
    %7174 = vmatpush.bf16.msra.mxu0 %v7078
    %7175 = vmatpush.bf16.msra.mxu0 %v7070
    %7176 = vmatpush.bf16.msra.mxu0 %v7062
    %7177 = vmatmul.bf16.gmra.mxu0 %v7117
    %v7178 = vpop.f32.mrf.mxu0
    %v7179 = vadd.f32 0.0, %v7178
    %v7180 = vpop.f32.mrf.mxu0
    %7181 = vdwg.mxu0
    %7182 = vmatpush.bf16.msra.mxu0 0
    %7183 = vmatpush.bf16.msra.mxu0 0
    %7184 = vmatpush.bf16.msra.mxu0 0
    %7185 = vmatpush.bf16.msra.mxu0 0
    %7186 = vmatpush.bf16.msra.mxu0 %v7129
    %7187 = vmatpush.bf16.msra.mxu0 %v7079
    %7188 = vmatpush.bf16.msra.mxu0 %v7071
    %7189 = vmatpush.bf16.msra.mxu0 %v7063
    %7190 = vmatmul.bf16.gmra.mxu0 %v7117
    %v7191 = vpop.f32.mrf.mxu0
    %v7192 = vadd.f32 0.0, %v7191
    %v7193 = vpop.f32.mrf.mxu0
    %7194 = vdwg.mxu0
    %7195 = vmatpush.bf16.msra.mxu0 0
    %7196 = vmatpush.bf16.msra.mxu0 0
    %7197 = vmatpush.bf16.msra.mxu0 0
    %7198 = vmatpush.bf16.msra.mxu0 0
    %7199 = vmatpush.bf16.msra.mxu0 %v7132
    %7200 = vmatpush.bf16.msra.mxu0 %v7080
    %7201 = vmatpush.bf16.msra.mxu0 %v7072
    %7202 = vmatpush.bf16.msra.mxu0 %v7064
    %7203 = vmatmul.bf16.gmra.mxu0 %v7117
    %v7204 = vpop.f32.mrf.mxu0
    %v7205 = vadd.f32 0.0, %v7204
    %v7206 = vpop.f32.mrf.mxu0
    %7207 = vdwg.mxu0
    %7208 = vmatpush.bf16.msra.mxu0 0
    %7209 = vmatpush.bf16.msra.mxu0 0
    %7210 = vmatpush.bf16.msra.mxu0 0
    %7211 = vmatpush.bf16.msra.mxu0 0
    %7212 = vmatpush.bf16.msra.mxu0 %v7135
    %7213 = vmatpush.bf16.msra.mxu0 %v7081
    %7214 = vmatpush.bf16.msra.mxu0 %v7073
    %7215 = vmatpush.bf16.msra.mxu0 %v7065
    %7216 = vmatmul.bf16.gmra.mxu0 %v7117
    %v7217 = vpop.f32.mrf.mxu0
    %v7218 = vadd.f32 0.0, %v7217
    %v7219 = vpop.f32.mrf.mxu0
    %7220 = vdwg.mxu0
    %7221 = vmatpush.bf16.msra.mxu0 0
    %7222 = vmatpush.bf16.msra.mxu0 0
    %7223 = vmatpush.bf16.msra.mxu0 0
    %7224 = vmatpush.bf16.msra.mxu0 0
    %7225 = vmatpush.bf16.msra.mxu0 %v7138
    %7226 = vmatpush.bf16.msra.mxu0 %v7082
    %7227 = vmatpush.bf16.msra.mxu0 %v7074
    %7228 = vmatpush.bf16.msra.mxu0 %v7066
    %7229 = vmatmul.bf16.gmra.mxu0 %v7117
    %v7230 = vpop.f32.mrf.mxu0
    %v7231 = vadd.f32 0.0, %v7230
    %v7232 = vpop.f32.mrf.mxu0
    %7233 = vdwg.mxu0
    %7234 = vmatpush.bf16.msra.mxu0 0
    %7235 = vmatpush.bf16.msra.mxu0 0
    %7236 = vmatpush.bf16.msra.mxu0 0
    %7237 = vmatpush.bf16.msra.mxu0 0
    %7238 = vmatpush.bf16.msra.mxu0 %v7141
    %7239 = vmatpush.bf16.msra.mxu0 %v7083
    %7240 = vmatpush.bf16.msra.mxu0 %v7075
    %7241 = vmatpush.bf16.msra.mxu0 %v7067
    %7242 = vmatmul.bf16.gmra.mxu0 %v7117
    %v7243 = vpop.f32.mrf.mxu0
    %v7244 = vadd.f32 0.0, %v7243
    %v7245 = vpop.f32.mrf.mxu0
    %7246 = vdwg.mxu0
    %v7255 = vrot.slane %v7166, 7
    %v7256 = vrot.slane %v7179, 6
    %v7257 = vrot.slane %v7192, 5
    %v7258 = vrot.slane %v7205, 4
    %v7259 = vrot.slane %v7218, 3
    %v7260 = vrot.slane %v7231, 2
    %v7261 = vrot.slane %v7244, 1
    %v7262 = vsel %vm708, %v7153, %v7255
    %v7263 = vsel %vm4003, %v7256, %v7257
    %v7264 = vsel %vm2497, %v7262, %v7263
    %v7265 = vsel %vm4006, %v7258, %v7259
    %v7266 = vsel %vm4008, %v7260, %v7261
    %v7267 = vsel %vm4010, %v7265, %v7266
    %v7268 = vsel %vm3120, %v7264, %v7267
    %v7270 = vadd.f32 %v6943, %v7268
    %s7271 = scalar_lea.vmem [#allocation2], 2464
    %v7272 = vld [vmem:[%s7271] sm:$0xff]
    %v7273 = vld [vmem:[%s7271 + $0x8] sm:$0xff]
    %v7274 = vld [vmem:[%s7271 + $0x10] sm:$0xff]
    %v7275 = vld [vmem:[%s7271 + $0x18] sm:$0xff]
    %v7276 = vld [vmem:[%s7271 + $0x20] sm:$0xff]
    %v7277 = vld [vmem:[%s7271 + $0x28] sm:$0xff]
    %v7278 = vld [vmem:[%s7271 + $0x30] sm:$0xff]
    %v7279 = vld [vmem:[%s7271 + $0x38] sm:$0xff]
    %v7280 = vld [vmem:[%s7271 + $0x40] sm:$0xff]
    %v7281 = vld [vmem:[%s7271 + $0x48] sm:$0xff]
    %v7282 = vld [vmem:[%s7271 + $0x50] sm:$0xff]
    %v7283 = vld [vmem:[%s7271 + $0x58] sm:$0xff]
    %v7284 = vld [vmem:[%s7271 + $0x60] sm:$0xff]
    %v7285 = vld [vmem:[%s7271 + $0x68] sm:$0xff]
    %v7286 = vld [vmem:[%s7271 + $0x70] sm:$0xff]
    %v7287 = vld [vmem:[%s7271 + $0x78] sm:$0xff]
    %v7288 = vld [vmem:[%s7271 + $0x80] sm:$0xff]
    %v7289 = vld [vmem:[%s7271 + $0x88] sm:$0xff]
    %v7290 = vld [vmem:[%s7271 + $0x90] sm:$0xff]
    %v7291 = vld [vmem:[%s7271 + $0x98] sm:$0xff]
    %v7292 = vld [vmem:[%s7271 + $0xa0] sm:$0xff]
    %v7293 = vld [vmem:[%s7271 + $0xa8] sm:$0xff]
    %v7294 = vld [vmem:[%s7271 + $0xb0] sm:$0xff]
    %v7295 = vld [vmem:[%s7271 + $0xb8] sm:$0xff]
    %v7296 = vld [vmem:[%s7271 + $0xc0] sm:$0x11]
    %v7297 = vld [vmem:[%s7271 + $0xc8] sm:$0x11]
    %v7298 = vld [vmem:[%s7271 + $0xd0] sm:$0x11]
    %v7299 = vld [vmem:[%s7271 + $0xd8] sm:$0x11]
    %v7300 = vrot.slane %v6944, 3
    %v7329 = vunpack.c.l.b16 %v7272
    %v7330 = vunpack.c.h.b16 %v7272
    %v7331 = vunpack.c.l.b16 %v7273
    %v7332 = vunpack.c.h.b16 %v7273
    %v7333 = vunpack.c.l.b16 %v7274
    %v7334 = vunpack.c.h.b16 %v7274
    %v7335 = vunpack.c.l.b16 %v7275
    %v7336 = vunpack.c.h.b16 %v7275
    %v7337 = vunpack.c.l.b16 %v7276
    %v7338 = vunpack.c.h.b16 %v7276
    %v7339 = vunpack.c.l.b16 %v7277
    %v7340 = vunpack.c.h.b16 %v7277
    %v7341 = vunpack.c.l.b16 %v7278
    %v7342 = vunpack.c.h.b16 %v7278
    %v7343 = vunpack.c.l.b16 %v7279
    %v7344 = vunpack.c.h.b16 %v7279
    %v7345 = vunpack.c.l.b16 %v7280
    %v7346 = vunpack.c.h.b16 %v7280
    %v7347 = vunpack.c.l.b16 %v7281
    %v7348 = vunpack.c.h.b16 %v7281
    %v7349 = vunpack.c.l.b16 %v7282
    %v7350 = vunpack.c.h.b16 %v7282
    %v7351 = vunpack.c.l.b16 %v7283
    %v7352 = vunpack.c.h.b16 %v7283
    %v7353 = vunpack.c.l.b16 %v7284
    %v7354 = vunpack.c.h.b16 %v7284
    %v7355 = vunpack.c.l.b16 %v7285
    %v7356 = vunpack.c.h.b16 %v7285
    %v7357 = vunpack.c.l.b16 %v7286
    %v7358 = vunpack.c.h.b16 %v7286
    %v7359 = vunpack.c.l.b16 %v7287
    %v7360 = vunpack.c.h.b16 %v7287
    %v7361 = vunpack.c.l.b16 %v7288
    %v7362 = vunpack.c.h.b16 %v7288
    %v7363 = vunpack.c.l.b16 %v7289
    %v7364 = vunpack.c.h.b16 %v7289
    %v7365 = vunpack.c.l.b16 %v7290
    %v7366 = vunpack.c.h.b16 %v7290
    %v7367 = vunpack.c.l.b16 %v7291
    %v7368 = vunpack.c.h.b16 %v7291
    %v7369 = vunpack.c.l.b16 %v7292
    %v7370 = vunpack.c.h.b16 %v7292
    %v7371 = vunpack.c.l.b16 %v7293
    %v7372 = vunpack.c.h.b16 %v7293
    %v7373 = vunpack.c.l.b16 %v7294
    %v7374 = vunpack.c.h.b16 %v7294
    %v7375 = vunpack.c.l.b16 %v7295
    %v7376 = vunpack.c.h.b16 %v7295
    %v7377 = vunpack.c.l.b16 %v7296
    %v7378 = vunpack.c.h.b16 %v7296
    %v7379 = vunpack.c.l.b16 %v7297
    %v7380 = vunpack.c.h.b16 %v7297
    %v7381 = vunpack.c.l.b16 %v7298
    %v7382 = vunpack.c.h.b16 %v7298
    %v7383 = vunpack.c.l.b16 %v7299
    %v7384 = vunpack.c.h.b16 %v7299
    %v7385 = vpack.c.b16 %v7337, %v7329
    %v7386 = vpack.c.b16 %v7338, %v7330
    %v7387 = vpack.c.b16 %v7339, %v7331
    %v7388 = vpack.c.b16 %v7340, %v7332
    %v7389 = vpack.c.b16 %v7341, %v7333
    %v7390 = vpack.c.b16 %v7342, %v7334
    %v7391 = vpack.c.b16 %v7343, %v7335
    %v7392 = vpack.c.b16 %v7344, %v7336
    %v7393 = vpack.c.b16 %v7353, %v7345
    %v7394 = vpack.c.b16 %v7354, %v7346
    %v7395 = vpack.c.b16 %v7355, %v7347
    %v7396 = vpack.c.b16 %v7356, %v7348
    %v7397 = vpack.c.b16 %v7357, %v7349
    %v7398 = vpack.c.b16 %v7358, %v7350
    %v7399 = vpack.c.b16 %v7359, %v7351
    %v7400 = vpack.c.b16 %v7360, %v7352
    %v7401 = vpack.c.b16 %v7369, %v7361
    %v7402 = vpack.c.b16 %v7370, %v7362
    %v7403 = vpack.c.b16 %v7371, %v7363
    %v7404 = vpack.c.b16 %v7372, %v7364
    %v7405 = vpack.c.b16 %v7373, %v7365
    %v7406 = vpack.c.b16 %v7374, %v7366
    %v7407 = vpack.c.b16 %v7375, %v7367
    %v7408 = vpack.c.b16 %v7376, %v7368
    %v7409 = vpack.c.b16 %v7377, %v7377
    %v7410 = vpack.c.b16 %v7378, %v7378
    %v7411 = vpack.c.b16 %v7379, %v7379
    %v7412 = vpack.c.b16 %v7380, %v7380
    %v7413 = vpack.c.b16 %v7381, %v7381
    %v7414 = vpack.c.b16 %v7382, %v7382
    %v7415 = vpack.c.b16 %v7383, %v7383
    %v7416 = vpack.c.b16 %v7384, %v7384
    %v7442 = vsel %vm3855, %v7300, 0
    %v7445 = vsel %vm708, %v7409, 0
    %v7448 = vsel %vm708, %v7410, 0
    %v7451 = vsel %vm708, %v7411, 0
    %v7454 = vsel %vm708, %v7412, 0
    %v7457 = vsel %vm708, %v7413, 0
    %v7460 = vsel %vm708, %v7414, 0
    %v7463 = vsel %vm708, %v7415, 0
    %v7466 = vsel %vm708, %v7416, 0
    %7468 = vmatpush.bf16.msra.mxu0 0
    %7469 = vmatpush.bf16.msra.mxu0 0
    %7470 = vmatpush.bf16.msra.mxu0 0
    %7471 = vmatpush.bf16.msra.mxu0 0
    %7472 = vmatpush.bf16.msra.mxu0 %v7445
    %7473 = vmatpush.bf16.msra.mxu0 %v7401
    %7474 = vmatpush.bf16.msra.mxu0 %v7393
    %7475 = vmatpush.bf16.msra.mxu0 %v7385
    %7476 = vmatmul.bf16.gmra.mxu0 %v7442
    %v7477 = vpop.f32.mrf.mxu0
    %v7478 = vadd.f32 0.0, %v7477
    %v7479 = vpop.f32.mrf.mxu0
    %7480 = vdwg.mxu0
    %7481 = vmatpush.bf16.msra.mxu0 0
    %7482 = vmatpush.bf16.msra.mxu0 0
    %7483 = vmatpush.bf16.msra.mxu0 0
    %7484 = vmatpush.bf16.msra.mxu0 0
    %7485 = vmatpush.bf16.msra.mxu0 %v7448
    %7486 = vmatpush.bf16.msra.mxu0 %v7402
    %7487 = vmatpush.bf16.msra.mxu0 %v7394
    %7488 = vmatpush.bf16.msra.mxu0 %v7386
    %7489 = vmatmul.bf16.gmra.mxu0 %v7442
    %v7490 = vpop.f32.mrf.mxu0
    %v7491 = vadd.f32 0.0, %v7490
    %v7492 = vpop.f32.mrf.mxu0
    %7493 = vdwg.mxu0
    %7494 = vmatpush.bf16.msra.mxu0 0
    %7495 = vmatpush.bf16.msra.mxu0 0
    %7496 = vmatpush.bf16.msra.mxu0 0
    %7497 = vmatpush.bf16.msra.mxu0 0
    %7498 = vmatpush.bf16.msra.mxu0 %v7451
    %7499 = vmatpush.bf16.msra.mxu0 %v7403
    %7500 = vmatpush.bf16.msra.mxu0 %v7395
    %7501 = vmatpush.bf16.msra.mxu0 %v7387
    %7502 = vmatmul.bf16.gmra.mxu0 %v7442
    %v7503 = vpop.f32.mrf.mxu0
    %v7504 = vadd.f32 0.0, %v7503
    %v7505 = vpop.f32.mrf.mxu0
    %7506 = vdwg.mxu0
    %7507 = vmatpush.bf16.msra.mxu0 0
    %7508 = vmatpush.bf16.msra.mxu0 0
    %7509 = vmatpush.bf16.msra.mxu0 0
    %7510 = vmatpush.bf16.msra.mxu0 0
    %7511 = vmatpush.bf16.msra.mxu0 %v7454
    %7512 = vmatpush.bf16.msra.mxu0 %v7404
    %7513 = vmatpush.bf16.msra.mxu0 %v7396
    %7514 = vmatpush.bf16.msra.mxu0 %v7388
    %7515 = vmatmul.bf16.gmra.mxu0 %v7442
    %v7516 = vpop.f32.mrf.mxu0
    %v7517 = vadd.f32 0.0, %v7516
    %v7518 = vpop.f32.mrf.mxu0
    %7519 = vdwg.mxu0
    %7520 = vmatpush.bf16.msra.mxu0 0
    %7521 = vmatpush.bf16.msra.mxu0 0
    %7522 = vmatpush.bf16.msra.mxu0 0
    %7523 = vmatpush.bf16.msra.mxu0 0
    %7524 = vmatpush.bf16.msra.mxu0 %v7457
    %7525 = vmatpush.bf16.msra.mxu0 %v7405
    %7526 = vmatpush.bf16.msra.mxu0 %v7397
    %7527 = vmatpush.bf16.msra.mxu0 %v7389
    %7528 = vmatmul.bf16.gmra.mxu0 %v7442
    %v7529 = vpop.f32.mrf.mxu0
    %v7530 = vadd.f32 0.0, %v7529
    %v7531 = vpop.f32.mrf.mxu0
    %7532 = vdwg.mxu0
    %7533 = vmatpush.bf16.msra.mxu0 0
    %7534 = vmatpush.bf16.msra.mxu0 0
    %7535 = vmatpush.bf16.msra.mxu0 0
    %7536 = vmatpush.bf16.msra.mxu0 0
    %7537 = vmatpush.bf16.msra.mxu0 %v7460
    %7538 = vmatpush.bf16.msra.mxu0 %v7406
    %7539 = vmatpush.bf16.msra.mxu0 %v7398
    %7540 = vmatpush.bf16.msra.mxu0 %v7390
    %7541 = vmatmul.bf16.gmra.mxu0 %v7442
    %v7542 = vpop.f32.mrf.mxu0
    %v7543 = vadd.f32 0.0, %v7542
    %v7544 = vpop.f32.mrf.mxu0
    %7545 = vdwg.mxu0
    %7546 = vmatpush.bf16.msra.mxu0 0
    %7547 = vmatpush.bf16.msra.mxu0 0
    %7548 = vmatpush.bf16.msra.mxu0 0
    %7549 = vmatpush.bf16.msra.mxu0 0
    %7550 = vmatpush.bf16.msra.mxu0 %v7463
    %7551 = vmatpush.bf16.msra.mxu0 %v7407
    %7552 = vmatpush.bf16.msra.mxu0 %v7399
    %7553 = vmatpush.bf16.msra.mxu0 %v7391
    %7554 = vmatmul.bf16.gmra.mxu0 %v7442
    %v7555 = vpop.f32.mrf.mxu0
    %v7556 = vadd.f32 0.0, %v7555
    %v7557 = vpop.f32.mrf.mxu0
    %7558 = vdwg.mxu0
    %7559 = vmatpush.bf16.msra.mxu0 0
    %7560 = vmatpush.bf16.msra.mxu0 0
    %7561 = vmatpush.bf16.msra.mxu0 0
    %7562 = vmatpush.bf16.msra.mxu0 0
    %7563 = vmatpush.bf16.msra.mxu0 %v7466
    %7564 = vmatpush.bf16.msra.mxu0 %v7408
    %7565 = vmatpush.bf16.msra.mxu0 %v7400
    %7566 = vmatpush.bf16.msra.mxu0 %v7392
    %7567 = vmatmul.bf16.gmra.mxu0 %v7442
    %v7568 = vpop.f32.mrf.mxu0
    %v7569 = vadd.f32 0.0, %v7568
    %v7570 = vpop.f32.mrf.mxu0
    %7571 = vdwg.mxu0
    %v7580 = vrot.slane %v7491, 7
    %v7581 = vrot.slane %v7504, 6
    %v7582 = vrot.slane %v7517, 5
    %v7583 = vrot.slane %v7530, 4
    %v7584 = vrot.slane %v7543, 3
    %v7585 = vrot.slane %v7556, 2
    %v7586 = vrot.slane %v7569, 1
    %v7587 = vsel %vm708, %v7478, %v7580
    %v7588 = vsel %vm4003, %v7581, %v7582
    %v7589 = vsel %vm2497, %v7587, %v7588
    %v7590 = vsel %vm4006, %v7583, %v7584
    %v7591 = vsel %vm4008, %v7585, %v7586
    %v7592 = vsel %vm4010, %v7590, %v7591
    %v7593 = vsel %vm3120, %v7589, %v7592
    %v7595 = vadd.f32 %v7270, %v7593
    %v7596 = vpack.c.bf16 %v3675, %v3675
    %s7597 = scalar_lea.vmem [#allocation2], 2688
    %v7598 = vld [vmem:[%s7597] sm:$0xff]
    %v7599 = vld [vmem:[%s7597 + $0x8] sm:$0xff]
    %v7600 = vld [vmem:[%s7597 + $0x10] sm:$0xff]
    %v7601 = vld [vmem:[%s7597 + $0x18] sm:$0xff]
    %v7602 = vld [vmem:[%s7597 + $0x20] sm:$0xff]
    %v7603 = vld [vmem:[%s7597 + $0x28] sm:$0xff]
    %v7604 = vld [vmem:[%s7597 + $0x30] sm:$0xff]
    %v7605 = vld [vmem:[%s7597 + $0x38] sm:$0xff]
    %v7606 = vld [vmem:[%s7597 + $0x40] sm:$0xff]
    %v7607 = vld [vmem:[%s7597 + $0x48] sm:$0xff]
    %v7608 = vld [vmem:[%s7597 + $0x50] sm:$0xff]
    %v7609 = vld [vmem:[%s7597 + $0x58] sm:$0xff]
    %v7610 = vld [vmem:[%s7597 + $0x60] sm:$0xff]
    %v7611 = vld [vmem:[%s7597 + $0x68] sm:$0xff]
    %v7612 = vld [vmem:[%s7597 + $0x70] sm:$0xff]
    %v7613 = vld [vmem:[%s7597 + $0x78] sm:$0xff]
    %v7614 = vld [vmem:[%s7597 + $0x80] sm:$0xff]
    %v7615 = vld [vmem:[%s7597 + $0x88] sm:$0xff]
    %v7616 = vld [vmem:[%s7597 + $0x90] sm:$0xff]
    %v7617 = vld [vmem:[%s7597 + $0x98] sm:$0xff]
    %v7618 = vld [vmem:[%s7597 + $0xa0] sm:$0xff]
    %v7619 = vld [vmem:[%s7597 + $0xa8] sm:$0xff]
    %v7620 = vld [vmem:[%s7597 + $0xb0] sm:$0xff]
    %v7621 = vld [vmem:[%s7597 + $0xb8] sm:$0xff]
    %v7622 = vld [vmem:[%s7597 + $0xc0] sm:$0x11]
    %v7623 = vld [vmem:[%s7597 + $0xc8] sm:$0x11]
    %v7624 = vld [vmem:[%s7597 + $0xd0] sm:$0x11]
    %v7625 = vld [vmem:[%s7597 + $0xd8] sm:$0x11]
    %v7654 = vunpack.c.l.b16 %v7598
    %v7655 = vunpack.c.h.b16 %v7598
    %v7656 = vunpack.c.l.b16 %v7599
    %v7657 = vunpack.c.h.b16 %v7599
    %v7658 = vunpack.c.l.b16 %v7600
    %v7659 = vunpack.c.h.b16 %v7600
    %v7660 = vunpack.c.l.b16 %v7601
    %v7661 = vunpack.c.h.b16 %v7601
    %v7662 = vunpack.c.l.b16 %v7602
    %v7663 = vunpack.c.h.b16 %v7602
    %v7664 = vunpack.c.l.b16 %v7603
    %v7665 = vunpack.c.h.b16 %v7603
    %v7666 = vunpack.c.l.b16 %v7604
    %v7667 = vunpack.c.h.b16 %v7604
    %v7668 = vunpack.c.l.b16 %v7605
    %v7669 = vunpack.c.h.b16 %v7605
    %v7670 = vunpack.c.l.b16 %v7606
    %v7671 = vunpack.c.h.b16 %v7606
    %v7672 = vunpack.c.l.b16 %v7607
    %v7673 = vunpack.c.h.b16 %v7607
    %v7674 = vunpack.c.l.b16 %v7608
    %v7675 = vunpack.c.h.b16 %v7608
    %v7676 = vunpack.c.l.b16 %v7609
    %v7677 = vunpack.c.h.b16 %v7609
    %v7678 = vunpack.c.l.b16 %v7610
    %v7679 = vunpack.c.h.b16 %v7610
    %v7680 = vunpack.c.l.b16 %v7611
    %v7681 = vunpack.c.h.b16 %v7611
    %v7682 = vunpack.c.l.b16 %v7612
    %v7683 = vunpack.c.h.b16 %v7612
    %v7684 = vunpack.c.l.b16 %v7613
    %v7685 = vunpack.c.h.b16 %v7613
    %v7686 = vunpack.c.l.b16 %v7614
    %v7687 = vunpack.c.h.b16 %v7614
    %v7688 = vunpack.c.l.b16 %v7615
    %v7689 = vunpack.c.h.b16 %v7615
    %v7690 = vunpack.c.l.b16 %v7616
    %v7691 = vunpack.c.h.b16 %v7616
    %v7692 = vunpack.c.l.b16 %v7617
    %v7693 = vunpack.c.h.b16 %v7617
    %v7694 = vunpack.c.l.b16 %v7618
    %v7695 = vunpack.c.h.b16 %v7618
    %v7696 = vunpack.c.l.b16 %v7619
    %v7697 = vunpack.c.h.b16 %v7619
    %v7698 = vunpack.c.l.b16 %v7620
    %v7699 = vunpack.c.h.b16 %v7620
    %v7700 = vunpack.c.l.b16 %v7621
    %v7701 = vunpack.c.h.b16 %v7621
    %v7702 = vunpack.c.l.b16 %v7622
    %v7703 = vunpack.c.h.b16 %v7622
    %v7704 = vunpack.c.l.b16 %v7623
    %v7705 = vunpack.c.h.b16 %v7623
    %v7706 = vunpack.c.l.b16 %v7624
    %v7707 = vunpack.c.h.b16 %v7624
    %v7708 = vunpack.c.l.b16 %v7625
    %v7709 = vunpack.c.h.b16 %v7625
    %v7710 = vpack.c.b16 %v7662, %v7654
    %v7711 = vpack.c.b16 %v7663, %v7655
    %v7712 = vpack.c.b16 %v7664, %v7656
    %v7713 = vpack.c.b16 %v7665, %v7657
    %v7714 = vpack.c.b16 %v7666, %v7658
    %v7715 = vpack.c.b16 %v7667, %v7659
    %v7716 = vpack.c.b16 %v7668, %v7660
    %v7717 = vpack.c.b16 %v7669, %v7661
    %v7718 = vpack.c.b16 %v7678, %v7670
    %v7719 = vpack.c.b16 %v7679, %v7671
    %v7720 = vpack.c.b16 %v7680, %v7672
    %v7721 = vpack.c.b16 %v7681, %v7673
    %v7722 = vpack.c.b16 %v7682, %v7674
    %v7723 = vpack.c.b16 %v7683, %v7675
    %v7724 = vpack.c.b16 %v7684, %v7676
    %v7725 = vpack.c.b16 %v7685, %v7677
    %v7726 = vpack.c.b16 %v7694, %v7686
    %v7727 = vpack.c.b16 %v7695, %v7687
    %v7728 = vpack.c.b16 %v7696, %v7688
    %v7729 = vpack.c.b16 %v7697, %v7689
    %v7730 = vpack.c.b16 %v7698, %v7690
    %v7731 = vpack.c.b16 %v7699, %v7691
    %v7732 = vpack.c.b16 %v7700, %v7692
    %v7733 = vpack.c.b16 %v7701, %v7693
    %v7734 = vpack.c.b16 %v7702, %v7702
    %v7735 = vpack.c.b16 %v7703, %v7703
    %v7736 = vpack.c.b16 %v7704, %v7704
    %v7737 = vpack.c.b16 %v7705, %v7705
    %v7738 = vpack.c.b16 %v7706, %v7706
    %v7739 = vpack.c.b16 %v7707, %v7707
    %v7740 = vpack.c.b16 %v7708, %v7708
    %v7741 = vpack.c.b16 %v7709, %v7709
    %v7767 = vsel %vm3855, %v7596, 0
    %v7770 = vsel %vm708, %v7734, 0
    %v7773 = vsel %vm708, %v7735, 0
    %v7776 = vsel %vm708, %v7736, 0
    %v7779 = vsel %vm708, %v7737, 0
    %v7782 = vsel %vm708, %v7738, 0
    %v7785 = vsel %vm708, %v7739, 0
    %v7788 = vsel %vm708, %v7740, 0
    %v7791 = vsel %vm708, %v7741, 0
    %7793 = vmatpush.bf16.msra.mxu0 0
    %7794 = vmatpush.bf16.msra.mxu0 0
    %7795 = vmatpush.bf16.msra.mxu0 0
    %7796 = vmatpush.bf16.msra.mxu0 0
    %7797 = vmatpush.bf16.msra.mxu0 %v7770
    %7798 = vmatpush.bf16.msra.mxu0 %v7726
    %7799 = vmatpush.bf16.msra.mxu0 %v7718
    %7800 = vmatpush.bf16.msra.mxu0 %v7710
    %7801 = vmatmul.bf16.gmra.mxu0 %v7767
    %v7802 = vpop.f32.mrf.mxu0
    %v7803 = vadd.f32 0.0, %v7802
    %v7804 = vpop.f32.mrf.mxu0
    %7805 = vdwg.mxu0
    %7806 = vmatpush.bf16.msra.mxu0 0
    %7807 = vmatpush.bf16.msra.mxu0 0
    %7808 = vmatpush.bf16.msra.mxu0 0
    %7809 = vmatpush.bf16.msra.mxu0 0
    %7810 = vmatpush.bf16.msra.mxu0 %v7773
    %7811 = vmatpush.bf16.msra.mxu0 %v7727
    %7812 = vmatpush.bf16.msra.mxu0 %v7719
    %7813 = vmatpush.bf16.msra.mxu0 %v7711
    %7814 = vmatmul.bf16.gmra.mxu0 %v7767
    %v7815 = vpop.f32.mrf.mxu0
    %v7816 = vadd.f32 0.0, %v7815
    %v7817 = vpop.f32.mrf.mxu0
    %7818 = vdwg.mxu0
    %7819 = vmatpush.bf16.msra.mxu0 0
    %7820 = vmatpush.bf16.msra.mxu0 0
    %7821 = vmatpush.bf16.msra.mxu0 0
    %7822 = vmatpush.bf16.msra.mxu0 0
    %7823 = vmatpush.bf16.msra.mxu0 %v7776
    %7824 = vmatpush.bf16.msra.mxu0 %v7728
    %7825 = vmatpush.bf16.msra.mxu0 %v7720
    %7826 = vmatpush.bf16.msra.mxu0 %v7712
    %7827 = vmatmul.bf16.gmra.mxu0 %v7767
    %v7828 = vpop.f32.mrf.mxu0
    %v7829 = vadd.f32 0.0, %v7828
    %v7830 = vpop.f32.mrf.mxu0
    %7831 = vdwg.mxu0
    %7832 = vmatpush.bf16.msra.mxu0 0
    %7833 = vmatpush.bf16.msra.mxu0 0
    %7834 = vmatpush.bf16.msra.mxu0 0
    %7835 = vmatpush.bf16.msra.mxu0 0
    %7836 = vmatpush.bf16.msra.mxu0 %v7779
    %7837 = vmatpush.bf16.msra.mxu0 %v7729
    %7838 = vmatpush.bf16.msra.mxu0 %v7721
    %7839 = vmatpush.bf16.msra.mxu0 %v7713
    %7840 = vmatmul.bf16.gmra.mxu0 %v7767
    %v7841 = vpop.f32.mrf.mxu0
    %v7842 = vadd.f32 0.0, %v7841
    %v7843 = vpop.f32.mrf.mxu0
    %7844 = vdwg.mxu0
    %7845 = vmatpush.bf16.msra.mxu0 0
    %7846 = vmatpush.bf16.msra.mxu0 0
    %7847 = vmatpush.bf16.msra.mxu0 0
    %7848 = vmatpush.bf16.msra.mxu0 0
    %7849 = vmatpush.bf16.msra.mxu0 %v7782
    %7850 = vmatpush.bf16.msra.mxu0 %v7730
    %7851 = vmatpush.bf16.msra.mxu0 %v7722
    %7852 = vmatpush.bf16.msra.mxu0 %v7714
    %7853 = vmatmul.bf16.gmra.mxu0 %v7767
    %v7854 = vpop.f32.mrf.mxu0
    %v7855 = vadd.f32 0.0, %v7854
    %v7856 = vpop.f32.mrf.mxu0
    %7857 = vdwg.mxu0
    %7858 = vmatpush.bf16.msra.mxu0 0
    %7859 = vmatpush.bf16.msra.mxu0 0
    %7860 = vmatpush.bf16.msra.mxu0 0
    %7861 = vmatpush.bf16.msra.mxu0 0
    %7862 = vmatpush.bf16.msra.mxu0 %v7785
    %7863 = vmatpush.bf16.msra.mxu0 %v7731
    %7864 = vmatpush.bf16.msra.mxu0 %v7723
    %7865 = vmatpush.bf16.msra.mxu0 %v7715
    %7866 = vmatmul.bf16.gmra.mxu0 %v7767
    %v7867 = vpop.f32.mrf.mxu0
    %v7868 = vadd.f32 0.0, %v7867
    %v7869 = vpop.f32.mrf.mxu0
    %7870 = vdwg.mxu0
    %7871 = vmatpush.bf16.msra.mxu0 0
    %7872 = vmatpush.bf16.msra.mxu0 0
    %7873 = vmatpush.bf16.msra.mxu0 0
    %7874 = vmatpush.bf16.msra.mxu0 0
    %7875 = vmatpush.bf16.msra.mxu0 %v7788
    %7876 = vmatpush.bf16.msra.mxu0 %v7732
    %7877 = vmatpush.bf16.msra.mxu0 %v7724
    %7878 = vmatpush.bf16.msra.mxu0 %v7716
    %7879 = vmatmul.bf16.gmra.mxu0 %v7767
    %v7880 = vpop.f32.mrf.mxu0
    %v7881 = vadd.f32 0.0, %v7880
    %v7882 = vpop.f32.mrf.mxu0
    %7883 = vdwg.mxu0
    %7884 = vmatpush.bf16.msra.mxu0 0
    %7885 = vmatpush.bf16.msra.mxu0 0
    %7886 = vmatpush.bf16.msra.mxu0 0
    %7887 = vmatpush.bf16.msra.mxu0 0
    %7888 = vmatpush.bf16.msra.mxu0 %v7791
    %7889 = vmatpush.bf16.msra.mxu0 %v7733
    %7890 = vmatpush.bf16.msra.mxu0 %v7725
    %7891 = vmatpush.bf16.msra.mxu0 %v7717
    %7892 = vmatmul.bf16.gmra.mxu0 %v7767
    %v7893 = vpop.f32.mrf.mxu0
    %v7894 = vadd.f32 0.0, %v7893
    %v7895 = vpop.f32.mrf.mxu0
    %7896 = vdwg.mxu0
    %v7905 = vrot.slane %v7816, 7
    %v7906 = vrot.slane %v7829, 6
    %v7907 = vrot.slane %v7842, 5
    %v7908 = vrot.slane %v7855, 4
    %v7909 = vrot.slane %v7868, 3
    %v7910 = vrot.slane %v7881, 2
    %v7911 = vrot.slane %v7894, 1
    %v7912 = vsel %vm708, %v7803, %v7905
    %v7913 = vsel %vm4003, %v7906, %v7907
    %v7914 = vsel %vm2497, %v7912, %v7913
    %v7915 = vsel %vm4006, %v7908, %v7909
    %v7916 = vsel %vm4008, %v7910, %v7911
    %v7917 = vsel %vm4010, %v7915, %v7916
    %v7918 = vsel %vm3120, %v7914, %v7917
    %v7920 = vadd.f32 %v7595, %v7918
    %s7921 = scalar_lea.vmem [#allocation2], 2912
    %v7922 = vld [vmem:[%s7921] sm:$0xff]
    %v7923 = vld [vmem:[%s7921 + $0x8] sm:$0xff]
    %v7924 = vld [vmem:[%s7921 + $0x10] sm:$0xff]
    %v7925 = vld [vmem:[%s7921 + $0x18] sm:$0xff]
    %v7926 = vld [vmem:[%s7921 + $0x20] sm:$0xff]
    %v7927 = vld [vmem:[%s7921 + $0x28] sm:$0xff]
    %v7928 = vld [vmem:[%s7921 + $0x30] sm:$0xff]
    %v7929 = vld [vmem:[%s7921 + $0x38] sm:$0xff]
    %v7930 = vld [vmem:[%s7921 + $0x40] sm:$0xff]
    %v7931 = vld [vmem:[%s7921 + $0x48] sm:$0xff]
    %v7932 = vld [vmem:[%s7921 + $0x50] sm:$0xff]
    %v7933 = vld [vmem:[%s7921 + $0x58] sm:$0xff]
    %v7934 = vld [vmem:[%s7921 + $0x60] sm:$0xff]
    %v7935 = vld [vmem:[%s7921 + $0x68] sm:$0xff]
    %v7936 = vld [vmem:[%s7921 + $0x70] sm:$0xff]
    %v7937 = vld [vmem:[%s7921 + $0x78] sm:$0xff]
    %v7938 = vld [vmem:[%s7921 + $0x80] sm:$0xff]
    %v7939 = vld [vmem:[%s7921 + $0x88] sm:$0xff]
    %v7940 = vld [vmem:[%s7921 + $0x90] sm:$0xff]
    %v7941 = vld [vmem:[%s7921 + $0x98] sm:$0xff]
    %v7942 = vld [vmem:[%s7921 + $0xa0] sm:$0xff]
    %v7943 = vld [vmem:[%s7921 + $0xa8] sm:$0xff]
    %v7944 = vld [vmem:[%s7921 + $0xb0] sm:$0xff]
    %v7945 = vld [vmem:[%s7921 + $0xb8] sm:$0xff]
    %v7946 = vld [vmem:[%s7921 + $0xc0] sm:$0x11]
    %v7947 = vld [vmem:[%s7921 + $0xc8] sm:$0x11]
    %v7948 = vld [vmem:[%s7921 + $0xd0] sm:$0x11]
    %v7949 = vld [vmem:[%s7921 + $0xd8] sm:$0x11]
    %v7951 = vrot.slane %v7596, 1
    %v7980 = vunpack.c.l.b16 %v7922
    %v7981 = vunpack.c.h.b16 %v7922
    %v7982 = vunpack.c.l.b16 %v7923
    %v7983 = vunpack.c.h.b16 %v7923
    %v7984 = vunpack.c.l.b16 %v7924
    %v7985 = vunpack.c.h.b16 %v7924
    %v7986 = vunpack.c.l.b16 %v7925
    %v7987 = vunpack.c.h.b16 %v7925
    %v7988 = vunpack.c.l.b16 %v7926
    %v7989 = vunpack.c.h.b16 %v7926
    %v7990 = vunpack.c.l.b16 %v7927
    %v7991 = vunpack.c.h.b16 %v7927
    %v7992 = vunpack.c.l.b16 %v7928
    %v7993 = vunpack.c.h.b16 %v7928
    %v7994 = vunpack.c.l.b16 %v7929
    %v7995 = vunpack.c.h.b16 %v7929
    %v7996 = vunpack.c.l.b16 %v7930
    %v7997 = vunpack.c.h.b16 %v7930
    %v7998 = vunpack.c.l.b16 %v7931
    %v7999 = vunpack.c.h.b16 %v7931
    %v8000 = vunpack.c.l.b16 %v7932
    %v8001 = vunpack.c.h.b16 %v7932
    %v8002 = vunpack.c.l.b16 %v7933
    %v8003 = vunpack.c.h.b16 %v7933
    %v8004 = vunpack.c.l.b16 %v7934
    %v8005 = vunpack.c.h.b16 %v7934
    %v8006 = vunpack.c.l.b16 %v7935
    %v8007 = vunpack.c.h.b16 %v7935
    %v8008 = vunpack.c.l.b16 %v7936
    %v8009 = vunpack.c.h.b16 %v7936
    %v8010 = vunpack.c.l.b16 %v7937
    %v8011 = vunpack.c.h.b16 %v7937
    %v8012 = vunpack.c.l.b16 %v7938
    %v8013 = vunpack.c.h.b16 %v7938
    %v8014 = vunpack.c.l.b16 %v7939
    %v8015 = vunpack.c.h.b16 %v7939
    %v8016 = vunpack.c.l.b16 %v7940
    %v8017 = vunpack.c.h.b16 %v7940
    %v8018 = vunpack.c.l.b16 %v7941
    %v8019 = vunpack.c.h.b16 %v7941
    %v8020 = vunpack.c.l.b16 %v7942
    %v8021 = vunpack.c.h.b16 %v7942
    %v8022 = vunpack.c.l.b16 %v7943
    %v8023 = vunpack.c.h.b16 %v7943
    %v8024 = vunpack.c.l.b16 %v7944
    %v8025 = vunpack.c.h.b16 %v7944
    %v8026 = vunpack.c.l.b16 %v7945
    %v8027 = vunpack.c.h.b16 %v7945
    %v8028 = vunpack.c.l.b16 %v7946
    %v8029 = vunpack.c.h.b16 %v7946
    %v8030 = vunpack.c.l.b16 %v7947
    %v8031 = vunpack.c.h.b16 %v7947
    %v8032 = vunpack.c.l.b16 %v7948
    %v8033 = vunpack.c.h.b16 %v7948
    %v8034 = vunpack.c.l.b16 %v7949
    %v8035 = vunpack.c.h.b16 %v7949
    %v8036 = vpack.c.b16 %v7988, %v7980
    %v8037 = vpack.c.b16 %v7989, %v7981
    %v8038 = vpack.c.b16 %v7990, %v7982
    %v8039 = vpack.c.b16 %v7991, %v7983
    %v8040 = vpack.c.b16 %v7992, %v7984
    %v8041 = vpack.c.b16 %v7993, %v7985
    %v8042 = vpack.c.b16 %v7994, %v7986
    %v8043 = vpack.c.b16 %v7995, %v7987
    %v8044 = vpack.c.b16 %v8004, %v7996
    %v8045 = vpack.c.b16 %v8005, %v7997
    %v8046 = vpack.c.b16 %v8006, %v7998
    %v8047 = vpack.c.b16 %v8007, %v7999
    %v8048 = vpack.c.b16 %v8008, %v8000
    %v8049 = vpack.c.b16 %v8009, %v8001
    %v8050 = vpack.c.b16 %v8010, %v8002
    %v8051 = vpack.c.b16 %v8011, %v8003
    %v8052 = vpack.c.b16 %v8020, %v8012
    %v8053 = vpack.c.b16 %v8021, %v8013
    %v8054 = vpack.c.b16 %v8022, %v8014
    %v8055 = vpack.c.b16 %v8023, %v8015
    %v8056 = vpack.c.b16 %v8024, %v8016
    %v8057 = vpack.c.b16 %v8025, %v8017
    %v8058 = vpack.c.b16 %v8026, %v8018
    %v8059 = vpack.c.b16 %v8027, %v8019
    %v8060 = vpack.c.b16 %v8028, %v8028
    %v8061 = vpack.c.b16 %v8029, %v8029
    %v8062 = vpack.c.b16 %v8030, %v8030
    %v8063 = vpack.c.b16 %v8031, %v8031
    %v8064 = vpack.c.b16 %v8032, %v8032
    %v8065 = vpack.c.b16 %v8033, %v8033
    %v8066 = vpack.c.b16 %v8034, %v8034
    %v8067 = vpack.c.b16 %v8035, %v8035
    %v8093 = vsel %vm3855, %v7951, 0
    %v8096 = vsel %vm708, %v8060, 0
    %v8099 = vsel %vm708, %v8061, 0
    %v8102 = vsel %vm708, %v8062, 0
    %v8105 = vsel %vm708, %v8063, 0
    %v8108 = vsel %vm708, %v8064, 0
    %v8111 = vsel %vm708, %v8065, 0
    %v8114 = vsel %vm708, %v8066, 0
    %v8117 = vsel %vm708, %v8067, 0
    %8119 = vmatpush.bf16.msra.mxu0 0
    %8120 = vmatpush.bf16.msra.mxu0 0
    %8121 = vmatpush.bf16.msra.mxu0 0
    %8122 = vmatpush.bf16.msra.mxu0 0
    %8123 = vmatpush.bf16.msra.mxu0 %v8096
    %8124 = vmatpush.bf16.msra.mxu0 %v8052
    %8125 = vmatpush.bf16.msra.mxu0 %v8044
    %8126 = vmatpush.bf16.msra.mxu0 %v8036
    %8127 = vmatmul.bf16.gmra.mxu0 %v8093
    %v8128 = vpop.f32.mrf.mxu0
    %v8129 = vadd.f32 0.0, %v8128
    %v8130 = vpop.f32.mrf.mxu0
    %8131 = vdwg.mxu0
    %8132 = vmatpush.bf16.msra.mxu0 0
    %8133 = vmatpush.bf16.msra.mxu0 0
    %8134 = vmatpush.bf16.msra.mxu0 0
    %8135 = vmatpush.bf16.msra.mxu0 0
    %8136 = vmatpush.bf16.msra.mxu0 %v8099
    %8137 = vmatpush.bf16.msra.mxu0 %v8053
    %8138 = vmatpush.bf16.msra.mxu0 %v8045
    %8139 = vmatpush.bf16.msra.mxu0 %v8037
    %8140 = vmatmul.bf16.gmra.mxu0 %v8093
    %v8141 = vpop.f32.mrf.mxu0
    %v8142 = vadd.f32 0.0, %v8141
    %v8143 = vpop.f32.mrf.mxu0
    %8144 = vdwg.mxu0
    %8145 = vmatpush.bf16.msra.mxu0 0
    %8146 = vmatpush.bf16.msra.mxu0 0
    %8147 = vmatpush.bf16.msra.mxu0 0
    %8148 = vmatpush.bf16.msra.mxu0 0
    %8149 = vmatpush.bf16.msra.mxu0 %v8102
    %8150 = vmatpush.bf16.msra.mxu0 %v8054
    %8151 = vmatpush.bf16.msra.mxu0 %v8046
    %8152 = vmatpush.bf16.msra.mxu0 %v8038
    %8153 = vmatmul.bf16.gmra.mxu0 %v8093
    %v8154 = vpop.f32.mrf.mxu0
    %v8155 = vadd.f32 0.0, %v8154
    %v8156 = vpop.f32.mrf.mxu0
    %8157 = vdwg.mxu0
    %8158 = vmatpush.bf16.msra.mxu0 0
    %8159 = vmatpush.bf16.msra.mxu0 0
    %8160 = vmatpush.bf16.msra.mxu0 0
    %8161 = vmatpush.bf16.msra.mxu0 0
    %8162 = vmatpush.bf16.msra.mxu0 %v8105
    %8163 = vmatpush.bf16.msra.mxu0 %v8055
    %8164 = vmatpush.bf16.msra.mxu0 %v8047
    %8165 = vmatpush.bf16.msra.mxu0 %v8039
    %8166 = vmatmul.bf16.gmra.mxu0 %v8093
    %v8167 = vpop.f32.mrf.mxu0
    %v8168 = vadd.f32 0.0, %v8167
    %v8169 = vpop.f32.mrf.mxu0
    %8170 = vdwg.mxu0
    %8171 = vmatpush.bf16.msra.mxu0 0
    %8172 = vmatpush.bf16.msra.mxu0 0
    %8173 = vmatpush.bf16.msra.mxu0 0
    %8174 = vmatpush.bf16.msra.mxu0 0
    %8175 = vmatpush.bf16.msra.mxu0 %v8108
    %8176 = vmatpush.bf16.msra.mxu0 %v8056
    %8177 = vmatpush.bf16.msra.mxu0 %v8048
    %8178 = vmatpush.bf16.msra.mxu0 %v8040
    %8179 = vmatmul.bf16.gmra.mxu0 %v8093
    %v8180 = vpop.f32.mrf.mxu0
    %v8181 = vadd.f32 0.0, %v8180
    %v8182 = vpop.f32.mrf.mxu0
    %8183 = vdwg.mxu0
    %8184 = vmatpush.bf16.msra.mxu0 0
    %8185 = vmatpush.bf16.msra.mxu0 0
    %8186 = vmatpush.bf16.msra.mxu0 0
    %8187 = vmatpush.bf16.msra.mxu0 0
    %8188 = vmatpush.bf16.msra.mxu0 %v8111
    %8189 = vmatpush.bf16.msra.mxu0 %v8057
    %8190 = vmatpush.bf16.msra.mxu0 %v8049
    %8191 = vmatpush.bf16.msra.mxu0 %v8041
    %8192 = vmatmul.bf16.gmra.mxu0 %v8093
    %v8193 = vpop.f32.mrf.mxu0
    %v8194 = vadd.f32 0.0, %v8193
    %v8195 = vpop.f32.mrf.mxu0
    %8196 = vdwg.mxu0
    %8197 = vmatpush.bf16.msra.mxu0 0
    %8198 = vmatpush.bf16.msra.mxu0 0
    %8199 = vmatpush.bf16.msra.mxu0 0
    %8200 = vmatpush.bf16.msra.mxu0 0
    %8201 = vmatpush.bf16.msra.mxu0 %v8114
    %8202 = vmatpush.bf16.msra.mxu0 %v8058
    %8203 = vmatpush.bf16.msra.mxu0 %v8050
    %8204 = vmatpush.bf16.msra.mxu0 %v8042
    %8205 = vmatmul.bf16.gmra.mxu0 %v8093
    %v8206 = vpop.f32.mrf.mxu0
    %v8207 = vadd.f32 0.0, %v8206
    %v8208 = vpop.f32.mrf.mxu0
    %8209 = vdwg.mxu0
    %8210 = vmatpush.bf16.msra.mxu0 0
    %8211 = vmatpush.bf16.msra.mxu0 0
    %8212 = vmatpush.bf16.msra.mxu0 0
    %8213 = vmatpush.bf16.msra.mxu0 0
    %8214 = vmatpush.bf16.msra.mxu0 %v8117
    %8215 = vmatpush.bf16.msra.mxu0 %v8059
    %8216 = vmatpush.bf16.msra.mxu0 %v8051
    %8217 = vmatpush.bf16.msra.mxu0 %v8043
    %8218 = vmatmul.bf16.gmra.mxu0 %v8093
    %v8219 = vpop.f32.mrf.mxu0
    %v8220 = vadd.f32 0.0, %v8219
    %v8221 = vpop.f32.mrf.mxu0
    %8222 = vdwg.mxu0
    %v8231 = vrot.slane %v8142, 7
    %v8232 = vrot.slane %v8155, 6
    %v8233 = vrot.slane %v8168, 5
    %v8234 = vrot.slane %v8181, 4
    %v8235 = vrot.slane %v8194, 3
    %v8236 = vrot.slane %v8207, 2
    %v8237 = vrot.slane %v8220, 1
    %v8238 = vsel %vm708, %v8129, %v8231
    %v8239 = vsel %vm4003, %v8232, %v8233
    %v8240 = vsel %vm2497, %v8238, %v8239
    %v8241 = vsel %vm4006, %v8234, %v8235
    %v8242 = vsel %vm4008, %v8236, %v8237
    %v8243 = vsel %vm4010, %v8241, %v8242
    %v8244 = vsel %vm3120, %v8240, %v8243
    %v8246 = vadd.f32 %v7920, %v8244
    %s8247 = scalar_lea.vmem [#allocation2], 3136
    %v8248 = vld [vmem:[%s8247] sm:$0xff]
    %v8249 = vld [vmem:[%s8247 + $0x8] sm:$0xff]
    %v8250 = vld [vmem:[%s8247 + $0x10] sm:$0xff]
    %v8251 = vld [vmem:[%s8247 + $0x18] sm:$0xff]
    %v8252 = vld [vmem:[%s8247 + $0x20] sm:$0xff]
    %v8253 = vld [vmem:[%s8247 + $0x28] sm:$0xff]
    %v8254 = vld [vmem:[%s8247 + $0x30] sm:$0xff]
    %v8255 = vld [vmem:[%s8247 + $0x38] sm:$0xff]
    %v8256 = vld [vmem:[%s8247 + $0x40] sm:$0xff]
    %v8257 = vld [vmem:[%s8247 + $0x48] sm:$0xff]
    %v8258 = vld [vmem:[%s8247 + $0x50] sm:$0xff]
    %v8259 = vld [vmem:[%s8247 + $0x58] sm:$0xff]
    %v8260 = vld [vmem:[%s8247 + $0x60] sm:$0xff]
    %v8261 = vld [vmem:[%s8247 + $0x68] sm:$0xff]
    %v8262 = vld [vmem:[%s8247 + $0x70] sm:$0xff]
    %v8263 = vld [vmem:[%s8247 + $0x78] sm:$0xff]
    %v8264 = vld [vmem:[%s8247 + $0x80] sm:$0xff]
    %v8265 = vld [vmem:[%s8247 + $0x88] sm:$0xff]
    %v8266 = vld [vmem:[%s8247 + $0x90] sm:$0xff]
    %v8267 = vld [vmem:[%s8247 + $0x98] sm:$0xff]
    %v8268 = vld [vmem:[%s8247 + $0xa0] sm:$0xff]
    %v8269 = vld [vmem:[%s8247 + $0xa8] sm:$0xff]
    %v8270 = vld [vmem:[%s8247 + $0xb0] sm:$0xff]
    %v8271 = vld [vmem:[%s8247 + $0xb8] sm:$0xff]
    %v8272 = vld [vmem:[%s8247 + $0xc0] sm:$0x11]
    %v8273 = vld [vmem:[%s8247 + $0xc8] sm:$0x11]
    %v8274 = vld [vmem:[%s8247 + $0xd0] sm:$0x11]
    %v8275 = vld [vmem:[%s8247 + $0xd8] sm:$0x11]
    %v8276 = vrot.slane %v7596, 2
    %v8305 = vunpack.c.l.b16 %v8248
    %v8306 = vunpack.c.h.b16 %v8248
    %v8307 = vunpack.c.l.b16 %v8249
    %v8308 = vunpack.c.h.b16 %v8249
    %v8309 = vunpack.c.l.b16 %v8250
    %v8310 = vunpack.c.h.b16 %v8250
    %v8311 = vunpack.c.l.b16 %v8251
    %v8312 = vunpack.c.h.b16 %v8251
    %v8313 = vunpack.c.l.b16 %v8252
    %v8314 = vunpack.c.h.b16 %v8252
    %v8315 = vunpack.c.l.b16 %v8253
    %v8316 = vunpack.c.h.b16 %v8253
    %v8317 = vunpack.c.l.b16 %v8254
    %v8318 = vunpack.c.h.b16 %v8254
    %v8319 = vunpack.c.l.b16 %v8255
    %v8320 = vunpack.c.h.b16 %v8255
    %v8321 = vunpack.c.l.b16 %v8256
    %v8322 = vunpack.c.h.b16 %v8256
    %v8323 = vunpack.c.l.b16 %v8257
    %v8324 = vunpack.c.h.b16 %v8257
    %v8325 = vunpack.c.l.b16 %v8258
    %v8326 = vunpack.c.h.b16 %v8258
    %v8327 = vunpack.c.l.b16 %v8259
    %v8328 = vunpack.c.h.b16 %v8259
    %v8329 = vunpack.c.l.b16 %v8260
    %v8330 = vunpack.c.h.b16 %v8260
    %v8331 = vunpack.c.l.b16 %v8261
    %v8332 = vunpack.c.h.b16 %v8261
    %v8333 = vunpack.c.l.b16 %v8262
    %v8334 = vunpack.c.h.b16 %v8262
    %v8335 = vunpack.c.l.b16 %v8263
    %v8336 = vunpack.c.h.b16 %v8263
    %v8337 = vunpack.c.l.b16 %v8264
    %v8338 = vunpack.c.h.b16 %v8264
    %v8339 = vunpack.c.l.b16 %v8265
    %v8340 = vunpack.c.h.b16 %v8265
    %v8341 = vunpack.c.l.b16 %v8266
    %v8342 = vunpack.c.h.b16 %v8266
    %v8343 = vunpack.c.l.b16 %v8267
    %v8344 = vunpack.c.h.b16 %v8267
    %v8345 = vunpack.c.l.b16 %v8268
    %v8346 = vunpack.c.h.b16 %v8268
    %v8347 = vunpack.c.l.b16 %v8269
    %v8348 = vunpack.c.h.b16 %v8269
    %v8349 = vunpack.c.l.b16 %v8270
    %v8350 = vunpack.c.h.b16 %v8270
    %v8351 = vunpack.c.l.b16 %v8271
    %v8352 = vunpack.c.h.b16 %v8271
    %v8353 = vunpack.c.l.b16 %v8272
    %v8354 = vunpack.c.h.b16 %v8272
    %v8355 = vunpack.c.l.b16 %v8273
    %v8356 = vunpack.c.h.b16 %v8273
    %v8357 = vunpack.c.l.b16 %v8274
    %v8358 = vunpack.c.h.b16 %v8274
    %v8359 = vunpack.c.l.b16 %v8275
    %v8360 = vunpack.c.h.b16 %v8275
    %v8361 = vpack.c.b16 %v8313, %v8305
    %v8362 = vpack.c.b16 %v8314, %v8306
    %v8363 = vpack.c.b16 %v8315, %v8307
    %v8364 = vpack.c.b16 %v8316, %v8308
    %v8365 = vpack.c.b16 %v8317, %v8309
    %v8366 = vpack.c.b16 %v8318, %v8310
    %v8367 = vpack.c.b16 %v8319, %v8311
    %v8368 = vpack.c.b16 %v8320, %v8312
    %v8369 = vpack.c.b16 %v8329, %v8321
    %v8370 = vpack.c.b16 %v8330, %v8322
    %v8371 = vpack.c.b16 %v8331, %v8323
    %v8372 = vpack.c.b16 %v8332, %v8324
    %v8373 = vpack.c.b16 %v8333, %v8325
    %v8374 = vpack.c.b16 %v8334, %v8326
    %v8375 = vpack.c.b16 %v8335, %v8327
    %v8376 = vpack.c.b16 %v8336, %v8328
    %v8377 = vpack.c.b16 %v8345, %v8337
    %v8378 = vpack.c.b16 %v8346, %v8338
    %v8379 = vpack.c.b16 %v8347, %v8339
    %v8380 = vpack.c.b16 %v8348, %v8340
    %v8381 = vpack.c.b16 %v8349, %v8341
    %v8382 = vpack.c.b16 %v8350, %v8342
    %v8383 = vpack.c.b16 %v8351, %v8343
    %v8384 = vpack.c.b16 %v8352, %v8344
    %v8385 = vpack.c.b16 %v8353, %v8353
    %v8386 = vpack.c.b16 %v8354, %v8354
    %v8387 = vpack.c.b16 %v8355, %v8355
    %v8388 = vpack.c.b16 %v8356, %v8356
    %v8389 = vpack.c.b16 %v8357, %v8357
    %v8390 = vpack.c.b16 %v8358, %v8358
    %v8391 = vpack.c.b16 %v8359, %v8359
    %v8392 = vpack.c.b16 %v8360, %v8360
    %v8418 = vsel %vm3855, %v8276, 0
    %v8421 = vsel %vm708, %v8385, 0
    %v8424 = vsel %vm708, %v8386, 0
    %v8427 = vsel %vm708, %v8387, 0
    %v8430 = vsel %vm708, %v8388, 0
    %v8433 = vsel %vm708, %v8389, 0
    %v8436 = vsel %vm708, %v8390, 0
    %v8439 = vsel %vm708, %v8391, 0
    %v8442 = vsel %vm708, %v8392, 0
    %8444 = vmatpush.bf16.msra.mxu0 0
    %8445 = vmatpush.bf16.msra.mxu0 0
    %8446 = vmatpush.bf16.msra.mxu0 0
    %8447 = vmatpush.bf16.msra.mxu0 0
    %8448 = vmatpush.bf16.msra.mxu0 %v8421
    %8449 = vmatpush.bf16.msra.mxu0 %v8377
    %8450 = vmatpush.bf16.msra.mxu0 %v8369
    %8451 = vmatpush.bf16.msra.mxu0 %v8361
    %8452 = vmatmul.bf16.gmra.mxu0 %v8418
    %v8453 = vpop.f32.mrf.mxu0
    %v8454 = vadd.f32 0.0, %v8453
    %v8455 = vpop.f32.mrf.mxu0
    %8456 = vdwg.mxu0
    %8457 = vmatpush.bf16.msra.mxu0 0
    %8458 = vmatpush.bf16.msra.mxu0 0
    %8459 = vmatpush.bf16.msra.mxu0 0
    %8460 = vmatpush.bf16.msra.mxu0 0
    %8461 = vmatpush.bf16.msra.mxu0 %v8424
    %8462 = vmatpush.bf16.msra.mxu0 %v8378
    %8463 = vmatpush.bf16.msra.mxu0 %v8370
    %8464 = vmatpush.bf16.msra.mxu0 %v8362
    %8465 = vmatmul.bf16.gmra.mxu0 %v8418
    %v8466 = vpop.f32.mrf.mxu0
    %v8467 = vadd.f32 0.0, %v8466
    %v8468 = vpop.f32.mrf.mxu0
    %8469 = vdwg.mxu0
    %8470 = vmatpush.bf16.msra.mxu0 0
    %8471 = vmatpush.bf16.msra.mxu0 0
    %8472 = vmatpush.bf16.msra.mxu0 0
    %8473 = vmatpush.bf16.msra.mxu0 0
    %8474 = vmatpush.bf16.msra.mxu0 %v8427
    %8475 = vmatpush.bf16.msra.mxu0 %v8379
    %8476 = vmatpush.bf16.msra.mxu0 %v8371
    %8477 = vmatpush.bf16.msra.mxu0 %v8363
    %8478 = vmatmul.bf16.gmra.mxu0 %v8418
    %v8479 = vpop.f32.mrf.mxu0
    %v8480 = vadd.f32 0.0, %v8479
    %v8481 = vpop.f32.mrf.mxu0
    %8482 = vdwg.mxu0
    %8483 = vmatpush.bf16.msra.mxu0 0
    %8484 = vmatpush.bf16.msra.mxu0 0
    %8485 = vmatpush.bf16.msra.mxu0 0
    %8486 = vmatpush.bf16.msra.mxu0 0
    %8487 = vmatpush.bf16.msra.mxu0 %v8430
    %8488 = vmatpush.bf16.msra.mxu0 %v8380
    %8489 = vmatpush.bf16.msra.mxu0 %v8372
    %8490 = vmatpush.bf16.msra.mxu0 %v8364
    %8491 = vmatmul.bf16.gmra.mxu0 %v8418
    %v8492 = vpop.f32.mrf.mxu0
    %v8493 = vadd.f32 0.0, %v8492
    %v8494 = vpop.f32.mrf.mxu0
    %8495 = vdwg.mxu0
    %8496 = vmatpush.bf16.msra.mxu0 0
    %8497 = vmatpush.bf16.msra.mxu0 0
    %8498 = vmatpush.bf16.msra.mxu0 0
    %8499 = vmatpush.bf16.msra.mxu0 0
    %8500 = vmatpush.bf16.msra.mxu0 %v8433
    %8501 = vmatpush.bf16.msra.mxu0 %v8381
    %8502 = vmatpush.bf16.msra.mxu0 %v8373
    %8503 = vmatpush.bf16.msra.mxu0 %v8365
    %8504 = vmatmul.bf16.gmra.mxu0 %v8418
    %v8505 = vpop.f32.mrf.mxu0
    %v8506 = vadd.f32 0.0, %v8505
    %v8507 = vpop.f32.mrf.mxu0
    %8508 = vdwg.mxu0
    %8509 = vmatpush.bf16.msra.mxu0 0
    %8510 = vmatpush.bf16.msra.mxu0 0
    %8511 = vmatpush.bf16.msra.mxu0 0
    %8512 = vmatpush.bf16.msra.mxu0 0
    %8513 = vmatpush.bf16.msra.mxu0 %v8436
    %8514 = vmatpush.bf16.msra.mxu0 %v8382
    %8515 = vmatpush.bf16.msra.mxu0 %v8374
    %8516 = vmatpush.bf16.msra.mxu0 %v8366
    %8517 = vmatmul.bf16.gmra.mxu0 %v8418
    %v8518 = vpop.f32.mrf.mxu0
    %v8519 = vadd.f32 0.0, %v8518
    %v8520 = vpop.f32.mrf.mxu0
    %8521 = vdwg.mxu0
    %8522 = vmatpush.bf16.msra.mxu0 0
    %8523 = vmatpush.bf16.msra.mxu0 0
    %8524 = vmatpush.bf16.msra.mxu0 0
    %8525 = vmatpush.bf16.msra.mxu0 0
    %8526 = vmatpush.bf16.msra.mxu0 %v8439
    %8527 = vmatpush.bf16.msra.mxu0 %v8383
    %8528 = vmatpush.bf16.msra.mxu0 %v8375
    %8529 = vmatpush.bf16.msra.mxu0 %v8367
    %8530 = vmatmul.bf16.gmra.mxu0 %v8418
    %v8531 = vpop.f32.mrf.mxu0
    %v8532 = vadd.f32 0.0, %v8531
    %v8533 = vpop.f32.mrf.mxu0
    %8534 = vdwg.mxu0
    %8535 = vmatpush.bf16.msra.mxu0 0
    %8536 = vmatpush.bf16.msra.mxu0 0
    %8537 = vmatpush.bf16.msra.mxu0 0
    %8538 = vmatpush.bf16.msra.mxu0 0
    %8539 = vmatpush.bf16.msra.mxu0 %v8442
    %8540 = vmatpush.bf16.msra.mxu0 %v8384
    %8541 = vmatpush.bf16.msra.mxu0 %v8376
    %8542 = vmatpush.bf16.msra.mxu0 %v8368
    %8543 = vmatmul.bf16.gmra.mxu0 %v8418
    %v8544 = vpop.f32.mrf.mxu0
    %v8545 = vadd.f32 0.0, %v8544
    %v8546 = vpop.f32.mrf.mxu0
    %8547 = vdwg.mxu0
    %v8556 = vrot.slane %v8467, 7
    %v8557 = vrot.slane %v8480, 6
    %v8558 = vrot.slane %v8493, 5
    %v8559 = vrot.slane %v8506, 4
    %v8560 = vrot.slane %v8519, 3
    %v8561 = vrot.slane %v8532, 2
    %v8562 = vrot.slane %v8545, 1
    %v8563 = vsel %vm708, %v8454, %v8556
    %v8564 = vsel %vm4003, %v8557, %v8558
    %v8565 = vsel %vm2497, %v8563, %v8564
    %v8566 = vsel %vm4006, %v8559, %v8560
    %v8567 = vsel %vm4008, %v8561, %v8562
    %v8568 = vsel %vm4010, %v8566, %v8567
    %v8569 = vsel %vm3120, %v8565, %v8568
    %v8571 = vadd.f32 %v8246, %v8569
    %v8572 = vpack.c.bf16 %v3676, %v3676
    %s8573 = scalar_lea.vmem [#allocation2], 3360
    %v8574 = vld [vmem:[%s8573] sm:$0xff]
    %v8575 = vld [vmem:[%s8573 + $0x8] sm:$0xff]
    %v8576 = vld [vmem:[%s8573 + $0x10] sm:$0xff]
    %v8577 = vld [vmem:[%s8573 + $0x18] sm:$0xff]
    %v8578 = vld [vmem:[%s8573 + $0x20] sm:$0xff]
    %v8579 = vld [vmem:[%s8573 + $0x28] sm:$0xff]
    %v8580 = vld [vmem:[%s8573 + $0x30] sm:$0xff]
    %v8581 = vld [vmem:[%s8573 + $0x38] sm:$0xff]
    %v8582 = vld [vmem:[%s8573 + $0x40] sm:$0xff]
    %v8583 = vld [vmem:[%s8573 + $0x48] sm:$0xff]
    %v8584 = vld [vmem:[%s8573 + $0x50] sm:$0xff]
    %v8585 = vld [vmem:[%s8573 + $0x58] sm:$0xff]
    %v8586 = vld [vmem:[%s8573 + $0x60] sm:$0xff]
    %v8587 = vld [vmem:[%s8573 + $0x68] sm:$0xff]
    %v8588 = vld [vmem:[%s8573 + $0x70] sm:$0xff]
    %v8589 = vld [vmem:[%s8573 + $0x78] sm:$0xff]
    %v8590 = vld [vmem:[%s8573 + $0x80] sm:$0xff]
    %v8591 = vld [vmem:[%s8573 + $0x88] sm:$0xff]
    %v8592 = vld [vmem:[%s8573 + $0x90] sm:$0xff]
    %v8593 = vld [vmem:[%s8573 + $0x98] sm:$0xff]
    %v8594 = vld [vmem:[%s8573 + $0xa0] sm:$0xff]
    %v8595 = vld [vmem:[%s8573 + $0xa8] sm:$0xff]
    %v8596 = vld [vmem:[%s8573 + $0xb0] sm:$0xff]
    %v8597 = vld [vmem:[%s8573 + $0xb8] sm:$0xff]
    %v8598 = vld [vmem:[%s8573 + $0xc0] sm:$0x11]
    %v8599 = vld [vmem:[%s8573 + $0xc8] sm:$0x11]
    %v8600 = vld [vmem:[%s8573 + $0xd0] sm:$0x11]
    %v8601 = vld [vmem:[%s8573 + $0xd8] sm:$0x11]
    %v8603 = vrot.slane %v8572, 3
    %v8632 = vunpack.c.l.b16 %v8574
    %v8633 = vunpack.c.h.b16 %v8574
    %v8634 = vunpack.c.l.b16 %v8575
    %v8635 = vunpack.c.h.b16 %v8575
    %v8636 = vunpack.c.l.b16 %v8576
    %v8637 = vunpack.c.h.b16 %v8576
    %v8638 = vunpack.c.l.b16 %v8577
    %v8639 = vunpack.c.h.b16 %v8577
    %v8640 = vunpack.c.l.b16 %v8578
    %v8641 = vunpack.c.h.b16 %v8578
    %v8642 = vunpack.c.l.b16 %v8579
    %v8643 = vunpack.c.h.b16 %v8579
    %v8644 = vunpack.c.l.b16 %v8580
    %v8645 = vunpack.c.h.b16 %v8580
    %v8646 = vunpack.c.l.b16 %v8581
    %v8647 = vunpack.c.h.b16 %v8581
    %v8648 = vunpack.c.l.b16 %v8582
    %v8649 = vunpack.c.h.b16 %v8582
    %v8650 = vunpack.c.l.b16 %v8583
    %v8651 = vunpack.c.h.b16 %v8583
    %v8652 = vunpack.c.l.b16 %v8584
    %v8653 = vunpack.c.h.b16 %v8584
    %v8654 = vunpack.c.l.b16 %v8585
    %v8655 = vunpack.c.h.b16 %v8585
    %v8656 = vunpack.c.l.b16 %v8586
    %v8657 = vunpack.c.h.b16 %v8586
    %v8658 = vunpack.c.l.b16 %v8587
    %v8659 = vunpack.c.h.b16 %v8587
    %v8660 = vunpack.c.l.b16 %v8588
    %v8661 = vunpack.c.h.b16 %v8588
    %v8662 = vunpack.c.l.b16 %v8589
    %v8663 = vunpack.c.h.b16 %v8589
    %v8664 = vunpack.c.l.b16 %v8590
    %v8665 = vunpack.c.h.b16 %v8590
    %v8666 = vunpack.c.l.b16 %v8591
    %v8667 = vunpack.c.h.b16 %v8591
    %v8668 = vunpack.c.l.b16 %v8592
    %v8669 = vunpack.c.h.b16 %v8592
    %v8670 = vunpack.c.l.b16 %v8593
    %v8671 = vunpack.c.h.b16 %v8593
    %v8672 = vunpack.c.l.b16 %v8594
    %v8673 = vunpack.c.h.b16 %v8594
    %v8674 = vunpack.c.l.b16 %v8595
    %v8675 = vunpack.c.h.b16 %v8595
    %v8676 = vunpack.c.l.b16 %v8596
    %v8677 = vunpack.c.h.b16 %v8596
    %v8678 = vunpack.c.l.b16 %v8597
    %v8679 = vunpack.c.h.b16 %v8597
    %v8680 = vunpack.c.l.b16 %v8598
    %v8681 = vunpack.c.h.b16 %v8598
    %v8682 = vunpack.c.l.b16 %v8599
    %v8683 = vunpack.c.h.b16 %v8599
    %v8684 = vunpack.c.l.b16 %v8600
    %v8685 = vunpack.c.h.b16 %v8600
    %v8686 = vunpack.c.l.b16 %v8601
    %v8687 = vunpack.c.h.b16 %v8601
    %v8688 = vpack.c.b16 %v8640, %v8632
    %v8689 = vpack.c.b16 %v8641, %v8633
    %v8690 = vpack.c.b16 %v8642, %v8634
    %v8691 = vpack.c.b16 %v8643, %v8635
    %v8692 = vpack.c.b16 %v8644, %v8636
    %v8693 = vpack.c.b16 %v8645, %v8637
    %v8694 = vpack.c.b16 %v8646, %v8638
    %v8695 = vpack.c.b16 %v8647, %v8639
    %v8696 = vpack.c.b16 %v8656, %v8648
    %v8697 = vpack.c.b16 %v8657, %v8649
    %v8698 = vpack.c.b16 %v8658, %v8650
    %v8699 = vpack.c.b16 %v8659, %v8651
    %v8700 = vpack.c.b16 %v8660, %v8652
    %v8701 = vpack.c.b16 %v8661, %v8653
    %v8702 = vpack.c.b16 %v8662, %v8654
    %v8703 = vpack.c.b16 %v8663, %v8655
    %v8704 = vpack.c.b16 %v8672, %v8664
    %v8705 = vpack.c.b16 %v8673, %v8665
    %v8706 = vpack.c.b16 %v8674, %v8666
    %v8707 = vpack.c.b16 %v8675, %v8667
    %v8708 = vpack.c.b16 %v8676, %v8668
    %v8709 = vpack.c.b16 %v8677, %v8669
    %v8710 = vpack.c.b16 %v8678, %v8670
    %v8711 = vpack.c.b16 %v8679, %v8671
    %v8712 = vpack.c.b16 %v8680, %v8680
    %v8713 = vpack.c.b16 %v8681, %v8681
    %v8714 = vpack.c.b16 %v8682, %v8682
    %v8715 = vpack.c.b16 %v8683, %v8683
    %v8716 = vpack.c.b16 %v8684, %v8684
    %v8717 = vpack.c.b16 %v8685, %v8685
    %v8718 = vpack.c.b16 %v8686, %v8686
    %v8719 = vpack.c.b16 %v8687, %v8687
    %v8745 = vsel %vm3855, %v8603, 0
    %v8748 = vsel %vm708, %v8712, 0
    %v8751 = vsel %vm708, %v8713, 0
    %v8754 = vsel %vm708, %v8714, 0
    %v8757 = vsel %vm708, %v8715, 0
    %v8760 = vsel %vm708, %v8716, 0
    %v8763 = vsel %vm708, %v8717, 0
    %v8766 = vsel %vm708, %v8718, 0
    %v8769 = vsel %vm708, %v8719, 0
    %8771 = vmatpush.bf16.msra.mxu0 0
    %8772 = vmatpush.bf16.msra.mxu0 0
    %8773 = vmatpush.bf16.msra.mxu0 0
    %8774 = vmatpush.bf16.msra.mxu0 0
    %8775 = vmatpush.bf16.msra.mxu0 %v8748
    %8776 = vmatpush.bf16.msra.mxu0 %v8704
    %8777 = vmatpush.bf16.msra.mxu0 %v8696
    %8778 = vmatpush.bf16.msra.mxu0 %v8688
    %8779 = vmatmul.bf16.gmra.mxu0 %v8745
    %v8780 = vpop.f32.mrf.mxu0
    %v8781 = vadd.f32 0.0, %v8780
    %v8782 = vpop.f32.mrf.mxu0
    %8783 = vdwg.mxu0
    %8784 = vmatpush.bf16.msra.mxu0 0
    %8785 = vmatpush.bf16.msra.mxu0 0
    %8786 = vmatpush.bf16.msra.mxu0 0
    %8787 = vmatpush.bf16.msra.mxu0 0
    %8788 = vmatpush.bf16.msra.mxu0 %v8751
    %8789 = vmatpush.bf16.msra.mxu0 %v8705
    %8790 = vmatpush.bf16.msra.mxu0 %v8697
    %8791 = vmatpush.bf16.msra.mxu0 %v8689
    %8792 = vmatmul.bf16.gmra.mxu0 %v8745
    %v8793 = vpop.f32.mrf.mxu0
    %v8794 = vadd.f32 0.0, %v8793
    %v8795 = vpop.f32.mrf.mxu0
    %8796 = vdwg.mxu0
    %8797 = vmatpush.bf16.msra.mxu0 0
    %8798 = vmatpush.bf16.msra.mxu0 0
    %8799 = vmatpush.bf16.msra.mxu0 0
    %8800 = vmatpush.bf16.msra.mxu0 0
    %8801 = vmatpush.bf16.msra.mxu0 %v8754
    %8802 = vmatpush.bf16.msra.mxu0 %v8706
    %8803 = vmatpush.bf16.msra.mxu0 %v8698
    %8804 = vmatpush.bf16.msra.mxu0 %v8690
    %8805 = vmatmul.bf16.gmra.mxu0 %v8745
    %v8806 = vpop.f32.mrf.mxu0
    %v8807 = vadd.f32 0.0, %v8806
    %v8808 = vpop.f32.mrf.mxu0
    %8809 = vdwg.mxu0
    %8810 = vmatpush.bf16.msra.mxu0 0
    %8811 = vmatpush.bf16.msra.mxu0 0
    %8812 = vmatpush.bf16.msra.mxu0 0
    %8813 = vmatpush.bf16.msra.mxu0 0
    %8814 = vmatpush.bf16.msra.mxu0 %v8757
    %8815 = vmatpush.bf16.msra.mxu0 %v8707
    %8816 = vmatpush.bf16.msra.mxu0 %v8699
    %8817 = vmatpush.bf16.msra.mxu0 %v8691
    %8818 = vmatmul.bf16.gmra.mxu0 %v8745
    %v8819 = vpop.f32.mrf.mxu0
    %v8820 = vadd.f32 0.0, %v8819
    %v8821 = vpop.f32.mrf.mxu0
    %8822 = vdwg.mxu0
    %8823 = vmatpush.bf16.msra.mxu0 0
    %8824 = vmatpush.bf16.msra.mxu0 0
    %8825 = vmatpush.bf16.msra.mxu0 0
    %8826 = vmatpush.bf16.msra.mxu0 0
    %8827 = vmatpush.bf16.msra.mxu0 %v8760
    %8828 = vmatpush.bf16.msra.mxu0 %v8708
    %8829 = vmatpush.bf16.msra.mxu0 %v8700
    %8830 = vmatpush.bf16.msra.mxu0 %v8692
    %8831 = vmatmul.bf16.gmra.mxu0 %v8745
    %v8832 = vpop.f32.mrf.mxu0
    %v8833 = vadd.f32 0.0, %v8832
    %v8834 = vpop.f32.mrf.mxu0
    %8835 = vdwg.mxu0
    %8836 = vmatpush.bf16.msra.mxu0 0
    %8837 = vmatpush.bf16.msra.mxu0 0
    %8838 = vmatpush.bf16.msra.mxu0 0
    %8839 = vmatpush.bf16.msra.mxu0 0
    %8840 = vmatpush.bf16.msra.mxu0 %v8763
    %8841 = vmatpush.bf16.msra.mxu0 %v8709
    %8842 = vmatpush.bf16.msra.mxu0 %v8701
    %8843 = vmatpush.bf16.msra.mxu0 %v8693
    %8844 = vmatmul.bf16.gmra.mxu0 %v8745
    %v8845 = vpop.f32.mrf.mxu0
    %v8846 = vadd.f32 0.0, %v8845
    %v8847 = vpop.f32.mrf.mxu0
    %8848 = vdwg.mxu0
    %8849 = vmatpush.bf16.msra.mxu0 0
    %8850 = vmatpush.bf16.msra.mxu0 0
    %8851 = vmatpush.bf16.msra.mxu0 0
    %8852 = vmatpush.bf16.msra.mxu0 0
    %8853 = vmatpush.bf16.msra.mxu0 %v8766
    %8854 = vmatpush.bf16.msra.mxu0 %v8710
    %8855 = vmatpush.bf16.msra.mxu0 %v8702
    %8856 = vmatpush.bf16.msra.mxu0 %v8694
    %8857 = vmatmul.bf16.gmra.mxu0 %v8745
    %v8858 = vpop.f32.mrf.mxu0
    %v8859 = vadd.f32 0.0, %v8858
    %v8860 = vpop.f32.mrf.mxu0
    %8861 = vdwg.mxu0
    %8862 = vmatpush.bf16.msra.mxu0 0
    %8863 = vmatpush.bf16.msra.mxu0 0
    %8864 = vmatpush.bf16.msra.mxu0 0
    %8865 = vmatpush.bf16.msra.mxu0 0
    %8866 = vmatpush.bf16.msra.mxu0 %v8769
    %8867 = vmatpush.bf16.msra.mxu0 %v8711
    %8868 = vmatpush.bf16.msra.mxu0 %v8703
    %8869 = vmatpush.bf16.msra.mxu0 %v8695
    %8870 = vmatmul.bf16.gmra.mxu0 %v8745
    %v8871 = vpop.f32.mrf.mxu0
    %v8872 = vadd.f32 0.0, %v8871
    %v8873 = vpop.f32.mrf.mxu0
    %8874 = vdwg.mxu0
    %v8883 = vrot.slane %v8794, 7
    %v8884 = vrot.slane %v8807, 6
    %v8885 = vrot.slane %v8820, 5
    %v8886 = vrot.slane %v8833, 4
    %v8887 = vrot.slane %v8846, 3
    %v8888 = vrot.slane %v8859, 2
    %v8889 = vrot.slane %v8872, 1
    %v8890 = vsel %vm708, %v8781, %v8883
    %v8891 = vsel %vm4003, %v8884, %v8885
    %v8892 = vsel %vm2497, %v8890, %v8891
    %v8893 = vsel %vm4006, %v8886, %v8887
    %v8894 = vsel %vm4008, %v8888, %v8889
    %v8895 = vsel %vm4010, %v8893, %v8894
    %v8896 = vsel %vm3120, %v8892, %v8895
    %v8898 = vadd.f32 %v8571, %v8896
    %v8899 = vpack.c.bf16 %v3677, %v3677
    %s8900 = scalar_lea.vmem [#allocation2], 3584
    %v8901 = vld [vmem:[%s8900] sm:$0xff]
    %v8902 = vld [vmem:[%s8900 + $0x8] sm:$0xff]
    %v8903 = vld [vmem:[%s8900 + $0x10] sm:$0xff]
    %v8904 = vld [vmem:[%s8900 + $0x18] sm:$0xff]
    %v8905 = vld [vmem:[%s8900 + $0x20] sm:$0xff]
    %v8906 = vld [vmem:[%s8900 + $0x28] sm:$0xff]
    %v8907 = vld [vmem:[%s8900 + $0x30] sm:$0xff]
    %v8908 = vld [vmem:[%s8900 + $0x38] sm:$0xff]
    %v8909 = vld [vmem:[%s8900 + $0x40] sm:$0xff]
    %v8910 = vld [vmem:[%s8900 + $0x48] sm:$0xff]
    %v8911 = vld [vmem:[%s8900 + $0x50] sm:$0xff]
    %v8912 = vld [vmem:[%s8900 + $0x58] sm:$0xff]
    %v8913 = vld [vmem:[%s8900 + $0x60] sm:$0xff]
    %v8914 = vld [vmem:[%s8900 + $0x68] sm:$0xff]
    %v8915 = vld [vmem:[%s8900 + $0x70] sm:$0xff]
    %v8916 = vld [vmem:[%s8900 + $0x78] sm:$0xff]
    %v8917 = vld [vmem:[%s8900 + $0x80] sm:$0xff]
    %v8918 = vld [vmem:[%s8900 + $0x88] sm:$0xff]
    %v8919 = vld [vmem:[%s8900 + $0x90] sm:$0xff]
    %v8920 = vld [vmem:[%s8900 + $0x98] sm:$0xff]
    %v8921 = vld [vmem:[%s8900 + $0xa0] sm:$0xff]
    %v8922 = vld [vmem:[%s8900 + $0xa8] sm:$0xff]
    %v8923 = vld [vmem:[%s8900 + $0xb0] sm:$0xff]
    %v8924 = vld [vmem:[%s8900 + $0xb8] sm:$0xff]
    %v8925 = vld [vmem:[%s8900 + $0xc0] sm:$0x11]
    %v8926 = vld [vmem:[%s8900 + $0xc8] sm:$0x11]
    %v8927 = vld [vmem:[%s8900 + $0xd0] sm:$0x11]
    %v8928 = vld [vmem:[%s8900 + $0xd8] sm:$0x11]
    %v8957 = vunpack.c.l.b16 %v8901
    %v8958 = vunpack.c.h.b16 %v8901
    %v8959 = vunpack.c.l.b16 %v8902
    %v8960 = vunpack.c.h.b16 %v8902
    %v8961 = vunpack.c.l.b16 %v8903
    %v8962 = vunpack.c.h.b16 %v8903
    %v8963 = vunpack.c.l.b16 %v8904
    %v8964 = vunpack.c.h.b16 %v8904
    %v8965 = vunpack.c.l.b16 %v8905
    %v8966 = vunpack.c.h.b16 %v8905
    %v8967 = vunpack.c.l.b16 %v8906
    %v8968 = vunpack.c.h.b16 %v8906
    %v8969 = vunpack.c.l.b16 %v8907
    %v8970 = vunpack.c.h.b16 %v8907
    %v8971 = vunpack.c.l.b16 %v8908
    %v8972 = vunpack.c.h.b16 %v8908
    %v8973 = vunpack.c.l.b16 %v8909
    %v8974 = vunpack.c.h.b16 %v8909
    %v8975 = vunpack.c.l.b16 %v8910
    %v8976 = vunpack.c.h.b16 %v8910
    %v8977 = vunpack.c.l.b16 %v8911
    %v8978 = vunpack.c.h.b16 %v8911
    %v8979 = vunpack.c.l.b16 %v8912
    %v8980 = vunpack.c.h.b16 %v8912
    %v8981 = vunpack.c.l.b16 %v8913
    %v8982 = vunpack.c.h.b16 %v8913
    %v8983 = vunpack.c.l.b16 %v8914
    %v8984 = vunpack.c.h.b16 %v8914
    %v8985 = vunpack.c.l.b16 %v8915
    %v8986 = vunpack.c.h.b16 %v8915
    %v8987 = vunpack.c.l.b16 %v8916
    %v8988 = vunpack.c.h.b16 %v8916
    %v8989 = vunpack.c.l.b16 %v8917
    %v8990 = vunpack.c.h.b16 %v8917
    %v8991 = vunpack.c.l.b16 %v8918
    %v8992 = vunpack.c.h.b16 %v8918
    %v8993 = vunpack.c.l.b16 %v8919
    %v8994 = vunpack.c.h.b16 %v8919
    %v8995 = vunpack.c.l.b16 %v8920
    %v8996 = vunpack.c.h.b16 %v8920
    %v8997 = vunpack.c.l.b16 %v8921
    %v8998 = vunpack.c.h.b16 %v8921
    %v8999 = vunpack.c.l.b16 %v8922
    %v9000 = vunpack.c.h.b16 %v8922
    %v9001 = vunpack.c.l.b16 %v8923
    %v9002 = vunpack.c.h.b16 %v8923
    %v9003 = vunpack.c.l.b16 %v8924
    %v9004 = vunpack.c.h.b16 %v8924
    %v9005 = vunpack.c.l.b16 %v8925
    %v9006 = vunpack.c.h.b16 %v8925
    %v9007 = vunpack.c.l.b16 %v8926
    %v9008 = vunpack.c.h.b16 %v8926
    %v9009 = vunpack.c.l.b16 %v8927
    %v9010 = vunpack.c.h.b16 %v8927
    %v9011 = vunpack.c.l.b16 %v8928
    %v9012 = vunpack.c.h.b16 %v8928
    %v9013 = vpack.c.b16 %v8965, %v8957
    %v9014 = vpack.c.b16 %v8966, %v8958
    %v9015 = vpack.c.b16 %v8967, %v8959
    %v9016 = vpack.c.b16 %v8968, %v8960
    %v9017 = vpack.c.b16 %v8969, %v8961
    %v9018 = vpack.c.b16 %v8970, %v8962
    %v9019 = vpack.c.b16 %v8971, %v8963
    %v9020 = vpack.c.b16 %v8972, %v8964
    %v9021 = vpack.c.b16 %v8981, %v8973
    %v9022 = vpack.c.b16 %v8982, %v8974
    %v9023 = vpack.c.b16 %v8983, %v8975
    %v9024 = vpack.c.b16 %v8984, %v8976
    %v9025 = vpack.c.b16 %v8985, %v8977
    %v9026 = vpack.c.b16 %v8986, %v8978
    %v9027 = vpack.c.b16 %v8987, %v8979
    %v9028 = vpack.c.b16 %v8988, %v8980
    %v9029 = vpack.c.b16 %v8997, %v8989
    %v9030 = vpack.c.b16 %v8998, %v8990
    %v9031 = vpack.c.b16 %v8999, %v8991
    %v9032 = vpack.c.b16 %v9000, %v8992
    %v9033 = vpack.c.b16 %v9001, %v8993
    %v9034 = vpack.c.b16 %v9002, %v8994
    %v9035 = vpack.c.b16 %v9003, %v8995
    %v9036 = vpack.c.b16 %v9004, %v8996
    %v9037 = vpack.c.b16 %v9005, %v9005
    %v9038 = vpack.c.b16 %v9006, %v9006
    %v9039 = vpack.c.b16 %v9007, %v9007
    %v9040 = vpack.c.b16 %v9008, %v9008
    %v9041 = vpack.c.b16 %v9009, %v9009
    %v9042 = vpack.c.b16 %v9010, %v9010
    %v9043 = vpack.c.b16 %v9011, %v9011
    %v9044 = vpack.c.b16 %v9012, %v9012
    %v9070 = vsel %vm3855, %v8899, 0
    %v9073 = vsel %vm708, %v9037, 0
    %v9076 = vsel %vm708, %v9038, 0
    %v9079 = vsel %vm708, %v9039, 0
    %v9082 = vsel %vm708, %v9040, 0
    %v9085 = vsel %vm708, %v9041, 0
    %v9088 = vsel %vm708, %v9042, 0
    %v9091 = vsel %vm708, %v9043, 0
    %v9094 = vsel %vm708, %v9044, 0
    %9096 = vmatpush.bf16.msra.mxu0 0
    %9097 = vmatpush.bf16.msra.mxu0 0
    %9098 = vmatpush.bf16.msra.mxu0 0
    %9099 = vmatpush.bf16.msra.mxu0 0
    %9100 = vmatpush.bf16.msra.mxu0 %v9073
    %9101 = vmatpush.bf16.msra.mxu0 %v9029
    %9102 = vmatpush.bf16.msra.mxu0 %v9021
    %9103 = vmatpush.bf16.msra.mxu0 %v9013
    %9104 = vmatmul.bf16.gmra.mxu0 %v9070
    %v9105 = vpop.f32.mrf.mxu0
    %v9106 = vadd.f32 0.0, %v9105
    %v9107 = vpop.f32.mrf.mxu0
    %9108 = vdwg.mxu0
    %9109 = vmatpush.bf16.msra.mxu0 0
    %9110 = vmatpush.bf16.msra.mxu0 0
    %9111 = vmatpush.bf16.msra.mxu0 0
    %9112 = vmatpush.bf16.msra.mxu0 0
    %9113 = vmatpush.bf16.msra.mxu0 %v9076
    %9114 = vmatpush.bf16.msra.mxu0 %v9030
    %9115 = vmatpush.bf16.msra.mxu0 %v9022
    %9116 = vmatpush.bf16.msra.mxu0 %v9014
    %9117 = vmatmul.bf16.gmra.mxu0 %v9070
    %v9118 = vpop.f32.mrf.mxu0
    %v9119 = vadd.f32 0.0, %v9118
    %v9120 = vpop.f32.mrf.mxu0
    %9121 = vdwg.mxu0
    %9122 = vmatpush.bf16.msra.mxu0 0
    %9123 = vmatpush.bf16.msra.mxu0 0
    %9124 = vmatpush.bf16.msra.mxu0 0
    %9125 = vmatpush.bf16.msra.mxu0 0
    %9126 = vmatpush.bf16.msra.mxu0 %v9079
    %9127 = vmatpush.bf16.msra.mxu0 %v9031
    %9128 = vmatpush.bf16.msra.mxu0 %v9023
    %9129 = vmatpush.bf16.msra.mxu0 %v9015
    %9130 = vmatmul.bf16.gmra.mxu0 %v9070
    %v9131 = vpop.f32.mrf.mxu0
    %v9132 = vadd.f32 0.0, %v9131
    %v9133 = vpop.f32.mrf.mxu0
    %9134 = vdwg.mxu0
    %9135 = vmatpush.bf16.msra.mxu0 0
    %9136 = vmatpush.bf16.msra.mxu0 0
    %9137 = vmatpush.bf16.msra.mxu0 0
    %9138 = vmatpush.bf16.msra.mxu0 0
    %9139 = vmatpush.bf16.msra.mxu0 %v9082
    %9140 = vmatpush.bf16.msra.mxu0 %v9032
    %9141 = vmatpush.bf16.msra.mxu0 %v9024
    %9142 = vmatpush.bf16.msra.mxu0 %v9016
    %9143 = vmatmul.bf16.gmra.mxu0 %v9070
    %v9144 = vpop.f32.mrf.mxu0
    %v9145 = vadd.f32 0.0, %v9144
    %v9146 = vpop.f32.mrf.mxu0
    %9147 = vdwg.mxu0
    %9148 = vmatpush.bf16.msra.mxu0 0
    %9149 = vmatpush.bf16.msra.mxu0 0
    %9150 = vmatpush.bf16.msra.mxu0 0
    %9151 = vmatpush.bf16.msra.mxu0 0
    %9152 = vmatpush.bf16.msra.mxu0 %v9085
    %9153 = vmatpush.bf16.msra.mxu0 %v9033
    %9154 = vmatpush.bf16.msra.mxu0 %v9025
    %9155 = vmatpush.bf16.msra.mxu0 %v9017
    %9156 = vmatmul.bf16.gmra.mxu0 %v9070
    %v9157 = vpop.f32.mrf.mxu0
    %v9158 = vadd.f32 0.0, %v9157
    %v9159 = vpop.f32.mrf.mxu0
    %9160 = vdwg.mxu0
    %9161 = vmatpush.bf16.msra.mxu0 0
    %9162 = vmatpush.bf16.msra.mxu0 0
    %9163 = vmatpush.bf16.msra.mxu0 0
    %9164 = vmatpush.bf16.msra.mxu0 0
    %9165 = vmatpush.bf16.msra.mxu0 %v9088
    %9166 = vmatpush.bf16.msra.mxu0 %v9034
    %9167 = vmatpush.bf16.msra.mxu0 %v9026
    %9168 = vmatpush.bf16.msra.mxu0 %v9018
    %9169 = vmatmul.bf16.gmra.mxu0 %v9070
    %v9170 = vpop.f32.mrf.mxu0
    %v9171 = vadd.f32 0.0, %v9170
    %v9172 = vpop.f32.mrf.mxu0
    %9173 = vdwg.mxu0
    %9174 = vmatpush.bf16.msra.mxu0 0
    %9175 = vmatpush.bf16.msra.mxu0 0
    %9176 = vmatpush.bf16.msra.mxu0 0
    %9177 = vmatpush.bf16.msra.mxu0 0
    %9178 = vmatpush.bf16.msra.mxu0 %v9091
    %9179 = vmatpush.bf16.msra.mxu0 %v9035
    %9180 = vmatpush.bf16.msra.mxu0 %v9027
    %9181 = vmatpush.bf16.msra.mxu0 %v9019
    %9182 = vmatmul.bf16.gmra.mxu0 %v9070
    %v9183 = vpop.f32.mrf.mxu0
    %v9184 = vadd.f32 0.0, %v9183
    %v9185 = vpop.f32.mrf.mxu0
    %9186 = vdwg.mxu0
    %9187 = vmatpush.bf16.msra.mxu0 0
    %9188 = vmatpush.bf16.msra.mxu0 0
    %9189 = vmatpush.bf16.msra.mxu0 0
    %9190 = vmatpush.bf16.msra.mxu0 0
    %9191 = vmatpush.bf16.msra.mxu0 %v9094
    %9192 = vmatpush.bf16.msra.mxu0 %v9036
    %9193 = vmatpush.bf16.msra.mxu0 %v9028
    %9194 = vmatpush.bf16.msra.mxu0 %v9020
    %9195 = vmatmul.bf16.gmra.mxu0 %v9070
    %v9196 = vpop.f32.mrf.mxu0
    %v9197 = vadd.f32 0.0, %v9196
    %v9198 = vpop.f32.mrf.mxu0
    %9199 = vdwg.mxu0
    %v9208 = vrot.slane %v9119, 7
    %v9209 = vrot.slane %v9132, 6
    %v9210 = vrot.slane %v9145, 5
    %v9211 = vrot.slane %v9158, 4
    %v9212 = vrot.slane %v9171, 3
    %v9213 = vrot.slane %v9184, 2
    %v9214 = vrot.slane %v9197, 1
    %v9215 = vsel %vm708, %v9106, %v9208
    %v9216 = vsel %vm4003, %v9209, %v9210
    %v9217 = vsel %vm2497, %v9215, %v9216
    %v9218 = vsel %vm4006, %v9211, %v9212
    %v9219 = vsel %vm4008, %v9213, %v9214
    %v9220 = vsel %vm4010, %v9218, %v9219
    %v9221 = vsel %vm3120, %v9217, %v9220
    %v9223 = vadd.f32 %v8898, %v9221
    %s9224 = scalar_lea.vmem [#allocation2], 3808
    %v9225 = vld [vmem:[%s9224] sm:$0xff]
    %v9226 = vld [vmem:[%s9224 + $0x8] sm:$0xff]
    %v9227 = vld [vmem:[%s9224 + $0x10] sm:$0xff]
    %v9228 = vld [vmem:[%s9224 + $0x18] sm:$0xff]
    %v9229 = vld [vmem:[%s9224 + $0x20] sm:$0xff]
    %v9230 = vld [vmem:[%s9224 + $0x28] sm:$0xff]
    %v9231 = vld [vmem:[%s9224 + $0x30] sm:$0xff]
    %v9232 = vld [vmem:[%s9224 + $0x38] sm:$0xff]
    %v9233 = vld [vmem:[%s9224 + $0x40] sm:$0xff]
    %v9234 = vld [vmem:[%s9224 + $0x48] sm:$0xff]
    %v9235 = vld [vmem:[%s9224 + $0x50] sm:$0xff]
    %v9236 = vld [vmem:[%s9224 + $0x58] sm:$0xff]
    %v9237 = vld [vmem:[%s9224 + $0x60] sm:$0xff]
    %v9238 = vld [vmem:[%s9224 + $0x68] sm:$0xff]
    %v9239 = vld [vmem:[%s9224 + $0x70] sm:$0xff]
    %v9240 = vld [vmem:[%s9224 + $0x78] sm:$0xff]
    %v9241 = vld [vmem:[%s9224 + $0x80] sm:$0xff]
    %v9242 = vld [vmem:[%s9224 + $0x88] sm:$0xff]
    %v9243 = vld [vmem:[%s9224 + $0x90] sm:$0xff]
    %v9244 = vld [vmem:[%s9224 + $0x98] sm:$0xff]
    %v9245 = vld [vmem:[%s9224 + $0xa0] sm:$0xff]
    %v9246 = vld [vmem:[%s9224 + $0xa8] sm:$0xff]
    %v9247 = vld [vmem:[%s9224 + $0xb0] sm:$0xff]
    %v9248 = vld [vmem:[%s9224 + $0xb8] sm:$0xff]
    %v9249 = vld [vmem:[%s9224 + $0xc0] sm:$0x11]
    %v9250 = vld [vmem:[%s9224 + $0xc8] sm:$0x11]
    %v9251 = vld [vmem:[%s9224 + $0xd0] sm:$0x11]
    %v9252 = vld [vmem:[%s9224 + $0xd8] sm:$0x11]
    %v9254 = vrot.slane %v8899, 1
    %v9283 = vunpack.c.l.b16 %v9225
    %v9284 = vunpack.c.h.b16 %v9225
    %v9285 = vunpack.c.l.b16 %v9226
    %v9286 = vunpack.c.h.b16 %v9226
    %v9287 = vunpack.c.l.b16 %v9227
    %v9288 = vunpack.c.h.b16 %v9227
    %v9289 = vunpack.c.l.b16 %v9228
    %v9290 = vunpack.c.h.b16 %v9228
    %v9291 = vunpack.c.l.b16 %v9229
    %v9292 = vunpack.c.h.b16 %v9229
    %v9293 = vunpack.c.l.b16 %v9230
    %v9294 = vunpack.c.h.b16 %v9230
    %v9295 = vunpack.c.l.b16 %v9231
    %v9296 = vunpack.c.h.b16 %v9231
    %v9297 = vunpack.c.l.b16 %v9232
    %v9298 = vunpack.c.h.b16 %v9232
    %v9299 = vunpack.c.l.b16 %v9233
    %v9300 = vunpack.c.h.b16 %v9233
    %v9301 = vunpack.c.l.b16 %v9234
    %v9302 = vunpack.c.h.b16 %v9234
    %v9303 = vunpack.c.l.b16 %v9235
    %v9304 = vunpack.c.h.b16 %v9235
    %v9305 = vunpack.c.l.b16 %v9236
    %v9306 = vunpack.c.h.b16 %v9236
    %v9307 = vunpack.c.l.b16 %v9237
    %v9308 = vunpack.c.h.b16 %v9237
    %v9309 = vunpack.c.l.b16 %v9238
    %v9310 = vunpack.c.h.b16 %v9238
    %v9311 = vunpack.c.l.b16 %v9239
    %v9312 = vunpack.c.h.b16 %v9239
    %v9313 = vunpack.c.l.b16 %v9240
    %v9314 = vunpack.c.h.b16 %v9240
    %v9315 = vunpack.c.l.b16 %v9241
    %v9316 = vunpack.c.h.b16 %v9241
    %v9317 = vunpack.c.l.b16 %v9242
    %v9318 = vunpack.c.h.b16 %v9242
    %v9319 = vunpack.c.l.b16 %v9243
    %v9320 = vunpack.c.h.b16 %v9243
    %v9321 = vunpack.c.l.b16 %v9244
    %v9322 = vunpack.c.h.b16 %v9244
    %v9323 = vunpack.c.l.b16 %v9245
    %v9324 = vunpack.c.h.b16 %v9245
    %v9325 = vunpack.c.l.b16 %v9246
    %v9326 = vunpack.c.h.b16 %v9246
    %v9327 = vunpack.c.l.b16 %v9247
    %v9328 = vunpack.c.h.b16 %v9247
    %v9329 = vunpack.c.l.b16 %v9248
    %v9330 = vunpack.c.h.b16 %v9248
    %v9331 = vunpack.c.l.b16 %v9249
    %v9332 = vunpack.c.h.b16 %v9249
    %v9333 = vunpack.c.l.b16 %v9250
    %v9334 = vunpack.c.h.b16 %v9250
    %v9335 = vunpack.c.l.b16 %v9251
    %v9336 = vunpack.c.h.b16 %v9251
    %v9337 = vunpack.c.l.b16 %v9252
    %v9338 = vunpack.c.h.b16 %v9252
    %v9339 = vpack.c.b16 %v9291, %v9283
    %v9340 = vpack.c.b16 %v9292, %v9284
    %v9341 = vpack.c.b16 %v9293, %v9285
    %v9342 = vpack.c.b16 %v9294, %v9286
    %v9343 = vpack.c.b16 %v9295, %v9287
    %v9344 = vpack.c.b16 %v9296, %v9288
    %v9345 = vpack.c.b16 %v9297, %v9289
    %v9346 = vpack.c.b16 %v9298, %v9290
    %v9347 = vpack.c.b16 %v9307, %v9299
    %v9348 = vpack.c.b16 %v9308, %v9300
    %v9349 = vpack.c.b16 %v9309, %v9301
    %v9350 = vpack.c.b16 %v9310, %v9302
    %v9351 = vpack.c.b16 %v9311, %v9303
    %v9352 = vpack.c.b16 %v9312, %v9304
    %v9353 = vpack.c.b16 %v9313, %v9305
    %v9354 = vpack.c.b16 %v9314, %v9306
    %v9355 = vpack.c.b16 %v9323, %v9315
    %v9356 = vpack.c.b16 %v9324, %v9316
    %v9357 = vpack.c.b16 %v9325, %v9317
    %v9358 = vpack.c.b16 %v9326, %v9318
    %v9359 = vpack.c.b16 %v9327, %v9319
    %v9360 = vpack.c.b16 %v9328, %v9320
    %v9361 = vpack.c.b16 %v9329, %v9321
    %v9362 = vpack.c.b16 %v9330, %v9322
    %v9363 = vpack.c.b16 %v9331, %v9331
    %v9364 = vpack.c.b16 %v9332, %v9332
    %v9365 = vpack.c.b16 %v9333, %v9333
    %v9366 = vpack.c.b16 %v9334, %v9334
    %v9367 = vpack.c.b16 %v9335, %v9335
    %v9368 = vpack.c.b16 %v9336, %v9336
    %v9369 = vpack.c.b16 %v9337, %v9337
    %v9370 = vpack.c.b16 %v9338, %v9338
    %v9396 = vsel %vm3855, %v9254, 0
    %v9399 = vsel %vm708, %v9363, 0
    %v9402 = vsel %vm708, %v9364, 0
    %v9405 = vsel %vm708, %v9365, 0
    %v9408 = vsel %vm708, %v9366, 0
    %v9411 = vsel %vm708, %v9367, 0
    %v9414 = vsel %vm708, %v9368, 0
    %v9417 = vsel %vm708, %v9369, 0
    %v9420 = vsel %vm708, %v9370, 0
    %9422 = vmatpush.bf16.msra.mxu0 0
    %9423 = vmatpush.bf16.msra.mxu0 0
    %9424 = vmatpush.bf16.msra.mxu0 0
    %9425 = vmatpush.bf16.msra.mxu0 0
    %9426 = vmatpush.bf16.msra.mxu0 %v9399
    %9427 = vmatpush.bf16.msra.mxu0 %v9355
    %9428 = vmatpush.bf16.msra.mxu0 %v9347
    %9429 = vmatpush.bf16.msra.mxu0 %v9339
    %9430 = vmatmul.bf16.gmra.mxu0 %v9396
    %v9431 = vpop.f32.mrf.mxu0
    %v9432 = vadd.f32 0.0, %v9431
    %v9433 = vpop.f32.mrf.mxu0
    %9434 = vdwg.mxu0
    %9435 = vmatpush.bf16.msra.mxu0 0
    %9436 = vmatpush.bf16.msra.mxu0 0
    %9437 = vmatpush.bf16.msra.mxu0 0
    %9438 = vmatpush.bf16.msra.mxu0 0
    %9439 = vmatpush.bf16.msra.mxu0 %v9402
    %9440 = vmatpush.bf16.msra.mxu0 %v9356
    %9441 = vmatpush.bf16.msra.mxu0 %v9348
    %9442 = vmatpush.bf16.msra.mxu0 %v9340
    %9443 = vmatmul.bf16.gmra.mxu0 %v9396
    %v9444 = vpop.f32.mrf.mxu0
    %v9445 = vadd.f32 0.0, %v9444
    %v9446 = vpop.f32.mrf.mxu0
    %9447 = vdwg.mxu0
    %9448 = vmatpush.bf16.msra.mxu0 0
    %9449 = vmatpush.bf16.msra.mxu0 0
    %9450 = vmatpush.bf16.msra.mxu0 0
    %9451 = vmatpush.bf16.msra.mxu0 0
    %9452 = vmatpush.bf16.msra.mxu0 %v9405
    %9453 = vmatpush.bf16.msra.mxu0 %v9357
    %9454 = vmatpush.bf16.msra.mxu0 %v9349
    %9455 = vmatpush.bf16.msra.mxu0 %v9341
    %9456 = vmatmul.bf16.gmra.mxu0 %v9396
    %v9457 = vpop.f32.mrf.mxu0
    %v9458 = vadd.f32 0.0, %v9457
    %v9459 = vpop.f32.mrf.mxu0
    %9460 = vdwg.mxu0
    %9461 = vmatpush.bf16.msra.mxu0 0
    %9462 = vmatpush.bf16.msra.mxu0 0
    %9463 = vmatpush.bf16.msra.mxu0 0
    %9464 = vmatpush.bf16.msra.mxu0 0
    %9465 = vmatpush.bf16.msra.mxu0 %v9408
    %9466 = vmatpush.bf16.msra.mxu0 %v9358
    %9467 = vmatpush.bf16.msra.mxu0 %v9350
    %9468 = vmatpush.bf16.msra.mxu0 %v9342
    %9469 = vmatmul.bf16.gmra.mxu0 %v9396
    %v9470 = vpop.f32.mrf.mxu0
    %v9471 = vadd.f32 0.0, %v9470
    %v9472 = vpop.f32.mrf.mxu0
    %9473 = vdwg.mxu0
    %9474 = vmatpush.bf16.msra.mxu0 0
    %9475 = vmatpush.bf16.msra.mxu0 0
    %9476 = vmatpush.bf16.msra.mxu0 0
    %9477 = vmatpush.bf16.msra.mxu0 0
    %9478 = vmatpush.bf16.msra.mxu0 %v9411
    %9479 = vmatpush.bf16.msra.mxu0 %v9359
    %9480 = vmatpush.bf16.msra.mxu0 %v9351
    %9481 = vmatpush.bf16.msra.mxu0 %v9343
    %9482 = vmatmul.bf16.gmra.mxu0 %v9396
    %v9483 = vpop.f32.mrf.mxu0
    %v9484 = vadd.f32 0.0, %v9483
    %v9485 = vpop.f32.mrf.mxu0
    %9486 = vdwg.mxu0
    %9487 = vmatpush.bf16.msra.mxu0 0
    %9488 = vmatpush.bf16.msra.mxu0 0
    %9489 = vmatpush.bf16.msra.mxu0 0
    %9490 = vmatpush.bf16.msra.mxu0 0
    %9491 = vmatpush.bf16.msra.mxu0 %v9414
    %9492 = vmatpush.bf16.msra.mxu0 %v9360
    %9493 = vmatpush.bf16.msra.mxu0 %v9352
    %9494 = vmatpush.bf16.msra.mxu0 %v9344
    %9495 = vmatmul.bf16.gmra.mxu0 %v9396
    %v9496 = vpop.f32.mrf.mxu0
    %v9497 = vadd.f32 0.0, %v9496
    %v9498 = vpop.f32.mrf.mxu0
    %9499 = vdwg.mxu0
    %9500 = vmatpush.bf16.msra.mxu0 0
    %9501 = vmatpush.bf16.msra.mxu0 0
    %9502 = vmatpush.bf16.msra.mxu0 0
    %9503 = vmatpush.bf16.msra.mxu0 0
    %9504 = vmatpush.bf16.msra.mxu0 %v9417
    %9505 = vmatpush.bf16.msra.mxu0 %v9361
    %9506 = vmatpush.bf16.msra.mxu0 %v9353
    %9507 = vmatpush.bf16.msra.mxu0 %v9345
    %9508 = vmatmul.bf16.gmra.mxu0 %v9396
    %v9509 = vpop.f32.mrf.mxu0
    %v9510 = vadd.f32 0.0, %v9509
    %v9511 = vpop.f32.mrf.mxu0
    %9512 = vdwg.mxu0
    %9513 = vmatpush.bf16.msra.mxu0 0
    %9514 = vmatpush.bf16.msra.mxu0 0
    %9515 = vmatpush.bf16.msra.mxu0 0
    %9516 = vmatpush.bf16.msra.mxu0 0
    %9517 = vmatpush.bf16.msra.mxu0 %v9420
    %9518 = vmatpush.bf16.msra.mxu0 %v9362
    %9519 = vmatpush.bf16.msra.mxu0 %v9354
    %9520 = vmatpush.bf16.msra.mxu0 %v9346
    %9521 = vmatmul.bf16.gmra.mxu0 %v9396
    %v9522 = vpop.f32.mrf.mxu0
    %v9523 = vadd.f32 0.0, %v9522
    %v9524 = vpop.f32.mrf.mxu0
    %9525 = vdwg.mxu0
    %v9534 = vrot.slane %v9445, 7
    %v9535 = vrot.slane %v9458, 6
    %v9536 = vrot.slane %v9471, 5
    %v9537 = vrot.slane %v9484, 4
    %v9538 = vrot.slane %v9497, 3
    %v9539 = vrot.slane %v9510, 2
    %v9540 = vrot.slane %v9523, 1
    %v9541 = vsel %vm708, %v9432, %v9534
    %v9542 = vsel %vm4003, %v9535, %v9536
    %v9543 = vsel %vm2497, %v9541, %v9542
    %v9544 = vsel %vm4006, %v9537, %v9538
    %v9545 = vsel %vm4008, %v9539, %v9540
    %v9546 = vsel %vm4010, %v9544, %v9545
    %v9547 = vsel %vm3120, %v9543, %v9546
    %v9549 = vadd.f32 %v9223, %v9547
    %s9550 = scalar_lea.vmem [#allocation2], 4032
    %v9551 = vld [vmem:[%s9550] sm:$0xff]
    %v9552 = vld [vmem:[%s9550 + $0x8] sm:$0xff]
    %v9553 = vld [vmem:[%s9550 + $0x10] sm:$0xff]
    %v9554 = vld [vmem:[%s9550 + $0x18] sm:$0xff]
    %v9555 = vld [vmem:[%s9550 + $0x20] sm:$0xff]
    %v9556 = vld [vmem:[%s9550 + $0x28] sm:$0xff]
    %v9557 = vld [vmem:[%s9550 + $0x30] sm:$0xff]
    %v9558 = vld [vmem:[%s9550 + $0x38] sm:$0xff]
    %v9559 = vld [vmem:[%s9550 + $0x40] sm:$0xff]
    %v9560 = vld [vmem:[%s9550 + $0x48] sm:$0xff]
    %v9561 = vld [vmem:[%s9550 + $0x50] sm:$0xff]
    %v9562 = vld [vmem:[%s9550 + $0x58] sm:$0xff]
    %v9563 = vld [vmem:[%s9550 + $0x60] sm:$0xff]
    %v9564 = vld [vmem:[%s9550 + $0x68] sm:$0xff]
    %v9565 = vld [vmem:[%s9550 + $0x70] sm:$0xff]
    %v9566 = vld [vmem:[%s9550 + $0x78] sm:$0xff]
    %v9567 = vld [vmem:[%s9550 + $0x80] sm:$0xff]
    %v9568 = vld [vmem:[%s9550 + $0x88] sm:$0xff]
    %v9569 = vld [vmem:[%s9550 + $0x90] sm:$0xff]
    %v9570 = vld [vmem:[%s9550 + $0x98] sm:$0xff]
    %v9571 = vld [vmem:[%s9550 + $0xa0] sm:$0xff]
    %v9572 = vld [vmem:[%s9550 + $0xa8] sm:$0xff]
    %v9573 = vld [vmem:[%s9550 + $0xb0] sm:$0xff]
    %v9574 = vld [vmem:[%s9550 + $0xb8] sm:$0xff]
    %v9575 = vld [vmem:[%s9550 + $0xc0] sm:$0x11]
    %v9576 = vld [vmem:[%s9550 + $0xc8] sm:$0x11]
    %v9577 = vld [vmem:[%s9550 + $0xd0] sm:$0x11]
    %v9578 = vld [vmem:[%s9550 + $0xd8] sm:$0x11]
    %v9579 = vrot.slane %v8899, 2
    %v9608 = vunpack.c.l.b16 %v9551
    %v9609 = vunpack.c.h.b16 %v9551
    %v9610 = vunpack.c.l.b16 %v9552
    %v9611 = vunpack.c.h.b16 %v9552
    %v9612 = vunpack.c.l.b16 %v9553
    %v9613 = vunpack.c.h.b16 %v9553
    %v9614 = vunpack.c.l.b16 %v9554
    %v9615 = vunpack.c.h.b16 %v9554
    %v9616 = vunpack.c.l.b16 %v9555
    %v9617 = vunpack.c.h.b16 %v9555
    %v9618 = vunpack.c.l.b16 %v9556
    %v9619 = vunpack.c.h.b16 %v9556
    %v9620 = vunpack.c.l.b16 %v9557
    %v9621 = vunpack.c.h.b16 %v9557
    %v9622 = vunpack.c.l.b16 %v9558
    %v9623 = vunpack.c.h.b16 %v9558
    %v9624 = vunpack.c.l.b16 %v9559
    %v9625 = vunpack.c.h.b16 %v9559
    %v9626 = vunpack.c.l.b16 %v9560
    %v9627 = vunpack.c.h.b16 %v9560
    %v9628 = vunpack.c.l.b16 %v9561
    %v9629 = vunpack.c.h.b16 %v9561
    %v9630 = vunpack.c.l.b16 %v9562
    %v9631 = vunpack.c.h.b16 %v9562
    %v9632 = vunpack.c.l.b16 %v9563
    %v9633 = vunpack.c.h.b16 %v9563
    %v9634 = vunpack.c.l.b16 %v9564
    %v9635 = vunpack.c.h.b16 %v9564
    %v9636 = vunpack.c.l.b16 %v9565
    %v9637 = vunpack.c.h.b16 %v9565
    %v9638 = vunpack.c.l.b16 %v9566
    %v9639 = vunpack.c.h.b16 %v9566
    %v9640 = vunpack.c.l.b16 %v9567
    %v9641 = vunpack.c.h.b16 %v9567
    %v9642 = vunpack.c.l.b16 %v9568
    %v9643 = vunpack.c.h.b16 %v9568
    %v9644 = vunpack.c.l.b16 %v9569
    %v9645 = vunpack.c.h.b16 %v9569
    %v9646 = vunpack.c.l.b16 %v9570
    %v9647 = vunpack.c.h.b16 %v9570
    %v9648 = vunpack.c.l.b16 %v9571
    %v9649 = vunpack.c.h.b16 %v9571
    %v9650 = vunpack.c.l.b16 %v9572
    %v9651 = vunpack.c.h.b16 %v9572
    %v9652 = vunpack.c.l.b16 %v9573
    %v9653 = vunpack.c.h.b16 %v9573
    %v9654 = vunpack.c.l.b16 %v9574
    %v9655 = vunpack.c.h.b16 %v9574
    %v9656 = vunpack.c.l.b16 %v9575
    %v9657 = vunpack.c.h.b16 %v9575
    %v9658 = vunpack.c.l.b16 %v9576
    %v9659 = vunpack.c.h.b16 %v9576
    %v9660 = vunpack.c.l.b16 %v9577
    %v9661 = vunpack.c.h.b16 %v9577
    %v9662 = vunpack.c.l.b16 %v9578
    %v9663 = vunpack.c.h.b16 %v9578
    %v9664 = vpack.c.b16 %v9616, %v9608
    %v9665 = vpack.c.b16 %v9617, %v9609
    %v9666 = vpack.c.b16 %v9618, %v9610
    %v9667 = vpack.c.b16 %v9619, %v9611
    %v9668 = vpack.c.b16 %v9620, %v9612
    %v9669 = vpack.c.b16 %v9621, %v9613
    %v9670 = vpack.c.b16 %v9622, %v9614
    %v9671 = vpack.c.b16 %v9623, %v9615
    %v9672 = vpack.c.b16 %v9632, %v9624
    %v9673 = vpack.c.b16 %v9633, %v9625
    %v9674 = vpack.c.b16 %v9634, %v9626
    %v9675 = vpack.c.b16 %v9635, %v9627
    %v9676 = vpack.c.b16 %v9636, %v9628
    %v9677 = vpack.c.b16 %v9637, %v9629
    %v9678 = vpack.c.b16 %v9638, %v9630
    %v9679 = vpack.c.b16 %v9639, %v9631
    %v9680 = vpack.c.b16 %v9648, %v9640
    %v9681 = vpack.c.b16 %v9649, %v9641
    %v9682 = vpack.c.b16 %v9650, %v9642
    %v9683 = vpack.c.b16 %v9651, %v9643
    %v9684 = vpack.c.b16 %v9652, %v9644
    %v9685 = vpack.c.b16 %v9653, %v9645
    %v9686 = vpack.c.b16 %v9654, %v9646
    %v9687 = vpack.c.b16 %v9655, %v9647
    %v9688 = vpack.c.b16 %v9656, %v9656
    %v9689 = vpack.c.b16 %v9657, %v9657
    %v9690 = vpack.c.b16 %v9658, %v9658
    %v9691 = vpack.c.b16 %v9659, %v9659
    %v9692 = vpack.c.b16 %v9660, %v9660
    %v9693 = vpack.c.b16 %v9661, %v9661
    %v9694 = vpack.c.b16 %v9662, %v9662
    %v9695 = vpack.c.b16 %v9663, %v9663
    %v9721 = vsel %vm3855, %v9579, 0
    %v9724 = vsel %vm708, %v9688, 0
    %v9727 = vsel %vm708, %v9689, 0
    %v9730 = vsel %vm708, %v9690, 0
    %v9733 = vsel %vm708, %v9691, 0
    %v9736 = vsel %vm708, %v9692, 0
    %v9739 = vsel %vm708, %v9693, 0
    %v9742 = vsel %vm708, %v9694, 0
    %v9745 = vsel %vm708, %v9695, 0
    %9747 = vmatpush.bf16.msra.mxu0 0
    %9748 = vmatpush.bf16.msra.mxu0 0
    %9749 = vmatpush.bf16.msra.mxu0 0
    %9750 = vmatpush.bf16.msra.mxu0 0
    %9751 = vmatpush.bf16.msra.mxu0 %v9724
    %9752 = vmatpush.bf16.msra.mxu0 %v9680
    %9753 = vmatpush.bf16.msra.mxu0 %v9672
    %9754 = vmatpush.bf16.msra.mxu0 %v9664
    %9755 = vmatmul.bf16.gmra.mxu0 %v9721
    %v9756 = vpop.f32.mrf.mxu0
    %v9757 = vadd.f32 0.0, %v9756
    %v9758 = vpop.f32.mrf.mxu0
    %9759 = vdwg.mxu0
    %9760 = vmatpush.bf16.msra.mxu0 0
    %9761 = vmatpush.bf16.msra.mxu0 0
    %9762 = vmatpush.bf16.msra.mxu0 0
    %9763 = vmatpush.bf16.msra.mxu0 0
    %9764 = vmatpush.bf16.msra.mxu0 %v9727
    %9765 = vmatpush.bf16.msra.mxu0 %v9681
    %9766 = vmatpush.bf16.msra.mxu0 %v9673
    %9767 = vmatpush.bf16.msra.mxu0 %v9665
    %9768 = vmatmul.bf16.gmra.mxu0 %v9721
    %v9769 = vpop.f32.mrf.mxu0
    %v9770 = vadd.f32 0.0, %v9769
    %v9771 = vpop.f32.mrf.mxu0
    %9772 = vdwg.mxu0
    %9773 = vmatpush.bf16.msra.mxu0 0
    %9774 = vmatpush.bf16.msra.mxu0 0
    %9775 = vmatpush.bf16.msra.mxu0 0
    %9776 = vmatpush.bf16.msra.mxu0 0
    %9777 = vmatpush.bf16.msra.mxu0 %v9730
    %9778 = vmatpush.bf16.msra.mxu0 %v9682
    %9779 = vmatpush.bf16.msra.mxu0 %v9674
    %9780 = vmatpush.bf16.msra.mxu0 %v9666
    %9781 = vmatmul.bf16.gmra.mxu0 %v9721
    %v9782 = vpop.f32.mrf.mxu0
    %v9783 = vadd.f32 0.0, %v9782
    %v9784 = vpop.f32.mrf.mxu0
    %9785 = vdwg.mxu0
    %9786 = vmatpush.bf16.msra.mxu0 0
    %9787 = vmatpush.bf16.msra.mxu0 0
    %9788 = vmatpush.bf16.msra.mxu0 0
    %9789 = vmatpush.bf16.msra.mxu0 0
    %9790 = vmatpush.bf16.msra.mxu0 %v9733
    %9791 = vmatpush.bf16.msra.mxu0 %v9683
    %9792 = vmatpush.bf16.msra.mxu0 %v9675
    %9793 = vmatpush.bf16.msra.mxu0 %v9667
    %9794 = vmatmul.bf16.gmra.mxu0 %v9721
    %v9795 = vpop.f32.mrf.mxu0
    %v9796 = vadd.f32 0.0, %v9795
    %v9797 = vpop.f32.mrf.mxu0
    %9798 = vdwg.mxu0
    %9799 = vmatpush.bf16.msra.mxu0 0
    %9800 = vmatpush.bf16.msra.mxu0 0
    %9801 = vmatpush.bf16.msra.mxu0 0
    %9802 = vmatpush.bf16.msra.mxu0 0
    %9803 = vmatpush.bf16.msra.mxu0 %v9736
    %9804 = vmatpush.bf16.msra.mxu0 %v9684
    %9805 = vmatpush.bf16.msra.mxu0 %v9676
    %9806 = vmatpush.bf16.msra.mxu0 %v9668
    %9807 = vmatmul.bf16.gmra.mxu0 %v9721
    %v9808 = vpop.f32.mrf.mxu0
    %v9809 = vadd.f32 0.0, %v9808
    %v9810 = vpop.f32.mrf.mxu0
    %9811 = vdwg.mxu0
    %9812 = vmatpush.bf16.msra.mxu0 0
    %9813 = vmatpush.bf16.msra.mxu0 0
    %9814 = vmatpush.bf16.msra.mxu0 0
    %9815 = vmatpush.bf16.msra.mxu0 0
    %9816 = vmatpush.bf16.msra.mxu0 %v9739
    %9817 = vmatpush.bf16.msra.mxu0 %v9685
    %9818 = vmatpush.bf16.msra.mxu0 %v9677
    %9819 = vmatpush.bf16.msra.mxu0 %v9669
    %9820 = vmatmul.bf16.gmra.mxu0 %v9721
    %v9821 = vpop.f32.mrf.mxu0
    %v9822 = vadd.f32 0.0, %v9821
    %v9823 = vpop.f32.mrf.mxu0
    %9824 = vdwg.mxu0
    %9825 = vmatpush.bf16.msra.mxu0 0
    %9826 = vmatpush.bf16.msra.mxu0 0
    %9827 = vmatpush.bf16.msra.mxu0 0
    %9828 = vmatpush.bf16.msra.mxu0 0
    %9829 = vmatpush.bf16.msra.mxu0 %v9742
    %9830 = vmatpush.bf16.msra.mxu0 %v9686
    %9831 = vmatpush.bf16.msra.mxu0 %v9678
    %9832 = vmatpush.bf16.msra.mxu0 %v9670
    %9833 = vmatmul.bf16.gmra.mxu0 %v9721
    %v9834 = vpop.f32.mrf.mxu0
    %v9835 = vadd.f32 0.0, %v9834
    %v9836 = vpop.f32.mrf.mxu0
    %9837 = vdwg.mxu0
    %9838 = vmatpush.bf16.msra.mxu0 0
    %9839 = vmatpush.bf16.msra.mxu0 0
    %9840 = vmatpush.bf16.msra.mxu0 0
    %9841 = vmatpush.bf16.msra.mxu0 0
    %9842 = vmatpush.bf16.msra.mxu0 %v9745
    %9843 = vmatpush.bf16.msra.mxu0 %v9687
    %9844 = vmatpush.bf16.msra.mxu0 %v9679
    %9845 = vmatpush.bf16.msra.mxu0 %v9671
    %9846 = vmatmul.bf16.gmra.mxu0 %v9721
    %v9847 = vpop.f32.mrf.mxu0
    %v9848 = vadd.f32 0.0, %v9847
    %v9849 = vpop.f32.mrf.mxu0
    %9850 = vdwg.mxu0
    %v9859 = vrot.slane %v9770, 7
    %v9860 = vrot.slane %v9783, 6
    %v9861 = vrot.slane %v9796, 5
    %v9862 = vrot.slane %v9809, 4
    %v9863 = vrot.slane %v9822, 3
    %v9864 = vrot.slane %v9835, 2
    %v9865 = vrot.slane %v9848, 1
    %v9866 = vsel %vm708, %v9757, %v9859
    %v9867 = vsel %vm4003, %v9860, %v9861
    %v9868 = vsel %vm2497, %v9866, %v9867
    %v9869 = vsel %vm4006, %v9862, %v9863
    %v9870 = vsel %vm4008, %v9864, %v9865
    %v9871 = vsel %vm4010, %v9869, %v9870
    %v9872 = vsel %vm3120, %v9868, %v9871
    %v9874 = vadd.f32 %v9549, %v9872
    %s9875 = scalar_lea.vmem [#allocation2], 4256
    %v9876 = vld [vmem:[%s9875] sm:$0xff]
    %v9877 = vld [vmem:[%s9875 + $0x8] sm:$0xff]
    %v9878 = vld [vmem:[%s9875 + $0x10] sm:$0xff]
    %v9879 = vld [vmem:[%s9875 + $0x18] sm:$0xff]
    %v9880 = vld [vmem:[%s9875 + $0x20] sm:$0xff]
    %v9881 = vld [vmem:[%s9875 + $0x28] sm:$0xff]
    %v9882 = vld [vmem:[%s9875 + $0x30] sm:$0xff]
    %v9883 = vld [vmem:[%s9875 + $0x38] sm:$0xff]
    %v9884 = vld [vmem:[%s9875 + $0x40] sm:$0xff]
    %v9885 = vld [vmem:[%s9875 + $0x48] sm:$0xff]
    %v9886 = vld [vmem:[%s9875 + $0x50] sm:$0xff]
    %v9887 = vld [vmem:[%s9875 + $0x58] sm:$0xff]
    %v9888 = vld [vmem:[%s9875 + $0x60] sm:$0xff]
    %v9889 = vld [vmem:[%s9875 + $0x68] sm:$0xff]
    %v9890 = vld [vmem:[%s9875 + $0x70] sm:$0xff]
    %v9891 = vld [vmem:[%s9875 + $0x78] sm:$0xff]
    %v9892 = vld [vmem:[%s9875 + $0x80] sm:$0xff]
    %v9893 = vld [vmem:[%s9875 + $0x88] sm:$0xff]
    %v9894 = vld [vmem:[%s9875 + $0x90] sm:$0xff]
    %v9895 = vld [vmem:[%s9875 + $0x98] sm:$0xff]
    %v9896 = vld [vmem:[%s9875 + $0xa0] sm:$0xff]
    %v9897 = vld [vmem:[%s9875 + $0xa8] sm:$0xff]
    %v9898 = vld [vmem:[%s9875 + $0xb0] sm:$0xff]
    %v9899 = vld [vmem:[%s9875 + $0xb8] sm:$0xff]
    %v9900 = vld [vmem:[%s9875 + $0xc0] sm:$0x11]
    %v9901 = vld [vmem:[%s9875 + $0xc8] sm:$0x11]
    %v9902 = vld [vmem:[%s9875 + $0xd0] sm:$0x11]
    %v9903 = vld [vmem:[%s9875 + $0xd8] sm:$0x11]
    %v9904 = vrot.slane %v8899, 3
    %v9933 = vunpack.c.l.b16 %v9876
    %v9934 = vunpack.c.h.b16 %v9876
    %v9935 = vunpack.c.l.b16 %v9877
    %v9936 = vunpack.c.h.b16 %v9877
    %v9937 = vunpack.c.l.b16 %v9878
    %v9938 = vunpack.c.h.b16 %v9878
    %v9939 = vunpack.c.l.b16 %v9879
    %v9940 = vunpack.c.h.b16 %v9879
    %v9941 = vunpack.c.l.b16 %v9880
    %v9942 = vunpack.c.h.b16 %v9880
    %v9943 = vunpack.c.l.b16 %v9881
    %v9944 = vunpack.c.h.b16 %v9881
    %v9945 = vunpack.c.l.b16 %v9882
    %v9946 = vunpack.c.h.b16 %v9882
    %v9947 = vunpack.c.l.b16 %v9883
    %v9948 = vunpack.c.h.b16 %v9883
    %v9949 = vunpack.c.l.b16 %v9884
    %v9950 = vunpack.c.h.b16 %v9884
    %v9951 = vunpack.c.l.b16 %v9885
    %v9952 = vunpack.c.h.b16 %v9885
    %v9953 = vunpack.c.l.b16 %v9886
    %v9954 = vunpack.c.h.b16 %v9886
    %v9955 = vunpack.c.l.b16 %v9887
    %v9956 = vunpack.c.h.b16 %v9887
    %v9957 = vunpack.c.l.b16 %v9888
    %v9958 = vunpack.c.h.b16 %v9888
    %v9959 = vunpack.c.l.b16 %v9889
    %v9960 = vunpack.c.h.b16 %v9889
    %v9961 = vunpack.c.l.b16 %v9890
    %v9962 = vunpack.c.h.b16 %v9890
    %v9963 = vunpack.c.l.b16 %v9891
    %v9964 = vunpack.c.h.b16 %v9891
    %v9965 = vunpack.c.l.b16 %v9892
    %v9966 = vunpack.c.h.b16 %v9892
    %v9967 = vunpack.c.l.b16 %v9893
    %v9968 = vunpack.c.h.b16 %v9893
    %v9969 = vunpack.c.l.b16 %v9894
    %v9970 = vunpack.c.h.b16 %v9894
    %v9971 = vunpack.c.l.b16 %v9895
    %v9972 = vunpack.c.h.b16 %v9895
    %v9973 = vunpack.c.l.b16 %v9896
    %v9974 = vunpack.c.h.b16 %v9896
    %v9975 = vunpack.c.l.b16 %v9897
    %v9976 = vunpack.c.h.b16 %v9897
    %v9977 = vunpack.c.l.b16 %v9898
    %v9978 = vunpack.c.h.b16 %v9898
    %v9979 = vunpack.c.l.b16 %v9899
    %v9980 = vunpack.c.h.b16 %v9899
    %v9981 = vunpack.c.l.b16 %v9900
    %v9982 = vunpack.c.h.b16 %v9900
    %v9983 = vunpack.c.l.b16 %v9901
    %v9984 = vunpack.c.h.b16 %v9901
    %v9985 = vunpack.c.l.b16 %v9902
    %v9986 = vunpack.c.h.b16 %v9902
    %v9987 = vunpack.c.l.b16 %v9903
    %v9988 = vunpack.c.h.b16 %v9903
    %v9989 = vpack.c.b16 %v9941, %v9933
    %v9990 = vpack.c.b16 %v9942, %v9934
    %v9991 = vpack.c.b16 %v9943, %v9935
    %v9992 = vpack.c.b16 %v9944, %v9936
    %v9993 = vpack.c.b16 %v9945, %v9937
    %v9994 = vpack.c.b16 %v9946, %v9938
    %v9995 = vpack.c.b16 %v9947, %v9939
    %v9996 = vpack.c.b16 %v9948, %v9940
    %v9997 = vpack.c.b16 %v9957, %v9949
    %v9998 = vpack.c.b16 %v9958, %v9950
    %v9999 = vpack.c.b16 %v9959, %v9951
    %v10000 = vpack.c.b16 %v9960, %v9952
    %v10001 = vpack.c.b16 %v9961, %v9953
    %v10002 = vpack.c.b16 %v9962, %v9954
    %v10003 = vpack.c.b16 %v9963, %v9955
    %v10004 = vpack.c.b16 %v9964, %v9956
    %v10005 = vpack.c.b16 %v9973, %v9965
    %v10006 = vpack.c.b16 %v9974, %v9966
    %v10007 = vpack.c.b16 %v9975, %v9967
    %v10008 = vpack.c.b16 %v9976, %v9968
    %v10009 = vpack.c.b16 %v9977, %v9969
    %v10010 = vpack.c.b16 %v9978, %v9970
    %v10011 = vpack.c.b16 %v9979, %v9971
    %v10012 = vpack.c.b16 %v9980, %v9972
    %v10013 = vpack.c.b16 %v9981, %v9981
    %v10014 = vpack.c.b16 %v9982, %v9982
    %v10015 = vpack.c.b16 %v9983, %v9983
    %v10016 = vpack.c.b16 %v9984, %v9984
    %v10017 = vpack.c.b16 %v9985, %v9985
    %v10018 = vpack.c.b16 %v9986, %v9986
    %v10019 = vpack.c.b16 %v9987, %v9987
    %v10020 = vpack.c.b16 %v9988, %v9988
    %v10046 = vsel %vm3855, %v9904, 0
    %v10049 = vsel %vm708, %v10013, 0
    %v10052 = vsel %vm708, %v10014, 0
    %v10055 = vsel %vm708, %v10015, 0
    %v10058 = vsel %vm708, %v10016, 0
    %v10061 = vsel %vm708, %v10017, 0
    %v10064 = vsel %vm708, %v10018, 0
    %v10067 = vsel %vm708, %v10019, 0
    %v10070 = vsel %vm708, %v10020, 0
    %10072 = vmatpush.bf16.msra.mxu0 0
    %10073 = vmatpush.bf16.msra.mxu0 0
    %10074 = vmatpush.bf16.msra.mxu0 0
    %10075 = vmatpush.bf16.msra.mxu0 0
    %10076 = vmatpush.bf16.msra.mxu0 %v10049
    %10077 = vmatpush.bf16.msra.mxu0 %v10005
    %10078 = vmatpush.bf16.msra.mxu0 %v9997
    %10079 = vmatpush.bf16.msra.mxu0 %v9989
    %10080 = vmatmul.bf16.gmra.mxu0 %v10046
    %v10081 = vpop.f32.mrf.mxu0
    %v10082 = vadd.f32 0.0, %v10081
    %v10083 = vpop.f32.mrf.mxu0
    %10084 = vdwg.mxu0
    %10085 = vmatpush.bf16.msra.mxu0 0
    %10086 = vmatpush.bf16.msra.mxu0 0
    %10087 = vmatpush.bf16.msra.mxu0 0
    %10088 = vmatpush.bf16.msra.mxu0 0
    %10089 = vmatpush.bf16.msra.mxu0 %v10052
    %10090 = vmatpush.bf16.msra.mxu0 %v10006
    %10091 = vmatpush.bf16.msra.mxu0 %v9998
    %10092 = vmatpush.bf16.msra.mxu0 %v9990
    %10093 = vmatmul.bf16.gmra.mxu0 %v10046
    %v10094 = vpop.f32.mrf.mxu0
    %v10095 = vadd.f32 0.0, %v10094
    %v10096 = vpop.f32.mrf.mxu0
    %10097 = vdwg.mxu0
    %10098 = vmatpush.bf16.msra.mxu0 0
    %10099 = vmatpush.bf16.msra.mxu0 0
    %10100 = vmatpush.bf16.msra.mxu0 0
    %10101 = vmatpush.bf16.msra.mxu0 0
    %10102 = vmatpush.bf16.msra.mxu0 %v10055
    %10103 = vmatpush.bf16.msra.mxu0 %v10007
    %10104 = vmatpush.bf16.msra.mxu0 %v9999
    %10105 = vmatpush.bf16.msra.mxu0 %v9991
    %10106 = vmatmul.bf16.gmra.mxu0 %v10046
    %v10107 = vpop.f32.mrf.mxu0
    %v10108 = vadd.f32 0.0, %v10107
    %v10109 = vpop.f32.mrf.mxu0
    %10110 = vdwg.mxu0
    %10111 = vmatpush.bf16.msra.mxu0 0
    %10112 = vmatpush.bf16.msra.mxu0 0
    %10113 = vmatpush.bf16.msra.mxu0 0
    %10114 = vmatpush.bf16.msra.mxu0 0
    %10115 = vmatpush.bf16.msra.mxu0 %v10058
    %10116 = vmatpush.bf16.msra.mxu0 %v10008
    %10117 = vmatpush.bf16.msra.mxu0 %v10000
    %10118 = vmatpush.bf16.msra.mxu0 %v9992
    %10119 = vmatmul.bf16.gmra.mxu0 %v10046
    %v10120 = vpop.f32.mrf.mxu0
    %v10121 = vadd.f32 0.0, %v10120
    %v10122 = vpop.f32.mrf.mxu0
    %10123 = vdwg.mxu0
    %10124 = vmatpush.bf16.msra.mxu0 0
    %10125 = vmatpush.bf16.msra.mxu0 0
    %10126 = vmatpush.bf16.msra.mxu0 0
    %10127 = vmatpush.bf16.msra.mxu0 0
    %10128 = vmatpush.bf16.msra.mxu0 %v10061
    %10129 = vmatpush.bf16.msra.mxu0 %v10009
    %10130 = vmatpush.bf16.msra.mxu0 %v10001
    %10131 = vmatpush.bf16.msra.mxu0 %v9993
    %10132 = vmatmul.bf16.gmra.mxu0 %v10046
    %v10133 = vpop.f32.mrf.mxu0
    %v10134 = vadd.f32 0.0, %v10133
    %v10135 = vpop.f32.mrf.mxu0
    %10136 = vdwg.mxu0
    %10137 = vmatpush.bf16.msra.mxu0 0
    %10138 = vmatpush.bf16.msra.mxu0 0
    %10139 = vmatpush.bf16.msra.mxu0 0
    %10140 = vmatpush.bf16.msra.mxu0 0
    %10141 = vmatpush.bf16.msra.mxu0 %v10064
    %10142 = vmatpush.bf16.msra.mxu0 %v10010
    %10143 = vmatpush.bf16.msra.mxu0 %v10002
    %10144 = vmatpush.bf16.msra.mxu0 %v9994
    %10145 = vmatmul.bf16.gmra.mxu0 %v10046
    %v10146 = vpop.f32.mrf.mxu0
    %v10147 = vadd.f32 0.0, %v10146
    %v10148 = vpop.f32.mrf.mxu0
    %10149 = vdwg.mxu0
    %10150 = vmatpush.bf16.msra.mxu0 0
    %10151 = vmatpush.bf16.msra.mxu0 0
    %10152 = vmatpush.bf16.msra.mxu0 0
    %10153 = vmatpush.bf16.msra.mxu0 0
    %10154 = vmatpush.bf16.msra.mxu0 %v10067
    %10155 = vmatpush.bf16.msra.mxu0 %v10011
    %10156 = vmatpush.bf16.msra.mxu0 %v10003
    %10157 = vmatpush.bf16.msra.mxu0 %v9995
    %10158 = vmatmul.bf16.gmra.mxu0 %v10046
    %v10159 = vpop.f32.mrf.mxu0
    %v10160 = vadd.f32 0.0, %v10159
    %v10161 = vpop.f32.mrf.mxu0
    %10162 = vdwg.mxu0
    %10163 = vmatpush.bf16.msra.mxu0 0
    %10164 = vmatpush.bf16.msra.mxu0 0
    %10165 = vmatpush.bf16.msra.mxu0 0
    %10166 = vmatpush.bf16.msra.mxu0 0
    %10167 = vmatpush.bf16.msra.mxu0 %v10070
    %10168 = vmatpush.bf16.msra.mxu0 %v10012
    %10169 = vmatpush.bf16.msra.mxu0 %v10004
    %10170 = vmatpush.bf16.msra.mxu0 %v9996
    %10171 = vmatmul.bf16.gmra.mxu0 %v10046
    %v10172 = vpop.f32.mrf.mxu0
    %v10173 = vadd.f32 0.0, %v10172
    %v10174 = vpop.f32.mrf.mxu0
    %10175 = vdwg.mxu0
    %v10184 = vrot.slane %v10095, 7
    %v10185 = vrot.slane %v10108, 6
    %v10186 = vrot.slane %v10121, 5
    %v10187 = vrot.slane %v10134, 4
    %v10188 = vrot.slane %v10147, 3
    %v10189 = vrot.slane %v10160, 2
    %v10190 = vrot.slane %v10173, 1
    %v10191 = vsel %vm708, %v10082, %v10184
    %v10192 = vsel %vm4003, %v10185, %v10186
    %v10193 = vsel %vm2497, %v10191, %v10192
    %v10194 = vsel %vm4006, %v10187, %v10188
    %v10195 = vsel %vm4008, %v10189, %v10190
    %v10196 = vsel %vm4010, %v10194, %v10195
    %v10197 = vsel %vm3120, %v10193, %v10196
    %v10199 = vadd.f32 %v9874, %v10197
    %v10200 = vpack.c.bf16 %v3678, %v3678
    %s10201 = scalar_lea.vmem [#allocation2], 4480
    %v10202 = vld [vmem:[%s10201] sm:$0xff]
    %v10203 = vld [vmem:[%s10201 + $0x8] sm:$0xff]
    %v10204 = vld [vmem:[%s10201 + $0x10] sm:$0xff]
    %v10205 = vld [vmem:[%s10201 + $0x18] sm:$0xff]
    %v10206 = vld [vmem:[%s10201 + $0x20] sm:$0xff]
    %v10207 = vld [vmem:[%s10201 + $0x28] sm:$0xff]
    %v10208 = vld [vmem:[%s10201 + $0x30] sm:$0xff]
    %v10209 = vld [vmem:[%s10201 + $0x38] sm:$0xff]
    %v10210 = vld [vmem:[%s10201 + $0x40] sm:$0xff]
    %v10211 = vld [vmem:[%s10201 + $0x48] sm:$0xff]
    %v10212 = vld [vmem:[%s10201 + $0x50] sm:$0xff]
    %v10213 = vld [vmem:[%s10201 + $0x58] sm:$0xff]
    %v10214 = vld [vmem:[%s10201 + $0x60] sm:$0xff]
    %v10215 = vld [vmem:[%s10201 + $0x68] sm:$0xff]
    %v10216 = vld [vmem:[%s10201 + $0x70] sm:$0xff]
    %v10217 = vld [vmem:[%s10201 + $0x78] sm:$0xff]
    %v10218 = vld [vmem:[%s10201 + $0x80] sm:$0xff]
    %v10219 = vld [vmem:[%s10201 + $0x88] sm:$0xff]
    %v10220 = vld [vmem:[%s10201 + $0x90] sm:$0xff]
    %v10221 = vld [vmem:[%s10201 + $0x98] sm:$0xff]
    %v10222 = vld [vmem:[%s10201 + $0xa0] sm:$0xff]
    %v10223 = vld [vmem:[%s10201 + $0xa8] sm:$0xff]
    %v10224 = vld [vmem:[%s10201 + $0xb0] sm:$0xff]
    %v10225 = vld [vmem:[%s10201 + $0xb8] sm:$0xff]
    %v10226 = vld [vmem:[%s10201 + $0xc0] sm:$0x11]
    %v10227 = vld [vmem:[%s10201 + $0xc8] sm:$0x11]
    %v10228 = vld [vmem:[%s10201 + $0xd0] sm:$0x11]
    %v10229 = vld [vmem:[%s10201 + $0xd8] sm:$0x11]
    %v10258 = vunpack.c.l.b16 %v10202
    %v10259 = vunpack.c.h.b16 %v10202
    %v10260 = vunpack.c.l.b16 %v10203
    %v10261 = vunpack.c.h.b16 %v10203
    %v10262 = vunpack.c.l.b16 %v10204
    %v10263 = vunpack.c.h.b16 %v10204
    %v10264 = vunpack.c.l.b16 %v10205
    %v10265 = vunpack.c.h.b16 %v10205
    %v10266 = vunpack.c.l.b16 %v10206
    %v10267 = vunpack.c.h.b16 %v10206
    %v10268 = vunpack.c.l.b16 %v10207
    %v10269 = vunpack.c.h.b16 %v10207
    %v10270 = vunpack.c.l.b16 %v10208
    %v10271 = vunpack.c.h.b16 %v10208
    %v10272 = vunpack.c.l.b16 %v10209
    %v10273 = vunpack.c.h.b16 %v10209
    %v10274 = vunpack.c.l.b16 %v10210
    %v10275 = vunpack.c.h.b16 %v10210
    %v10276 = vunpack.c.l.b16 %v10211
    %v10277 = vunpack.c.h.b16 %v10211
    %v10278 = vunpack.c.l.b16 %v10212
    %v10279 = vunpack.c.h.b16 %v10212
    %v10280 = vunpack.c.l.b16 %v10213
    %v10281 = vunpack.c.h.b16 %v10213
    %v10282 = vunpack.c.l.b16 %v10214
    %v10283 = vunpack.c.h.b16 %v10214
    %v10284 = vunpack.c.l.b16 %v10215
    %v10285 = vunpack.c.h.b16 %v10215
    %v10286 = vunpack.c.l.b16 %v10216
    %v10287 = vunpack.c.h.b16 %v10216
    %v10288 = vunpack.c.l.b16 %v10217
    %v10289 = vunpack.c.h.b16 %v10217
    %v10290 = vunpack.c.l.b16 %v10218
    %v10291 = vunpack.c.h.b16 %v10218
    %v10292 = vunpack.c.l.b16 %v10219
    %v10293 = vunpack.c.h.b16 %v10219
    %v10294 = vunpack.c.l.b16 %v10220
    %v10295 = vunpack.c.h.b16 %v10220
    %v10296 = vunpack.c.l.b16 %v10221
    %v10297 = vunpack.c.h.b16 %v10221
    %v10298 = vunpack.c.l.b16 %v10222
    %v10299 = vunpack.c.h.b16 %v10222
    %v10300 = vunpack.c.l.b16 %v10223
    %v10301 = vunpack.c.h.b16 %v10223
    %v10302 = vunpack.c.l.b16 %v10224
    %v10303 = vunpack.c.h.b16 %v10224
    %v10304 = vunpack.c.l.b16 %v10225
    %v10305 = vunpack.c.h.b16 %v10225
    %v10306 = vunpack.c.l.b16 %v10226
    %v10307 = vunpack.c.h.b16 %v10226
    %v10308 = vunpack.c.l.b16 %v10227
    %v10309 = vunpack.c.h.b16 %v10227
    %v10310 = vunpack.c.l.b16 %v10228
    %v10311 = vunpack.c.h.b16 %v10228
    %v10312 = vunpack.c.l.b16 %v10229
    %v10313 = vunpack.c.h.b16 %v10229
    %v10314 = vpack.c.b16 %v10266, %v10258
    %v10315 = vpack.c.b16 %v10267, %v10259
    %v10316 = vpack.c.b16 %v10268, %v10260
    %v10317 = vpack.c.b16 %v10269, %v10261
    %v10318 = vpack.c.b16 %v10270, %v10262
    %v10319 = vpack.c.b16 %v10271, %v10263
    %v10320 = vpack.c.b16 %v10272, %v10264
    %v10321 = vpack.c.b16 %v10273, %v10265
    %v10322 = vpack.c.b16 %v10282, %v10274
    %v10323 = vpack.c.b16 %v10283, %v10275
    %v10324 = vpack.c.b16 %v10284, %v10276
    %v10325 = vpack.c.b16 %v10285, %v10277
    %v10326 = vpack.c.b16 %v10286, %v10278
    %v10327 = vpack.c.b16 %v10287, %v10279
    %v10328 = vpack.c.b16 %v10288, %v10280
    %v10329 = vpack.c.b16 %v10289, %v10281
    %v10330 = vpack.c.b16 %v10298, %v10290
    %v10331 = vpack.c.b16 %v10299, %v10291
    %v10332 = vpack.c.b16 %v10300, %v10292
    %v10333 = vpack.c.b16 %v10301, %v10293
    %v10334 = vpack.c.b16 %v10302, %v10294
    %v10335 = vpack.c.b16 %v10303, %v10295
    %v10336 = vpack.c.b16 %v10304, %v10296
    %v10337 = vpack.c.b16 %v10305, %v10297
    %v10338 = vpack.c.b16 %v10306, %v10306
    %v10339 = vpack.c.b16 %v10307, %v10307
    %v10340 = vpack.c.b16 %v10308, %v10308
    %v10341 = vpack.c.b16 %v10309, %v10309
    %v10342 = vpack.c.b16 %v10310, %v10310
    %v10343 = vpack.c.b16 %v10311, %v10311
    %v10344 = vpack.c.b16 %v10312, %v10312
    %v10345 = vpack.c.b16 %v10313, %v10313
    %v10371 = vsel %vm3855, %v10200, 0
    %v10374 = vsel %vm708, %v10338, 0
    %v10377 = vsel %vm708, %v10339, 0
    %v10380 = vsel %vm708, %v10340, 0
    %v10383 = vsel %vm708, %v10341, 0
    %v10386 = vsel %vm708, %v10342, 0
    %v10389 = vsel %vm708, %v10343, 0
    %v10392 = vsel %vm708, %v10344, 0
    %v10395 = vsel %vm708, %v10345, 0
    %10397 = vmatpush.bf16.msra.mxu0 0
    %10398 = vmatpush.bf16.msra.mxu0 0
    %10399 = vmatpush.bf16.msra.mxu0 0
    %10400 = vmatpush.bf16.msra.mxu0 0
    %10401 = vmatpush.bf16.msra.mxu0 %v10374
    %10402 = vmatpush.bf16.msra.mxu0 %v10330
    %10403 = vmatpush.bf16.msra.mxu0 %v10322
    %10404 = vmatpush.bf16.msra.mxu0 %v10314
    %10405 = vmatmul.bf16.gmra.mxu0 %v10371
    %v10406 = vpop.f32.mrf.mxu0
    %v10407 = vadd.f32 0.0, %v10406
    %v10408 = vpop.f32.mrf.mxu0
    %10409 = vdwg.mxu0
    %10410 = vmatpush.bf16.msra.mxu0 0
    %10411 = vmatpush.bf16.msra.mxu0 0
    %10412 = vmatpush.bf16.msra.mxu0 0
    %10413 = vmatpush.bf16.msra.mxu0 0
    %10414 = vmatpush.bf16.msra.mxu0 %v10377
    %10415 = vmatpush.bf16.msra.mxu0 %v10331
    %10416 = vmatpush.bf16.msra.mxu0 %v10323
    %10417 = vmatpush.bf16.msra.mxu0 %v10315
    %10418 = vmatmul.bf16.gmra.mxu0 %v10371
    %v10419 = vpop.f32.mrf.mxu0
    %v10420 = vadd.f32 0.0, %v10419
    %v10421 = vpop.f32.mrf.mxu0
    %10422 = vdwg.mxu0
    %10423 = vmatpush.bf16.msra.mxu0 0
    %10424 = vmatpush.bf16.msra.mxu0 0
    %10425 = vmatpush.bf16.msra.mxu0 0
    %10426 = vmatpush.bf16.msra.mxu0 0
    %10427 = vmatpush.bf16.msra.mxu0 %v10380
    %10428 = vmatpush.bf16.msra.mxu0 %v10332
    %10429 = vmatpush.bf16.msra.mxu0 %v10324
    %10430 = vmatpush.bf16.msra.mxu0 %v10316
    %10431 = vmatmul.bf16.gmra.mxu0 %v10371
    %v10432 = vpop.f32.mrf.mxu0
    %v10433 = vadd.f32 0.0, %v10432
    %v10434 = vpop.f32.mrf.mxu0
    %10435 = vdwg.mxu0
    %10436 = vmatpush.bf16.msra.mxu0 0
    %10437 = vmatpush.bf16.msra.mxu0 0
    %10438 = vmatpush.bf16.msra.mxu0 0
    %10439 = vmatpush.bf16.msra.mxu0 0
    %10440 = vmatpush.bf16.msra.mxu0 %v10383
    %10441 = vmatpush.bf16.msra.mxu0 %v10333
    %10442 = vmatpush.bf16.msra.mxu0 %v10325
    %10443 = vmatpush.bf16.msra.mxu0 %v10317
    %10444 = vmatmul.bf16.gmra.mxu0 %v10371
    %v10445 = vpop.f32.mrf.mxu0
    %v10446 = vadd.f32 0.0, %v10445
    %v10447 = vpop.f32.mrf.mxu0
    %10448 = vdwg.mxu0
    %10449 = vmatpush.bf16.msra.mxu0 0
    %10450 = vmatpush.bf16.msra.mxu0 0
    %10451 = vmatpush.bf16.msra.mxu0 0
    %10452 = vmatpush.bf16.msra.mxu0 0
    %10453 = vmatpush.bf16.msra.mxu0 %v10386
    %10454 = vmatpush.bf16.msra.mxu0 %v10334
    %10455 = vmatpush.bf16.msra.mxu0 %v10326
    %10456 = vmatpush.bf16.msra.mxu0 %v10318
    %10457 = vmatmul.bf16.gmra.mxu0 %v10371
    %v10458 = vpop.f32.mrf.mxu0
    %v10459 = vadd.f32 0.0, %v10458
    %v10460 = vpop.f32.mrf.mxu0
    %10461 = vdwg.mxu0
    %10462 = vmatpush.bf16.msra.mxu0 0
    %10463 = vmatpush.bf16.msra.mxu0 0
    %10464 = vmatpush.bf16.msra.mxu0 0
    %10465 = vmatpush.bf16.msra.mxu0 0
    %10466 = vmatpush.bf16.msra.mxu0 %v10389
    %10467 = vmatpush.bf16.msra.mxu0 %v10335
    %10468 = vmatpush.bf16.msra.mxu0 %v10327
    %10469 = vmatpush.bf16.msra.mxu0 %v10319
    %10470 = vmatmul.bf16.gmra.mxu0 %v10371
    %v10471 = vpop.f32.mrf.mxu0
    %v10472 = vadd.f32 0.0, %v10471
    %v10473 = vpop.f32.mrf.mxu0
    %10474 = vdwg.mxu0
    %10475 = vmatpush.bf16.msra.mxu0 0
    %10476 = vmatpush.bf16.msra.mxu0 0
    %10477 = vmatpush.bf16.msra.mxu0 0
    %10478 = vmatpush.bf16.msra.mxu0 0
    %10479 = vmatpush.bf16.msra.mxu0 %v10392
    %10480 = vmatpush.bf16.msra.mxu0 %v10336
    %10481 = vmatpush.bf16.msra.mxu0 %v10328
    %10482 = vmatpush.bf16.msra.mxu0 %v10320
    %10483 = vmatmul.bf16.gmra.mxu0 %v10371
    %v10484 = vpop.f32.mrf.mxu0
    %v10485 = vadd.f32 0.0, %v10484
    %v10486 = vpop.f32.mrf.mxu0
    %10487 = vdwg.mxu0
    %10488 = vmatpush.bf16.msra.mxu0 0
    %10489 = vmatpush.bf16.msra.mxu0 0
    %10490 = vmatpush.bf16.msra.mxu0 0
    %10491 = vmatpush.bf16.msra.mxu0 0
    %10492 = vmatpush.bf16.msra.mxu0 %v10395
    %10493 = vmatpush.bf16.msra.mxu0 %v10337
    %10494 = vmatpush.bf16.msra.mxu0 %v10329
    %10495 = vmatpush.bf16.msra.mxu0 %v10321
    %10496 = vmatmul.bf16.gmra.mxu0 %v10371
    %v10497 = vpop.f32.mrf.mxu0
    %v10498 = vadd.f32 0.0, %v10497
    %v10499 = vpop.f32.mrf.mxu0
    %10500 = vdwg.mxu0
    %v10509 = vrot.slane %v10420, 7
    %v10510 = vrot.slane %v10433, 6
    %v10511 = vrot.slane %v10446, 5
    %v10512 = vrot.slane %v10459, 4
    %v10513 = vrot.slane %v10472, 3
    %v10514 = vrot.slane %v10485, 2
    %v10515 = vrot.slane %v10498, 1
    %v10516 = vsel %vm708, %v10407, %v10509
    %v10517 = vsel %vm4003, %v10510, %v10511
    %v10518 = vsel %vm2497, %v10516, %v10517
    %v10519 = vsel %vm4006, %v10512, %v10513
    %v10520 = vsel %vm4008, %v10514, %v10515
    %v10521 = vsel %vm4010, %v10519, %v10520
    %v10522 = vsel %vm3120, %v10518, %v10521
    %v10524 = vadd.f32 %v10199, %v10522
    %s10525 = scalar_lea.vmem [#allocation2], 4704
    %v10526 = vld [vmem:[%s10525] sm:$0xff]
    %v10527 = vld [vmem:[%s10525 + $0x8] sm:$0xff]
    %v10528 = vld [vmem:[%s10525 + $0x10] sm:$0xff]
    %v10529 = vld [vmem:[%s10525 + $0x18] sm:$0xff]
    %v10530 = vld [vmem:[%s10525 + $0x20] sm:$0xff]
    %v10531 = vld [vmem:[%s10525 + $0x28] sm:$0xff]
    %v10532 = vld [vmem:[%s10525 + $0x30] sm:$0xff]
    %v10533 = vld [vmem:[%s10525 + $0x38] sm:$0xff]
    %v10534 = vld [vmem:[%s10525 + $0x40] sm:$0xff]
    %v10535 = vld [vmem:[%s10525 + $0x48] sm:$0xff]
    %v10536 = vld [vmem:[%s10525 + $0x50] sm:$0xff]
    %v10537 = vld [vmem:[%s10525 + $0x58] sm:$0xff]
    %v10538 = vld [vmem:[%s10525 + $0x60] sm:$0xff]
    %v10539 = vld [vmem:[%s10525 + $0x68] sm:$0xff]
    %v10540 = vld [vmem:[%s10525 + $0x70] sm:$0xff]
    %v10541 = vld [vmem:[%s10525 + $0x78] sm:$0xff]
    %v10542 = vld [vmem:[%s10525 + $0x80] sm:$0xff]
    %v10543 = vld [vmem:[%s10525 + $0x88] sm:$0xff]
    %v10544 = vld [vmem:[%s10525 + $0x90] sm:$0xff]
    %v10545 = vld [vmem:[%s10525 + $0x98] sm:$0xff]
    %v10546 = vld [vmem:[%s10525 + $0xa0] sm:$0xff]
    %v10547 = vld [vmem:[%s10525 + $0xa8] sm:$0xff]
    %v10548 = vld [vmem:[%s10525 + $0xb0] sm:$0xff]
    %v10549 = vld [vmem:[%s10525 + $0xb8] sm:$0xff]
    %v10550 = vld [vmem:[%s10525 + $0xc0] sm:$0x11]
    %v10551 = vld [vmem:[%s10525 + $0xc8] sm:$0x11]
    %v10552 = vld [vmem:[%s10525 + $0xd0] sm:$0x11]
    %v10553 = vld [vmem:[%s10525 + $0xd8] sm:$0x11]
    %v10555 = vrot.slane %v10200, 1
    %v10584 = vunpack.c.l.b16 %v10526
    %v10585 = vunpack.c.h.b16 %v10526
    %v10586 = vunpack.c.l.b16 %v10527
    %v10587 = vunpack.c.h.b16 %v10527
    %v10588 = vunpack.c.l.b16 %v10528
    %v10589 = vunpack.c.h.b16 %v10528
    %v10590 = vunpack.c.l.b16 %v10529
    %v10591 = vunpack.c.h.b16 %v10529
    %v10592 = vunpack.c.l.b16 %v10530
    %v10593 = vunpack.c.h.b16 %v10530
    %v10594 = vunpack.c.l.b16 %v10531
    %v10595 = vunpack.c.h.b16 %v10531
    %v10596 = vunpack.c.l.b16 %v10532
    %v10597 = vunpack.c.h.b16 %v10532
    %v10598 = vunpack.c.l.b16 %v10533
    %v10599 = vunpack.c.h.b16 %v10533
    %v10600 = vunpack.c.l.b16 %v10534
    %v10601 = vunpack.c.h.b16 %v10534
    %v10602 = vunpack.c.l.b16 %v10535
    %v10603 = vunpack.c.h.b16 %v10535
    %v10604 = vunpack.c.l.b16 %v10536
    %v10605 = vunpack.c.h.b16 %v10536
    %v10606 = vunpack.c.l.b16 %v10537
    %v10607 = vunpack.c.h.b16 %v10537
    %v10608 = vunpack.c.l.b16 %v10538
    %v10609 = vunpack.c.h.b16 %v10538
    %v10610 = vunpack.c.l.b16 %v10539
    %v10611 = vunpack.c.h.b16 %v10539
    %v10612 = vunpack.c.l.b16 %v10540
    %v10613 = vunpack.c.h.b16 %v10540
    %v10614 = vunpack.c.l.b16 %v10541
    %v10615 = vunpack.c.h.b16 %v10541
    %v10616 = vunpack.c.l.b16 %v10542
    %v10617 = vunpack.c.h.b16 %v10542
    %v10618 = vunpack.c.l.b16 %v10543
    %v10619 = vunpack.c.h.b16 %v10543
    %v10620 = vunpack.c.l.b16 %v10544
    %v10621 = vunpack.c.h.b16 %v10544
    %v10622 = vunpack.c.l.b16 %v10545
    %v10623 = vunpack.c.h.b16 %v10545
    %v10624 = vunpack.c.l.b16 %v10546
    %v10625 = vunpack.c.h.b16 %v10546
    %v10626 = vunpack.c.l.b16 %v10547
    %v10627 = vunpack.c.h.b16 %v10547
    %v10628 = vunpack.c.l.b16 %v10548
    %v10629 = vunpack.c.h.b16 %v10548
    %v10630 = vunpack.c.l.b16 %v10549
    %v10631 = vunpack.c.h.b16 %v10549
    %v10632 = vunpack.c.l.b16 %v10550
    %v10633 = vunpack.c.h.b16 %v10550
    %v10634 = vunpack.c.l.b16 %v10551
    %v10635 = vunpack.c.h.b16 %v10551
    %v10636 = vunpack.c.l.b16 %v10552
    %v10637 = vunpack.c.h.b16 %v10552
    %v10638 = vunpack.c.l.b16 %v10553
    %v10639 = vunpack.c.h.b16 %v10553
    %v10640 = vpack.c.b16 %v10592, %v10584
    %v10641 = vpack.c.b16 %v10593, %v10585
    %v10642 = vpack.c.b16 %v10594, %v10586
    %v10643 = vpack.c.b16 %v10595, %v10587
    %v10644 = vpack.c.b16 %v10596, %v10588
    %v10645 = vpack.c.b16 %v10597, %v10589
    %v10646 = vpack.c.b16 %v10598, %v10590
    %v10647 = vpack.c.b16 %v10599, %v10591
    %v10648 = vpack.c.b16 %v10608, %v10600
    %v10649 = vpack.c.b16 %v10609, %v10601
    %v10650 = vpack.c.b16 %v10610, %v10602
    %v10651 = vpack.c.b16 %v10611, %v10603
    %v10652 = vpack.c.b16 %v10612, %v10604
    %v10653 = vpack.c.b16 %v10613, %v10605
    %v10654 = vpack.c.b16 %v10614, %v10606
    %v10655 = vpack.c.b16 %v10615, %v10607
    %v10656 = vpack.c.b16 %v10624, %v10616
    %v10657 = vpack.c.b16 %v10625, %v10617
    %v10658 = vpack.c.b16 %v10626, %v10618
    %v10659 = vpack.c.b16 %v10627, %v10619
    %v10660 = vpack.c.b16 %v10628, %v10620
    %v10661 = vpack.c.b16 %v10629, %v10621
    %v10662 = vpack.c.b16 %v10630, %v10622
    %v10663 = vpack.c.b16 %v10631, %v10623
    %v10664 = vpack.c.b16 %v10632, %v10632
    %v10665 = vpack.c.b16 %v10633, %v10633
    %v10666 = vpack.c.b16 %v10634, %v10634
    %v10667 = vpack.c.b16 %v10635, %v10635
    %v10668 = vpack.c.b16 %v10636, %v10636
    %v10669 = vpack.c.b16 %v10637, %v10637
    %v10670 = vpack.c.b16 %v10638, %v10638
    %v10671 = vpack.c.b16 %v10639, %v10639
    %v10697 = vsel %vm3855, %v10555, 0
    %v10700 = vsel %vm708, %v10664, 0
    %v10703 = vsel %vm708, %v10665, 0
    %v10706 = vsel %vm708, %v10666, 0
    %v10709 = vsel %vm708, %v10667, 0
    %v10712 = vsel %vm708, %v10668, 0
    %v10715 = vsel %vm708, %v10669, 0
    %v10718 = vsel %vm708, %v10670, 0
    %v10721 = vsel %vm708, %v10671, 0
    %10723 = vmatpush.bf16.msra.mxu0 0
    %10724 = vmatpush.bf16.msra.mxu0 0
    %10725 = vmatpush.bf16.msra.mxu0 0
    %10726 = vmatpush.bf16.msra.mxu0 0
    %10727 = vmatpush.bf16.msra.mxu0 %v10700
    %10728 = vmatpush.bf16.msra.mxu0 %v10656
    %10729 = vmatpush.bf16.msra.mxu0 %v10648
    %10730 = vmatpush.bf16.msra.mxu0 %v10640
    %10731 = vmatmul.bf16.gmra.mxu0 %v10697
    %v10732 = vpop.f32.mrf.mxu0
    %v10733 = vadd.f32 0.0, %v10732
    %v10734 = vpop.f32.mrf.mxu0
    %10735 = vdwg.mxu0
    %10736 = vmatpush.bf16.msra.mxu0 0
    %10737 = vmatpush.bf16.msra.mxu0 0
    %10738 = vmatpush.bf16.msra.mxu0 0
    %10739 = vmatpush.bf16.msra.mxu0 0
    %10740 = vmatpush.bf16.msra.mxu0 %v10703
    %10741 = vmatpush.bf16.msra.mxu0 %v10657
    %10742 = vmatpush.bf16.msra.mxu0 %v10649
    %10743 = vmatpush.bf16.msra.mxu0 %v10641
    %10744 = vmatmul.bf16.gmra.mxu0 %v10697
    %v10745 = vpop.f32.mrf.mxu0
    %v10746 = vadd.f32 0.0, %v10745
    %v10747 = vpop.f32.mrf.mxu0
    %10748 = vdwg.mxu0
    %10749 = vmatpush.bf16.msra.mxu0 0
    %10750 = vmatpush.bf16.msra.mxu0 0
    %10751 = vmatpush.bf16.msra.mxu0 0
    %10752 = vmatpush.bf16.msra.mxu0 0
    %10753 = vmatpush.bf16.msra.mxu0 %v10706
    %10754 = vmatpush.bf16.msra.mxu0 %v10658
    %10755 = vmatpush.bf16.msra.mxu0 %v10650
    %10756 = vmatpush.bf16.msra.mxu0 %v10642
    %10757 = vmatmul.bf16.gmra.mxu0 %v10697
    %v10758 = vpop.f32.mrf.mxu0
    %v10759 = vadd.f32 0.0, %v10758
    %v10760 = vpop.f32.mrf.mxu0
    %10761 = vdwg.mxu0
    %10762 = vmatpush.bf16.msra.mxu0 0
    %10763 = vmatpush.bf16.msra.mxu0 0
    %10764 = vmatpush.bf16.msra.mxu0 0
    %10765 = vmatpush.bf16.msra.mxu0 0
    %10766 = vmatpush.bf16.msra.mxu0 %v10709
    %10767 = vmatpush.bf16.msra.mxu0 %v10659
    %10768 = vmatpush.bf16.msra.mxu0 %v10651
    %10769 = vmatpush.bf16.msra.mxu0 %v10643
    %10770 = vmatmul.bf16.gmra.mxu0 %v10697
    %v10771 = vpop.f32.mrf.mxu0
    %v10772 = vadd.f32 0.0, %v10771
    %v10773 = vpop.f32.mrf.mxu0
    %10774 = vdwg.mxu0
    %10775 = vmatpush.bf16.msra.mxu0 0
    %10776 = vmatpush.bf16.msra.mxu0 0
    %10777 = vmatpush.bf16.msra.mxu0 0
    %10778 = vmatpush.bf16.msra.mxu0 0
    %10779 = vmatpush.bf16.msra.mxu0 %v10712
    %10780 = vmatpush.bf16.msra.mxu0 %v10660
    %10781 = vmatpush.bf16.msra.mxu0 %v10652
    %10782 = vmatpush.bf16.msra.mxu0 %v10644
    %10783 = vmatmul.bf16.gmra.mxu0 %v10697
    %v10784 = vpop.f32.mrf.mxu0
    %v10785 = vadd.f32 0.0, %v10784
    %v10786 = vpop.f32.mrf.mxu0
    %10787 = vdwg.mxu0
    %10788 = vmatpush.bf16.msra.mxu0 0
    %10789 = vmatpush.bf16.msra.mxu0 0
    %10790 = vmatpush.bf16.msra.mxu0 0
    %10791 = vmatpush.bf16.msra.mxu0 0
    %10792 = vmatpush.bf16.msra.mxu0 %v10715
    %10793 = vmatpush.bf16.msra.mxu0 %v10661
    %10794 = vmatpush.bf16.msra.mxu0 %v10653
    %10795 = vmatpush.bf16.msra.mxu0 %v10645
    %10796 = vmatmul.bf16.gmra.mxu0 %v10697
    %v10797 = vpop.f32.mrf.mxu0
    %v10798 = vadd.f32 0.0, %v10797
    %v10799 = vpop.f32.mrf.mxu0
    %10800 = vdwg.mxu0
    %10801 = vmatpush.bf16.msra.mxu0 0
    %10802 = vmatpush.bf16.msra.mxu0 0
    %10803 = vmatpush.bf16.msra.mxu0 0
    %10804 = vmatpush.bf16.msra.mxu0 0
    %10805 = vmatpush.bf16.msra.mxu0 %v10718
    %10806 = vmatpush.bf16.msra.mxu0 %v10662
    %10807 = vmatpush.bf16.msra.mxu0 %v10654
    %10808 = vmatpush.bf16.msra.mxu0 %v10646
    %10809 = vmatmul.bf16.gmra.mxu0 %v10697
    %v10810 = vpop.f32.mrf.mxu0
    %v10811 = vadd.f32 0.0, %v10810
    %v10812 = vpop.f32.mrf.mxu0
    %10813 = vdwg.mxu0
    %10814 = vmatpush.bf16.msra.mxu0 0
    %10815 = vmatpush.bf16.msra.mxu0 0
    %10816 = vmatpush.bf16.msra.mxu0 0
    %10817 = vmatpush.bf16.msra.mxu0 0
    %10818 = vmatpush.bf16.msra.mxu0 %v10721
    %10819 = vmatpush.bf16.msra.mxu0 %v10663
    %10820 = vmatpush.bf16.msra.mxu0 %v10655
    %10821 = vmatpush.bf16.msra.mxu0 %v10647
    %10822 = vmatmul.bf16.gmra.mxu0 %v10697
    %v10823 = vpop.f32.mrf.mxu0
    %v10824 = vadd.f32 0.0, %v10823
    %v10825 = vpop.f32.mrf.mxu0
    %10826 = vdwg.mxu0
    %v10835 = vrot.slane %v10746, 7
    %v10836 = vrot.slane %v10759, 6
    %v10837 = vrot.slane %v10772, 5
    %v10838 = vrot.slane %v10785, 4
    %v10839 = vrot.slane %v10798, 3
    %v10840 = vrot.slane %v10811, 2
    %v10841 = vrot.slane %v10824, 1
    %v10842 = vsel %vm708, %v10733, %v10835
    %v10843 = vsel %vm4003, %v10836, %v10837
    %v10844 = vsel %vm2497, %v10842, %v10843
    %v10845 = vsel %vm4006, %v10838, %v10839
    %v10846 = vsel %vm4008, %v10840, %v10841
    %v10847 = vsel %vm4010, %v10845, %v10846
    %v10848 = vsel %vm3120, %v10844, %v10847
    %v10850 = vadd.f32 %v10524, %v10848
    %s10851 = scalar_lea.vmem [#allocation2], 4928
    %v10852 = vld [vmem:[%s10851] sm:$0xff]
    %v10853 = vld [vmem:[%s10851 + $0x8] sm:$0xff]
    %v10854 = vld [vmem:[%s10851 + $0x10] sm:$0xff]
    %v10855 = vld [vmem:[%s10851 + $0x18] sm:$0xff]
    %v10856 = vld [vmem:[%s10851 + $0x20] sm:$0xff]
    %v10857 = vld [vmem:[%s10851 + $0x28] sm:$0xff]
    %v10858 = vld [vmem:[%s10851 + $0x30] sm:$0xff]
    %v10859 = vld [vmem:[%s10851 + $0x38] sm:$0xff]
    %v10860 = vld [vmem:[%s10851 + $0x40] sm:$0xff]
    %v10861 = vld [vmem:[%s10851 + $0x48] sm:$0xff]
    %v10862 = vld [vmem:[%s10851 + $0x50] sm:$0xff]
    %v10863 = vld [vmem:[%s10851 + $0x58] sm:$0xff]
    %v10864 = vld [vmem:[%s10851 + $0x60] sm:$0xff]
    %v10865 = vld [vmem:[%s10851 + $0x68] sm:$0xff]
    %v10866 = vld [vmem:[%s10851 + $0x70] sm:$0xff]
    %v10867 = vld [vmem:[%s10851 + $0x78] sm:$0xff]
    %v10868 = vld [vmem:[%s10851 + $0x80] sm:$0xff]
    %v10869 = vld [vmem:[%s10851 + $0x88] sm:$0xff]
    %v10870 = vld [vmem:[%s10851 + $0x90] sm:$0xff]
    %v10871 = vld [vmem:[%s10851 + $0x98] sm:$0xff]
    %v10872 = vld [vmem:[%s10851 + $0xa0] sm:$0xff]
    %v10873 = vld [vmem:[%s10851 + $0xa8] sm:$0xff]
    %v10874 = vld [vmem:[%s10851 + $0xb0] sm:$0xff]
    %v10875 = vld [vmem:[%s10851 + $0xb8] sm:$0xff]
    %v10876 = vld [vmem:[%s10851 + $0xc0] sm:$0x11]
    %v10877 = vld [vmem:[%s10851 + $0xc8] sm:$0x11]
    %v10878 = vld [vmem:[%s10851 + $0xd0] sm:$0x11]
    %v10879 = vld [vmem:[%s10851 + $0xd8] sm:$0x11]
    %v10880 = vrot.slane %v10200, 2
    %v10909 = vunpack.c.l.b16 %v10852
    %v10910 = vunpack.c.h.b16 %v10852
    %v10911 = vunpack.c.l.b16 %v10853
    %v10912 = vunpack.c.h.b16 %v10853
    %v10913 = vunpack.c.l.b16 %v10854
    %v10914 = vunpack.c.h.b16 %v10854
    %v10915 = vunpack.c.l.b16 %v10855
    %v10916 = vunpack.c.h.b16 %v10855
    %v10917 = vunpack.c.l.b16 %v10856
    %v10918 = vunpack.c.h.b16 %v10856
    %v10919 = vunpack.c.l.b16 %v10857
    %v10920 = vunpack.c.h.b16 %v10857
    %v10921 = vunpack.c.l.b16 %v10858
    %v10922 = vunpack.c.h.b16 %v10858
    %v10923 = vunpack.c.l.b16 %v10859
    %v10924 = vunpack.c.h.b16 %v10859
    %v10925 = vunpack.c.l.b16 %v10860
    %v10926 = vunpack.c.h.b16 %v10860
    %v10927 = vunpack.c.l.b16 %v10861
    %v10928 = vunpack.c.h.b16 %v10861
    %v10929 = vunpack.c.l.b16 %v10862
    %v10930 = vunpack.c.h.b16 %v10862
    %v10931 = vunpack.c.l.b16 %v10863
    %v10932 = vunpack.c.h.b16 %v10863
    %v10933 = vunpack.c.l.b16 %v10864
    %v10934 = vunpack.c.h.b16 %v10864
    %v10935 = vunpack.c.l.b16 %v10865
    %v10936 = vunpack.c.h.b16 %v10865
    %v10937 = vunpack.c.l.b16 %v10866
    %v10938 = vunpack.c.h.b16 %v10866
    %v10939 = vunpack.c.l.b16 %v10867
    %v10940 = vunpack.c.h.b16 %v10867
    %v10941 = vunpack.c.l.b16 %v10868
    %v10942 = vunpack.c.h.b16 %v10868
    %v10943 = vunpack.c.l.b16 %v10869
    %v10944 = vunpack.c.h.b16 %v10869
    %v10945 = vunpack.c.l.b16 %v10870
    %v10946 = vunpack.c.h.b16 %v10870
    %v10947 = vunpack.c.l.b16 %v10871
    %v10948 = vunpack.c.h.b16 %v10871
    %v10949 = vunpack.c.l.b16 %v10872
    %v10950 = vunpack.c.h.b16 %v10872
    %v10951 = vunpack.c.l.b16 %v10873
    %v10952 = vunpack.c.h.b16 %v10873
    %v10953 = vunpack.c.l.b16 %v10874
    %v10954 = vunpack.c.h.b16 %v10874
    %v10955 = vunpack.c.l.b16 %v10875
    %v10956 = vunpack.c.h.b16 %v10875
    %v10957 = vunpack.c.l.b16 %v10876
    %v10958 = vunpack.c.h.b16 %v10876
    %v10959 = vunpack.c.l.b16 %v10877
    %v10960 = vunpack.c.h.b16 %v10877
    %v10961 = vunpack.c.l.b16 %v10878
    %v10962 = vunpack.c.h.b16 %v10878
    %v10963 = vunpack.c.l.b16 %v10879
    %v10964 = vunpack.c.h.b16 %v10879
    %v10965 = vpack.c.b16 %v10917, %v10909
    %v10966 = vpack.c.b16 %v10918, %v10910
    %v10967 = vpack.c.b16 %v10919, %v10911
    %v10968 = vpack.c.b16 %v10920, %v10912
    %v10969 = vpack.c.b16 %v10921, %v10913
    %v10970 = vpack.c.b16 %v10922, %v10914
    %v10971 = vpack.c.b16 %v10923, %v10915
    %v10972 = vpack.c.b16 %v10924, %v10916
    %v10973 = vpack.c.b16 %v10933, %v10925
    %v10974 = vpack.c.b16 %v10934, %v10926
    %v10975 = vpack.c.b16 %v10935, %v10927
    %v10976 = vpack.c.b16 %v10936, %v10928
    %v10977 = vpack.c.b16 %v10937, %v10929
    %v10978 = vpack.c.b16 %v10938, %v10930
    %v10979 = vpack.c.b16 %v10939, %v10931
    %v10980 = vpack.c.b16 %v10940, %v10932
    %v10981 = vpack.c.b16 %v10949, %v10941
    %v10982 = vpack.c.b16 %v10950, %v10942
    %v10983 = vpack.c.b16 %v10951, %v10943
    %v10984 = vpack.c.b16 %v10952, %v10944
    %v10985 = vpack.c.b16 %v10953, %v10945
    %v10986 = vpack.c.b16 %v10954, %v10946
    %v10987 = vpack.c.b16 %v10955, %v10947
    %v10988 = vpack.c.b16 %v10956, %v10948
    %v10989 = vpack.c.b16 %v10957, %v10957
    %v10990 = vpack.c.b16 %v10958, %v10958
    %v10991 = vpack.c.b16 %v10959, %v10959
    %v10992 = vpack.c.b16 %v10960, %v10960
    %v10993 = vpack.c.b16 %v10961, %v10961
    %v10994 = vpack.c.b16 %v10962, %v10962
    %v10995 = vpack.c.b16 %v10963, %v10963
    %v10996 = vpack.c.b16 %v10964, %v10964
    %v11022 = vsel %vm3855, %v10880, 0
    %v11025 = vsel %vm708, %v10989, 0
    %v11028 = vsel %vm708, %v10990, 0
    %v11031 = vsel %vm708, %v10991, 0
    %v11034 = vsel %vm708, %v10992, 0
    %v11037 = vsel %vm708, %v10993, 0
    %v11040 = vsel %vm708, %v10994, 0
    %v11043 = vsel %vm708, %v10995, 0
    %v11046 = vsel %vm708, %v10996, 0
    %11048 = vmatpush.bf16.msra.mxu0 0
    %11049 = vmatpush.bf16.msra.mxu0 0
    %11050 = vmatpush.bf16.msra.mxu0 0
    %11051 = vmatpush.bf16.msra.mxu0 0
    %11052 = vmatpush.bf16.msra.mxu0 %v11025
    %11053 = vmatpush.bf16.msra.mxu0 %v10981
    %11054 = vmatpush.bf16.msra.mxu0 %v10973
    %11055 = vmatpush.bf16.msra.mxu0 %v10965
    %11056 = vmatmul.bf16.gmra.mxu0 %v11022
    %v11057 = vpop.f32.mrf.mxu0
    %v11058 = vadd.f32 0.0, %v11057
    %v11059 = vpop.f32.mrf.mxu0
    %11060 = vdwg.mxu0
    %11061 = vmatpush.bf16.msra.mxu0 0
    %11062 = vmatpush.bf16.msra.mxu0 0
    %11063 = vmatpush.bf16.msra.mxu0 0
    %11064 = vmatpush.bf16.msra.mxu0 0
    %11065 = vmatpush.bf16.msra.mxu0 %v11028
    %11066 = vmatpush.bf16.msra.mxu0 %v10982
    %11067 = vmatpush.bf16.msra.mxu0 %v10974
    %11068 = vmatpush.bf16.msra.mxu0 %v10966
    %11069 = vmatmul.bf16.gmra.mxu0 %v11022
    %v11070 = vpop.f32.mrf.mxu0
    %v11071 = vadd.f32 0.0, %v11070
    %v11072 = vpop.f32.mrf.mxu0
    %11073 = vdwg.mxu0
    %11074 = vmatpush.bf16.msra.mxu0 0
    %11075 = vmatpush.bf16.msra.mxu0 0
    %11076 = vmatpush.bf16.msra.mxu0 0
    %11077 = vmatpush.bf16.msra.mxu0 0
    %11078 = vmatpush.bf16.msra.mxu0 %v11031
    %11079 = vmatpush.bf16.msra.mxu0 %v10983
    %11080 = vmatpush.bf16.msra.mxu0 %v10975
    %11081 = vmatpush.bf16.msra.mxu0 %v10967
    %11082 = vmatmul.bf16.gmra.mxu0 %v11022
    %v11083 = vpop.f32.mrf.mxu0
    %v11084 = vadd.f32 0.0, %v11083
    %v11085 = vpop.f32.mrf.mxu0
    %11086 = vdwg.mxu0
    %11087 = vmatpush.bf16.msra.mxu0 0
    %11088 = vmatpush.bf16.msra.mxu0 0
    %11089 = vmatpush.bf16.msra.mxu0 0
    %11090 = vmatpush.bf16.msra.mxu0 0
    %11091 = vmatpush.bf16.msra.mxu0 %v11034
    %11092 = vmatpush.bf16.msra.mxu0 %v10984
    %11093 = vmatpush.bf16.msra.mxu0 %v10976
    %11094 = vmatpush.bf16.msra.mxu0 %v10968
    %11095 = vmatmul.bf16.gmra.mxu0 %v11022
    %v11096 = vpop.f32.mrf.mxu0
    %v11097 = vadd.f32 0.0, %v11096
    %v11098 = vpop.f32.mrf.mxu0
    %11099 = vdwg.mxu0
    %11100 = vmatpush.bf16.msra.mxu0 0
    %11101 = vmatpush.bf16.msra.mxu0 0
    %11102 = vmatpush.bf16.msra.mxu0 0
    %11103 = vmatpush.bf16.msra.mxu0 0
    %11104 = vmatpush.bf16.msra.mxu0 %v11037
    %11105 = vmatpush.bf16.msra.mxu0 %v10985
    %11106 = vmatpush.bf16.msra.mxu0 %v10977
    %11107 = vmatpush.bf16.msra.mxu0 %v10969
    %11108 = vmatmul.bf16.gmra.mxu0 %v11022
    %v11109 = vpop.f32.mrf.mxu0
    %v11110 = vadd.f32 0.0, %v11109
    %v11111 = vpop.f32.mrf.mxu0
    %11112 = vdwg.mxu0
    %11113 = vmatpush.bf16.msra.mxu0 0
    %11114 = vmatpush.bf16.msra.mxu0 0
    %11115 = vmatpush.bf16.msra.mxu0 0
    %11116 = vmatpush.bf16.msra.mxu0 0
    %11117 = vmatpush.bf16.msra.mxu0 %v11040
    %11118 = vmatpush.bf16.msra.mxu0 %v10986
    %11119 = vmatpush.bf16.msra.mxu0 %v10978
    %11120 = vmatpush.bf16.msra.mxu0 %v10970
    %11121 = vmatmul.bf16.gmra.mxu0 %v11022
    %v11122 = vpop.f32.mrf.mxu0
    %v11123 = vadd.f32 0.0, %v11122
    %v11124 = vpop.f32.mrf.mxu0
    %11125 = vdwg.mxu0
    %11126 = vmatpush.bf16.msra.mxu0 0
    %11127 = vmatpush.bf16.msra.mxu0 0
    %11128 = vmatpush.bf16.msra.mxu0 0
    %11129 = vmatpush.bf16.msra.mxu0 0
    %11130 = vmatpush.bf16.msra.mxu0 %v11043
    %11131 = vmatpush.bf16.msra.mxu0 %v10987
    %11132 = vmatpush.bf16.msra.mxu0 %v10979
    %11133 = vmatpush.bf16.msra.mxu0 %v10971
    %11134 = vmatmul.bf16.gmra.mxu0 %v11022
    %v11135 = vpop.f32.mrf.mxu0
    %v11136 = vadd.f32 0.0, %v11135
    %v11137 = vpop.f32.mrf.mxu0
    %11138 = vdwg.mxu0
    %11139 = vmatpush.bf16.msra.mxu0 0
    %11140 = vmatpush.bf16.msra.mxu0 0
    %11141 = vmatpush.bf16.msra.mxu0 0
    %11142 = vmatpush.bf16.msra.mxu0 0
    %11143 = vmatpush.bf16.msra.mxu0 %v11046
    %11144 = vmatpush.bf16.msra.mxu0 %v10988
    %11145 = vmatpush.bf16.msra.mxu0 %v10980
    %11146 = vmatpush.bf16.msra.mxu0 %v10972
    %11147 = vmatmul.bf16.gmra.mxu0 %v11022
    %v11148 = vpop.f32.mrf.mxu0
    %v11149 = vadd.f32 0.0, %v11148
    %v11150 = vpop.f32.mrf.mxu0
    %11151 = vdwg.mxu0
    %v11160 = vrot.slane %v11071, 7
    %v11161 = vrot.slane %v11084, 6
    %v11162 = vrot.slane %v11097, 5
    %v11163 = vrot.slane %v11110, 4
    %v11164 = vrot.slane %v11123, 3
    %v11165 = vrot.slane %v11136, 2
    %v11166 = vrot.slane %v11149, 1
    %v11167 = vsel %vm708, %v11058, %v11160
    %v11168 = vsel %vm4003, %v11161, %v11162
    %v11169 = vsel %vm2497, %v11167, %v11168
    %v11170 = vsel %vm4006, %v11163, %v11164
    %v11171 = vsel %vm4008, %v11165, %v11166
    %v11172 = vsel %vm4010, %v11170, %v11171
    %v11173 = vsel %vm3120, %v11169, %v11172
    %v11175 = vadd.f32 %v10850, %v11173
    %s11176 = scalar_lea.vmem [#allocation2], 5152
    %v11177 = vld [vmem:[%s11176] sm:$0xff]
    %v11178 = vld [vmem:[%s11176 + $0x8] sm:$0xff]
    %v11179 = vld [vmem:[%s11176 + $0x10] sm:$0xff]
    %v11180 = vld [vmem:[%s11176 + $0x18] sm:$0xff]
    %v11181 = vld [vmem:[%s11176 + $0x20] sm:$0xff]
    %v11182 = vld [vmem:[%s11176 + $0x28] sm:$0xff]
    %v11183 = vld [vmem:[%s11176 + $0x30] sm:$0xff]
    %v11184 = vld [vmem:[%s11176 + $0x38] sm:$0xff]
    %v11185 = vld [vmem:[%s11176 + $0x40] sm:$0xff]
    %v11186 = vld [vmem:[%s11176 + $0x48] sm:$0xff]
    %v11187 = vld [vmem:[%s11176 + $0x50] sm:$0xff]
    %v11188 = vld [vmem:[%s11176 + $0x58] sm:$0xff]
    %v11189 = vld [vmem:[%s11176 + $0x60] sm:$0xff]
    %v11190 = vld [vmem:[%s11176 + $0x68] sm:$0xff]
    %v11191 = vld [vmem:[%s11176 + $0x70] sm:$0xff]
    %v11192 = vld [vmem:[%s11176 + $0x78] sm:$0xff]
    %v11193 = vld [vmem:[%s11176 + $0x80] sm:$0xff]
    %v11194 = vld [vmem:[%s11176 + $0x88] sm:$0xff]
    %v11195 = vld [vmem:[%s11176 + $0x90] sm:$0xff]
    %v11196 = vld [vmem:[%s11176 + $0x98] sm:$0xff]
    %v11197 = vld [vmem:[%s11176 + $0xa0] sm:$0xff]
    %v11198 = vld [vmem:[%s11176 + $0xa8] sm:$0xff]
    %v11199 = vld [vmem:[%s11176 + $0xb0] sm:$0xff]
    %v11200 = vld [vmem:[%s11176 + $0xb8] sm:$0xff]
    %v11201 = vld [vmem:[%s11176 + $0xc0] sm:$0x11]
    %v11202 = vld [vmem:[%s11176 + $0xc8] sm:$0x11]
    %v11203 = vld [vmem:[%s11176 + $0xd0] sm:$0x11]
    %v11204 = vld [vmem:[%s11176 + $0xd8] sm:$0x11]
    %v11205 = vrot.slane %v10200, 3
    %v11234 = vunpack.c.l.b16 %v11177
    %v11235 = vunpack.c.h.b16 %v11177
    %v11236 = vunpack.c.l.b16 %v11178
    %v11237 = vunpack.c.h.b16 %v11178
    %v11238 = vunpack.c.l.b16 %v11179
    %v11239 = vunpack.c.h.b16 %v11179
    %v11240 = vunpack.c.l.b16 %v11180
    %v11241 = vunpack.c.h.b16 %v11180
    %v11242 = vunpack.c.l.b16 %v11181
    %v11243 = vunpack.c.h.b16 %v11181
    %v11244 = vunpack.c.l.b16 %v11182
    %v11245 = vunpack.c.h.b16 %v11182
    %v11246 = vunpack.c.l.b16 %v11183
    %v11247 = vunpack.c.h.b16 %v11183
    %v11248 = vunpack.c.l.b16 %v11184
    %v11249 = vunpack.c.h.b16 %v11184
    %v11250 = vunpack.c.l.b16 %v11185
    %v11251 = vunpack.c.h.b16 %v11185
    %v11252 = vunpack.c.l.b16 %v11186
    %v11253 = vunpack.c.h.b16 %v11186
    %v11254 = vunpack.c.l.b16 %v11187
    %v11255 = vunpack.c.h.b16 %v11187
    %v11256 = vunpack.c.l.b16 %v11188
    %v11257 = vunpack.c.h.b16 %v11188
    %v11258 = vunpack.c.l.b16 %v11189
    %v11259 = vunpack.c.h.b16 %v11189
    %v11260 = vunpack.c.l.b16 %v11190
    %v11261 = vunpack.c.h.b16 %v11190
    %v11262 = vunpack.c.l.b16 %v11191
    %v11263 = vunpack.c.h.b16 %v11191
    %v11264 = vunpack.c.l.b16 %v11192
    %v11265 = vunpack.c.h.b16 %v11192
    %v11266 = vunpack.c.l.b16 %v11193
    %v11267 = vunpack.c.h.b16 %v11193
    %v11268 = vunpack.c.l.b16 %v11194
    %v11269 = vunpack.c.h.b16 %v11194
    %v11270 = vunpack.c.l.b16 %v11195
    %v11271 = vunpack.c.h.b16 %v11195
    %v11272 = vunpack.c.l.b16 %v11196
    %v11273 = vunpack.c.h.b16 %v11196
    %v11274 = vunpack.c.l.b16 %v11197
    %v11275 = vunpack.c.h.b16 %v11197
    %v11276 = vunpack.c.l.b16 %v11198
    %v11277 = vunpack.c.h.b16 %v11198
    %v11278 = vunpack.c.l.b16 %v11199
    %v11279 = vunpack.c.h.b16 %v11199
    %v11280 = vunpack.c.l.b16 %v11200
    %v11281 = vunpack.c.h.b16 %v11200
    %v11282 = vunpack.c.l.b16 %v11201
    %v11283 = vunpack.c.h.b16 %v11201
    %v11284 = vunpack.c.l.b16 %v11202
    %v11285 = vunpack.c.h.b16 %v11202
    %v11286 = vunpack.c.l.b16 %v11203
    %v11287 = vunpack.c.h.b16 %v11203
    %v11288 = vunpack.c.l.b16 %v11204
    %v11289 = vunpack.c.h.b16 %v11204
    %v11290 = vpack.c.b16 %v11242, %v11234
    %v11291 = vpack.c.b16 %v11243, %v11235
    %v11292 = vpack.c.b16 %v11244, %v11236
    %v11293 = vpack.c.b16 %v11245, %v11237
    %v11294 = vpack.c.b16 %v11246, %v11238
    %v11295 = vpack.c.b16 %v11247, %v11239
    %v11296 = vpack.c.b16 %v11248, %v11240
    %v11297 = vpack.c.b16 %v11249, %v11241
    %v11298 = vpack.c.b16 %v11258, %v11250
    %v11299 = vpack.c.b16 %v11259, %v11251
    %v11300 = vpack.c.b16 %v11260, %v11252
    %v11301 = vpack.c.b16 %v11261, %v11253
    %v11302 = vpack.c.b16 %v11262, %v11254
    %v11303 = vpack.c.b16 %v11263, %v11255
    %v11304 = vpack.c.b16 %v11264, %v11256
    %v11305 = vpack.c.b16 %v11265, %v11257
    %v11306 = vpack.c.b16 %v11274, %v11266
    %v11307 = vpack.c.b16 %v11275, %v11267
    %v11308 = vpack.c.b16 %v11276, %v11268
    %v11309 = vpack.c.b16 %v11277, %v11269
    %v11310 = vpack.c.b16 %v11278, %v11270
    %v11311 = vpack.c.b16 %v11279, %v11271
    %v11312 = vpack.c.b16 %v11280, %v11272
    %v11313 = vpack.c.b16 %v11281, %v11273
    %v11314 = vpack.c.b16 %v11282, %v11282
    %v11315 = vpack.c.b16 %v11283, %v11283
    %v11316 = vpack.c.b16 %v11284, %v11284
    %v11317 = vpack.c.b16 %v11285, %v11285
    %v11318 = vpack.c.b16 %v11286, %v11286
    %v11319 = vpack.c.b16 %v11287, %v11287
    %v11320 = vpack.c.b16 %v11288, %v11288
    %v11321 = vpack.c.b16 %v11289, %v11289
    %v11347 = vsel %vm3855, %v11205, 0
    %v11350 = vsel %vm708, %v11314, 0
    %v11353 = vsel %vm708, %v11315, 0
    %v11356 = vsel %vm708, %v11316, 0
    %v11359 = vsel %vm708, %v11317, 0
    %v11362 = vsel %vm708, %v11318, 0
    %v11365 = vsel %vm708, %v11319, 0
    %v11368 = vsel %vm708, %v11320, 0
    %v11371 = vsel %vm708, %v11321, 0
    %11373 = vmatpush.bf16.msra.mxu0 0
    %11374 = vmatpush.bf16.msra.mxu0 0
    %11375 = vmatpush.bf16.msra.mxu0 0
    %11376 = vmatpush.bf16.msra.mxu0 0
    %11377 = vmatpush.bf16.msra.mxu0 %v11350
    %11378 = vmatpush.bf16.msra.mxu0 %v11306
    %11379 = vmatpush.bf16.msra.mxu0 %v11298
    %11380 = vmatpush.bf16.msra.mxu0 %v11290
    %11381 = vmatmul.bf16.gmra.mxu0 %v11347
    %v11382 = vpop.f32.mrf.mxu0
    %v11383 = vadd.f32 0.0, %v11382
    %v11384 = vpop.f32.mrf.mxu0
    %11385 = vdwg.mxu0
    %11386 = vmatpush.bf16.msra.mxu0 0
    %11387 = vmatpush.bf16.msra.mxu0 0
    %11388 = vmatpush.bf16.msra.mxu0 0
    %11389 = vmatpush.bf16.msra.mxu0 0
    %11390 = vmatpush.bf16.msra.mxu0 %v11353
    %11391 = vmatpush.bf16.msra.mxu0 %v11307
    %11392 = vmatpush.bf16.msra.mxu0 %v11299
    %11393 = vmatpush.bf16.msra.mxu0 %v11291
    %11394 = vmatmul.bf16.gmra.mxu0 %v11347
    %v11395 = vpop.f32.mrf.mxu0
    %v11396 = vadd.f32 0.0, %v11395
    %v11397 = vpop.f32.mrf.mxu0
    %11398 = vdwg.mxu0
    %11399 = vmatpush.bf16.msra.mxu0 0
    %11400 = vmatpush.bf16.msra.mxu0 0
    %11401 = vmatpush.bf16.msra.mxu0 0
    %11402 = vmatpush.bf16.msra.mxu0 0
    %11403 = vmatpush.bf16.msra.mxu0 %v11356
    %11404 = vmatpush.bf16.msra.mxu0 %v11308
    %11405 = vmatpush.bf16.msra.mxu0 %v11300
    %11406 = vmatpush.bf16.msra.mxu0 %v11292
    %11407 = vmatmul.bf16.gmra.mxu0 %v11347
    %v11408 = vpop.f32.mrf.mxu0
    %v11409 = vadd.f32 0.0, %v11408
    %v11410 = vpop.f32.mrf.mxu0
    %11411 = vdwg.mxu0
    %11412 = vmatpush.bf16.msra.mxu0 0
    %11413 = vmatpush.bf16.msra.mxu0 0
    %11414 = vmatpush.bf16.msra.mxu0 0
    %11415 = vmatpush.bf16.msra.mxu0 0
    %11416 = vmatpush.bf16.msra.mxu0 %v11359
    %11417 = vmatpush.bf16.msra.mxu0 %v11309
    %11418 = vmatpush.bf16.msra.mxu0 %v11301
    %11419 = vmatpush.bf16.msra.mxu0 %v11293
    %11420 = vmatmul.bf16.gmra.mxu0 %v11347
    %v11421 = vpop.f32.mrf.mxu0
    %v11422 = vadd.f32 0.0, %v11421
    %v11423 = vpop.f32.mrf.mxu0
    %11424 = vdwg.mxu0
    %11425 = vmatpush.bf16.msra.mxu0 0
    %11426 = vmatpush.bf16.msra.mxu0 0
    %11427 = vmatpush.bf16.msra.mxu0 0
    %11428 = vmatpush.bf16.msra.mxu0 0
    %11429 = vmatpush.bf16.msra.mxu0 %v11362
    %11430 = vmatpush.bf16.msra.mxu0 %v11310
    %11431 = vmatpush.bf16.msra.mxu0 %v11302
    %11432 = vmatpush.bf16.msra.mxu0 %v11294
    %11433 = vmatmul.bf16.gmra.mxu0 %v11347
    %v11434 = vpop.f32.mrf.mxu0
    %v11435 = vadd.f32 0.0, %v11434
    %v11436 = vpop.f32.mrf.mxu0
    %11437 = vdwg.mxu0
    %11438 = vmatpush.bf16.msra.mxu0 0
    %11439 = vmatpush.bf16.msra.mxu0 0
    %11440 = vmatpush.bf16.msra.mxu0 0
    %11441 = vmatpush.bf16.msra.mxu0 0
    %11442 = vmatpush.bf16.msra.mxu0 %v11365
    %11443 = vmatpush.bf16.msra.mxu0 %v11311
    %11444 = vmatpush.bf16.msra.mxu0 %v11303
    %11445 = vmatpush.bf16.msra.mxu0 %v11295
    %11446 = vmatmul.bf16.gmra.mxu0 %v11347
    %v11447 = vpop.f32.mrf.mxu0
    %v11448 = vadd.f32 0.0, %v11447
    %v11449 = vpop.f32.mrf.mxu0
    %11450 = vdwg.mxu0
    %11451 = vmatpush.bf16.msra.mxu0 0
    %11452 = vmatpush.bf16.msra.mxu0 0
    %11453 = vmatpush.bf16.msra.mxu0 0
    %11454 = vmatpush.bf16.msra.mxu0 0
    %11455 = vmatpush.bf16.msra.mxu0 %v11368
    %11456 = vmatpush.bf16.msra.mxu0 %v11312
    %11457 = vmatpush.bf16.msra.mxu0 %v11304
    %11458 = vmatpush.bf16.msra.mxu0 %v11296
    %11459 = vmatmul.bf16.gmra.mxu0 %v11347
    %v11460 = vpop.f32.mrf.mxu0
    %v11461 = vadd.f32 0.0, %v11460
    %v11462 = vpop.f32.mrf.mxu0
    %11463 = vdwg.mxu0
    %11464 = vmatpush.bf16.msra.mxu0 0
    %11465 = vmatpush.bf16.msra.mxu0 0
    %11466 = vmatpush.bf16.msra.mxu0 0
    %11467 = vmatpush.bf16.msra.mxu0 0
    %11468 = vmatpush.bf16.msra.mxu0 %v11371
    %11469 = vmatpush.bf16.msra.mxu0 %v11313
    %11470 = vmatpush.bf16.msra.mxu0 %v11305
    %11471 = vmatpush.bf16.msra.mxu0 %v11297
    %11472 = vmatmul.bf16.gmra.mxu0 %v11347
    %v11473 = vpop.f32.mrf.mxu0
    %v11474 = vadd.f32 0.0, %v11473
    %v11475 = vpop.f32.mrf.mxu0
    %11476 = vdwg.mxu0
    %v11485 = vrot.slane %v11396, 7
    %v11486 = vrot.slane %v11409, 6
    %v11487 = vrot.slane %v11422, 5
    %v11488 = vrot.slane %v11435, 4
    %v11489 = vrot.slane %v11448, 3
    %v11490 = vrot.slane %v11461, 2
    %v11491 = vrot.slane %v11474, 1
    %v11492 = vsel %vm708, %v11383, %v11485
    %v11493 = vsel %vm4003, %v11486, %v11487
    %v11494 = vsel %vm2497, %v11492, %v11493
    %v11495 = vsel %vm4006, %v11488, %v11489
    %v11496 = vsel %vm4008, %v11490, %v11491
    %v11497 = vsel %vm4010, %v11495, %v11496
    %v11498 = vsel %vm3120, %v11494, %v11497
    %v11500 = vadd.f32 %v11175, %v11498
    %v11501 = vpack.c.bf16 %v3679, %v3679
    %s11502 = scalar_lea.vmem [#allocation2], 5376
    %v11503 = vld [vmem:[%s11502] sm:$0xff]
    %v11504 = vld [vmem:[%s11502 + $0x8] sm:$0xff]
    %v11505 = vld [vmem:[%s11502 + $0x10] sm:$0xff]
    %v11506 = vld [vmem:[%s11502 + $0x18] sm:$0xff]
    %v11507 = vld [vmem:[%s11502 + $0x20] sm:$0xff]
    %v11508 = vld [vmem:[%s11502 + $0x28] sm:$0xff]
    %v11509 = vld [vmem:[%s11502 + $0x30] sm:$0xff]
    %v11510 = vld [vmem:[%s11502 + $0x38] sm:$0xff]
    %v11511 = vld [vmem:[%s11502 + $0x40] sm:$0xff]
    %v11512 = vld [vmem:[%s11502 + $0x48] sm:$0xff]
    %v11513 = vld [vmem:[%s11502 + $0x50] sm:$0xff]
    %v11514 = vld [vmem:[%s11502 + $0x58] sm:$0xff]
    %v11515 = vld [vmem:[%s11502 + $0x60] sm:$0xff]
    %v11516 = vld [vmem:[%s11502 + $0x68] sm:$0xff]
    %v11517 = vld [vmem:[%s11502 + $0x70] sm:$0xff]
    %v11518 = vld [vmem:[%s11502 + $0x78] sm:$0xff]
    %v11519 = vld [vmem:[%s11502 + $0x80] sm:$0xff]
    %v11520 = vld [vmem:[%s11502 + $0x88] sm:$0xff]
    %v11521 = vld [vmem:[%s11502 + $0x90] sm:$0xff]
    %v11522 = vld [vmem:[%s11502 + $0x98] sm:$0xff]
    %v11523 = vld [vmem:[%s11502 + $0xa0] sm:$0xff]
    %v11524 = vld [vmem:[%s11502 + $0xa8] sm:$0xff]
    %v11525 = vld [vmem:[%s11502 + $0xb0] sm:$0xff]
    %v11526 = vld [vmem:[%s11502 + $0xb8] sm:$0xff]
    %v11527 = vld [vmem:[%s11502 + $0xc0] sm:$0x11]
    %v11528 = vld [vmem:[%s11502 + $0xc8] sm:$0x11]
    %v11529 = vld [vmem:[%s11502 + $0xd0] sm:$0x11]
    %v11530 = vld [vmem:[%s11502 + $0xd8] sm:$0x11]
    %v11559 = vunpack.c.l.b16 %v11503
    %v11560 = vunpack.c.h.b16 %v11503
    %v11561 = vunpack.c.l.b16 %v11504
    %v11562 = vunpack.c.h.b16 %v11504
    %v11563 = vunpack.c.l.b16 %v11505
    %v11564 = vunpack.c.h.b16 %v11505
    %v11565 = vunpack.c.l.b16 %v11506
    %v11566 = vunpack.c.h.b16 %v11506
    %v11567 = vunpack.c.l.b16 %v11507
    %v11568 = vunpack.c.h.b16 %v11507
    %v11569 = vunpack.c.l.b16 %v11508
    %v11570 = vunpack.c.h.b16 %v11508
    %v11571 = vunpack.c.l.b16 %v11509
    %v11572 = vunpack.c.h.b16 %v11509
    %v11573 = vunpack.c.l.b16 %v11510
    %v11574 = vunpack.c.h.b16 %v11510
    %v11575 = vunpack.c.l.b16 %v11511
    %v11576 = vunpack.c.h.b16 %v11511
    %v11577 = vunpack.c.l.b16 %v11512
    %v11578 = vunpack.c.h.b16 %v11512
    %v11579 = vunpack.c.l.b16 %v11513
    %v11580 = vunpack.c.h.b16 %v11513
    %v11581 = vunpack.c.l.b16 %v11514
    %v11582 = vunpack.c.h.b16 %v11514
    %v11583 = vunpack.c.l.b16 %v11515
    %v11584 = vunpack.c.h.b16 %v11515
    %v11585 = vunpack.c.l.b16 %v11516
    %v11586 = vunpack.c.h.b16 %v11516
    %v11587 = vunpack.c.l.b16 %v11517
    %v11588 = vunpack.c.h.b16 %v11517
    %v11589 = vunpack.c.l.b16 %v11518
    %v11590 = vunpack.c.h.b16 %v11518
    %v11591 = vunpack.c.l.b16 %v11519
    %v11592 = vunpack.c.h.b16 %v11519
    %v11593 = vunpack.c.l.b16 %v11520
    %v11594 = vunpack.c.h.b16 %v11520
    %v11595 = vunpack.c.l.b16 %v11521
    %v11596 = vunpack.c.h.b16 %v11521
    %v11597 = vunpack.c.l.b16 %v11522
    %v11598 = vunpack.c.h.b16 %v11522
    %v11599 = vunpack.c.l.b16 %v11523
    %v11600 = vunpack.c.h.b16 %v11523
    %v11601 = vunpack.c.l.b16 %v11524
    %v11602 = vunpack.c.h.b16 %v11524
    %v11603 = vunpack.c.l.b16 %v11525
    %v11604 = vunpack.c.h.b16 %v11525
    %v11605 = vunpack.c.l.b16 %v11526
    %v11606 = vunpack.c.h.b16 %v11526
    %v11607 = vunpack.c.l.b16 %v11527
    %v11608 = vunpack.c.h.b16 %v11527
    %v11609 = vunpack.c.l.b16 %v11528
    %v11610 = vunpack.c.h.b16 %v11528
    %v11611 = vunpack.c.l.b16 %v11529
    %v11612 = vunpack.c.h.b16 %v11529
    %v11613 = vunpack.c.l.b16 %v11530
    %v11614 = vunpack.c.h.b16 %v11530
    %v11615 = vpack.c.b16 %v11567, %v11559
    %v11616 = vpack.c.b16 %v11568, %v11560
    %v11617 = vpack.c.b16 %v11569, %v11561
    %v11618 = vpack.c.b16 %v11570, %v11562
    %v11619 = vpack.c.b16 %v11571, %v11563
    %v11620 = vpack.c.b16 %v11572, %v11564
    %v11621 = vpack.c.b16 %v11573, %v11565
    %v11622 = vpack.c.b16 %v11574, %v11566
    %v11623 = vpack.c.b16 %v11583, %v11575
    %v11624 = vpack.c.b16 %v11584, %v11576
    %v11625 = vpack.c.b16 %v11585, %v11577
    %v11626 = vpack.c.b16 %v11586, %v11578
    %v11627 = vpack.c.b16 %v11587, %v11579
    %v11628 = vpack.c.b16 %v11588, %v11580
    %v11629 = vpack.c.b16 %v11589, %v11581
    %v11630 = vpack.c.b16 %v11590, %v11582
    %v11631 = vpack.c.b16 %v11599, %v11591
    %v11632 = vpack.c.b16 %v11600, %v11592
    %v11633 = vpack.c.b16 %v11601, %v11593
    %v11634 = vpack.c.b16 %v11602, %v11594
    %v11635 = vpack.c.b16 %v11603, %v11595
    %v11636 = vpack.c.b16 %v11604, %v11596
    %v11637 = vpack.c.b16 %v11605, %v11597
    %v11638 = vpack.c.b16 %v11606, %v11598
    %v11639 = vpack.c.b16 %v11607, %v11607
    %v11640 = vpack.c.b16 %v11608, %v11608
    %v11641 = vpack.c.b16 %v11609, %v11609
    %v11642 = vpack.c.b16 %v11610, %v11610
    %v11643 = vpack.c.b16 %v11611, %v11611
    %v11644 = vpack.c.b16 %v11612, %v11612
    %v11645 = vpack.c.b16 %v11613, %v11613
    %v11646 = vpack.c.b16 %v11614, %v11614
    %v11672 = vsel %vm3855, %v11501, 0
    %v11675 = vsel %vm708, %v11639, 0
    %v11678 = vsel %vm708, %v11640, 0
    %v11681 = vsel %vm708, %v11641, 0
    %v11684 = vsel %vm708, %v11642, 0
    %v11687 = vsel %vm708, %v11643, 0
    %v11690 = vsel %vm708, %v11644, 0
    %v11693 = vsel %vm708, %v11645, 0
    %v11696 = vsel %vm708, %v11646, 0
    %11698 = vmatpush.bf16.msra.mxu0 0
    %11699 = vmatpush.bf16.msra.mxu0 0
    %11700 = vmatpush.bf16.msra.mxu0 0
    %11701 = vmatpush.bf16.msra.mxu0 0
    %11702 = vmatpush.bf16.msra.mxu0 %v11675
    %11703 = vmatpush.bf16.msra.mxu0 %v11631
    %11704 = vmatpush.bf16.msra.mxu0 %v11623
    %11705 = vmatpush.bf16.msra.mxu0 %v11615
    %11706 = vmatmul.bf16.gmra.mxu0 %v11672
    %v11707 = vpop.f32.mrf.mxu0
    %v11708 = vadd.f32 0.0, %v11707
    %v11709 = vpop.f32.mrf.mxu0
    %11710 = vdwg.mxu0
    %11711 = vmatpush.bf16.msra.mxu0 0
    %11712 = vmatpush.bf16.msra.mxu0 0
    %11713 = vmatpush.bf16.msra.mxu0 0
    %11714 = vmatpush.bf16.msra.mxu0 0
    %11715 = vmatpush.bf16.msra.mxu0 %v11678
    %11716 = vmatpush.bf16.msra.mxu0 %v11632
    %11717 = vmatpush.bf16.msra.mxu0 %v11624
    %11718 = vmatpush.bf16.msra.mxu0 %v11616
    %11719 = vmatmul.bf16.gmra.mxu0 %v11672
    %v11720 = vpop.f32.mrf.mxu0
    %v11721 = vadd.f32 0.0, %v11720
    %v11722 = vpop.f32.mrf.mxu0
    %11723 = vdwg.mxu0
    %11724 = vmatpush.bf16.msra.mxu0 0
    %11725 = vmatpush.bf16.msra.mxu0 0
    %11726 = vmatpush.bf16.msra.mxu0 0
    %11727 = vmatpush.bf16.msra.mxu0 0
    %11728 = vmatpush.bf16.msra.mxu0 %v11681
    %11729 = vmatpush.bf16.msra.mxu0 %v11633
    %11730 = vmatpush.bf16.msra.mxu0 %v11625
    %11731 = vmatpush.bf16.msra.mxu0 %v11617
    %11732 = vmatmul.bf16.gmra.mxu0 %v11672
    %v11733 = vpop.f32.mrf.mxu0
    %v11734 = vadd.f32 0.0, %v11733
    %v11735 = vpop.f32.mrf.mxu0
    %11736 = vdwg.mxu0
    %11737 = vmatpush.bf16.msra.mxu0 0
    %11738 = vmatpush.bf16.msra.mxu0 0
    %11739 = vmatpush.bf16.msra.mxu0 0
    %11740 = vmatpush.bf16.msra.mxu0 0
    %11741 = vmatpush.bf16.msra.mxu0 %v11684
    %11742 = vmatpush.bf16.msra.mxu0 %v11634
    %11743 = vmatpush.bf16.msra.mxu0 %v11626
    %11744 = vmatpush.bf16.msra.mxu0 %v11618
    %11745 = vmatmul.bf16.gmra.mxu0 %v11672
    %v11746 = vpop.f32.mrf.mxu0
    %v11747 = vadd.f32 0.0, %v11746
    %v11748 = vpop.f32.mrf.mxu0
    %11749 = vdwg.mxu0
    %11750 = vmatpush.bf16.msra.mxu0 0
    %11751 = vmatpush.bf16.msra.mxu0 0
    %11752 = vmatpush.bf16.msra.mxu0 0
    %11753 = vmatpush.bf16.msra.mxu0 0
    %11754 = vmatpush.bf16.msra.mxu0 %v11687
    %11755 = vmatpush.bf16.msra.mxu0 %v11635
    %11756 = vmatpush.bf16.msra.mxu0 %v11627
    %11757 = vmatpush.bf16.msra.mxu0 %v11619
    %11758 = vmatmul.bf16.gmra.mxu0 %v11672
    %v11759 = vpop.f32.mrf.mxu0
    %v11760 = vadd.f32 0.0, %v11759
    %v11761 = vpop.f32.mrf.mxu0
    %11762 = vdwg.mxu0
    %11763 = vmatpush.bf16.msra.mxu0 0
    %11764 = vmatpush.bf16.msra.mxu0 0
    %11765 = vmatpush.bf16.msra.mxu0 0
    %11766 = vmatpush.bf16.msra.mxu0 0
    %11767 = vmatpush.bf16.msra.mxu0 %v11690
    %11768 = vmatpush.bf16.msra.mxu0 %v11636
    %11769 = vmatpush.bf16.msra.mxu0 %v11628
    %11770 = vmatpush.bf16.msra.mxu0 %v11620
    %11771 = vmatmul.bf16.gmra.mxu0 %v11672
    %v11772 = vpop.f32.mrf.mxu0
    %v11773 = vadd.f32 0.0, %v11772
    %v11774 = vpop.f32.mrf.mxu0
    %11775 = vdwg.mxu0
    %11776 = vmatpush.bf16.msra.mxu0 0
    %11777 = vmatpush.bf16.msra.mxu0 0
    %11778 = vmatpush.bf16.msra.mxu0 0
    %11779 = vmatpush.bf16.msra.mxu0 0
    %11780 = vmatpush.bf16.msra.mxu0 %v11693
    %11781 = vmatpush.bf16.msra.mxu0 %v11637
    %11782 = vmatpush.bf16.msra.mxu0 %v11629
    %11783 = vmatpush.bf16.msra.mxu0 %v11621
    %11784 = vmatmul.bf16.gmra.mxu0 %v11672
    %v11785 = vpop.f32.mrf.mxu0
    %v11786 = vadd.f32 0.0, %v11785
    %v11787 = vpop.f32.mrf.mxu0
    %11788 = vdwg.mxu0
    %11789 = vmatpush.bf16.msra.mxu0 0
    %11790 = vmatpush.bf16.msra.mxu0 0
    %11791 = vmatpush.bf16.msra.mxu0 0
    %11792 = vmatpush.bf16.msra.mxu0 0
    %11793 = vmatpush.bf16.msra.mxu0 %v11696
    %11794 = vmatpush.bf16.msra.mxu0 %v11638
    %11795 = vmatpush.bf16.msra.mxu0 %v11630
    %11796 = vmatpush.bf16.msra.mxu0 %v11622
    %11797 = vmatmul.bf16.gmra.mxu0 %v11672
    %v11798 = vpop.f32.mrf.mxu0
    %v11799 = vadd.f32 0.0, %v11798
    %v11800 = vpop.f32.mrf.mxu0
    %11801 = vdwg.mxu0
    %v11810 = vrot.slane %v11721, 7
    %v11811 = vrot.slane %v11734, 6
    %v11812 = vrot.slane %v11747, 5
    %v11813 = vrot.slane %v11760, 4
    %v11814 = vrot.slane %v11773, 3
    %v11815 = vrot.slane %v11786, 2
    %v11816 = vrot.slane %v11799, 1
    %v11817 = vsel %vm708, %v11708, %v11810
    %v11818 = vsel %vm4003, %v11811, %v11812
    %v11819 = vsel %vm2497, %v11817, %v11818
    %v11820 = vsel %vm4006, %v11813, %v11814
    %v11821 = vsel %vm4008, %v11815, %v11816
    %v11822 = vsel %vm4010, %v11820, %v11821
    %v11823 = vsel %vm3120, %v11819, %v11822
    %v11825 = vadd.f32 %v11500, %v11823
    %v11826 = vmax.f32 %v11825, 0.0
    %s11827 = smul.u32 4, 128
    %s11828 = smul.u32 %s11827, 1
    %s11829 = sshll.u32 %s11828, 4
    %11830 = dma.done %s335, %s11829
    %v11832 = vperm.slane %v11826, 0
    %v11833 = vperm.slane %v11826, 1
    %v11834 = vperm.slane %v11826, 2
    %v11835 = vperm.slane %v11826, 3
    %v11836 = vperm.slane %v11826, 4
    %v11837 = vperm.slane %v11826, 5
    %v11838 = vperm.slane %v11826, 6
    %v11839 = vperm.slane %v11826, 7
    %v11848 = vpack.c.bf16 %v11832, %v11832
    %v11849 = vpack.c.bf16 %v11833, %v11833
    %v11850 = vpack.c.bf16 %v11834, %v11834
    %v11851 = vpack.c.bf16 %v11835, %v11835
    %v11852 = vpack.c.bf16 %v11836, %v11836
    %v11853 = vpack.c.bf16 %v11837, %v11837
    %v11854 = vpack.c.bf16 %v11838, %v11838
    %v11855 = vpack.c.bf16 %v11839, %v11839
    %v11856 = vld [vmem:[#allocation3] sm:$0xf]
    %v11857 = vld [vmem:[#allocation3 + $0x4] sm:$0xf]
    %v11858 = vld [vmem:[#allocation3 + $0x8] sm:$0xf]
    %v11859 = vld [vmem:[#allocation3 + $0xc] sm:$0xf]
    %v11860 = vld [vmem:[#allocation3 + $0x10] sm:$0xf]
    %v11861 = vld [vmem:[#allocation3 + $0x14] sm:$0xf]
    %v11862 = vld [vmem:[#allocation3 + $0x18] sm:$0xf]
    %v11863 = vld [vmem:[#allocation3 + $0x1c] sm:$0xf]
    %v11864 = vld [vmem:[#allocation3 + $0x20] sm:$0xf]
    %v11865 = vld [vmem:[#allocation3 + $0x24] sm:$0xf]
    %v11866 = vld [vmem:[#allocation3 + $0x28] sm:$0xf]
    %v11867 = vld [vmem:[#allocation3 + $0x2c] sm:$0xf]
    %v11868 = vld [vmem:[#allocation3 + $0x30] sm:$0xf]
    %v11869 = vld [vmem:[#allocation3 + $0x34] sm:$0xf]
    %v11870 = vld [vmem:[#allocation3 + $0x38] sm:$0xf]
    %v11871 = vld [vmem:[#allocation3 + $0x3c] sm:$0xf]
    %v11872 = vld [vmem:[#allocation3 + $0x40] sm:$0xf]
    %v11873 = vld [vmem:[#allocation3 + $0x44] sm:$0xf]
    %v11874 = vld [vmem:[#allocation3 + $0x48] sm:$0xf]
    %v11875 = vld [vmem:[#allocation3 + $0x4c] sm:$0xf]
    %v11876 = vld [vmem:[#allocation3 + $0x50] sm:$0xf]
    %v11877 = vld [vmem:[#allocation3 + $0x54] sm:$0xf]
    %v11878 = vld [vmem:[#allocation3 + $0x58] sm:$0xf]
    %v11879 = vld [vmem:[#allocation3 + $0x5c] sm:$0xf]
    %v11880 = vld [vmem:[#allocation3 + $0x60] sm:$0xf]
    %v11881 = vld [vmem:[#allocation3 + $0x64] sm:$0xf]
    %v11882 = vld [vmem:[#allocation3 + $0x68] sm:$0xf]
    %v11883 = vld [vmem:[#allocation3 + $0x6c] sm:$0xf]
    %v11884 = vld [vmem:[#allocation3 + $0x70] sm:$0xf]
    %v11885 = vld [vmem:[#allocation3 + $0x74] sm:$0xf]
    %v11886 = vld [vmem:[#allocation3 + $0x78] sm:$0xf]
    %v11887 = vld [vmem:[#allocation3 + $0x7c] sm:$0xf]
    %v11888 = vld [vmem:[#allocation3 + $0x80] sm:$0xf]
    %v11889 = vld [vmem:[#allocation3 + $0x84] sm:$0xf]
    %v11890 = vld [vmem:[#allocation3 + $0x88] sm:$0xf]
    %v11891 = vld [vmem:[#allocation3 + $0x8c] sm:$0xf]
    %v11892 = vld [vmem:[#allocation3 + $0x90] sm:$0xf]
    %v11893 = vld [vmem:[#allocation3 + $0x94] sm:$0xf]
    %v11894 = vld [vmem:[#allocation3 + $0x98] sm:$0xf]
    %v11895 = vld [vmem:[#allocation3 + $0x9c] sm:$0xf]
    %v11896 = vld [vmem:[#allocation3 + $0xa0] sm:$0xf]
    %v11897 = vld [vmem:[#allocation3 + $0xa4] sm:$0xf]
    %v11898 = vld [vmem:[#allocation3 + $0xa8] sm:$0xf]
    %v11899 = vld [vmem:[#allocation3 + $0xac] sm:$0xf]
    %v11900 = vld [vmem:[#allocation3 + $0xb0] sm:$0xf]
    %v11901 = vld [vmem:[#allocation3 + $0xb4] sm:$0xf]
    %v11902 = vld [vmem:[#allocation3 + $0xb8] sm:$0xf]
    %v11903 = vld [vmem:[#allocation3 + $0xbc] sm:$0xf]
    %v11904 = vld [vmem:[#allocation3 + $0xc0] sm:$0xf]
    %v11905 = vld [vmem:[#allocation3 + $0xc4] sm:$0xf]
    %v11906 = vld [vmem:[#allocation3 + $0xc8] sm:$0xf]
    %v11907 = vld [vmem:[#allocation3 + $0xcc] sm:$0xf]
    %v11908 = vld [vmem:[#allocation3 + $0xd0] sm:$0xf]
    %v11909 = vld [vmem:[#allocation3 + $0xd4] sm:$0xf]
    %v11910 = vld [vmem:[#allocation3 + $0xd8] sm:$0xf]
    %v11911 = vld [vmem:[#allocation3 + $0xdc] sm:$0xf]
    %v11912 = vld [vmem:[#allocation3 + $0xe0] sm:$0xf]
    %v11913 = vld [vmem:[#allocation3 + $0xe4] sm:$0xf]
    %v11914 = vld [vmem:[#allocation3 + $0xe8] sm:$0xf]
    %v11915 = vld [vmem:[#allocation3 + $0xec] sm:$0xf]
    %v11916 = vld [vmem:[#allocation3 + $0xf0] sm:$0xf]
    %v11917 = vld [vmem:[#allocation3 + $0xf4] sm:$0xf]
    %v11918 = vld [vmem:[#allocation3 + $0xf8] sm:$0xf]
    %v11919 = vld [vmem:[#allocation3 + $0xfc] sm:$0xf]
    %v11920 = vld [vmem:[#allocation3 + $0x100] sm:$0xf]
    %v11921 = vld [vmem:[#allocation3 + $0x104] sm:$0xf]
    %v11922 = vld [vmem:[#allocation3 + $0x108] sm:$0xf]
    %v11923 = vld [vmem:[#allocation3 + $0x10c] sm:$0xf]
    %v11924 = vld [vmem:[#allocation3 + $0x110] sm:$0xf]
    %v11925 = vld [vmem:[#allocation3 + $0x114] sm:$0xf]
    %v11926 = vld [vmem:[#allocation3 + $0x118] sm:$0xf]
    %v11927 = vld [vmem:[#allocation3 + $0x11c] sm:$0xf]
    %v11928 = vld [vmem:[#allocation3 + $0x120] sm:$0xf]
    %v11929 = vld [vmem:[#allocation3 + $0x124] sm:$0xf]
    %v11930 = vld [vmem:[#allocation3 + $0x128] sm:$0xf]
    %v11931 = vld [vmem:[#allocation3 + $0x12c] sm:$0xf]
    %v11932 = vld [vmem:[#allocation3 + $0x130] sm:$0xf]
    %v11933 = vld [vmem:[#allocation3 + $0x134] sm:$0xf]
    %v11934 = vld [vmem:[#allocation3 + $0x138] sm:$0xf]
    %v11935 = vld [vmem:[#allocation3 + $0x13c] sm:$0xf]
    %v11936 = vld [vmem:[#allocation3 + $0x140] sm:$0xf]
    %v11937 = vld [vmem:[#allocation3 + $0x144] sm:$0xf]
    %v11938 = vld [vmem:[#allocation3 + $0x148] sm:$0xf]
    %v11939 = vld [vmem:[#allocation3 + $0x14c] sm:$0xf]
    %v11940 = vld [vmem:[#allocation3 + $0x150] sm:$0xf]
    %v11941 = vld [vmem:[#allocation3 + $0x154] sm:$0xf]
    %v11942 = vld [vmem:[#allocation3 + $0x158] sm:$0xf]
    %v11943 = vld [vmem:[#allocation3 + $0x15c] sm:$0xf]
    %v11944 = vld [vmem:[#allocation3 + $0x160] sm:$0xf]
    %v11945 = vld [vmem:[#allocation3 + $0x164] sm:$0xf]
    %v11946 = vld [vmem:[#allocation3 + $0x168] sm:$0xf]
    %v11947 = vld [vmem:[#allocation3 + $0x16c] sm:$0xf]
    %v11948 = vld [vmem:[#allocation3 + $0x170] sm:$0xf]
    %v11949 = vld [vmem:[#allocation3 + $0x174] sm:$0xf]
    %v11950 = vld [vmem:[#allocation3 + $0x178] sm:$0xf]
    %v11951 = vld [vmem:[#allocation3 + $0x17c] sm:$0xf]
    %v11952 = vld [vmem:[#allocation3 + $0x180] sm:$0xf]
    %v11953 = vld [vmem:[#allocation3 + $0x184] sm:$0xf]
    %v11954 = vld [vmem:[#allocation3 + $0x188] sm:$0xf]
    %v11955 = vld [vmem:[#allocation3 + $0x18c] sm:$0xf]
    %v11956 = vld [vmem:[#allocation3 + $0x190] sm:$0xf]
    %v11957 = vld [vmem:[#allocation3 + $0x194] sm:$0xf]
    %v11958 = vld [vmem:[#allocation3 + $0x198] sm:$0xf]
    %v11959 = vld [vmem:[#allocation3 + $0x19c] sm:$0xf]
    %v11960 = vld [vmem:[#allocation3 + $0x1a0] sm:$0xf]
    %v11961 = vld [vmem:[#allocation3 + $0x1a4] sm:$0xf]
    %v11962 = vld [vmem:[#allocation3 + $0x1a8] sm:$0xf]
    %v11963 = vld [vmem:[#allocation3 + $0x1ac] sm:$0xf]
    %v11964 = vld [vmem:[#allocation3 + $0x1b0] sm:$0xf]
    %v11965 = vld [vmem:[#allocation3 + $0x1b4] sm:$0xf]
    %v11966 = vld [vmem:[#allocation3 + $0x1b8] sm:$0xf]
    %v11967 = vld [vmem:[#allocation3 + $0x1bc] sm:$0xf]
    %v11968 = vld [vmem:[#allocation3 + $0x1c0] sm:$0xf]
    %v11969 = vld [vmem:[#allocation3 + $0x1c4] sm:$0xf]
    %v11970 = vld [vmem:[#allocation3 + $0x1c8] sm:$0xf]
    %v11971 = vld [vmem:[#allocation3 + $0x1cc] sm:$0xf]
    %v11972 = vld [vmem:[#allocation3 + $0x1d0] sm:$0xf]
    %v11973 = vld [vmem:[#allocation3 + $0x1d4] sm:$0xf]
    %v11974 = vld [vmem:[#allocation3 + $0x1d8] sm:$0xf]
    %v11975 = vld [vmem:[#allocation3 + $0x1dc] sm:$0xf]
    %v11976 = vld [vmem:[#allocation3 + $0x1e0] sm:$0xf]
    %v11977 = vld [vmem:[#allocation3 + $0x1e4] sm:$0xf]
    %v11978 = vld [vmem:[#allocation3 + $0x1e8] sm:$0xf]
    %v11979 = vld [vmem:[#allocation3 + $0x1ec] sm:$0xf]
    %v11980 = vld [vmem:[#allocation3 + $0x1f0] sm:$0xf]
    %v11981 = vld [vmem:[#allocation3 + $0x1f4] sm:$0xf]
    %v11982 = vld [vmem:[#allocation3 + $0x1f8] sm:$0xf]
    %v11983 = vld [vmem:[#allocation3 + $0x1fc] sm:$0xf]
    %v11984 = vld [vmem:[#allocation22] sm:$0x1]
    %v12113 = vunpack.c.l.b16 %v11856
    %v12114 = vunpack.c.l.b16 %v11857
    %v12115 = vunpack.c.l.b16 %v11858
    %v12116 = vunpack.c.l.b16 %v11859
    %v12117 = vunpack.c.l.b16 %v11860
    %v12118 = vunpack.c.l.b16 %v11861
    %v12119 = vunpack.c.l.b16 %v11862
    %v12120 = vunpack.c.l.b16 %v11863
    %v12121 = vunpack.c.l.b16 %v11864
    %v12122 = vunpack.c.l.b16 %v11865
    %v12123 = vunpack.c.l.b16 %v11866
    %v12124 = vunpack.c.l.b16 %v11867
    %v12125 = vunpack.c.l.b16 %v11868
    %v12126 = vunpack.c.l.b16 %v11869
    %v12127 = vunpack.c.l.b16 %v11870
    %v12128 = vunpack.c.l.b16 %v11871
    %v12129 = vunpack.c.l.b16 %v11872
    %v12130 = vunpack.c.l.b16 %v11873
    %v12131 = vunpack.c.l.b16 %v11874
    %v12132 = vunpack.c.l.b16 %v11875
    %v12133 = vunpack.c.l.b16 %v11876
    %v12134 = vunpack.c.l.b16 %v11877
    %v12135 = vunpack.c.l.b16 %v11878
    %v12136 = vunpack.c.l.b16 %v11879
    %v12137 = vunpack.c.l.b16 %v11880
    %v12138 = vunpack.c.l.b16 %v11881
    %v12139 = vunpack.c.l.b16 %v11882
    %v12140 = vunpack.c.l.b16 %v11883
    %v12141 = vunpack.c.l.b16 %v11884
    %v12142 = vunpack.c.l.b16 %v11885
    %v12143 = vunpack.c.l.b16 %v11886
    %v12144 = vunpack.c.l.b16 %v11887
    %v12145 = vunpack.c.l.b16 %v11888
    %v12146 = vunpack.c.l.b16 %v11889
    %v12147 = vunpack.c.l.b16 %v11890
    %v12148 = vunpack.c.l.b16 %v11891
    %v12149 = vunpack.c.l.b16 %v11892
    %v12150 = vunpack.c.l.b16 %v11893
    %v12151 = vunpack.c.l.b16 %v11894
    %v12152 = vunpack.c.l.b16 %v11895
    %v12153 = vunpack.c.l.b16 %v11896
    %v12154 = vunpack.c.l.b16 %v11897
    %v12155 = vunpack.c.l.b16 %v11898
    %v12156 = vunpack.c.l.b16 %v11899
    %v12157 = vunpack.c.l.b16 %v11900
    %v12158 = vunpack.c.l.b16 %v11901
    %v12159 = vunpack.c.l.b16 %v11902
    %v12160 = vunpack.c.l.b16 %v11903
    %v12161 = vunpack.c.l.b16 %v11904
    %v12162 = vunpack.c.l.b16 %v11905
    %v12163 = vunpack.c.l.b16 %v11906
    %v12164 = vunpack.c.l.b16 %v11907
    %v12165 = vunpack.c.l.b16 %v11908
    %v12166 = vunpack.c.l.b16 %v11909
    %v12167 = vunpack.c.l.b16 %v11910
    %v12168 = vunpack.c.l.b16 %v11911
    %v12169 = vunpack.c.l.b16 %v11912
    %v12170 = vunpack.c.l.b16 %v11913
    %v12171 = vunpack.c.l.b16 %v11914
    %v12172 = vunpack.c.l.b16 %v11915
    %v12173 = vunpack.c.l.b16 %v11916
    %v12174 = vunpack.c.l.b16 %v11917
    %v12175 = vunpack.c.l.b16 %v11918
    %v12176 = vunpack.c.l.b16 %v11919
    %v12177 = vunpack.c.l.b16 %v11920
    %v12178 = vunpack.c.l.b16 %v11921
    %v12179 = vunpack.c.l.b16 %v11922
    %v12180 = vunpack.c.l.b16 %v11923
    %v12181 = vunpack.c.l.b16 %v11924
    %v12182 = vunpack.c.l.b16 %v11925
    %v12183 = vunpack.c.l.b16 %v11926
    %v12184 = vunpack.c.l.b16 %v11927
    %v12185 = vunpack.c.l.b16 %v11928
    %v12186 = vunpack.c.l.b16 %v11929
    %v12187 = vunpack.c.l.b16 %v11930
    %v12188 = vunpack.c.l.b16 %v11931
    %v12189 = vunpack.c.l.b16 %v11932
    %v12190 = vunpack.c.l.b16 %v11933
    %v12191 = vunpack.c.l.b16 %v11934
    %v12192 = vunpack.c.l.b16 %v11935
    %v12193 = vunpack.c.l.b16 %v11936
    %v12194 = vunpack.c.l.b16 %v11937
    %v12195 = vunpack.c.l.b16 %v11938
    %v12196 = vunpack.c.l.b16 %v11939
    %v12197 = vunpack.c.l.b16 %v11940
    %v12198 = vunpack.c.l.b16 %v11941
    %v12199 = vunpack.c.l.b16 %v11942
    %v12200 = vunpack.c.l.b16 %v11943
    %v12201 = vunpack.c.l.b16 %v11944
    %v12202 = vunpack.c.l.b16 %v11945
    %v12203 = vunpack.c.l.b16 %v11946
    %v12204 = vunpack.c.l.b16 %v11947
    %v12205 = vunpack.c.l.b16 %v11948
    %v12206 = vunpack.c.l.b16 %v11949
    %v12207 = vunpack.c.l.b16 %v11950
    %v12208 = vunpack.c.l.b16 %v11951
    %v12209 = vunpack.c.l.b16 %v11952
    %v12210 = vunpack.c.l.b16 %v11953
    %v12211 = vunpack.c.l.b16 %v11954
    %v12212 = vunpack.c.l.b16 %v11955
    %v12213 = vunpack.c.l.b16 %v11956
    %v12214 = vunpack.c.l.b16 %v11957
    %v12215 = vunpack.c.l.b16 %v11958
    %v12216 = vunpack.c.l.b16 %v11959
    %v12217 = vunpack.c.l.b16 %v11960
    %v12218 = vunpack.c.l.b16 %v11961
    %v12219 = vunpack.c.l.b16 %v11962
    %v12220 = vunpack.c.l.b16 %v11963
    %v12221 = vunpack.c.l.b16 %v11964
    %v12222 = vunpack.c.l.b16 %v11965
    %v12223 = vunpack.c.l.b16 %v11966
    %v12224 = vunpack.c.l.b16 %v11967
    %v12225 = vunpack.c.l.b16 %v11968
    %v12226 = vunpack.c.l.b16 %v11969
    %v12227 = vunpack.c.l.b16 %v11970
    %v12228 = vunpack.c.l.b16 %v11971
    %v12229 = vunpack.c.l.b16 %v11972
    %v12230 = vunpack.c.l.b16 %v11973
    %v12231 = vunpack.c.l.b16 %v11974
    %v12232 = vunpack.c.l.b16 %v11975
    %v12233 = vunpack.c.l.b16 %v11976
    %v12234 = vunpack.c.l.b16 %v11977
    %v12235 = vunpack.c.l.b16 %v11978
    %v12236 = vunpack.c.l.b16 %v11979
    %v12237 = vunpack.c.l.b16 %v11980
    %v12238 = vunpack.c.l.b16 %v11981
    %v12239 = vunpack.c.l.b16 %v11982
    %v12240 = vunpack.c.l.b16 %v11983
    %v12241 = vpack.c.b16 %v12114, %v12113
    %v12242 = vpack.c.b16 %v12116, %v12115
    %v12243 = vpack.c.b16 %v12118, %v12117
    %v12244 = vpack.c.b16 %v12120, %v12119
    %v12245 = vpack.c.b16 %v12122, %v12121
    %v12246 = vpack.c.b16 %v12124, %v12123
    %v12247 = vpack.c.b16 %v12126, %v12125
    %v12248 = vpack.c.b16 %v12128, %v12127
    %v12249 = vpack.c.b16 %v12130, %v12129
    %v12250 = vpack.c.b16 %v12132, %v12131
    %v12251 = vpack.c.b16 %v12134, %v12133
    %v12252 = vpack.c.b16 %v12136, %v12135
    %v12253 = vpack.c.b16 %v12138, %v12137
    %v12254 = vpack.c.b16 %v12140, %v12139
    %v12255 = vpack.c.b16 %v12142, %v12141
    %v12256 = vpack.c.b16 %v12144, %v12143
    %v12257 = vpack.c.b16 %v12146, %v12145
    %v12258 = vpack.c.b16 %v12148, %v12147
    %v12259 = vpack.c.b16 %v12150, %v12149
    %v12260 = vpack.c.b16 %v12152, %v12151
    %v12261 = vpack.c.b16 %v12154, %v12153
    %v12262 = vpack.c.b16 %v12156, %v12155
    %v12263 = vpack.c.b16 %v12158, %v12157
    %v12264 = vpack.c.b16 %v12160, %v12159
    %v12265 = vpack.c.b16 %v12162, %v12161
    %v12266 = vpack.c.b16 %v12164, %v12163
    %v12267 = vpack.c.b16 %v12166, %v12165
    %v12268 = vpack.c.b16 %v12168, %v12167
    %v12269 = vpack.c.b16 %v12170, %v12169
    %v12270 = vpack.c.b16 %v12172, %v12171
    %v12271 = vpack.c.b16 %v12174, %v12173
    %v12272 = vpack.c.b16 %v12176, %v12175
    %v12273 = vpack.c.b16 %v12178, %v12177
    %v12274 = vpack.c.b16 %v12180, %v12179
    %v12275 = vpack.c.b16 %v12182, %v12181
    %v12276 = vpack.c.b16 %v12184, %v12183
    %v12277 = vpack.c.b16 %v12186, %v12185
    %v12278 = vpack.c.b16 %v12188, %v12187
    %v12279 = vpack.c.b16 %v12190, %v12189
    %v12280 = vpack.c.b16 %v12192, %v12191
    %v12281 = vpack.c.b16 %v12194, %v12193
    %v12282 = vpack.c.b16 %v12196, %v12195
    %v12283 = vpack.c.b16 %v12198, %v12197
    %v12284 = vpack.c.b16 %v12200, %v12199
    %v12285 = vpack.c.b16 %v12202, %v12201
    %v12286 = vpack.c.b16 %v12204, %v12203
    %v12287 = vpack.c.b16 %v12206, %v12205
    %v12288 = vpack.c.b16 %v12208, %v12207
    %v12289 = vpack.c.b16 %v12210, %v12209
    %v12290 = vpack.c.b16 %v12212, %v12211
    %v12291 = vpack.c.b16 %v12214, %v12213
    %v12292 = vpack.c.b16 %v12216, %v12215
    %v12293 = vpack.c.b16 %v12218, %v12217
    %v12294 = vpack.c.b16 %v12220, %v12219
    %v12295 = vpack.c.b16 %v12222, %v12221
    %v12296 = vpack.c.b16 %v12224, %v12223
    %v12297 = vpack.c.b16 %v12226, %v12225
    %v12298 = vpack.c.b16 %v12228, %v12227
    %v12299 = vpack.c.b16 %v12230, %v12229
    %v12300 = vpack.c.b16 %v12232, %v12231
    %v12301 = vpack.c.b16 %v12234, %v12233
    %v12302 = vpack.c.b16 %v12236, %v12235
    %v12303 = vpack.c.b16 %v12238, %v12237
    %v12304 = vpack.c.b16 %v12240, %v12239
    %12369 = vmatpush.bf16.msra.mxu0 %v12248
    %12370 = vmatpush.bf16.msra.mxu0 %v12247
    %12371 = vmatpush.bf16.msra.mxu0 %v12246
    %12372 = vmatpush.bf16.msra.mxu0 %v12245
    %12373 = vmatpush.bf16.msra.mxu0 %v12244
    %12374 = vmatpush.bf16.msra.mxu0 %v12243
    %12375 = vmatpush.bf16.msra.mxu0 %v12242
    %12376 = vmatpush.bf16.msra.mxu0 %v12241
    %12377 = vmatmul.bf16.gmra.mxu0 %v11848
    %v12378 = vpop.f32.mrf.mxu0
    %v12379 = vadd.f32 %v11984, %v12378
    %v12380 = vpop.f32.mrf.mxu0
    %12381 = vdwg.mxu0
    %12382 = vmatpush.bf16.msra.mxu0 %v12256
    %12383 = vmatpush.bf16.msra.mxu0 %v12255
    %12384 = vmatpush.bf16.msra.mxu0 %v12254
    %12385 = vmatpush.bf16.msra.mxu0 %v12253
    %12386 = vmatpush.bf16.msra.mxu0 %v12252
    %12387 = vmatpush.bf16.msra.mxu0 %v12251
    %12388 = vmatpush.bf16.msra.mxu0 %v12250
    %12389 = vmatpush.bf16.msra.mxu0 %v12249
    %12390 = vmatmul.bf16.gmra.mxu0 %v11849
    %v12391 = vpop.f32.mrf.mxu0
    %v12392 = vadd.f32 %v12379, %v12391
    %v12393 = vpop.f32.mrf.mxu0
    %12394 = vdwg.mxu0
    %12395 = vmatpush.bf16.msra.mxu0 %v12264
    %12396 = vmatpush.bf16.msra.mxu0 %v12263
    %12397 = vmatpush.bf16.msra.mxu0 %v12262
    %12398 = vmatpush.bf16.msra.mxu0 %v12261
    %12399 = vmatpush.bf16.msra.mxu0 %v12260
    %12400 = vmatpush.bf16.msra.mxu0 %v12259
    %12401 = vmatpush.bf16.msra.mxu0 %v12258
    %12402 = vmatpush.bf16.msra.mxu0 %v12257
    %12403 = vmatmul.bf16.gmra.mxu0 %v11850
    %v12404 = vpop.f32.mrf.mxu0
    %v12405 = vadd.f32 %v12392, %v12404
    %v12406 = vpop.f32.mrf.mxu0
    %12407 = vdwg.mxu0
    %12408 = vmatpush.bf16.msra.mxu0 %v12272
    %12409 = vmatpush.bf16.msra.mxu0 %v12271
    %12410 = vmatpush.bf16.msra.mxu0 %v12270
    %12411 = vmatpush.bf16.msra.mxu0 %v12269
    %12412 = vmatpush.bf16.msra.mxu0 %v12268
    %12413 = vmatpush.bf16.msra.mxu0 %v12267
    %12414 = vmatpush.bf16.msra.mxu0 %v12266
    %12415 = vmatpush.bf16.msra.mxu0 %v12265
    %12416 = vmatmul.bf16.gmra.mxu0 %v11851
    %v12417 = vpop.f32.mrf.mxu0
    %v12418 = vadd.f32 %v12405, %v12417
    %v12419 = vpop.f32.mrf.mxu0
    %12420 = vdwg.mxu0
    %12421 = vmatpush.bf16.msra.mxu0 %v12280
    %12422 = vmatpush.bf16.msra.mxu0 %v12279
    %12423 = vmatpush.bf16.msra.mxu0 %v12278
    %12424 = vmatpush.bf16.msra.mxu0 %v12277
    %12425 = vmatpush.bf16.msra.mxu0 %v12276
    %12426 = vmatpush.bf16.msra.mxu0 %v12275
    %12427 = vmatpush.bf16.msra.mxu0 %v12274
    %12428 = vmatpush.bf16.msra.mxu0 %v12273
    %12429 = vmatmul.bf16.gmra.mxu0 %v11852
    %v12430 = vpop.f32.mrf.mxu0
    %v12431 = vadd.f32 %v12418, %v12430
    %v12432 = vpop.f32.mrf.mxu0
    %12433 = vdwg.mxu0
    %12434 = vmatpush.bf16.msra.mxu0 %v12288
    %12435 = vmatpush.bf16.msra.mxu0 %v12287
    %12436 = vmatpush.bf16.msra.mxu0 %v12286
    %12437 = vmatpush.bf16.msra.mxu0 %v12285
    %12438 = vmatpush.bf16.msra.mxu0 %v12284
    %12439 = vmatpush.bf16.msra.mxu0 %v12283
    %12440 = vmatpush.bf16.msra.mxu0 %v12282
    %12441 = vmatpush.bf16.msra.mxu0 %v12281
    %12442 = vmatmul.bf16.gmra.mxu0 %v11853
    %v12443 = vpop.f32.mrf.mxu0
    %v12444 = vadd.f32 %v12431, %v12443
    %v12445 = vpop.f32.mrf.mxu0
    %12446 = vdwg.mxu0
    %12447 = vmatpush.bf16.msra.mxu0 %v12296
    %12448 = vmatpush.bf16.msra.mxu0 %v12295
    %12449 = vmatpush.bf16.msra.mxu0 %v12294
    %12450 = vmatpush.bf16.msra.mxu0 %v12293
    %12451 = vmatpush.bf16.msra.mxu0 %v12292
    %12452 = vmatpush.bf16.msra.mxu0 %v12291
    %12453 = vmatpush.bf16.msra.mxu0 %v12290
    %12454 = vmatpush.bf16.msra.mxu0 %v12289
    %12455 = vmatmul.bf16.gmra.mxu0 %v11854
    %v12456 = vpop.f32.mrf.mxu0
    %v12457 = vadd.f32 %v12444, %v12456
    %v12458 = vpop.f32.mrf.mxu0
    %12459 = vdwg.mxu0
    %12460 = vmatpush.bf16.msra.mxu0 %v12304
    %12461 = vmatpush.bf16.msra.mxu0 %v12303
    %12462 = vmatpush.bf16.msra.mxu0 %v12302
    %12463 = vmatpush.bf16.msra.mxu0 %v12301
    %12464 = vmatpush.bf16.msra.mxu0 %v12300
    %12465 = vmatpush.bf16.msra.mxu0 %v12299
    %12466 = vmatpush.bf16.msra.mxu0 %v12298
    %12467 = vmatpush.bf16.msra.mxu0 %v12297
    %12468 = vmatmul.bf16.gmra.mxu0 %v11855
    %v12469 = vpop.f32.mrf.mxu0
    %v12470 = vadd.f32 %v12457, %v12469
    %v12471 = vpop.f32.mrf.mxu0
    %12472 = vdwg.mxu0
    %v12473 = vmax.f32 %v12470, 0.0
    %v12474 = vpack.c.bf16 %v12473, %v12473
    %v12475 = vld [vmem:[#allocation24] sm:$0xf]
    %v12476 = vld [vmem:[#allocation24 + $0x4] sm:$0xf]
    %v12477 = vld [vmem:[#allocation24 + $0x8] sm:$0xf]
    %v12478 = vld [vmem:[#allocation24 + $0xc] sm:$0xf]
    %v12479 = vld [vmem:[#allocation24 + $0x10] sm:$0xf]
    %v12480 = vld [vmem:[#allocation24 + $0x14] sm:$0xf]
    %v12481 = vld [vmem:[#allocation24 + $0x18] sm:$0xf]
    %v12482 = vld [vmem:[#allocation24 + $0x1c] sm:$0xf]
    %v12483 = vld [vmem:[#allocation24 + $0x20] sm:$0xf]
    %v12484 = vld [vmem:[#allocation24 + $0x24] sm:$0xf]
    %v12485 = vld [vmem:[#allocation24 + $0x28] sm:$0xf]
    %v12486 = vld [vmem:[#allocation24 + $0x2c] sm:$0xf]
    %v12487 = vld [vmem:[#allocation24 + $0x30] sm:$0xf]
    %v12488 = vld [vmem:[#allocation24 + $0x34] sm:$0xf]
    %v12489 = vld [vmem:[#allocation24 + $0x38] sm:$0xf]
    %v12490 = vld [vmem:[#allocation24 + $0x3c] sm:$0xf]
    %v12491 = vld [vmem:[#allocation25] sm:$0x1]
    %v12508 = vunpack.c.l.b16 %v12475
    %v12509 = vunpack.c.l.b16 %v12476
    %v12510 = vunpack.c.l.b16 %v12477
    %v12511 = vunpack.c.l.b16 %v12478
    %v12512 = vunpack.c.l.b16 %v12479
    %v12513 = vunpack.c.l.b16 %v12480
    %v12514 = vunpack.c.l.b16 %v12481
    %v12515 = vunpack.c.l.b16 %v12482
    %v12516 = vunpack.c.l.b16 %v12483
    %v12517 = vunpack.c.l.b16 %v12484
    %v12518 = vunpack.c.l.b16 %v12485
    %v12519 = vunpack.c.l.b16 %v12486
    %v12520 = vunpack.c.l.b16 %v12487
    %v12521 = vunpack.c.l.b16 %v12488
    %v12522 = vunpack.c.l.b16 %v12489
    %v12523 = vunpack.c.l.b16 %v12490
    %v12524 = vpack.c.b16 %v12509, %v12508
    %v12525 = vpack.c.b16 %v12511, %v12510
    %v12526 = vpack.c.b16 %v12513, %v12512
    %v12527 = vpack.c.b16 %v12515, %v12514
    %v12528 = vpack.c.b16 %v12517, %v12516
    %v12529 = vpack.c.b16 %v12519, %v12518
    %v12530 = vpack.c.b16 %v12521, %v12520
    %v12531 = vpack.c.b16 %v12523, %v12522
    %12540 = vmatpush.bf16.msra.mxu0 %v12531
    %12541 = vmatpush.bf16.msra.mxu0 %v12530
    %12542 = vmatpush.bf16.msra.mxu0 %v12529
    %12543 = vmatpush.bf16.msra.mxu0 %v12528
    %12544 = vmatpush.bf16.msra.mxu0 %v12527
    %12545 = vmatpush.bf16.msra.mxu0 %v12526
    %12546 = vmatpush.bf16.msra.mxu0 %v12525
    %12547 = vmatpush.bf16.msra.mxu0 %v12524
    %12548 = vmatmul.bf16.gmra.mxu0 %v12474
    %v12549 = vpop.f32.mrf.mxu0
    %v12550 = vadd.f32 %v12491, %v12549
    %v12551 = vpop.f32.mrf.mxu0
    %12552 = vdwg.mxu0
    %v12553 = vld [vmem:[%s1] sm:$0x1]
    %v12554 = vpack.c.bf16 %v12553, %v12553
    %v12555 = vld [vmem:[#allocation27] sm:$0xf]
    %v12556 = vld [vmem:[#allocation27 + $0x4] sm:$0xf]
    %v12557 = vld [vmem:[#allocation27 + $0x8] sm:$0xf]
    %v12558 = vld [vmem:[#allocation27 + $0xc] sm:$0xf]
    %v12559 = vld [vmem:[#allocation27 + $0x10] sm:$0xf]
    %v12560 = vld [vmem:[#allocation27 + $0x14] sm:$0xf]
    %v12561 = vld [vmem:[#allocation27 + $0x18] sm:$0xf]
    %v12562 = vld [vmem:[#allocation27 + $0x1c] sm:$0xf]
    %v12563 = vld [vmem:[#allocation27 + $0x20] sm:$0xf]
    %v12564 = vld [vmem:[#allocation28] sm:$0x1]
    %v12574 = vunpack.c.l.b16 %v12555
    %v12575 = vunpack.c.l.b16 %v12556
    %v12576 = vunpack.c.l.b16 %v12557
    %v12577 = vunpack.c.l.b16 %v12558
    %v12578 = vunpack.c.l.b16 %v12559
    %v12579 = vunpack.c.l.b16 %v12560
    %v12580 = vunpack.c.l.b16 %v12561
    %v12581 = vunpack.c.l.b16 %v12562
    %v12582 = vunpack.c.l.b16 %v12563
    %v12583 = vpack.c.b16 %v12575, %v12574
    %v12584 = vpack.c.b16 %v12577, %v12576
    %v12585 = vpack.c.b16 %v12579, %v12578
    %v12586 = vpack.c.b16 %v12581, %v12580
    %v12587 = vpack.c.b16 %v12582, %v12582
    %vm12592 = vcmask 588800
    %v12594 = vsel %vm12592, %v12554, 0
    %v12597 = vsel %vm3120, %v12587, 0
    %12599 = vmatpush.bf16.msra.mxu0 0
    %12600 = vmatpush.bf16.msra.mxu0 0
    %12601 = vmatpush.bf16.msra.mxu0 0
    %12602 = vmatpush.bf16.msra.mxu0 %v12597
    %12603 = vmatpush.bf16.msra.mxu0 %v12586
    %12604 = vmatpush.bf16.msra.mxu0 %v12585
    %12605 = vmatpush.bf16.msra.mxu0 %v12584
    %12606 = vmatpush.bf16.msra.mxu0 %v12583
    %12607 = vmatmul.bf16.gmra.mxu0 %v12594
    %v12608 = vpop.f32.mrf.mxu0
    %v12609 = vadd.f32 %v12564, %v12608
    %v12610 = vpop.f32.mrf.mxu0
    %12611 = vdwg.mxu0
    %v12612 = vmax.f32 %v12609, 0.0
    %v12613 = vpack.c.bf16 %v12550, %v12550
    %v12614 = vpack.c.bf16 %v12612, %v12612
    %v12615 = vld [vmem:[#allocation30] sm:$0xf]
    %v12616 = vld [vmem:[#allocation30 + $0x4] sm:$0xf]
    %v12617 = vld [vmem:[#allocation30 + $0x8] sm:$0xf]
    %v12618 = vld [vmem:[#allocation30 + $0xc] sm:$0xf]
    %v12619 = vld [vmem:[#allocation30 + $0x10] sm:$0xf]
    %v12620 = vld [vmem:[#allocation30 + $0x14] sm:$0xf]
    %v12621 = vld [vmem:[#allocation30 + $0x18] sm:$0xf]
    %v12622 = vld [vmem:[#allocation30 + $0x1c] sm:$0xf]
    %v12623 = vld [vmem:[#allocation30 + $0x20] sm:$0xf]
    %v12624 = vld [vmem:[#allocation30 + $0x24] sm:$0xf]
    %v12625 = vld [vmem:[#allocation30 + $0x28] sm:$0xf]
    %v12626 = vld [vmem:[#allocation30 + $0x2c] sm:$0xf]
    %v12627 = vld [vmem:[#allocation30 + $0x30] sm:$0xf]
    %v12628 = vld [vmem:[#allocation30 + $0x34] sm:$0xf]
    %v12629 = vld [vmem:[#allocation30 + $0x38] sm:$0xf]
    %v12630 = vld [vmem:[#allocation30 + $0x3c] sm:$0xf]
    %v12631 = vld [vmem:[#allocation30 + $0x40] sm:$0xf]
    %v12632 = vld [vmem:[#allocation30 + $0x44] sm:$0xf]
    %v12633 = vld [vmem:[#allocation30 + $0x48] sm:$0xf]
    %v12634 = vld [vmem:[#allocation30 + $0x4c] sm:$0xf]
    %v12635 = vld [vmem:[#allocation30 + $0x50] sm:$0xf]
    %v12636 = vld [vmem:[#allocation30 + $0x54] sm:$0xf]
    %v12637 = vld [vmem:[#allocation30 + $0x58] sm:$0xf]
    %v12638 = vld [vmem:[#allocation30 + $0x5c] sm:$0xf]
    %v12639 = vld [vmem:[#allocation30 + $0x60] sm:$0xf]
    %v12640 = vld [vmem:[#allocation30 + $0x64] sm:$0xf]
    %v12641 = vld [vmem:[#allocation30 + $0x68] sm:$0xf]
    %v12642 = vld [vmem:[#allocation30 + $0x6c] sm:$0xf]
    %v12643 = vld [vmem:[#allocation30 + $0x70] sm:$0xf]
    %v12644 = vld [vmem:[#allocation30 + $0x74] sm:$0xf]
    %v12645 = vld [vmem:[#allocation30 + $0x78] sm:$0xf]
    %v12646 = vld [vmem:[#allocation30 + $0x7c] sm:$0xf]
    %v12647 = vld [vmem:[#allocation31] sm:$0x1]
    %v12680 = vunpack.c.l.b16 %v12615
    %v12681 = vunpack.c.l.b16 %v12616
    %v12682 = vunpack.c.l.b16 %v12617
    %v12683 = vunpack.c.l.b16 %v12618
    %v12684 = vunpack.c.l.b16 %v12619
    %v12685 = vunpack.c.l.b16 %v12620
    %v12686 = vunpack.c.l.b16 %v12621
    %v12687 = vunpack.c.l.b16 %v12622
    %v12688 = vunpack.c.l.b16 %v12623
    %v12689 = vunpack.c.l.b16 %v12624
    %v12690 = vunpack.c.l.b16 %v12625
    %v12691 = vunpack.c.l.b16 %v12626
    %v12692 = vunpack.c.l.b16 %v12627
    %v12693 = vunpack.c.l.b16 %v12628
    %v12694 = vunpack.c.l.b16 %v12629
    %v12695 = vunpack.c.l.b16 %v12630
    %v12696 = vunpack.c.l.b16 %v12631
    %v12697 = vunpack.c.l.b16 %v12632
    %v12698 = vunpack.c.l.b16 %v12633
    %v12699 = vunpack.c.l.b16 %v12634
    %v12700 = vunpack.c.l.b16 %v12635
    %v12701 = vunpack.c.l.b16 %v12636
    %v12702 = vunpack.c.l.b16 %v12637
    %v12703 = vunpack.c.l.b16 %v12638
    %v12704 = vunpack.c.l.b16 %v12639
    %v12705 = vunpack.c.l.b16 %v12640
    %v12706 = vunpack.c.l.b16 %v12641
    %v12707 = vunpack.c.l.b16 %v12642
    %v12708 = vunpack.c.l.b16 %v12643
    %v12709 = vunpack.c.l.b16 %v12644
    %v12710 = vunpack.c.l.b16 %v12645
    %v12711 = vunpack.c.l.b16 %v12646
    %v12712 = vpack.c.b16 %v12681, %v12680
    %v12713 = vpack.c.b16 %v12683, %v12682
    %v12714 = vpack.c.b16 %v12685, %v12684
    %v12715 = vpack.c.b16 %v12687, %v12686
    %v12716 = vpack.c.b16 %v12689, %v12688
    %v12717 = vpack.c.b16 %v12691, %v12690
    %v12718 = vpack.c.b16 %v12693, %v12692
    %v12719 = vpack.c.b16 %v12695, %v12694
    %v12720 = vpack.c.b16 %v12697, %v12696
    %v12721 = vpack.c.b16 %v12699, %v12698
    %v12722 = vpack.c.b16 %v12701, %v12700
    %v12723 = vpack.c.b16 %v12703, %v12702
    %v12724 = vpack.c.b16 %v12705, %v12704
    %v12725 = vpack.c.b16 %v12707, %v12706
    %v12726 = vpack.c.b16 %v12709, %v12708
    %v12727 = vpack.c.b16 %v12711, %v12710
    %12744 = vmatpush.bf16.msra.mxu0 %v12719
    %12745 = vmatpush.bf16.msra.mxu0 %v12718
    %12746 = vmatpush.bf16.msra.mxu0 %v12717
    %12747 = vmatpush.bf16.msra.mxu0 %v12716
    %12748 = vmatpush.bf16.msra.mxu0 %v12715
    %12749 = vmatpush.bf16.msra.mxu0 %v12714
    %12750 = vmatpush.bf16.msra.mxu0 %v12713
    %12751 = vmatpush.bf16.msra.mxu0 %v12712
    %12752 = vmatmul.bf16.gmra.mxu0 %v12613
    %v12753 = vpop.f32.mrf.mxu0
    %v12754 = vadd.f32 %v12647, %v12753
    %v12755 = vpop.f32.mrf.mxu0
    %12756 = vdwg.mxu0
    %12757 = vmatpush.bf16.msra.mxu0 %v12727
    %12758 = vmatpush.bf16.msra.mxu0 %v12726
    %12759 = vmatpush.bf16.msra.mxu0 %v12725
    %12760 = vmatpush.bf16.msra.mxu0 %v12724
    %12761 = vmatpush.bf16.msra.mxu0 %v12723
    %12762 = vmatpush.bf16.msra.mxu0 %v12722
    %12763 = vmatpush.bf16.msra.mxu0 %v12721
    %12764 = vmatpush.bf16.msra.mxu0 %v12720
    %12765 = vmatmul.bf16.gmra.mxu0 %v12614
    %v12766 = vpop.f32.mrf.mxu0
    %v12767 = vadd.f32 %v12754, %v12766
    %v12768 = vpop.f32.mrf.mxu0
    %12769 = vdwg.mxu0
    %v12770 = vmax.f32 %v12767, 0.0
    %12771 = vst [vmem:[%s22] sm:$0x1] %v12770
    // Predicated region
    $region162: #{value_net_forward.1} parent=1 // pred_check
      _
    $region163: #{value_net_forward.1} parent=1 // pred_check_branch
      %12773 = sbr.rel (0) target = $region165
    $region164: #{value_net_forward.1} parent=1 // pred_region
      _
    $region165: #{value_net_forward.1} parent=1 // pred_fallthru
      _
    // Predicated region
    $region166: #{value_net_forward.1} parent=1 // pred_check
      _
    $region167: #{value_net_forward.1} parent=1 // pred_check_branch
      %12775 = sbr.rel (0) target = $region169
    $region168: #{value_net_forward.1} parent=1 // pred_region
      _
    $region169: #{value_net_forward.1} parent=1 // pred_fallthru
      _
    %12776 = vsyncpa [#allocation6], 1
    %12777 = vsyncpa [#allocation8], 1
    %12778 = vsyncpa [#allocation11], 1
    %12779 = vsyncpa [#allocation14], 1
    %12780 = vsyncpa [#allocation17], 1
    %12781 = vsyncpa [#allocation20], 1
    %12782 = vsyncpa [#allocation23], 1
    %12783 = vsyncpa [#allocation26], 1
    %12784 = vsyncpa [#allocation29], 1
    %12785 = vsyncpa [#allocation32], 1
  %12786 = vsyncmov [#allocation4]
  %s12787 = vpop.sfrf %12786
  %p12788 = scmp.eq.s32.totalorder %s12787, 0
  %p12789 = pneg %p12788
  %12791 = shalt.err (%p12789)
  %s12792 = scalar_lea.sflag [#allocation4], 1
  %12793 = vsyncmov %s12792
  %s12794 = vpop.sfrf %12793
  %p12795 = scmp.eq.s32.totalorder %s12794, 0
  %p12796 = pneg %p12795
  %12798 = shalt.err (%p12796)

</llo_original>
